<compile_context>
chip_gen: v7x
topology: tpu7x:2x2x1
jax: 0.10.0
libtpu: 0.0.40
codegen_flags: <defaults>
</compile_context>

<pallas_src>
import math

import jax
import jax.numpy as jnp
from jax.experimental import pallas as pl
from jax.experimental.pallas import tpu as pltpu

_EPS = 1e-5


def _round_up(v, m):
    return ((v + m - 1) // m) * m


def _compiler_params():
    return pltpu.CompilerParams(
        dimension_semantics=("parallel",),
        vmem_limit_bytes=32 * 1024 * 1024,
    )


# --------------------------- Linear (fc) kernel -----------------------------
def _linear_kernel(x_ref, w_ref, b_ref, o_ref):
    o_ref[...] = (
        jnp.dot(x_ref[...], w_ref[...], preferred_element_type=jnp.float32)
        + b_ref[...]
    )


def linear(x, w, b):
    B, N = x.shape[0], w.shape[1]
    vspec = pl.BlockSpec(memory_space=pltpu.MemorySpace.VMEM)
    return pl.pallas_call(
        _linear_kernel,
        out_shape=jax.ShapeDtypeStruct((B, N), jnp.float32),
        in_specs=[vspec, vspec, vspec],
        out_specs=vspec,
    )(x, w, b.reshape(1, N))


# ------------------------- shared in-kernel helpers -------------------------
def _row_double(v):
    """(H, W, C) -> (2H, W, C) nearest-neighbour row upsample.

    Only uses concat along a leading dim + a leading-dims-only reshape,
    both of which are trivial relayouts on TPU."""
    H, W, C = v.shape
    return jnp.concatenate([v[:, None], v[:, None]], axis=1).reshape(2 * H, W, C)


def _conv_rows_from_padded(pad_ref, w_ref, rows):
    """Single K = 9*Cp matmul over a zero-padded VMEM buffer.

    pad_ref: (rows + 2, Wt + 2, Cp) zero-padded activations (Wt multiple of 8).
    w_ref:   (9 * Cp, Co) packed weights (tap order: dy major, col-shift minor).
    Returns f32 (rows, Wt, Co).
    """
    Wt = pad_ref.shape[1] - 2
    Cp = pad_ref.shape[2]
    Co = w_ref.shape[1]
    taps = []
    for dy in range(3):
        for cs in range(3):
            taps.append(pad_ref[dy:dy + rows, cs:cs + Wt, :])
    patches = jnp.concatenate(taps, axis=-1)              # (rows, Wt, 9*Cp)
    y = jnp.dot(
        patches.reshape(rows * Wt, 9 * Cp),
        w_ref[...],
        preferred_element_type=jnp.float32,
    )
    return y.reshape(rows, Wt, Co)


# ------------------ block half 1: BN1 + ReLU + up2x + conv1 ------------------
def _block_half1_kernel(x_ref, s_ref, t_ref, w_ref, b_ref, h1_ref, st_ref, pad_ref):
    H, W, C = x_ref.shape[1], x_ref.shape[2], x_ref.shape[3]
    x = x_ref[0].astype(jnp.float32)                       # (H, W, C)
    a = jnp.maximum(x * s_ref[0] + t_ref[0], 0.0)          # BN (folded) + ReLU, f32
    r = _row_double(a.astype(pad_ref.dtype))               # (2H, W, C) row-upsampled
    pad_ref[...] = jnp.zeros(pad_ref.shape, pad_ref.dtype)
    pad_ref[1:2 * H + 1, 1:W + 1, :] = r
    y = _conv_rows_from_padded(pad_ref, w_ref, 2 * H)      # (2H, Wt, 2C) f32
    y = y[:, :W, :] + b_ref[0]                             # keep real columns only
    st_ref[0, 0, :] = jnp.sum(y, axis=(0, 1))              # BN2 partial sums
    st_ref[0, 1, :] = jnp.sum(y * y, axis=(0, 1))
    h1_ref[0] = y.astype(h1_ref.dtype)                     # column-parity packed


def block_half1(x, scale, shift, w_packed, b_packed):
    B, H, W, C = x.shape
    K, Co2 = w_packed.shape
    Wt = _round_up(W, 8)
    isz = jnp.dtype(x.dtype).itemsize
    flops = 2 * B * (2 * H) * Wt * K * Co2
    bytes_accessed = (
        B * H * W * C * isz + K * Co2 * isz
        + B * 2 * H * W * Co2 * isz + B * 2 * Co2 * 4 + (2 * C + 2 * Co2) * 4
    )
    return pl.pallas_call(
        _block_half1_kernel,
        grid=(B,),
        in_specs=[
            pl.BlockSpec((1, H, W, C), lambda b: (b, 0, 0, 0)),
            pl.BlockSpec((1, C), lambda b: (0, 0)),
            pl.BlockSpec((1, C), lambda b: (0, 0)),
            pl.BlockSpec((K, Co2), lambda b: (0, 0)),
            pl.BlockSpec((1, Co2), lambda b: (0, 0)),
        ],
        out_specs=[
            pl.BlockSpec((1, 2 * H, W, Co2), lambda b: (b, 0, 0, 0)),
            pl.BlockSpec((1, 2, Co2), lambda b: (b, 0, 0)),
        ],
        out_shape=[
            jax.ShapeDtypeStruct((B, 2 * H, W, Co2), x.dtype),
            jax.ShapeDtypeStruct((B, 2, Co2), jnp.float32),
        ],
        scratch_shapes=[pltpu.VMEM((2 * H + 2, Wt + 2, C), x.dtype)],
        compiler_params=_compiler_params(),
        cost_estimate=pl.CostEstimate(
            flops=flops, transcendentals=0, bytes_accessed=bytes_accessed),
    )(
        x,
        scale.reshape(1, C).astype(jnp.float32),
        shift.reshape(1, C).astype(jnp.float32),
        w_packed,
        b_packed.reshape(1, Co2).astype(jnp.float32),
    )


# -------------- block half 2: BN2 + ReLU + conv2 + identity skip -------------
def _block_half2_kernel(h_ref, x_ref, s_ref, t_ref, w_ref, b_ref, o_ref, st_ref, pad_ref):
    H2, W = h_ref.shape[1], h_ref.shape[2]
    h = h_ref[0].astype(jnp.float32)                       # (2H, W, 2C) packed
    a = jnp.maximum(h * s_ref[0] + t_ref[0], 0.0)
    pad_ref[...] = jnp.zeros(pad_ref.shape, pad_ref.dtype)
    pad_ref[1:H2 + 1, 1:W + 1, :] = a.astype(pad_ref.dtype)
    y = _conv_rows_from_padded(pad_ref, w_ref, H2)         # (2H, Wt, 2C) f32
    y = y[:, :W, :] + b_ref[0]
    xr = _row_double(x_ref[0].astype(jnp.float32))         # (2H, W, C)
    y = y + jnp.concatenate([xr, xr], axis=-1)             # upsampled identity skip
    st_ref[0, 0, :] = jnp.sum(y, axis=(0, 1))              # next-block BN1 partials
    st_ref[0, 1, :] = jnp.sum(y * y, axis=(0, 1))
    o_ref[0] = y.astype(o_ref.dtype)


def block_half2(h_packed, x, scale_p, shift_p, w_packed, b_packed):
    B, H2, W, C2 = h_packed.shape
    C = x.shape[3]
    K, Co2 = w_packed.shape
    Wt = _round_up(W, 8)
    isz = jnp.dtype(h_packed.dtype).itemsize
    flops = 2 * B * H2 * Wt * K * Co2
    bytes_accessed = (
        B * H2 * W * C2 * isz * 2 + B * (H2 // 2) * W * C * isz
        + K * Co2 * isz + B * 2 * Co2 * 4 + (4 * C2 + Co2) * 4
    )
    return pl.pallas_call(
        _block_half2_kernel,
        grid=(B,),
        in_specs=[
            pl.BlockSpec((1, H2, W, C2), lambda b: (b, 0, 0, 0)),
            pl.BlockSpec((1, H2 // 2, W, C), lambda b: (b, 0, 0, 0)),
            pl.BlockSpec((1, C2), lambda b: (0, 0)),
            pl.BlockSpec((1, C2), lambda b: (0, 0)),
            pl.BlockSpec((K, Co2), lambda b: (0, 0)),
            pl.BlockSpec((1, Co2), lambda b: (0, 0)),
        ],
        out_specs=[
            pl.BlockSpec((1, H2, W, Co2), lambda b: (b, 0, 0, 0)),
            pl.BlockSpec((1, 2, Co2), lambda b: (b, 0, 0)),
        ],
        out_shape=[
            jax.ShapeDtypeStruct((B, H2, W, Co2), h_packed.dtype),
            jax.ShapeDtypeStruct((B, 2, Co2), jnp.float32),
        ],
        scratch_shapes=[pltpu.VMEM((H2 + 2, Wt + 2, C2), h_packed.dtype)],
        compiler_params=_compiler_params(),
        cost_estimate=pl.CostEstimate(
            flops=flops, transcendentals=0, bytes_accessed=bytes_accessed),
    )(
        h_packed,
        x,
        scale_p.reshape(1, C2).astype(jnp.float32),
        shift_p.reshape(1, C2).astype(jnp.float32),
        w_packed,
        b_packed.reshape(1, Co2).astype(jnp.float32),
    )


# ------------------------- final conv3x3 + tanh kernel -----------------------
def _final_conv_kernel(x_ref, w_ref, b_ref, o_ref, pad_ref):
    Hs, Ws = x_ref.shape[1], x_ref.shape[2]
    pad_ref[...] = jnp.zeros(pad_ref.shape, pad_ref.dtype)
    pad_ref[1:Hs + 1, 1:Ws + 1, :] = x_ref[0]
    y = _conv_rows_from_padded(pad_ref, w_ref, Hs)          # (Hs, Wt, nc) f32
    y = y[:, :Ws, :] + b_ref[0]
    o_ref[0] = jnp.tanh(y)


def final_conv(x, w_packed, b):
    B, Hs, Ws, C = x.shape
    K, nc_ = w_packed.shape
    Wt = _round_up(Ws, 8)
    isz = jnp.dtype(x.dtype).itemsize
    flops = 2 * B * Hs * Wt * K * nc_
    bytes_accessed = B * Hs * Ws * C * isz + K * nc_ * isz + B * Hs * Ws * nc_ * 4
    return pl.pallas_call(
        _final_conv_kernel,
        grid=(B,),
        in_specs=[
            pl.BlockSpec((1, Hs, Ws, C), lambda b: (b, 0, 0, 0)),
            pl.BlockSpec((K, nc_), lambda b: (0, 0)),
            pl.BlockSpec((1, nc_), lambda b: (0, 0)),
        ],
        out_specs=pl.BlockSpec((1, Hs, Ws, nc_), lambda b: (b, 0, 0, 0)),
        out_shape=jax.ShapeDtypeStruct((B, Hs, Ws, nc_), jnp.float32),
        scratch_shapes=[pltpu.VMEM((Hs + 2, Wt + 2, C), x.dtype)],
        compiler_params=_compiler_params(),
        cost_estimate=pl.CostEstimate(
            flops=flops, transcendentals=B * Hs * Ws * nc_,
            bytes_accessed=bytes_accessed),
    )(x, w_packed, b.reshape(1, nc_).astype(jnp.float32))


# ----------------------- host-side weight packing ---------------------------
def _pack_upconv_weights(w):
    """(3,3,C,Co) -> (9C, 2Co) weights for the fused 2x-upsample + conv3x3.

    Row index = (dy*3 + col_shift)*C + cin; column halves are the even / odd
    output-column parities of the upsampled image."""
    C, Co = w.shape[2], w.shape[3]
    wa = jnp.zeros((3, 3, C, 2, Co), jnp.float32)
    wa = wa.at[:, 0, :, 0, :].set(w[:, 0])
    wa = wa.at[:, 1, :, 0, :].set(w[:, 1] + w[:, 2])
    wa = wa.at[:, 1, :, 1, :].set(w[:, 0] + w[:, 1])
    wa = wa.at[:, 2, :, 1, :].set(w[:, 2])
    return wa.reshape(9 * C, 2 * Co)


def _pack_packedconv_weights(w):
    """(3,3,C,Co) -> (18C, 2Co) weights for a conv3x3 whose input/output are in
    column-parity packed layout (..., W/2, 2C)."""
    C, Co = w.shape[2], w.shape[3]
    wb = jnp.zeros((3, 3, 2, C, 2, Co), jnp.float32)
    wb = wb.at[:, 0, 1, :, 0, :].set(w[:, 0])
    wb = wb.at[:, 1, 0, :, 0, :].set(w[:, 1])
    wb = wb.at[:, 1, 1, :, 0, :].set(w[:, 2])
    wb = wb.at[:, 1, 0, :, 1, :].set(w[:, 0])
    wb = wb.at[:, 1, 1, :, 1, :].set(w[:, 1])
    wb = wb.at[:, 2, 0, :, 1, :].set(w[:, 2])
    return wb.reshape(18 * C, 2 * Co)


# ------------------------------- forward pass -------------------------------
def generator_forward(x, params, opt, compute_dtype=jnp.bfloat16):
    im, E, nf = opt["im_size"], opt["embedding_size"], opt["nf"]
    nb = int(math.log2(im)) - int(math.log2(E))
    B = x.shape[0]

    z = linear(x, params["fc_w"], params["fc_b"])           # (B, nf*E*E) f32
    x0 = z.reshape(B, nf, E, E).transpose(0, 2, 3, 1)       # View -> NHWC (tiny glue)
    ssum = jnp.sum(x0, axis=(0, 1, 2))
    ssq = jnp.sum(x0 * x0, axis=(0, 1, 2))
    n = B * E * E
    cur = x0.astype(compute_dtype)
    H = W = E

    for i in range(nb):
        p = params["blocks"][i]
        mean = ssum / n
        var = ssq / n - mean * mean                         # biased var (BN train)
        s1 = p["bn1_g"] * jax.lax.rsqrt(var + _EPS)
        t1 = p["bn1_b"] - mean * s1
        wa = _pack_upconv_weights(p["conv1_w"]).astype(compute_dtype)
        ba = jnp.concatenate([p["conv1_b"], p["conv1_b"]])
        h1p, st_a = block_half1(cur, s1, t1, wa, ba)        # (B, 2H, W, 2C) packed

        sa = jnp.sum(st_a, axis=0)                          # (2, 2C) -> per-channel
        s_sum = sa[0, :nf] + sa[0, nf:]
        s_ssq = sa[1, :nf] + sa[1, nf:]
        n2 = B * (2 * H) * (2 * W)
        mean2 = s_sum / n2
        var2 = s_ssq / n2 - mean2 * mean2
        sc2 = p["bn2_g"] * jax.lax.rsqrt(var2 + _EPS)
        sh2 = p["bn2_b"] - mean2 * sc2
        s2p = jnp.concatenate([sc2, sc2])
        t2p = jnp.concatenate([sh2, sh2])
        wb = _pack_packedconv_weights(p["conv2_w"]).astype(compute_dtype)
        bb = jnp.concatenate([p["conv2_b"], p["conv2_b"]])
        outp, st_b = block_half2(h1p, cur, s2p, t2p, wb, bb)

        sb = jnp.sum(st_b, axis=0)
        ssum = sb[0, :nf] + sb[0, nf:]
        ssq = sb[1, :nf] + sb[1, nf:]
        n = n2
        H, W = 2 * H, 2 * W
        cur = outp.reshape(B, H, W, nf)                     # free un-pack (contiguity)

    wc = params["out_w"].reshape(9 * nf, -1).astype(compute_dtype)
    y = final_conv(cur, wc, params["out_b"])                # (B, im, im, nc) f32
    return y.transpose(0, 3, 1, 2)                          # back to NCHW


# -------------------- pure-JAX reference (for validation) -------------------
def _ref_conv3x3(x, w):
    return jax.lax.conv_general_dilated(
        x, w, window_strides=(1, 1), padding="SAME",
        dimension_numbers=("NHWC", "HWIO", "NHWC"),
        preferred_element_type=jnp.float32)


def reference_forward(x, params, opt, compute_dtype=jnp.bfloat16):
    im, E, nf = opt["im_size"], opt["embedding_size"], opt["nf"]
    nb = int(math.log2(im)) - int(math.log2(E))
    B = x.shape[0]
    z = x @ params["fc_w"] + params["fc_b"]
    x0 = z.reshape(B, nf, E, E).transpose(0, 2, 3, 1)
    ssum = x0.sum((0, 1, 2))
    ssq = (x0 * x0).sum((0, 1, 2))
    n = B * E * E
    cur = x0.astype(compute_dtype)
    for i in range(nb):
        p = params["blocks"][i]
        mean = ssum / n
        var = ssq / n - mean * mean
        s1 = p["bn1_g"] * jax.lax.rsqrt(var + _EPS)
        t1 = p["bn1_b"] - mean * s1
        a = jnp.maximum(cur.astype(jnp.float32) * s1 + t1, 0.0).astype(compute_dtype)
        u = jnp.repeat(jnp.repeat(a, 2, axis=1), 2, axis=2)
        h1 = _ref_conv3x3(u, p["conv1_w"].astype(compute_dtype)) + p["conv1_b"]
        ssum2 = h1.sum((0, 1, 2))
        ssq2 = (h1 * h1).sum((0, 1, 2))
        n2 = h1.shape[0] * h1.shape[1] * h1.shape[2]
        h1c = h1.astype(compute_dtype)
        mean2 = ssum2 / n2
        var2 = ssq2 / n2 - mean2 * mean2
        s2 = p["bn2_g"] * jax.lax.rsqrt(var2 + _EPS)
        t2 = p["bn2_b"] - mean2 * s2
        a2 = jnp.maximum(h1c.astype(jnp.float32) * s2 + t2, 0.0).astype(compute_dtype)
        h2 = _ref_conv3x3(a2, p["conv2_w"].astype(compute_dtype)) + p["conv2_b"]
        skip = jnp.repeat(jnp.repeat(cur.astype(jnp.float32), 2, axis=1), 2, axis=2)
        o = h2 + skip
        ssum = o.sum((0, 1, 2))
        ssq = (o * o).sum((0, 1, 2))
        n = o.shape[0] * o.shape[1] * o.shape[2]
        cur = o.astype(compute_dtype)
    y = jnp.tanh(_ref_conv3x3(cur, params["out_w"].astype(compute_dtype))
                 + params["out_b"])
    return y.transpose(0, 3, 1, 2)


# ------------------------- deterministic parameters -------------------------
def init_params(key, opt):
    nz, nf, nc = opt["nz"], opt["nf"], opt["nc"]
    E, im = opt["embedding_size"], opt["im_size"]
    nb = int(math.log2(im)) - int(math.log2(E))
    keys = iter(jax.random.split(key, 4 + 8 * nb))

    def conv_w(k, cin, cout):
        return jax.random.normal(k, (3, 3, cin, cout), jnp.float32) / math.sqrt(9 * cin)

    params = {
        "fc_w": jax.random.normal(next(keys), (nz, nf * E * E), jnp.float32)
                / math.sqrt(nz),
        "fc_b": 0.01 * jax.random.normal(next(keys), (nf * E * E,), jnp.float32),
        "out_w": conv_w(next(keys), nf, nc),
        "out_b": 0.01 * jax.random.normal(next(keys), (nc,), jnp.float32),
        "blocks": [],
    }
    for _ in range(nb):
        params["blocks"].append({
            "bn1_g": 1.0 + 0.1 * jax.random.normal(next(keys), (nf,), jnp.float32),
            "bn1_b": 0.1 * jax.random.normal(next(keys), (nf,), jnp.float32),
            "conv1_w": conv_w(next(keys), nf, nf),
            "conv1_b": 0.01 * jax.random.normal(next(keys), (nf,), jnp.float32),
            "bn2_g": 1.0 + 0.1 * jax.random.normal(next(keys), (nf,), jnp.float32),
            "bn2_b": 0.1 * jax.random.normal(next(keys), (nf,), jnp.float32),
            "conv2_w": conv_w(next(keys), nf, nf),
            "conv2_b": 0.01 * jax.random.normal(next(keys), (nf,), jnp.float32),
        })
    return params


if __name__ == "__main__":
    opt = {"im_size": 16, "embedding_size": 4, "nc": 4, "nz": 32, "nf": 32}
    key = jax.random.PRNGKey(0)
    pkey, xkey = jax.random.split(key)
    params = init_params(pkey, opt)

    batch = 2
    x = jax.random.normal(xkey, (batch, opt["nz"]), dtype=jnp.float32)

    fwd_f32 = jax.jit(lambda a, p: generator_forward(a, p, opt, jnp.float32))
    fwd_bf16 = jax.jit(lambda a, p: generator_forward(a, p, opt, jnp.bfloat16))
    ref_f32 = jax.jit(lambda a, p: reference_forward(a, p, opt, jnp.float32))
    ref_bf16 = jax.jit(lambda a, p: reference_forward(a, p, opt, jnp.bfloat16))

    out32 = jax.block_until_ready(fwd_f32(x, params))
    r32 = jax.block_until_ready(ref_f32(x, params))
    out16 = jax.block_until_ready(fwd_bf16(x, params))
    r16 = jax.block_until_ready(ref_bf16(x, params))

    expect = (batch, opt["nc"], opt["im_size"], opt["im_size"])
    assert out32.shape == expect and out16.shape == expect, (out32.shape, out16.shape)
    assert bool(jnp.all(jnp.isfinite(out32))) and bool(jnp.all(jnp.isfinite(out16)))
    assert bool(jnp.all(jnp.abs(out16) <= 1.0))             # tanh range

    err32 = float(jnp.max(jnp.abs(out32 - r32)))
    err16 = float(jnp.max(jnp.abs(out16 - r16)))
    assert err32 < 1e-2, f"f32 path mismatch vs reference: {err32}"
    assert err16 < 5e-2, f"bf16 path mismatch vs reference: {err16}"
    print("KERNEL_OK")
</pallas_src>

<mosaic_0001>
module attributes {stable_mosaic.version = 11 : i64} {
  func.func @_linear_kernel(%arg0: memref<2x32xf32, #tpu.memory_space<vmem>>, %arg1: memref<32x512xf32, #tpu.memory_space<vmem>>, %arg2: memref<1x512xf32, #tpu.memory_space<vmem>>, %arg3: memref<2x512xf32, #tpu.memory_space<vmem>>) attributes {dimension_semantics = [], scalar_prefetch = 0 : i64, scratch_operands = 0 : i64, tpu.core_type = #tpu.core_type<tc>} {
    %c0 = arith.constant 0 : index
    %c0_0 = arith.constant 0 : index
    %0 = vector.load %arg0[%c0, %c0_0] : memref<2x32xf32, #tpu.memory_space<vmem>>, vector<2x32xf32>
    %c0_1 = arith.constant 0 : index
    %c0_2 = arith.constant 0 : index
    %1 = vector.load %arg1[%c0_1, %c0_2] : memref<32x512xf32, #tpu.memory_space<vmem>>, vector<32x512xf32>
    %cst = arith.constant dense<0.000000e+00> : vector<2x512xf32>
    %2 = tpu.matmul %0, %1, %cst {dimension_numbers = #tpu.dot_dimension_numbers<[1], [0], [0], [1], [0, 0, 1, 1], [], []>} : vector<2x32xf32>, vector<32x512xf32>, vector<2x512xf32> -> vector<2x512xf32>
    %c0_3 = arith.constant 0 : index
    %c0_4 = arith.constant 0 : index
    %3 = vector.load %arg2[%c0_3, %c0_4] : memref<1x512xf32, #tpu.memory_space<vmem>>, vector<1x512xf32>
    %4 = vector.broadcast %3 : vector<1x512xf32> to vector<2x512xf32>
    %5 = arith.addf %2, %4 : vector<2x512xf32>
    %c0_5 = arith.constant 0 : index
    %c0_6 = arith.constant 0 : index
    %6 = vector.load %arg3[%c0_5, %c0_6] : memref<2x512xf32, #tpu.memory_space<vmem>>, vector<2x512xf32>
    tpu.vector_store %arg3[%c0_5, %c0_6], %5 {strides = array<i32>} : memref<2x512xf32, #tpu.memory_space<vmem>>, vector<2x512xf32>,
    return
  }
}

module attributes {stable_mosaic.version = 11 : i64} {
  func.func @_block_half1_kernel(%arg0: i32, %arg1: memref<1x4x4x32xf32, #tpu.memory_space<vmem>>, %arg2: memref<1x32xf32, #tpu.memory_space<vmem>>, %arg3: memref<1x32xf32, #tpu.memory_space<vmem>>, %arg4: memref<288x64xf32, #tpu.memory_space<vmem>>, %arg5: memref<1x64xf32, #tpu.memory_space<vmem>>, %arg6: memref<1x8x4x64xf32, #tpu.memory_space<vmem>>, %arg7: memref<1x2x64xf32, #tpu.memory_space<vmem>>, %arg8: memref<10x10x32xf32, #tpu.memory_space<vmem>>) attributes {dimension_semantics = [#tpu.dimension_semantics<parallel>], iteration_bounds = array<i64: 2>, scalar_prefetch = 0 : i64, scratch_operands = 1 : i64, tpu.core_type = #tpu.core_type<tc>, window_params = [{transform_indices = @transform_0, window_bounds = array<i64: 1, 4, 4, 32>}, {pipeline_mode = #tpu.pipeline_mode<synchronous>, transform_indices = @transform_1, window_bounds = array<i64: 1, 32>}, {pipeline_mode = #tpu.pipeline_mode<synchronous>, transform_indices = @transform_2, window_bounds = array<i64: 1, 32>}, {pipeline_mode = #tpu.pipeline_mode<synchronous>, transform_indices = @transform_3, window_bounds = array<i64: 288, 64>}, {pipeline_mode = #tpu.pipeline_mode<synchronous>, transform_indices = @transform_4, window_bounds = array<i64: 1, 64>}, {transform_indices = @transform_5, window_bounds = array<i64: 1, 8, 4, 64>}, {transform_indices = @transform_6, window_bounds = array<i64: 1, 2, 64>}]} {
    %c0 = arith.constant 0 : index
    %c0_0 = arith.constant 0 : index
    %c0_1 = arith.constant 0 : index
    %c0_2 = arith.constant 0 : index
    %0 = vector.load %arg1[%c0, %c0_0, %c0_1, %c0_2] : memref<1x4x4x32xf32, #tpu.memory_space<vmem>>, vector<1x4x4x32xf32>
    %1 = vector.shape_cast %0 : vector<1x4x4x32xf32> to vector<4x4x32xf32>
    %c0_3 = arith.constant 0 : index
    %c0_4 = arith.constant 0 : index
    %2 = vector.load %arg2[%c0_3, %c0_4] : memref<1x32xf32, #tpu.memory_space<vmem>>, vector<1x32xf32>
    %3 = vector.shape_cast %2 : vector<1x32xf32> to vector<32xf32>
    %4 = vector.shape_cast %3 : vector<32xf32> to vector<1x1x32xf32>
    %5 = vector.broadcast %4 : vector<1x1x32xf32> to vector<4x4x32xf32>
    %6 = arith.mulf %1, %5 : vector<4x4x32xf32>
    %c0_5 = arith.constant 0 : index
    %c0_6 = arith.constant 0 : index
    %7 = vector.load %arg3[%c0_5, %c0_6] : memref<1x32xf32, #tpu.memory_space<vmem>>, vector<1x32xf32>
    %8 = vector.shape_cast %7 : vector<1x32xf32> to vector<32xf32>
    %9 = vector.shape_cast %8 : vector<32xf32> to vector<1x1x32xf32>
    %10 = vector.broadcast %9 : vector<1x1x32xf32> to vector<4x4x32xf32>
    %11 = arith.addf %6, %10 : vector<4x4x32xf32>
    %cst = arith.constant 0.000000e+00 : f32
    %12 = vector.broadcast %cst : f32 to vector<4x4x32xf32>
    %13 = arith.maximumf %11, %12 : vector<4x4x32xf32>
    %14 = vector.shape_cast %13 : vector<4x4x32xf32> to vector<4x1x4x32xf32>
    %15 = vector.shape_cast %13 : vector<4x4x32xf32> to vector<4x1x4x32xf32>
    %16 = tpu.concatenate %14, %15 in 1 : vector<4x1x4x32xf32>, vector<4x1x4x32xf32> -> vector<4x2x4x32xf32>
    %17 = vector.shape_cast %16 : vector<4x2x4x32xf32> to vector<8x4x32xf32>
    %cst_7 = arith.constant 0.000000e+00 : f32
    %18 = vector.broadcast %cst_7 : f32 to vector<10x10x32xf32>
    %c0_8 = arith.constant 0 : index
    %c0_9 = arith.constant 0 : index
    %c0_10 = arith.constant 0 : index
    %19 = vector.load %arg8[%c0_8, %c0_9, %c0_10] : memref<10x10x32xf32, #tpu.memory_space<vmem>>, vector<10x10x32xf32>
    tpu.vector_store %arg8[%c0_8, %c0_9, %c0_10], %18 {strides = array<i32>} : memref<10x10x32xf32, #tpu.memory_space<vmem>>, vector<10x10x32xf32>,
    %c1 = arith.constant 1 : index
    %c1_11 = arith.constant 1 : index
    %c0_12 = arith.constant 0 : index
    %20 = vector.load %arg8[%c1, %c1_11, %c0_12] : memref<10x10x32xf32, #tpu.memory_space<vmem>>, vector<8x4x32xf32>
    tpu.vector_store %arg8[%c1, %c1_11, %c0_12], %17 {strides = array<i32>} : memref<10x10x32xf32, #tpu.memory_space<vmem>>, vector<8x4x32xf32>,
    %c0_13 = arith.constant 0 : index
    %c0_14 = arith.constant 0 : index
    %c0_15 = arith.constant 0 : index
    %21 = vector.load %arg8[%c0_13, %c0_14, %c0_15] : memref<10x10x32xf32, #tpu.memory_space<vmem>>, vector<8x8x32xf32>
    %c0_16 = arith.constant 0 : index
    %c1_17 = arith.constant 1 : index
    %c0_18 = arith.constant 0 : index
    %22 = vector.load %arg8[%c0_16, %c1_17, %c0_18] : memref<10x10x32xf32, #tpu.memory_space<vmem>>, vector<8x8x32xf32>
    %c0_19 = arith.constant 0 : index
    %c2 = arith.constant 2 : index
    %c0_20 = arith.constant 0 : index
    %23 = vector.load %arg8[%c0_19, %c2, %c0_20] : memref<10x10x32xf32, #tpu.memory_space<vmem>>, vector<8x8x32xf32>
    %c1_21 = arith.constant 1 : index
    %c0_22 = arith.constant 0 : index
    %c0_23 = arith.constant 0 : index
    %24 = vector.load %arg8[%c1_21, %c0_22, %c0_23] : memref<10x10x32xf32, #tpu.memory_space<vmem>>, vector<8x8x32xf32>
    %c1_24 = arith.constant 1 : index
    %c1_25 = arith.constant 1 : index
    %c0_26 = arith.constant 0 : index
    %25 = vector.load %arg8[%c1_24, %c1_25, %c0_26] : memref<10x10x32xf32, #tpu.memory_space<vmem>>, vector<8x8x32xf32>
    %c1_27 = arith.constant 1 : index
    %c2_28 = arith.constant 2 : index
    %c0_29 = arith.constant 0 : index
    %26 = vector.load %arg8[%c1_27, %c2_28, %c0_29] : memref<10x10x32xf32, #tpu.memory_space<vmem>>, vector<8x8x32xf32>
    %c2_30 = arith.constant 2 : index
    %c0_31 = arith.constant 0 : index
    %c0_32 = arith.constant 0 : index
    %27 = vector.load %arg8[%c2_30, %c0_31, %c0_32] : memref<10x10x32xf32, #tpu.memory_space<vmem>>, vector<8x8x32xf32>
    %c2_33 = arith.constant 2 : index
    %c1_34 = arith.constant 1 : index
    %c0_35 = arith.constant 0 : index
    %28 = vector.load %arg8[%c2_33, %c1_34, %c0_35] : memref<10x10x32xf32, #tpu.memory_space<vmem>>, vector<8x8x32xf32>
    %c2_36 = arith.constant 2 : index
    %c2_37 = arith.constant 2 : index
    %c0_38 = arith.constant 0 : index
    %29 = vector.load %arg8[%c2_36, %c2_37, %c0_38] : memref<10x10x32xf32, #tpu.memory_space<vmem>>, vector<8x8x32xf32>
    %30 = tpu.concatenate %21, %22, %23, %24, %25, %26, %27, %28, %29 in 2 : vector<8x8x32xf32>, vector<8x8x32xf32>, vector<8x8x32xf32>, vector<8x8x32xf32>, vector<8x8x32xf32>, vector<8x8x32xf32>, vector<8x8x32xf32>, vector<8x8x32xf32>, vector<8x8x32xf32> -> vector<8x8x288xf32>
    %31 = vector.shape_cast %30 : vector<8x8x288xf32> to vector<64x288xf32>
    %c0_39 = arith.constant 0 : index
    %c0_40 = arith.constant 0 : index
    %32 = vector.load %arg4[%c0_39, %c0_40] : memref<288x64xf32, #tpu.memory_space<vmem>>, vector<288x64xf32>
    %cst_41 = arith.constant dense<0.000000e+00> : vector<64x64xf32>
    %33 = tpu.matmul %31, %32, %cst_41 {dimension_numbers = #tpu.dot_dimension_numbers<[1], [0], [0], [1], [0, 0, 1, 1], [], []>} : vector<64x288xf32>, vector<288x64xf32>, vector<64x64xf32> -> vector<64x64xf32>
    %34 = vector.shape_cast %33 : vector<64x64xf32> to vector<8x8x64xf32>
    %35 = vector.extract_strided_slice %34 {offsets = [0, 0, 0], sizes = [8, 4, 64], strides = [1, 1, 1]} : vector<8x8x64xf32> to vector<8x4x64xf32>
    %c0_42 = arith.constant 0 : index
    %c0_43 = arith.constant 0 : index
    %36 = vector.load %arg5[%c0_42, %c0_43] : memref<1x64xf32, #tpu.memory_space<vmem>>, vector<1x64xf32>
    %37 = vector.shape_cast %36 : vector<1x64xf32> to vector<64xf32>
    %38 = vector.shape_cast %37 : vector<64xf32> to vector<1x1x64xf32>
    %39 = vector.broadcast %38 : vector<1x1x64xf32> to vector<8x4x64xf32>
    %40 = arith.addf %35, %39 : vector<8x4x64xf32>
    %cst_44 = arith.constant dense<0.000000e+00> : vector<64xf32>
    %41 = vector.multi_reduction <add>, %40, %cst_44 [0, 1] : vector<8x4x64xf32> to vector<64xf32>
    %c0_45 = arith.constant 0 : index
    %c0_46 = arith.constant 0 : index
    %c0_47 = arith.constant 0 : index
    %42 = vector.load %arg7[%c0_45, %c0_46, %c0_47] : memref<1x2x64xf32, #tpu.memory_space<vmem>>, vector<1x1x64xf32>
    %43 = vector.shape_cast %42 : vector<1x1x64xf32> to vector<64xf32>
    %44 = vector.shape_cast %41 : vector<64xf32> to vector<1x1x64xf32>
    tpu.vector_store %arg7[%c0_45, %c0_46, %c0_47], %44 {strides = array<i32>} : memref<1x2x64xf32, #tpu.memory_space<vmem>>, vector<1x1x64xf32>,
    %45 = arith.mulf %40, %40 : vector<8x4x64xf32>
    %cst_48 = arith.constant dense<0.000000e+00> : vector<64xf32>
    %46 = vector.multi_reduction <add>, %45, %cst_48 [0, 1] : vector<8x4x64xf32> to vector<64xf32>
    %c0_49 = arith.constant 0 : index
    %c1_50 = arith.constant 1 : index
    %c0_51 = arith.constant 0 : index
    %47 = vector.load %arg7[%c0_49, %c1_50, %c0_51] : memref<1x2x64xf32, #tpu.memory_space<vmem>>, vector<1x1x64xf32>
    %48 = vector.shape_cast %47 : vector<1x1x64xf32> to vector<64xf32>
    %49 = vector.shape_cast %46 : vector<64xf32> to vector<1x1x64xf32>
    tpu.vector_store %arg7[%c0_49, %c1_50, %c0_51], %49 {strides = array<i32>} : memref<1x2x64xf32, #tpu.memory_space<vmem>>, vector<1x1x64xf32>,
    %c0_52 = arith.constant 0 : index
    %c0_53 = arith.constant 0 : index
    %c0_54 = arith.constant 0 : index
    %c0_55 = arith.constant 0 : index
    %50 = vector.load %arg6[%c0_52, %c0_53, %c0_54, %c0_55] : memref<1x8x4x64xf32, #tpu.memory_space<vmem>>, vector<1x8x4x64xf32>
    %51 = vector.shape_cast %50 : vector<1x8x4x64xf32> to vector<8x4x64xf32>
    %52 = vector.shape_cast %40 : vector<8x4x64xf32> to vector<1x8x4x64xf32>
    tpu.vector_store %arg6[%c0_52, %c0_53, %c0_54, %c0_55], %52 {strides = array<i32>} : memref<1x8x4x64xf32, #tpu.memory_space<vmem>>, vector<1x8x4x64xf32>,
    return
  }
  func.func @transform_0(%arg0: i32) -> (i32, i32, i32, i32) {
    %c0_i32 = arith.constant 0 : i32
    %c0_i32_0 = arith.constant 0 : i32
    %c0_i32_1 = arith.constant 0 : i32
    %c0_i32_2 = arith.constant 0 : i32
    return %arg0, %c0_i32, %c0_i32_0, %c0_i32_1 : i32, i32, i32, i32
  }
  func.func @transform_1(%arg0: i32) -> (i32, i32) {
    %c0_i32 = arith.constant 0 : i32
    %c0_i32_0 = arith.constant 0 : i32
    %c0_i32_1 = arith.constant 0 : i32
    return %c0_i32, %c0_i32_0 : i32, i32
  }
  func.func @transform_2(%arg0: i32) -> (i32, i32) {
    %c0_i32 = arith.constant 0 : i32
    %c0_i32_0 = arith.constant 0 : i32
    %c0_i32_1 = arith.constant 0 : i32
    return %c0_i32, %c0_i32_0 : i32, i32
  }
  func.func @transform_3(%arg0: i32) -> (i32, i32) {
    %c0_i32 = arith.constant 0 : i32
    %c0_i32_0 = arith.constant 0 : i32
    %c0_i32_1 = arith.constant 0 : i32
    return %c0_i32, %c0_i32_0 : i32, i32
  }
  func.func @transform_4(%arg0: i32) -> (i32, i32) {
    %c0_i32 = arith.constant 0 : i32
    %c0_i32_0 = arith.constant 0 : i32
    %c0_i32_1 = arith.constant 0 : i32
    return %c0_i32, %c0_i32_0 : i32, i32
  }
  func.func @transform_5(%arg0: i32) -> (i32, i32, i32, i32) {
    %c0_i32 = arith.constant 0 : i32
    %c0_i32_0 = arith.constant 0 : i32
    %c0_i32_1 = arith.constant 0 : i32
    %c0_i32_2 = arith.constant 0 : i32
    return %arg0, %c0_i32, %c0_i32_0, %c0_i32_1 : i32, i32, i32, i32
  }
  func.func @transform_6(%arg0: i32) -> (i32, i32, i32) {
    %c0_i32 = arith.constant 0 : i32
    %c0_i32_0 = arith.constant 0 : i32
    %c0_i32_1 = arith.constant 0 : i32
    return %arg0, %c0_i32, %c0_i32_0 : i32, i32, i32
  }
}

module attributes {stable_mosaic.version = 11 : i64} {
  func.func @_block_half2_kernel(%arg0: i32, %arg1: memref<1x8x4x64xf32, #tpu.memory_space<vmem>>, %arg2: memref<1x4x4x32xf32, #tpu.memory_space<vmem>>, %arg3: memref<1x64xf32, #tpu.memory_space<vmem>>, %arg4: memref<1x64xf32, #tpu.memory_space<vmem>>, %arg5: memref<576x64xf32, #tpu.memory_space<vmem>>, %arg6: memref<1x64xf32, #tpu.memory_space<vmem>>, %arg7: memref<1x8x4x64xf32, #tpu.memory_space<vmem>>, %arg8: memref<1x2x64xf32, #tpu.memory_space<vmem>>, %arg9: memref<10x10x64xf32, #tpu.memory_space<vmem>>) attributes {dimension_semantics = [#tpu.dimension_semantics<parallel>], iteration_bounds = array<i64: 2>, scalar_prefetch = 0 : i64, scratch_operands = 1 : i64, tpu.core_type = #tpu.core_type<tc>, window_params = [{transform_indices = @transform_0, window_bounds = array<i64: 1, 8, 4, 64>}, {transform_indices = @transform_1, window_bounds = array<i64: 1, 4, 4, 32>}, {pipeline_mode = #tpu.pipeline_mode<synchronous>, transform_indices = @transform_2, window_bounds = array<i64: 1, 64>}, {pipeline_mode = #tpu.pipeline_mode<synchronous>, transform_indices = @transform_3, window_bounds = array<i64: 1, 64>}, {pipeline_mode = #tpu.pipeline_mode<synchronous>, transform_indices = @transform_4, window_bounds = array<i64: 576, 64>}, {pipeline_mode = #tpu.pipeline_mode<synchronous>, transform_indices = @transform_5, window_bounds = array<i64: 1, 64>}, {transform_indices = @transform_6, window_bounds = array<i64: 1, 8, 4, 64>}, {transform_indices = @transform_7, window_bounds = array<i64: 1, 2, 64>}]} {
    %c0 = arith.constant 0 : index
    %c0_0 = arith.constant 0 : index
    %c0_1 = arith.constant 0 : index
    %c0_2 = arith.constant 0 : index
    %0 = vector.load %arg1[%c0, %c0_0, %c0_1, %c0_2] : memref<1x8x4x64xf32, #tpu.memory_space<vmem>>, vector<1x8x4x64xf32>
    %1 = vector.shape_cast %0 : vector<1x8x4x64xf32> to vector<8x4x64xf32>
    %c0_3 = arith.constant 0 : index
    %c0_4 = arith.constant 0 : index
    %2 = vector.load %arg3[%c0_3, %c0_4] : memref<1x64xf32, #tpu.memory_space<vmem>>, vector<1x64xf32>
    %3 = vector.shape_cast %2 : vector<1x64xf32> to vector<64xf32>
    %4 = vector.shape_cast %3 : vector<64xf32> to vector<1x1x64xf32>
    %5 = vector.broadcast %4 : vector<1x1x64xf32> to vector<8x4x64xf32>
    %6 = arith.mulf %1, %5 : vector<8x4x64xf32>
    %c0_5 = arith.constant 0 : index
    %c0_6 = arith.constant 0 : index
    %7 = vector.load %arg4[%c0_5, %c0_6] : memref<1x64xf32, #tpu.memory_space<vmem>>, vector<1x64xf32>
    %8 = vector.shape_cast %7 : vector<1x64xf32> to vector<64xf32>
    %9 = vector.shape_cast %8 : vector<64xf32> to vector<1x1x64xf32>
    %10 = vector.broadcast %9 : vector<1x1x64xf32> to vector<8x4x64xf32>
    %11 = arith.addf %6, %10 : vector<8x4x64xf32>
    %cst = arith.constant 0.000000e+00 : f32
    %12 = vector.broadcast %cst : f32 to vector<8x4x64xf32>
    %13 = arith.maximumf %11, %12 : vector<8x4x64xf32>
    %cst_7 = arith.constant 0.000000e+00 : f32
    %14 = vector.broadcast %cst_7 : f32 to vector<10x10x64xf32>
    %c0_8 = arith.constant 0 : index
    %c0_9 = arith.constant 0 : index
    %c0_10 = arith.constant 0 : index
    %15 = vector.load %arg9[%c0_8, %c0_9, %c0_10] : memref<10x10x64xf32, #tpu.memory_space<vmem>>, vector<10x10x64xf32>
    tpu.vector_store %arg9[%c0_8, %c0_9, %c0_10], %14 {strides = array<i32>} : memref<10x10x64xf32, #tpu.memory_space<vmem>>, vector<10x10x64xf32>,
    %c1 = arith.constant 1 : index
    %c1_11 = arith.constant 1 : index
    %c0_12 = arith.constant 0 : index
    %16 = vector.load %arg9[%c1, %c1_11, %c0_12] : memref<10x10x64xf32, #tpu.memory_space<vmem>>, vector<8x4x64xf32>
    tpu.vector_store %arg9[%c1, %c1_11, %c0_12], %13 {strides = array<i32>} : memref<10x10x64xf32, #tpu.memory_space<vmem>>, vector<8x4x64xf32>,
    %c0_13 = arith.constant 0 : index
    %c0_14 = arith.constant 0 : index
    %c0_15 = arith.constant 0 : index
    %17 = vector.load %arg9[%c0_13, %c0_14, %c0_15] : memref<10x10x64xf32, #tpu.memory_space<vmem>>, vector<8x8x64xf32>
    %c0_16 = arith.constant 0 : index
    %c1_17 = arith.constant 1 : index
    %c0_18 = arith.constant 0 : index
    %18 = vector.load %arg9[%c0_16, %c1_17, %c0_18] : memref<10x10x64xf32, #tpu.memory_space<vmem>>, vector<8x8x64xf32>
    %c0_19 = arith.constant 0 : index
    %c2 = arith.constant 2 : index
    %c0_20 = arith.constant 0 : index
    %19 = vector.load %arg9[%c0_19, %c2, %c0_20] : memref<10x10x64xf32, #tpu.memory_space<vmem>>, vector<8x8x64xf32>
    %c1_21 = arith.constant 1 : index
    %c0_22 = arith.constant 0 : index
    %c0_23 = arith.constant 0 : index
    %20 = vector.load %arg9[%c1_21, %c0_22, %c0_23] : memref<10x10x64xf32, #tpu.memory_space<vmem>>, vector<8x8x64xf32>
    %c1_24 = arith.constant 1 : index
    %c1_25 = arith.constant 1 : index
    %c0_26 = arith.constant 0 : index
    %21 = vector.load %arg9[%c1_24, %c1_25, %c0_26] : memref<10x10x64xf32, #tpu.memory_space<vmem>>, vector<8x8x64xf32>
    %c1_27 = arith.constant 1 : index
    %c2_28 = arith.constant 2 : index
    %c0_29 = arith.constant 0 : index
    %22 = vector.load %arg9[%c1_27, %c2_28, %c0_29] : memref<10x10x64xf32, #tpu.memory_space<vmem>>, vector<8x8x64xf32>
    %c2_30 = arith.constant 2 : index
    %c0_31 = arith.constant 0 : index
    %c0_32 = arith.constant 0 : index
    %23 = vector.load %arg9[%c2_30, %c0_31, %c0_32] : memref<10x10x64xf32, #tpu.memory_space<vmem>>, vector<8x8x64xf32>
    %c2_33 = arith.constant 2 : index
    %c1_34 = arith.constant 1 : index
    %c0_35 = arith.constant 0 : index
    %24 = vector.load %arg9[%c2_33, %c1_34, %c0_35] : memref<10x10x64xf32, #tpu.memory_space<vmem>>, vector<8x8x64xf32>
    %c2_36 = arith.constant 2 : index
    %c2_37 = arith.constant 2 : index
    %c0_38 = arith.constant 0 : index
    %25 = vector.load %arg9[%c2_36, %c2_37, %c0_38] : memref<10x10x64xf32, #tpu.memory_space<vmem>>, vector<8x8x64xf32>
    %26 = tpu.concatenate %17, %18, %19, %20, %21, %22, %23, %24, %25 in 2 : vector<8x8x64xf32>, vector<8x8x64xf32>, vector<8x8x64xf32>, vector<8x8x64xf32>, vector<8x8x64xf32>, vector<8x8x64xf32>, vector<8x8x64xf32>, vector<8x8x64xf32>, vector<8x8x64xf32> -> vector<8x8x576xf32>
    %27 = vector.shape_cast %26 : vector<8x8x576xf32> to vector<64x576xf32>
    %c0_39 = arith.constant 0 : index
    %c0_40 = arith.constant 0 : index
    %28 = vector.load %arg5[%c0_39, %c0_40] : memref<576x64xf32, #tpu.memory_space<vmem>>, vector<576x64xf32>
    %cst_41 = arith.constant dense<0.000000e+00> : vector<64x64xf32>
    %29 = tpu.matmul %27, %28, %cst_41 {dimension_numbers = #tpu.dot_dimension_numbers<[1], [0], [0], [1], [0, 0, 1, 1], [], []>} : vector<64x576xf32>, vector<576x64xf32>, vector<64x64xf32> -> vector<64x64xf32>
    %30 = vector.shape_cast %29 : vector<64x64xf32> to vector<8x8x64xf32>
    %31 = vector.extract_strided_slice %30 {offsets = [0, 0, 0], sizes = [8, 4, 64], strides = [1, 1, 1]} : vector<8x8x64xf32> to vector<8x4x64xf32>
    %c0_42 = arith.constant 0 : index
    %c0_43 = arith.constant 0 : index
    %32 = vector.load %arg6[%c0_42, %c0_43] : memref<1x64xf32, #tpu.memory_space<vmem>>, vector<1x64xf32>
    %33 = vector.shape_cast %32 : vector<1x64xf32> to vector<64xf32>
    %34 = vector.shape_cast %33 : vector<64xf32> to vector<1x1x64xf32>
    %35 = vector.broadcast %34 : vector<1x1x64xf32> to vector<8x4x64xf32>
    %36 = arith.addf %31, %35 : vector<8x4x64xf32>
    %c0_44 = arith.constant 0 : index
    %c0_45 = arith.constant 0 : index
    %c0_46 = arith.constant 0 : index
    %c0_47 = arith.constant 0 : index
    %37 = vector.load %arg2[%c0_44, %c0_45, %c0_46, %c0_47] : memref<1x4x4x32xf32, #tpu.memory_space<vmem>>, vector<1x4x4x32xf32>
    %38 = vector.shape_cast %37 : vector<1x4x4x32xf32> to vector<4x4x32xf32>
    %39 = vector.shape_cast %38 : vector<4x4x32xf32> to vector<4x1x4x32xf32>
    %40 = vector.shape_cast %38 : vector<4x4x32xf32> to vector<4x1x4x32xf32>
    %41 = tpu.concatenate %39, %40 in 1 : vector<4x1x4x32xf32>, vector<4x1x4x32xf32> -> vector<4x2x4x32xf32>
    %42 = vector.shape_cast %41 : vector<4x2x4x32xf32> to vector<8x4x32xf32>
    %43 = tpu.concatenate %42, %42 in 2 : vector<8x4x32xf32>, vector<8x4x32xf32> -> vector<8x4x64xf32>
    %44 = arith.addf %36, %43 : vector<8x4x64xf32>
    %cst_48 = arith.constant dense<0.000000e+00> : vector<64xf32>
    %45 = vector.multi_reduction <add>, %44, %cst_48 [0, 1] : vector<8x4x64xf32> to vector<64xf32>
    %c0_49 = arith.constant 0 : index
    %c0_50 = arith.constant 0 : index
    %c0_51 = arith.constant 0 : index
    %46 = vector.load %arg8[%c0_49, %c0_50, %c0_51] : memref<1x2x64xf32, #tpu.memory_space<vmem>>, vector<1x1x64xf32>
    %47 = vector.shape_cast %46 : vector<1x1x64xf32> to vector<64xf32>
    %48 = vector.shape_cast %45 : vector<64xf32> to vector<1x1x64xf32>
    tpu.vector_store %arg8[%c0_49, %c0_50, %c0_51], %48 {strides = array<i32>} : memref<1x2x64xf32, #tpu.memory_space<vmem>>, vector<1x1x64xf32>,
    %49 = arith.mulf %44, %44 : vector<8x4x64xf32>
    %cst_52 = arith.constant dense<0.000000e+00> : vector<64xf32>
    %50 = vector.multi_reduction <add>, %49, %cst_52 [0, 1] : vector<8x4x64xf32> to vector<64xf32>
    %c0_53 = arith.constant 0 : index
    %c1_54 = arith.constant 1 : index
    %c0_55 = arith.constant 0 : index
    %51 = vector.load %arg8[%c0_53, %c1_54, %c0_55] : memref<1x2x64xf32, #tpu.memory_space<vmem>>, vector<1x1x64xf32>
    %52 = vector.shape_cast %51 : vector<1x1x64xf32> to vector<64xf32>
    %53 = vector.shape_cast %50 : vector<64xf32> to vector<1x1x64xf32>
    tpu.vector_store %arg8[%c0_53, %c1_54, %c0_55], %53 {strides = array<i32>} : memref<1x2x64xf32, #tpu.memory_space<vmem>>, vector<1x1x64xf32>,
    %c0_56 = arith.constant 0 : index
    %c0_57 = arith.constant 0 : index
    %c0_58 = arith.constant 0 : index
    %c0_59 = arith.constant 0 : index
    %54 = vector.load %arg7[%c0_56, %c0_57, %c0_58, %c0_59] : memref<1x8x4x64xf32, #tpu.memory_space<vmem>>, vector<1x8x4x64xf32>
    %55 = vector.shape_cast %54 : vector<1x8x4x64xf32> to vector<8x4x64xf32>
    %56 = vector.shape_cast %44 : vector<8x4x64xf32> to vector<1x8x4x64xf32>
    tpu.vector_store %arg7[%c0_56, %c0_57, %c0_58, %c0_59], %56 {strides = array<i32>} : memref<1x8x4x64xf32, #tpu.memory_space<vmem>>, vector<1x8x4x64xf32>,
    return
  }
  func.func @transform_0(%arg0: i32) -> (i32, i32, i32, i32) {
    %c0_i32 = arith.constant 0 : i32
    %c0_i32_0 = arith.constant 0 : i32
    %c0_i32_1 = arith.constant 0 : i32
    %c0_i32_2 = arith.constant 0 : i32
    return %arg0, %c0_i32, %c0_i32_0, %c0_i32_1 : i32, i32, i32, i32
  }
  func.func @transform_1(%arg0: i32) -> (i32, i32, i32, i32) {
    %c0_i32 = arith.constant 0 : i32
    %c0_i32_0 = arith.constant 0 : i32
    %c0_i32_1 = arith.constant 0 : i32
    %c0_i32_2 = arith.constant 0 : i32
    return %arg0, %c0_i32, %c0_i32_0, %c0_i32_1 : i32, i32, i32, i32
  }
  func.func @transform_2(%arg0: i32) -> (i32, i32) {
    %c0_i32 = arith.constant 0 : i32
    %c0_i32_0 = arith.constant 0 : i32
    %c0_i32_1 = arith.constant 0 : i32
    return %c0_i32, %c0_i32_0 : i32, i32
  }
  func.func @transform_3(%arg0: i32) -> (i32, i32) {
    %c0_i32 = arith.constant 0 : i32
    %c0_i32_0 = arith.constant 0 : i32
    %c0_i32_1 = arith.constant 0 : i32
    return %c0_i32, %c0_i32_0 : i32, i32
  }
  func.func @transform_4(%arg0: i32) -> (i32, i32) {
    %c0_i32 = arith.constant 0 : i32
    %c0_i32_0 = arith.constant 0 : i32
    %c0_i32_1 = arith.constant 0 : i32
    return %c0_i32, %c0_i32_0 : i32, i32
  }
  func.func @transform_5(%arg0: i32) -> (i32, i32) {
    %c0_i32 = arith.constant 0 : i32
    %c0_i32_0 = arith.constant 0 : i32
    %c0_i32_1 = arith.constant 0 : i32
    return %c0_i32, %c0_i32_0 : i32, i32
  }
  func.func @transform_6(%arg0: i32) -> (i32, i32, i32, i32) {
    %c0_i32 = arith.constant 0 : i32
    %c0_i32_0 = arith.constant 0 : i32
    %c0_i32_1 = arith.constant 0 : i32
    %c0_i32_2 = arith.constant 0 : i32
    return %arg0, %c0_i32, %c0_i32_0, %c0_i32_1 : i32, i32, i32, i32
  }
  func.func @transform_7(%arg0: i32) -> (i32, i32, i32) {
    %c0_i32 = arith.constant 0 : i32
    %c0_i32_0 = arith.constant 0 : i32
    %c0_i32_1 = arith.constant 0 : i32
    return %arg0, %c0_i32, %c0_i32_0 : i32, i32, i32
  }
}

module attributes {stable_mosaic.version = 11 : i64} {
  func.func @_block_half1_kernel(%arg0: i32, %arg1: memref<1x8x8x32xf32, #tpu.memory_space<vmem>>, %arg2: memref<1x32xf32, #tpu.memory_space<vmem>>, %arg3: memref<1x32xf32, #tpu.memory_space<vmem>>, %arg4: memref<288x64xf32, #tpu.memory_space<vmem>>, %arg5: memref<1x64xf32, #tpu.memory_space<vmem>>, %arg6: memref<1x16x8x64xf32, #tpu.memory_space<vmem>>, %arg7: memref<1x2x64xf32, #tpu.memory_space<vmem>>, %arg8: memref<18x10x32xf32, #tpu.memory_space<vmem>>) attributes {dimension_semantics = [#tpu.dimension_semantics<parallel>], iteration_bounds = array<i64: 2>, scalar_prefetch = 0 : i64, scratch_operands = 1 : i64, tpu.core_type = #tpu.core_type<tc>, window_params = [{transform_indices = @transform_0, window_bounds = array<i64: 1, 8, 8, 32>}, {pipeline_mode = #tpu.pipeline_mode<synchronous>, transform_indices = @transform_1, window_bounds = array<i64: 1, 32>}, {pipeline_mode = #tpu.pipeline_mode<synchronous>, transform_indices = @transform_2, window_bounds = array<i64: 1, 32>}, {pipeline_mode = #tpu.pipeline_mode<synchronous>, transform_indices = @transform_3, window_bounds = array<i64: 288, 64>}, {pipeline_mode = #tpu.pipeline_mode<synchronous>, transform_indices = @transform_4, window_bounds = array<i64: 1, 64>}, {transform_indices = @transform_5, window_bounds = array<i64: 1, 16, 8, 64>}, {transform_indices = @transform_6, window_bounds = array<i64: 1, 2, 64>}]} {
    %c0 = arith.constant 0 : index
    %c0_0 = arith.constant 0 : index
    %c0_1 = arith.constant 0 : index
    %c0_2 = arith.constant 0 : index
    %0 = vector.load %arg1[%c0, %c0_0, %c0_1, %c0_2] : memref<1x8x8x32xf32, #tpu.memory_space<vmem>>, vector<1x8x8x32xf32>
    %1 = vector.shape_cast %0 : vector<1x8x8x32xf32> to vector<8x8x32xf32>
    %c0_3 = arith.constant 0 : index
    %c0_4 = arith.constant 0 : index
    %2 = vector.load %arg2[%c0_3, %c0_4] : memref<1x32xf32, #tpu.memory_space<vmem>>, vector<1x32xf32>
    %3 = vector.shape_cast %2 : vector<1x32xf32> to vector<32xf32>
    %4 = vector.shape_cast %3 : vector<32xf32> to vector<1x1x32xf32>
    %5 = vector.broadcast %4 : vector<1x1x32xf32> to vector<8x8x32xf32>
    %6 = arith.mulf %1, %5 : vector<8x8x32xf32>
    %c0_5 = arith.constant 0 : index
    %c0_6 = arith.constant 0 : index
    %7 = vector.load %arg3[%c0_5, %c0_6] : memref<1x32xf32, #tpu.memory_space<vmem>>, vector<1x32xf32>
    %8 = vector.shape_cast %7 : vector<1x32xf32> to vector<32xf32>
    %9 = vector.shape_cast %8 : vector<32xf32> to vector<1x1x32xf32>
    %10 = vector.broadcast %9 : vector<1x1x32xf32> to vector<8x8x32xf32>
    %11 = arith.addf %6, %10 : vector<8x8x32xf32>
    %cst = arith.constant 0.000000e+00 : f32
    %12 = vector.broadcast %cst : f32 to vector<8x8x32xf32>
    %13 = arith.maximumf %11, %12 : vector<8x8x32xf32>
    %14 = vector.shape_cast %13 : vector<8x8x32xf32> to vector<8x1x8x32xf32>
    %15 = vector.shape_cast %13 : vector<8x8x32xf32> to vector<8x1x8x32xf32>
    %16 = tpu.concatenate %14, %15 in 1 : vector<8x1x8x32xf32>, vector<8x1x8x32xf32> -> vector<8x2x8x32xf32>
    %17 = vector.shape_cast %16 : vector<8x2x8x32xf32> to vector<16x8x32xf32>
    %cst_7 = arith.constant 0.000000e+00 : f32
    %18 = vector.broadcast %cst_7 : f32 to vector<18x10x32xf32>
    %c0_8 = arith.constant 0 : index
    %c0_9 = arith.constant 0 : index
    %c0_10 = arith.constant 0 : index
    %19 = vector.load %arg8[%c0_8, %c0_9, %c0_10] : memref<18x10x32xf32, #tpu.memory_space<vmem>>, vector<18x10x32xf32>
    tpu.vector_store %arg8[%c0_8, %c0_9, %c0_10], %18 {strides = array<i32>} : memref<18x10x32xf32, #tpu.memory_space<vmem>>, vector<18x10x32xf32>,
    %c1 = arith.constant 1 : index
    %c1_11 = arith.constant 1 : index
    %c0_12 = arith.constant 0 : index
    %20 = vector.load %arg8[%c1, %c1_11, %c0_12] : memref<18x10x32xf32, #tpu.memory_space<vmem>>, vector<16x8x32xf32>
    tpu.vector_store %arg8[%c1, %c1_11, %c0_12], %17 {strides = array<i32>} : memref<18x10x32xf32, #tpu.memory_space<vmem>>, vector<16x8x32xf32>,
    %c0_13 = arith.constant 0 : index
    %c0_14 = arith.constant 0 : index
    %c0_15 = arith.constant 0 : index
    %21 = vector.load %arg8[%c0_13, %c0_14, %c0_15] : memref<18x10x32xf32, #tpu.memory_space<vmem>>, vector<16x8x32xf32>
    %c0_16 = arith.constant 0 : index
    %c1_17 = arith.constant 1 : index
    %c0_18 = arith.constant 0 : index
    %22 = vector.load %arg8[%c0_16, %c1_17, %c0_18] : memref<18x10x32xf32, #tpu.memory_space<vmem>>, vector<16x8x32xf32>
    %c0_19 = arith.constant 0 : index
    %c2 = arith.constant 2 : index
    %c0_20 = arith.constant 0 : index
    %23 = vector.load %arg8[%c0_19, %c2, %c0_20] : memref<18x10x32xf32, #tpu.memory_space<vmem>>, vector<16x8x32xf32>
    %c1_21 = arith.constant 1 : index
    %c0_22 = arith.constant 0 : index
    %c0_23 = arith.constant 0 : index
    %24 = vector.load %arg8[%c1_21, %c0_22, %c0_23] : memref<18x10x32xf32, #tpu.memory_space<vmem>>, vector<16x8x32xf32>
    %c1_24 = arith.constant 1 : index
    %c1_25 = arith.constant 1 : index
    %c0_26 = arith.constant 0 : index
    %25 = vector.load %arg8[%c1_24, %c1_25, %c0_26] : memref<18x10x32xf32, #tpu.memory_space<vmem>>, vector<16x8x32xf32>
    %c1_27 = arith.constant 1 : index
    %c2_28 = arith.constant 2 : index
    %c0_29 = arith.constant 0 : index
    %26 = vector.load %arg8[%c1_27, %c2_28, %c0_29] : memref<18x10x32xf32, #tpu.memory_space<vmem>>, vector<16x8x32xf32>
    %c2_30 = arith.constant 2 : index
    %c0_31 = arith.constant 0 : index
    %c0_32 = arith.constant 0 : index
    %27 = vector.load %arg8[%c2_30, %c0_31, %c0_32] : memref<18x10x32xf32, #tpu.memory_space<vmem>>, vector<16x8x32xf32>
    %c2_33 = arith.constant 2 : index
    %c1_34 = arith.constant 1 : index
    %c0_35 = arith.constant 0 : index
    %28 = vector.load %arg8[%c2_33, %c1_34, %c0_35] : memref<18x10x32xf32, #tpu.memory_space<vmem>>, vector<16x8x32xf32>
    %c2_36 = arith.constant 2 : index
    %c2_37 = arith.constant 2 : index
    %c0_38 = arith.constant 0 : index
    %29 = vector.load %arg8[%c2_36, %c2_37, %c0_38] : memref<18x10x32xf32, #tpu.memory_space<vmem>>, vector<16x8x32xf32>
    %30 = tpu.concatenate %21, %22, %23, %24, %25, %26, %27, %28, %29 in 2 : vector<16x8x32xf32>, vector<16x8x32xf32>, vector<16x8x32xf32>, vector<16x8x32xf32>, vector<16x8x32xf32>, vector<16x8x32xf32>, vector<16x8x32xf32>, vector<16x8x32xf32>, vector<16x8x32xf32> -> vector<16x8x288xf32>
    %31 = vector.shape_cast %30 : vector<16x8x288xf32> to vector<128x288xf32>
    %c0_39 = arith.constant 0 : index
    %c0_40 = arith.constant 0 : index
    %32 = vector.load %arg4[%c0_39, %c0_40] : memref<288x64xf32, #tpu.memory_space<vmem>>, vector<288x64xf32>
    %cst_41 = arith.constant dense<0.000000e+00> : vector<128x64xf32>
    %33 = tpu.matmul %31, %32, %cst_41 {dimension_numbers = #tpu.dot_dimension_numbers<[1], [0], [0], [1], [0, 0, 1, 1], [], []>} : vector<128x288xf32>, vector<288x64xf32>, vector<128x64xf32> -> vector<128x64xf32>
    %34 = vector.shape_cast %33 : vector<128x64xf32> to vector<16x8x64xf32>
    %c0_42 = arith.constant 0 : index
    %c0_43 = arith.constant 0 : index
    %35 = vector.load %arg5[%c0_42, %c0_43] : memref<1x64xf32, #tpu.memory_space<vmem>>, vector<1x64xf32>
    %36 = vector.shape_cast %35 : vector<1x64xf32> to vector<64xf32>
    %37 = vector.shape_cast %36 : vector<64xf32> to vector<1x1x64xf32>
    %38 = vector.broadcast %37 : vector<1x1x64xf32> to vector<16x8x64xf32>
    %39 = arith.addf %34, %38 : vector<16x8x64xf32>
    %cst_44 = arith.constant dense<0.000000e+00> : vector<64xf32>
    %40 = vector.multi_reduction <add>, %39, %cst_44 [0, 1] : vector<16x8x64xf32> to vector<64xf32>
    %c0_45 = arith.constant 0 : index
    %c0_46 = arith.constant 0 : index
    %c0_47 = arith.constant 0 : index
    %41 = vector.load %arg7[%c0_45, %c0_46, %c0_47] : memref<1x2x64xf32, #tpu.memory_space<vmem>>, vector<1x1x64xf32>
    %42 = vector.shape_cast %41 : vector<1x1x64xf32> to vector<64xf32>
    %43 = vector.shape_cast %40 : vector<64xf32> to vector<1x1x64xf32>
    tpu.vector_store %arg7[%c0_45, %c0_46, %c0_47], %43 {strides = array<i32>} : memref<1x2x64xf32, #tpu.memory_space<vmem>>, vector<1x1x64xf32>,
    %44 = arith.mulf %39, %39 : vector<16x8x64xf32>
    %cst_48 = arith.constant dense<0.000000e+00> : vector<64xf32>
    %45 = vector.multi_reduction <add>, %44, %cst_48 [0, 1] : vector<16x8x64xf32> to vector<64xf32>
    %c0_49 = arith.constant 0 : index
    %c1_50 = arith.constant 1 : index
    %c0_51 = arith.constant 0 : index
    %46 = vector.load %arg7[%c0_49, %c1_50, %c0_51] : memref<1x2x64xf32, #tpu.memory_space<vmem>>, vector<1x1x64xf32>
    %47 = vector.shape_cast %46 : vector<1x1x64xf32> to vector<64xf32>
    %48 = vector.shape_cast %45 : vector<64xf32> to vector<1x1x64xf32>
    tpu.vector_store %arg7[%c0_49, %c1_50, %c0_51], %48 {strides = array<i32>} : memref<1x2x64xf32, #tpu.memory_space<vmem>>, vector<1x1x64xf32>,
    %c0_52 = arith.constant 0 : index
    %c0_53 = arith.constant 0 : index
    %c0_54 = arith.constant 0 : index
    %c0_55 = arith.constant 0 : index
    %49 = vector.load %arg6[%c0_52, %c0_53, %c0_54, %c0_55] : memref<1x16x8x64xf32, #tpu.memory_space<vmem>>, vector<1x16x8x64xf32>
    %50 = vector.shape_cast %49 : vector<1x16x8x64xf32> to vector<16x8x64xf32>
    %51 = vector.shape_cast %39 : vector<16x8x64xf32> to vector<1x16x8x64xf32>
    tpu.vector_store %arg6[%c0_52, %c0_53, %c0_54, %c0_55], %51 {strides = array<i32>} : memref<1x16x8x64xf32, #tpu.memory_space<vmem>>, vector<1x16x8x64xf32>,
    return
  }
  func.func @transform_0(%arg0: i32) -> (i32, i32, i32, i32) {
    %c0_i32 = arith.constant 0 : i32
    %c0_i32_0 = arith.constant 0 : i32
    %c0_i32_1 = arith.constant 0 : i32
    %c0_i32_2 = arith.constant 0 : i32
    return %arg0, %c0_i32, %c0_i32_0, %c0_i32_1 : i32, i32, i32, i32
  }
  func.func @transform_1(%arg0: i32) -> (i32, i32) {
    %c0_i32 = arith.constant 0 : i32
    %c0_i32_0 = arith.constant 0 : i32
    %c0_i32_1 = arith.constant 0 : i32
    return %c0_i32, %c0_i32_0 : i32, i32
  }
  func.func @transform_2(%arg0: i32) -> (i32, i32) {
    %c0_i32 = arith.constant 0 : i32
    %c0_i32_0 = arith.constant 0 : i32
    %c0_i32_1 = arith.constant 0 : i32
    return %c0_i32, %c0_i32_0 : i32, i32
  }
  func.func @transform_3(%arg0: i32) -> (i32, i32) {
    %c0_i32 = arith.constant 0 : i32
    %c0_i32_0 = arith.constant 0 : i32
    %c0_i32_1 = arith.constant 0 : i32
    return %c0_i32, %c0_i32_0 : i32, i32
  }
  func.func @transform_4(%arg0: i32) -> (i32, i32) {
    %c0_i32 = arith.constant 0 : i32
    %c0_i32_0 = arith.constant 0 : i32
    %c0_i32_1 = arith.constant 0 : i32
    return %c0_i32, %c0_i32_0 : i32, i32
  }
  func.func @transform_5(%arg0: i32) -> (i32, i32, i32, i32) {
    %c0_i32 = arith.constant 0 : i32
    %c0_i32_0 = arith.constant 0 : i32
    %c0_i32_1 = arith.constant 0 : i32
    %c0_i32_2 = arith.constant 0 : i32
    return %arg0, %c0_i32, %c0_i32_0, %c0_i32_1 : i32, i32, i32, i32
  }
  func.func @transform_6(%arg0: i32) -> (i32, i32, i32) {
    %c0_i32 = arith.constant 0 : i32
    %c0_i32_0 = arith.constant 0 : i32
    %c0_i32_1 = arith.constant 0 : i32
    return %arg0, %c0_i32, %c0_i32_0 : i32, i32, i32
  }
}

module attributes {stable_mosaic.version = 11 : i64} {
  func.func @_block_half2_kernel(%arg0: i32, %arg1: memref<1x16x8x64xf32, #tpu.memory_space<vmem>>, %arg2: memref<1x8x8x32xf32, #tpu.memory_space<vmem>>, %arg3: memref<1x64xf32, #tpu.memory_space<vmem>>, %arg4: memref<1x64xf32, #tpu.memory_space<vmem>>, %arg5: memref<576x64xf32, #tpu.memory_space<vmem>>, %arg6: memref<1x64xf32, #tpu.memory_space<vmem>>, %arg7: memref<1x16x8x64xf32, #tpu.memory_space<vmem>>, %arg8: memref<1x2x64xf32, #tpu.memory_space<vmem>>, %arg9: memref<18x10x64xf32, #tpu.memory_space<vmem>>) attributes {dimension_semantics = [#tpu.dimension_semantics<parallel>], iteration_bounds = array<i64: 2>, scalar_prefetch = 0 : i64, scratch_operands = 1 : i64, tpu.core_type = #tpu.core_type<tc>, window_params = [{transform_indices = @transform_0, window_bounds = array<i64: 1, 16, 8, 64>}, {transform_indices = @transform_1, window_bounds = array<i64: 1, 8, 8, 32>}, {pipeline_mode = #tpu.pipeline_mode<synchronous>, transform_indices = @transform_2, window_bounds = array<i64: 1, 64>}, {pipeline_mode = #tpu.pipeline_mode<synchronous>, transform_indices = @transform_3, window_bounds = array<i64: 1, 64>}, {pipeline_mode = #tpu.pipeline_mode<synchronous>, transform_indices = @transform_4, window_bounds = array<i64: 576, 64>}, {pipeline_mode = #tpu.pipeline_mode<synchronous>, transform_indices = @transform_5, window_bounds = array<i64: 1, 64>}, {transform_indices = @transform_6, window_bounds = array<i64: 1, 16, 8, 64>}, {transform_indices = @transform_7, window_bounds = array<i64: 1, 2, 64>}]} {
    %c0 = arith.constant 0 : index
    %c0_0 = arith.constant 0 : index
    %c0_1 = arith.constant 0 : index
    %c0_2 = arith.constant 0 : index
    %0 = vector.load %arg1[%c0, %c0_0, %c0_1, %c0_2] : memref<1x16x8x64xf32, #tpu.memory_space<vmem>>, vector<1x16x8x64xf32>
    %1 = vector.shape_cast %0 : vector<1x16x8x64xf32> to vector<16x8x64xf32>
    %c0_3 = arith.constant 0 : index
    %c0_4 = arith.constant 0 : index
    %2 = vector.load %arg3[%c0_3, %c0_4] : memref<1x64xf32, #tpu.memory_space<vmem>>, vector<1x64xf32>
    %3 = vector.shape_cast %2 : vector<1x64xf32> to vector<64xf32>
    %4 = vector.shape_cast %3 : vector<64xf32> to vector<1x1x64xf32>
    %5 = vector.broadcast %4 : vector<1x1x64xf32> to vector<16x8x64xf32>
    %6 = arith.mulf %1, %5 : vector<16x8x64xf32>
    %c0_5 = arith.constant 0 : index
    %c0_6 = arith.constant 0 : index
    %7 = vector.load %arg4[%c0_5, %c0_6] : memref<1x64xf32, #tpu.memory_space<vmem>>, vector<1x64xf32>
    %8 = vector.shape_cast %7 : vector<1x64xf32> to vector<64xf32>
    %9 = vector.shape_cast %8 : vector<64xf32> to vector<1x1x64xf32>
    %10 = vector.broadcast %9 : vector<1x1x64xf32> to vector<16x8x64xf32>
    %11 = arith.addf %6, %10 : vector<16x8x64xf32>
    %cst = arith.constant 0.000000e+00 : f32
    %12 = vector.broadcast %cst : f32 to vector<16x8x64xf32>
    %13 = arith.maximumf %11, %12 : vector<16x8x64xf32>
    %cst_7 = arith.constant 0.000000e+00 : f32
    %14 = vector.broadcast %cst_7 : f32 to vector<18x10x64xf32>
    %c0_8 = arith.constant 0 : index
    %c0_9 = arith.constant 0 : index
    %c0_10 = arith.constant 0 : index
    %15 = vector.load %arg9[%c0_8, %c0_9, %c0_10] : memref<18x10x64xf32, #tpu.memory_space<vmem>>, vector<18x10x64xf32>
    tpu.vector_store %arg9[%c0_8, %c0_9, %c0_10], %14 {strides = array<i32>} : memref<18x10x64xf32, #tpu.memory_space<vmem>>, vector<18x10x64xf32>,
    %c1 = arith.constant 1 : index
    %c1_11 = arith.constant 1 : index
    %c0_12 = arith.constant 0 : index
    %16 = vector.load %arg9[%c1, %c1_11, %c0_12] : memref<18x10x64xf32, #tpu.memory_space<vmem>>, vector<16x8x64xf32>
    tpu.vector_store %arg9[%c1, %c1_11, %c0_12], %13 {strides = array<i32>} : memref<18x10x64xf32, #tpu.memory_space<vmem>>, vector<16x8x64xf32>,
    %c0_13 = arith.constant 0 : index
    %c0_14 = arith.constant 0 : index
    %c0_15 = arith.constant 0 : index
    %17 = vector.load %arg9[%c0_13, %c0_14, %c0_15] : memref<18x10x64xf32, #tpu.memory_space<vmem>>, vector<16x8x64xf32>
    %c0_16 = arith.constant 0 : index
    %c1_17 = arith.constant 1 : index
    %c0_18 = arith.constant 0 : index
    %18 = vector.load %arg9[%c0_16, %c1_17, %c0_18] : memref<18x10x64xf32, #tpu.memory_space<vmem>>, vector<16x8x64xf32>
    %c0_19 = arith.constant 0 : index
    %c2 = arith.constant 2 : index
    %c0_20 = arith.constant 0 : index
    %19 = vector.load %arg9[%c0_19, %c2, %c0_20] : memref<18x10x64xf32, #tpu.memory_space<vmem>>, vector<16x8x64xf32>
    %c1_21 = arith.constant 1 : index
    %c0_22 = arith.constant 0 : index
    %c0_23 = arith.constant 0 : index
    %20 = vector.load %arg9[%c1_21, %c0_22, %c0_23] : memref<18x10x64xf32, #tpu.memory_space<vmem>>, vector<16x8x64xf32>
    %c1_24 = arith.constant 1 : index
    %c1_25 = arith.constant 1 : index
    %c0_26 = arith.constant 0 : index
    %21 = vector.load %arg9[%c1_24, %c1_25, %c0_26] : memref<18x10x64xf32, #tpu.memory_space<vmem>>, vector<16x8x64xf32>
    %c1_27 = arith.constant 1 : index
    %c2_28 = arith.constant 2 : index
    %c0_29 = arith.constant 0 : index
    %22 = vector.load %arg9[%c1_27, %c2_28, %c0_29] : memref<18x10x64xf32, #tpu.memory_space<vmem>>, vector<16x8x64xf32>
    %c2_30 = arith.constant 2 : index
    %c0_31 = arith.constant 0 : index
    %c0_32 = arith.constant 0 : index
    %23 = vector.load %arg9[%c2_30, %c0_31, %c0_32] : memref<18x10x64xf32, #tpu.memory_space<vmem>>, vector<16x8x64xf32>
    %c2_33 = arith.constant 2 : index
    %c1_34 = arith.constant 1 : index
    %c0_35 = arith.constant 0 : index
    %24 = vector.load %arg9[%c2_33, %c1_34, %c0_35] : memref<18x10x64xf32, #tpu.memory_space<vmem>>, vector<16x8x64xf32>
    %c2_36 = arith.constant 2 : index
    %c2_37 = arith.constant 2 : index
    %c0_38 = arith.constant 0 : index
    %25 = vector.load %arg9[%c2_36, %c2_37, %c0_38] : memref<18x10x64xf32, #tpu.memory_space<vmem>>, vector<16x8x64xf32>
    %26 = tpu.concatenate %17, %18, %19, %20, %21, %22, %23, %24, %25 in 2 : vector<16x8x64xf32>, vector<16x8x64xf32>, vector<16x8x64xf32>, vector<16x8x64xf32>, vector<16x8x64xf32>, vector<16x8x64xf32>, vector<16x8x64xf32>, vector<16x8x64xf32>, vector<16x8x64xf32> -> vector<16x8x576xf32>
    %27 = vector.shape_cast %26 : vector<16x8x576xf32> to vector<128x576xf32>
    %c0_39 = arith.constant 0 : index
    %c0_40 = arith.constant 0 : index
    %28 = vector.load %arg5[%c0_39, %c0_40] : memref<576x64xf32, #tpu.memory_space<vmem>>, vector<576x64xf32>
    %cst_41 = arith.constant dense<0.000000e+00> : vector<128x64xf32>
    %29 = tpu.matmul %27, %28, %cst_41 {dimension_numbers = #tpu.dot_dimension_numbers<[1], [0], [0], [1], [0, 0, 1, 1], [], []>} : vector<128x576xf32>, vector<576x64xf32>, vector<128x64xf32> -> vector<128x64xf32>
    %30 = vector.shape_cast %29 : vector<128x64xf32> to vector<16x8x64xf32>
    %c0_42 = arith.constant 0 : index
    %c0_43 = arith.constant 0 : index
    %31 = vector.load %arg6[%c0_42, %c0_43] : memref<1x64xf32, #tpu.memory_space<vmem>>, vector<1x64xf32>
    %32 = vector.shape_cast %31 : vector<1x64xf32> to vector<64xf32>
    %33 = vector.shape_cast %32 : vector<64xf32> to vector<1x1x64xf32>
    %34 = vector.broadcast %33 : vector<1x1x64xf32> to vector<16x8x64xf32>
    %35 = arith.addf %30, %34 : vector<16x8x64xf32>
    %c0_44 = arith.constant 0 : index
    %c0_45 = arith.constant 0 : index
    %c0_46 = arith.constant 0 : index
    %c0_47 = arith.constant 0 : index
    %36 = vector.load %arg2[%c0_44, %c0_45, %c0_46, %c0_47] : memref<1x8x8x32xf32, #tpu.memory_space<vmem>>, vector<1x8x8x32xf32>
    %37 = vector.shape_cast %36 : vector<1x8x8x32xf32> to vector<8x8x32xf32>
    %38 = vector.shape_cast %37 : vector<8x8x32xf32> to vector<8x1x8x32xf32>
    %39 = vector.shape_cast %37 : vector<8x8x32xf32> to vector<8x1x8x32xf32>
    %40 = tpu.concatenate %38, %39 in 1 : vector<8x1x8x32xf32>, vector<8x1x8x32xf32> -> vector<8x2x8x32xf32>
    %41 = vector.shape_cast %40 : vector<8x2x8x32xf32> to vector<16x8x32xf32>
    %42 = tpu.concatenate %41, %41 in 2 : vector<16x8x32xf32>, vector<16x8x32xf32> -> vector<16x8x64xf32>
    %43 = arith.addf %35, %42 : vector<16x8x64xf32>
    %cst_48 = arith.constant dense<0.000000e+00> : vector<64xf32>
    %44 = vector.multi_reduction <add>, %43, %cst_48 [0, 1] : vector<16x8x64xf32> to vector<64xf32>
    %c0_49 = arith.constant 0 : index
    %c0_50 = arith.constant 0 : index
    %c0_51 = arith.constant 0 : index
    %45 = vector.load %arg8[%c0_49, %c0_50, %c0_51] : memref<1x2x64xf32, #tpu.memory_space<vmem>>, vector<1x1x64xf32>
    %46 = vector.shape_cast %45 : vector<1x1x64xf32> to vector<64xf32>
    %47 = vector.shape_cast %44 : vector<64xf32> to vector<1x1x64xf32>
    tpu.vector_store %arg8[%c0_49, %c0_50, %c0_51], %47 {strides = array<i32>} : memref<1x2x64xf32, #tpu.memory_space<vmem>>, vector<1x1x64xf32>,
    %48 = arith.mulf %43, %43 : vector<16x8x64xf32>
    %cst_52 = arith.constant dense<0.000000e+00> : vector<64xf32>
    %49 = vector.multi_reduction <add>, %48, %cst_52 [0, 1] : vector<16x8x64xf32> to vector<64xf32>
    %c0_53 = arith.constant 0 : index
    %c1_54 = arith.constant 1 : index
    %c0_55 = arith.constant 0 : index
    %50 = vector.load %arg8[%c0_53, %c1_54, %c0_55] : memref<1x2x64xf32, #tpu.memory_space<vmem>>, vector<1x1x64xf32>
    %51 = vector.shape_cast %50 : vector<1x1x64xf32> to vector<64xf32>
    %52 = vector.shape_cast %49 : vector<64xf32> to vector<1x1x64xf32>
    tpu.vector_store %arg8[%c0_53, %c1_54, %c0_55], %52 {strides = array<i32>} : memref<1x2x64xf32, #tpu.memory_space<vmem>>, vector<1x1x64xf32>,
    %c0_56 = arith.constant 0 : index
    %c0_57 = arith.constant 0 : index
    %c0_58 = arith.constant 0 : index
    %c0_59 = arith.constant 0 : index
    %53 = vector.load %arg7[%c0_56, %c0_57, %c0_58, %c0_59] : memref<1x16x8x64xf32, #tpu.memory_space<vmem>>, vector<1x16x8x64xf32>
    %54 = vector.shape_cast %53 : vector<1x16x8x64xf32> to vector<16x8x64xf32>
    %55 = vector.shape_cast %43 : vector<16x8x64xf32> to vector<1x16x8x64xf32>
    tpu.vector_store %arg7[%c0_56, %c0_57, %c0_58, %c0_59], %55 {strides = array<i32>} : memref<1x16x8x64xf32, #tpu.memory_space<vmem>>, vector<1x16x8x64xf32>,
    return
  }
  func.func @transform_0(%arg0: i32) -> (i32, i32, i32, i32) {
    %c0_i32 = arith.constant 0 : i32
    %c0_i32_0 = arith.constant 0 : i32
    %c0_i32_1 = arith.constant 0 : i32
    %c0_i32_2 = arith.constant 0 : i32
    return %arg0, %c0_i32, %c0_i32_0, %c0_i32_1 : i32, i32, i32, i32
  }
  func.func @transform_1(%arg0: i32) -> (i32, i32, i32, i32) {
    %c0_i32 = arith.constant 0 : i32
    %c0_i32_0 = arith.constant 0 : i32
    %c0_i32_1 = arith.constant 0 : i32
    %c0_i32_2 = arith.constant 0 : i32
    return %arg0, %c0_i32, %c0_i32_0, %c0_i32_1 : i32, i32, i32, i32
  }
  func.func @transform_2(%arg0: i32) -> (i32, i32) {
    %c0_i32 = arith.constant 0 : i32
    %c0_i32_0 = arith.constant 0 : i32
    %c0_i32_1 = arith.constant 0 : i32
    return %c0_i32, %c0_i32_0 : i32, i32
  }
  func.func @transform_3(%arg0: i32) -> (i32, i32) {
    %c0_i32 = arith.constant 0 : i32
    %c0_i32_0 = arith.constant 0 : i32
    %c0_i32_1 = arith.constant 0 : i32
    return %c0_i32, %c0_i32_0 : i32, i32
  }
  func.func @transform_4(%arg0: i32) -> (i32, i32) {
    %c0_i32 = arith.constant 0 : i32
    %c0_i32_0 = arith.constant 0 : i32
    %c0_i32_1 = arith.constant 0 : i32
    return %c0_i32, %c0_i32_0 : i32, i32
  }
  func.func @transform_5(%arg0: i32) -> (i32, i32) {
    %c0_i32 = arith.constant 0 : i32
    %c0_i32_0 = arith.constant 0 : i32
    %c0_i32_1 = arith.constant 0 : i32
    return %c0_i32, %c0_i32_0 : i32, i32
  }
  func.func @transform_6(%arg0: i32) -> (i32, i32, i32, i32) {
    %c0_i32 = arith.constant 0 : i32
    %c0_i32_0 = arith.constant 0 : i32
    %c0_i32_1 = arith.constant 0 : i32
    %c0_i32_2 = arith.constant 0 : i32
    return %arg0, %c0_i32, %c0_i32_0, %c0_i32_1 : i32, i32, i32, i32
  }
  func.func @transform_7(%arg0: i32) -> (i32, i32, i32) {
    %c0_i32 = arith.constant 0 : i32
    %c0_i32_0 = arith.constant 0 : i32
    %c0_i32_1 = arith.constant 0 : i32
    return %arg0, %c0_i32, %c0_i32_0 : i32, i32, i32
  }
}

module attributes {stable_mosaic.version = 11 : i64} {
  func.func @_final_conv_kernel(%arg0: i32, %arg1: memref<1x16x16x32xf32, #tpu.memory_space<vmem>>, %arg2: memref<288x4xf32, #tpu.memory_space<vmem>>, %arg3: memref<1x4xf32, #tpu.memory_space<vmem>>, %arg4: memref<1x16x16x4xf32, #tpu.memory_space<vmem>>, %arg5: memref<18x18x32xf32, #tpu.memory_space<vmem>>) attributes {dimension_semantics = [#tpu.dimension_semantics<parallel>], iteration_bounds = array<i64: 2>, scalar_prefetch = 0 : i64, scratch_operands = 1 : i64, tpu.core_type = #tpu.core_type<tc>, window_params = [{transform_indices = @transform_0, window_bounds = array<i64: 1, 16, 16, 32>}, {pipeline_mode = #tpu.pipeline_mode<synchronous>, transform_indices = @transform_1, window_bounds = array<i64: 288, 4>}, {pipeline_mode = #tpu.pipeline_mode<synchronous>, transform_indices = @transform_2, window_bounds = array<i64: 1, 4>}, {transform_indices = @transform_3, window_bounds = array<i64: 1, 16, 16, 4>}]} {
    %cst = arith.constant 0.000000e+00 : f32
    %0 = vector.broadcast %cst : f32 to vector<18x18x32xf32>
    %c0 = arith.constant 0 : index
    %c0_0 = arith.constant 0 : index
    %c0_1 = arith.constant 0 : index
    %1 = vector.load %arg5[%c0, %c0_0, %c0_1] : memref<18x18x32xf32, #tpu.memory_space<vmem>>, vector<18x18x32xf32>
    tpu.vector_store %arg5[%c0, %c0_0, %c0_1], %0 {strides = array<i32>} : memref<18x18x32xf32, #tpu.memory_space<vmem>>, vector<18x18x32xf32>,
    %c0_2 = arith.constant 0 : index
    %c0_3 = arith.constant 0 : index
    %c0_4 = arith.constant 0 : index
    %c0_5 = arith.constant 0 : index
    %2 = vector.load %arg1[%c0_2, %c0_3, %c0_4, %c0_5] : memref<1x16x16x32xf32, #tpu.memory_space<vmem>>, vector<1x16x16x32xf32>
    %3 = vector.shape_cast %2 : vector<1x16x16x32xf32> to vector<16x16x32xf32>
    %c1 = arith.constant 1 : index
    %c1_6 = arith.constant 1 : index
    %c0_7 = arith.constant 0 : index
    %4 = vector.load %arg5[%c1, %c1_6, %c0_7] : memref<18x18x32xf32, #tpu.memory_space<vmem>>, vector<16x16x32xf32>
    tpu.vector_store %arg5[%c1, %c1_6, %c0_7], %3 {strides = array<i32>} : memref<18x18x32xf32, #tpu.memory_space<vmem>>, vector<16x16x32xf32>,
    %c0_8 = arith.constant 0 : index
    %c0_9 = arith.constant 0 : index
    %c0_10 = arith.constant 0 : index
    %5 = vector.load %arg5[%c0_8, %c0_9, %c0_10] : memref<18x18x32xf32, #tpu.memory_space<vmem>>, vector<16x16x32xf32>
    %c0_11 = arith.constant 0 : index
    %c1_12 = arith.constant 1 : index
    %c0_13 = arith.constant 0 : index
    %6 = vector.load %arg5[%c0_11, %c1_12, %c0_13] : memref<18x18x32xf32, #tpu.memory_space<vmem>>, vector<16x16x32xf32>
    %c0_14 = arith.constant 0 : index
    %c2 = arith.constant 2 : index
    %c0_15 = arith.constant 0 : index
    %7 = vector.load %arg5[%c0_14, %c2, %c0_15] : memref<18x18x32xf32, #tpu.memory_space<vmem>>, vector<16x16x32xf32>
    %c1_16 = arith.constant 1 : index
    %c0_17 = arith.constant 0 : index
    %c0_18 = arith.constant 0 : index
    %8 = vector.load %arg5[%c1_16, %c0_17, %c0_18] : memref<18x18x32xf32, #tpu.memory_space<vmem>>, vector<16x16x32xf32>
    %c1_19 = arith.constant 1 : index
    %c1_20 = arith.constant 1 : index
    %c0_21 = arith.constant 0 : index
    %9 = vector.load %arg5[%c1_19, %c1_20, %c0_21] : memref<18x18x32xf32, #tpu.memory_space<vmem>>, vector<16x16x32xf32>
    %c1_22 = arith.constant 1 : index
    %c2_23 = arith.constant 2 : index
    %c0_24 = arith.constant 0 : index
    %10 = vector.load %arg5[%c1_22, %c2_23, %c0_24] : memref<18x18x32xf32, #tpu.memory_space<vmem>>, vector<16x16x32xf32>
    %c2_25 = arith.constant 2 : index
    %c0_26 = arith.constant 0 : index
    %c0_27 = arith.constant 0 : index
    %11 = vector.load %arg5[%c2_25, %c0_26, %c0_27] : memref<18x18x32xf32, #tpu.memory_space<vmem>>, vector<16x16x32xf32>
    %c2_28 = arith.constant 2 : index
    %c1_29 = arith.constant 1 : index
    %c0_30 = arith.constant 0 : index
    %12 = vector.load %arg5[%c2_28, %c1_29, %c0_30] : memref<18x18x32xf32, #tpu.memory_space<vmem>>, vector<16x16x32xf32>
    %c2_31 = arith.constant 2 : index
    %c2_32 = arith.constant 2 : index
    %c0_33 = arith.constant 0 : index
    %13 = vector.load %arg5[%c2_31, %c2_32, %c0_33] : memref<18x18x32xf32, #tpu.memory_space<vmem>>, vector<16x16x32xf32>
    %14 = tpu.concatenate %5, %6, %7, %8, %9, %10, %11, %12, %13 in 2 : vector<16x16x32xf32>, vector<16x16x32xf32>, vector<16x16x32xf32>, vector<16x16x32xf32>, vector<16x16x32xf32>, vector<16x16x32xf32>, vector<16x16x32xf32>, vector<16x16x32xf32>, vector<16x16x32xf32> -> vector<16x16x288xf32>
    %15 = vector.shape_cast %14 : vector<16x16x288xf32> to vector<256x288xf32>
    %c0_34 = arith.constant 0 : index
    %c0_35 = arith.constant 0 : index
    %16 = vector.load %arg2[%c0_34, %c0_35] : memref<288x4xf32, #tpu.memory_space<vmem>>, vector<288x4xf32>
    %cst_36 = arith.constant dense<0.000000e+00> : vector<256x4xf32>
    %17 = tpu.matmul %15, %16, %cst_36 {dimension_numbers = #tpu.dot_dimension_numbers<[1], [0], [0], [1], [0, 0, 1, 1], [], []>} : vector<256x288xf32>, vector<288x4xf32>, vector<256x4xf32> -> vector<256x4xf32>
    %18 = vector.shape_cast %17 : vector<256x4xf32> to vector<16x16x4xf32>
    %c0_37 = arith.constant 0 : index
    %c0_38 = arith.constant 0 : index
    %19 = vector.load %arg3[%c0_37, %c0_38] : memref<1x4xf32, #tpu.memory_space<vmem>>, vector<1x4xf32>
    %20 = vector.shape_cast %19 : vector<1x4xf32> to vector<4xf32>
    %21 = vector.shape_cast %20 : vector<4xf32> to vector<1x1x4xf32>
    %22 = vector.broadcast %21 : vector<1x1x4xf32> to vector<16x16x4xf32>
    %23 = arith.addf %18, %22 : vector<16x16x4xf32>
    %24 = math.tanh %23 : vector<16x16x4xf32>
    %c0_39 = arith.constant 0 : index
    %c0_40 = arith.constant 0 : index
    %c0_41 = arith.constant 0 : index
    %c0_42 = arith.constant 0 : index
    %25 = vector.load %arg4[%c0_39, %c0_40, %c0_41, %c0_42] : memref<1x16x16x4xf32, #tpu.memory_space<vmem>>, vector<1x16x16x4xf32>
    %26 = vector.shape_cast %25 : vector<1x16x16x4xf32> to vector<16x16x4xf32>
    %27 = vector.shape_cast %24 : vector<16x16x4xf32> to vector<1x16x16x4xf32>
    tpu.vector_store %arg4[%c0_39, %c0_40, %c0_41, %c0_42], %27 {strides = array<i32>} : memref<1x16x16x4xf32, #tpu.memory_space<vmem>>, vector<1x16x16x4xf32>,
    return
  }
  func.func @transform_0(%arg0: i32) -> (i32, i32, i32, i32) {
    %c0_i32 = arith.constant 0 : i32
    %c0_i32_0 = arith.constant 0 : i32
    %c0_i32_1 = arith.constant 0 : i32
    %c0_i32_2 = arith.constant 0 : i32
    return %arg0, %c0_i32, %c0_i32_0, %c0_i32_1 : i32, i32, i32, i32
  }
  func.func @transform_1(%arg0: i32) -> (i32, i32) {
    %c0_i32 = arith.constant 0 : i32
    %c0_i32_0 = arith.constant 0 : i32
    %c0_i32_1 = arith.constant 0 : i32
    return %c0_i32, %c0_i32_0 : i32, i32
  }
  func.func @transform_2(%arg0: i32) -> (i32, i32) {
    %c0_i32 = arith.constant 0 : i32
    %c0_i32_0 = arith.constant 0 : i32
    %c0_i32_1 = arith.constant 0 : i32
    return %c0_i32, %c0_i32_0 : i32, i32
  }
  func.func @transform_3(%arg0: i32) -> (i32, i32, i32, i32) {
    %c0_i32 = arith.constant 0 : i32
    %c0_i32_0 = arith.constant 0 : i32
    %c0_i32_1 = arith.constant 0 : i32
    %c0_i32_2 = arith.constant 0 : i32
    return %arg0, %c0_i32, %c0_i32_0, %c0_i32_1 : i32, i32, i32, i32
  }
}

</mosaic_0001>

<llo_original>
// kernel: _lambda_.6
$region0: #{_lambda_.6}
  #allocation0 [shape = 'u32[]', space=smem, size = 0x4, offset = 0x4, fixed_abs, tag = 'smem constant byte address 0x4 - core index']
  #allocation1 [shape = 'u32[144,128]{1,0:T(1,128)}', space=vmem, size = 0x12000, scoped, tag = 'internal scratch']
  %s0 = inlined_call_operand.vmem [shape: f32[2,32], index: 0, kind: input, shape index: {}]
  %s1 = inlined_call_operand.hbm [shape: f32[32,512], index: 1, kind: input, shape index: {}]
  %s2 = inlined_call_operand.vmem [shape: f32[1,512], index: 2, kind: input, shape index: {}]
  %s3 = inlined_call_operand.vmem [shape: f32[2,512], index: 3, kind: output, shape index: {}]
  %s4 = sld [smem:[#allocation0]]
  $region26: #{_lambda_.6} parent=0
    _
  %s6 = ssub.s32 1, %s4
  %s7 = scalar_select 0, %s6, %s4
  $region1: #{_lambda_.6} parent=0
    #allocation2 [shape = 'u8[65536]{0}', space=vmem, size = 0x10000, scoped, tag = 'input window, operand 1, single buffered']
    #allocation3 [shape = 's32[1]{0}', space=sflag, size = 0x4, scoped, tag = 'scoped memory for _lambda_.6']
    %8 = vsyncpa [#allocation3], 0
    // Predicated region
    $region2: #{_lambda_.6} parent=1 // pred_check
      _
    $region3: #{_lambda_.6} parent=1 // pred_check_branch
      %10 = sbr.rel (0) target = $region5
    $region4: #{_lambda_.6} parent=1 // pred_region
      _
    $region5: #{_lambda_.6} parent=1 // pred_fallthru
      _
    // Predicated region
    $region6: #{_lambda_.6} parent=1 // pred_check
      _
    $region7: #{_lambda_.6} parent=1 // pred_check_branch
      %12 = sbr.rel (0) target = $region9
    $region8: #{_lambda_.6} parent=1 // pred_region
      %s14 = ssub.s32 2048, 2048
      %15 = vsyncadd [#allocation3], %s14
      %s16 = sshll.u32 [#allocation2], 4
      %s17 = int_to_ptr.vmem [resolvable:$true] %s16
      %22 = dma.hbm_to_vmem [thread:$0]  %s1, 2048, %s17, [#allocation3], 512, 512, 32
    $region9: #{_lambda_.6} parent=1 // pred_fallthru
      _
    // Predicated region
    $region10: #{_lambda_.6} parent=1 // pred_check
      _
    $region11: #{_lambda_.6} parent=1 // pred_check_branch
      %24 = sbr.rel (0) target = $region13
    $region12: #{_lambda_.6} parent=1 // pred_region
      _
    $region13: #{_lambda_.6} parent=1 // pred_fallthru
      _
    // Predicated region
    $region14: #{_lambda_.6} parent=1 // pred_check
      _
    $region15: #{_lambda_.6} parent=1 // pred_check_branch
      %26 = sbr.rel (0) target = $region17
    $region16: #{_lambda_.6} parent=1 // pred_region
      %27 = dma.done [#allocation3], 2048
    $region17: #{_lambda_.6} parent=1 // pred_fallthru
      _
    %v28 = vld [vmem:[%s0] sm:$0x3]
    %v29 = vld [vmem:[#allocation2] sm:$0xff]
    %v30 = vld [vmem:[#allocation2 + $0x8] sm:$0xff]
    %v31 = vld [vmem:[#allocation2 + $0x10] sm:$0xff]
    %v32 = vld [vmem:[#allocation2 + $0x18] sm:$0xff]
    %v33 = vld [vmem:[#allocation2 + $0x20] sm:$0xff]
    %v34 = vld [vmem:[#allocation2 + $0x28] sm:$0xff]
    %v35 = vld [vmem:[#allocation2 + $0x30] sm:$0xff]
    %v36 = vld [vmem:[#allocation2 + $0x38] sm:$0xff]
    %v37 = vld [vmem:[#allocation2 + $0x40] sm:$0xff]
    %v38 = vld [vmem:[#allocation2 + $0x48] sm:$0xff]
    %v39 = vld [vmem:[#allocation2 + $0x50] sm:$0xff]
    %v40 = vld [vmem:[#allocation2 + $0x58] sm:$0xff]
    %v41 = vld [vmem:[#allocation2 + $0x60] sm:$0xff]
    %v42 = vld [vmem:[#allocation2 + $0x68] sm:$0xff]
    %v43 = vld [vmem:[#allocation2 + $0x70] sm:$0xff]
    %v44 = vld [vmem:[#allocation2 + $0x78] sm:$0xff]
    %v45 = vld [vmem:[%s2] sm:$0xf]
    %v47 = vlaneseq
    %v48 = vshrl.u32 %v47, 7
    %v49 = vsub.s32 0, %v48
    %v50 = vrot.slane %v45, %v49
    %v51 = vlaneseq
    %v52 = vshrl.u32 %v51, 7
    %v53 = vsub.s32 1, %v52
    %v54 = vrot.slane %v45, %v53
    %v55 = vlaneseq
    %v56 = vshrl.u32 %v55, 7
    %v57 = vsub.s32 2, %v56
    %v58 = vrot.slane %v45, %v57
    %v59 = vlaneseq
    %v60 = vshrl.u32 %v59, 7
    %v61 = vsub.s32 3, %v60
    %v62 = vrot.slane %v45, %v61
    %vm67 = vcmask 261120
    %v69 = vsel %vm67, %v28, 0
    %71 = vmatprep.subr.mxu0 %v30
    %72 = vmatpush1.msra.mxu0 %v29
    %73 = vmatprep.subr.mxu0 %v34
    %74 = vmatpush1.msra.mxu0 %v33
    %75 = vmatprep.subr.mxu0 %v38
    %76 = vmatpush1.msra.mxu0 %v37
    %77 = vmatprep.subr.mxu0 %v42
    %78 = vmatpush1.msra.mxu0 %v41
    %79 = vmatprep.subr.mxu0 0.0
    %80 = vmatpush1.msra.mxu0 0.0
    %81 = vmatprep.subr.mxu0 0.0
    %82 = vmatpush1.msra.mxu0 0.0
    %83 = vmatprep.subr.mxu0 0.0
    %84 = vmatpush1.msra.mxu0 0.0
    %85 = vmatprep.subr.mxu0 0.0
    %86 = vmatpush1.msra.mxu0 0.0
    %87 = vmatprep.subr.mxu0 0.0
    %88 = vmatpush1.msra.mxu0 0.0
    %89 = vmatprep.subr.mxu0 0.0
    %90 = vmatpush1.msra.mxu0 0.0
    %91 = vmatprep.subr.mxu0 0.0
    %92 = vmatpush1.msra.mxu0 0.0
    %93 = vmatprep.subr.mxu0 0.0
    %94 = vmatpush1.msra.mxu0 0.0
    %95 = vmatprep.subr.mxu0 0.0
    %96 = vmatpush1.msra.mxu0 0.0
    %97 = vmatprep.subr.mxu0 0.0
    %98 = vmatpush1.msra.mxu0 0.0
    %99 = vmatprep.subr.mxu0 0.0
    %100 = vmatpush1.msra.mxu0 0.0
    %101 = vmatprep.subr.mxu0 0.0
    %102 = vmatpush1.msra.mxu0 0.0
    %103 = vmatprep.subr.mxu0 0.0
    %104 = vmatpush1.msra.mxu0 0.0
    %105 = vmatprep.subr.mxu0 0.0
    %106 = vmatpush1.msra.mxu0 0.0
    %107 = vmatprep.subr.mxu0 0.0
    %108 = vmatpush1.msra.mxu0 0.0
    %109 = vmatprep.subr.mxu0 0.0
    %110 = vmatpush1.msra.mxu0 0.0
    %111 = vmatprep.subr.mxu0 0.0
    %112 = vmatpush1.msra.mxu0 0.0
    %113 = vmatprep.subr.mxu0 0.0
    %114 = vmatpush1.msra.mxu0 0.0
    %115 = vmatprep.subr.mxu0 0.0
    %116 = vmatpush1.msra.mxu0 0.0
    %117 = vmatprep.subr.mxu0 0.0
    %118 = vmatpush1.msra.mxu0 0.0
    %119 = vmatprep.subr.mxu0 0.0
    %120 = vmatpush1.msra.mxu0 0.0
    %121 = vmatprep.subr.mxu0 0.0
    %122 = vmatpush1.msra.mxu0 0.0
    %123 = vmatprep.subr.mxu0 0.0
    %124 = vmatpush1.msra.mxu0 0.0
    %125 = vmatprep.subr.mxu0 0.0
    %126 = vmatpush1.msra.mxu0 0.0
    %127 = vmatprep.subr.mxu0 0.0
    %128 = vmatpush1.msra.mxu0 0.0
    %129 = vmatprep.subr.mxu0 0.0
    %130 = vmatpush1.msra.mxu0 0.0
    %131 = vmatprep.subr.mxu0 0.0
    %132 = vmatpush1.msra.mxu0 0.0
    %133 = vmatprep.subr.mxu0 0.0
    %134 = vmatpush1.msra.mxu0 0.0
    %135 = vmatprep.mubr.f32.mxu0 0.0
    %136 = vmatmul.mubr.f32.gmra.mrb[0].mxu0 %v69
    %v137 = vpop.f32.mrb[0].mxu0
    %v138 = vadd.f32 %v50, %v137
    %v139 = vpop.f32.mrb[0].mxu0
    %v140 = vadd.f32 %v54, %v139
    %141 = vdwg.mxu0
    %142 = vmatprep.subr.mxu0 %v32
    %143 = vmatpush1.msra.mxu0 %v31
    %144 = vmatprep.subr.mxu0 %v36
    %145 = vmatpush1.msra.mxu0 %v35
    %146 = vmatprep.subr.mxu0 %v40
    %147 = vmatpush1.msra.mxu0 %v39
    %148 = vmatprep.subr.mxu0 %v44
    %149 = vmatpush1.msra.mxu0 %v43
    %150 = vmatprep.subr.mxu0 0.0
    %151 = vmatpush1.msra.mxu0 0.0
    %152 = vmatprep.subr.mxu0 0.0
    %153 = vmatpush1.msra.mxu0 0.0
    %154 = vmatprep.subr.mxu0 0.0
    %155 = vmatpush1.msra.mxu0 0.0
    %156 = vmatprep.subr.mxu0 0.0
    %157 = vmatpush1.msra.mxu0 0.0
    %158 = vmatprep.subr.mxu0 0.0
    %159 = vmatpush1.msra.mxu0 0.0
    %160 = vmatprep.subr.mxu0 0.0
    %161 = vmatpush1.msra.mxu0 0.0
    %162 = vmatprep.subr.mxu0 0.0
    %163 = vmatpush1.msra.mxu0 0.0
    %164 = vmatprep.subr.mxu0 0.0
    %165 = vmatpush1.msra.mxu0 0.0
    %166 = vmatprep.subr.mxu0 0.0
    %167 = vmatpush1.msra.mxu0 0.0
    %168 = vmatprep.subr.mxu0 0.0
    %169 = vmatpush1.msra.mxu0 0.0
    %170 = vmatprep.subr.mxu0 0.0
    %171 = vmatpush1.msra.mxu0 0.0
    %172 = vmatprep.subr.mxu0 0.0
    %173 = vmatpush1.msra.mxu0 0.0
    %174 = vmatprep.subr.mxu0 0.0
    %175 = vmatpush1.msra.mxu0 0.0
    %176 = vmatprep.subr.mxu0 0.0
    %177 = vmatpush1.msra.mxu0 0.0
    %178 = vmatprep.subr.mxu0 0.0
    %179 = vmatpush1.msra.mxu0 0.0
    %180 = vmatprep.subr.mxu0 0.0
    %181 = vmatpush1.msra.mxu0 0.0
    %182 = vmatprep.subr.mxu0 0.0
    %183 = vmatpush1.msra.mxu0 0.0
    %184 = vmatprep.subr.mxu0 0.0
    %185 = vmatpush1.msra.mxu0 0.0
    %186 = vmatprep.subr.mxu0 0.0
    %187 = vmatpush1.msra.mxu0 0.0
    %188 = vmatprep.subr.mxu0 0.0
    %189 = vmatpush1.msra.mxu0 0.0
    %190 = vmatprep.subr.mxu0 0.0
    %191 = vmatpush1.msra.mxu0 0.0
    %192 = vmatprep.subr.mxu0 0.0
    %193 = vmatpush1.msra.mxu0 0.0
    %194 = vmatprep.subr.mxu0 0.0
    %195 = vmatpush1.msra.mxu0 0.0
    %196 = vmatprep.subr.mxu0 0.0
    %197 = vmatpush1.msra.mxu0 0.0
    %198 = vmatprep.subr.mxu0 0.0
    %199 = vmatpush1.msra.mxu0 0.0
    %200 = vmatprep.subr.mxu0 0.0
    %201 = vmatpush1.msra.mxu0 0.0
    %202 = vmatprep.subr.mxu0 0.0
    %203 = vmatpush1.msra.mxu0 0.0
    %204 = vmatprep.subr.mxu0 0.0
    %205 = vmatpush1.msra.mxu0 0.0
    %206 = vmatprep.mubr.f32.mxu0 0.0
    %207 = vmatmul.mubr.f32.gmra.mrb[0].mxu0 %v69
    %v208 = vpop.f32.mrb[0].mxu0
    %v209 = vadd.f32 %v58, %v208
    %v210 = vpop.f32.mrb[0].mxu0
    %v211 = vadd.f32 %v62, %v210
    %212 = vdwg.mxu0
    %v217 = vcombine.low %v138, %v140
    %v218 = vcombine.low %v209, %v211
    %v220 = vunpack.c.l.s4 1983009808
    %v221 = vunpack.c.0.s8 %v220
    %v222 = vlaneseq
    %v223 = vshrl.u32 %v222, 7
    %v224 = vsub.s32 %v221, %v223
    %v225 = vrot.slane %v217, %v224
    %v227 = vunpack.c.l.s4 1983009808
    %v228 = vunpack.c.0.s8 %v227
    %v229 = vlaneseq
    %v230 = vshrl.u32 %v229, 7
    %v231 = vsub.s32 %v228, %v230
    %v232 = vrot.slane %v218, %v231
    %v233 = vcombine.low %v225, %v232
    %235 = vst [vmem:[%s3] sm:$0xff] %v233
    // Predicated region
    $region18: #{_lambda_.6} parent=1 // pred_check
      _
    $region19: #{_lambda_.6} parent=1 // pred_check_branch
      %237 = sbr.rel (0) target = $region21
    $region20: #{_lambda_.6} parent=1 // pred_region
      _
    $region21: #{_lambda_.6} parent=1 // pred_fallthru
      _
    // Predicated region
    $region22: #{_lambda_.6} parent=1 // pred_check
      _
    $region23: #{_lambda_.6} parent=1 // pred_check_branch
      %239 = sbr.rel (0) target = $region25
    $region24: #{_lambda_.6} parent=1 // pred_region
      _
    $region25: #{_lambda_.6} parent=1 // pred_fallthru
      _
    %240 = vsyncpa [#allocation3], 1

// kernel: _lambda_.7
$region0: #{_lambda_.7}
  #allocation0 [shape = 'u32[]', space=smem, size = 0x4, offset = 0x4, fixed_abs, tag = 'smem constant byte address 0x4 - core index']
  #allocation1 [shape = 'u32[144,128]{1,0:T(1,128)}', space=vmem, size = 0x12000, scoped, tag = 'internal scratch']
  #allocation2 [shape = 'f32[10,10,32]{2,1,0:T(8,128)}', space=vmem, size = 0x14000, scoped, tag = 'scratch operand']
  %s0 = inlined_call_operand.vmem [shape: f32[2,4,4,32], index: 0, kind: input, shape index: {}]
  %s1 = inlined_call_operand.vmem [shape: f32[1,32], index: 1, kind: input, shape index: {}]
  %s2 = inlined_call_operand.vmem [shape: f32[1,32], index: 2, kind: input, shape index: {}]
  %s3 = inlined_call_operand.vmem [shape: f32[288,64], index: 3, kind: input, shape index: {}]
  %s4 = inlined_call_operand.vmem [shape: f32[1,64], index: 4, kind: input, shape index: {}]
  %s5 = inlined_call_operand.vmem [shape: f32[2,8,4,64], index: 5, kind: output, shape index: {0}]
  %s6 = inlined_call_operand.vmem [shape: f32[2,2,64], index: 6, kind: output, shape index: {1}]
  %7 = xla_tuple %s5, %s6
  %s8 = sld [smem:[#allocation0]]
  $region61: #{_lambda_.7} parent=0
    _
  %s10 = ssub.s32 1, %s8
  %s11 = scalar_select 0, %s10, %s8
  loop: start=0, step=1, limit=4
  $region2: #{_lambda_.7} parent=0 // loop_pre_header
    _
  $region3: #{_lambda_.7} parent=0 // loop_header
    %s13 = sphi 0, %s17
    %p14 = scmp.ge.s32.totalorder %s13, 4
    %s23 = sphi 0, %s25
    %s26 = sphi 0, %s23
    %s27 = sphi 0, %s26
    %s43 = sphi 0, %s27
    %s47 = sphi 0, %s47
    %s49 = sphi 0, %s47
    %s50 = sphi 0, %s49
    %s64 = sphi 0, %s50
    %s68 = sphi 0, %s68
    %s70 = sphi 0, %s68
    %s71 = sphi 0, %s70
    %s85 = sphi 0, %s71
    %s89 = sphi 0, %s89
    %s91 = sphi 0, %s89
    %s92 = sphi 0, %s91
    %s106 = sphi 0, %s92
    %s110 = sphi 0, %s110
    %s112 = sphi 0, %s110
    %s113 = sphi 0, %s112
    %s127 = sphi 0, %s113
    %s133 = sphi 0, %s135
    %s136 = sphi 0, %s133
    %s137 = sphi 0, %s136
    %s153 = sphi 0, %s137
    %s159 = sphi 0, %s161
    %s162 = sphi 0, %s159
    %s163 = sphi 0, %s162
    %s179 = sphi 0, %s163
  $region4: #{_lambda_.7} parent=0 // loop_header_branch
    %16 = sbr.rel (%p14) target = $region8
  $region5: #{_lambda_.7} parent=0 // loop_body
    %s18 = ssub.s32 %s13, 1
    %s19 = ssub.s32 %s13, 2
    %s20 = sadd.s32 %s13, 1
    %s21 = ssub.s32 %s13, %s20
    %p22 = scmp.eq.s32.totalorder %s21, 0
    %s24 = sadd.s32 %s23, 1
    %s25 = scalar_select %p22, %s23, %s24
    %p28 = pneg %p22
    %p29 = scmp.eq.s32.totalorder %s13, 1
    %p30 = por %p28, %p29
    %p31 = scmp.ne.s32.totalorder %s23, %s26
    %p32 = scmp.eq.s32.totalorder %s13, 0
    %p33 = por %p31, %p32
    %p34 = scmp.ne.s32.totalorder %s23, %s26
    %p35 = scmp.eq.s32.totalorder %s18, 1
    %p36 = por %p34, %p35
    %p37 = scmp.ne.s32.totalorder %s26, %s27
    %p38 = scmp.eq.s32.totalorder %s18, 0
    %p39 = por %p37, %p38
    %p40 = scmp.ne.s32.totalorder %s26, %s27
    %p41 = scmp.eq.s32.totalorder %s19, 1
    %p42 = por %p40, %p41
    %p44 = scmp.ne.s32.totalorder %s27, %s43
    %p45 = scmp.eq.s32.totalorder %s19, 0
    %p46 = por %p44, %p45
    %s48 = sadd.s32 %s47, 1
    %p51 = scmp.eq.s32.totalorder %s13, 1
    %p52 = scmp.ne.s32.totalorder %s47, %s49
    %p53 = scmp.eq.s32.totalorder %s13, 0
    %p54 = por %p52, %p53
    %p55 = scmp.ne.s32.totalorder %s47, %s49
    %p56 = scmp.eq.s32.totalorder %s18, 1
    %p57 = por %p55, %p56
    %p58 = scmp.ne.s32.totalorder %s49, %s50
    %p59 = scmp.eq.s32.totalorder %s18, 0
    %p60 = por %p58, %p59
    %p61 = scmp.ne.s32.totalorder %s49, %s50
    %p62 = scmp.eq.s32.totalorder %s19, 1
    %p63 = por %p61, %p62
    %p65 = scmp.ne.s32.totalorder %s50, %s64
    %p66 = scmp.eq.s32.totalorder %s19, 0
    %p67 = por %p65, %p66
    %s69 = sadd.s32 %s68, 1
    %p72 = scmp.eq.s32.totalorder %s13, 1
    %p73 = scmp.ne.s32.totalorder %s68, %s70
    %p74 = scmp.eq.s32.totalorder %s13, 0
    %p75 = por %p73, %p74
    %p76 = scmp.ne.s32.totalorder %s68, %s70
    %p77 = scmp.eq.s32.totalorder %s18, 1
    %p78 = por %p76, %p77
    %p79 = scmp.ne.s32.totalorder %s70, %s71
    %p80 = scmp.eq.s32.totalorder %s18, 0
    %p81 = por %p79, %p80
    %p82 = scmp.ne.s32.totalorder %s70, %s71
    %p83 = scmp.eq.s32.totalorder %s19, 1
    %p84 = por %p82, %p83
    %p86 = scmp.ne.s32.totalorder %s71, %s85
    %p87 = scmp.eq.s32.totalorder %s19, 0
    %p88 = por %p86, %p87
    %s90 = sadd.s32 %s89, 1
    %p93 = scmp.eq.s32.totalorder %s13, 1
    %p94 = scmp.ne.s32.totalorder %s89, %s91
    %p95 = scmp.eq.s32.totalorder %s13, 0
    %p96 = por %p94, %p95
    %p97 = scmp.ne.s32.totalorder %s89, %s91
    %p98 = scmp.eq.s32.totalorder %s18, 1
    %p99 = por %p97, %p98
    %p100 = scmp.ne.s32.totalorder %s91, %s92
    %p101 = scmp.eq.s32.totalorder %s18, 0
    %p102 = por %p100, %p101
    %p103 = scmp.ne.s32.totalorder %s91, %s92
    %p104 = scmp.eq.s32.totalorder %s19, 1
    %p105 = por %p103, %p104
    %p107 = scmp.ne.s32.totalorder %s92, %s106
    %p108 = scmp.eq.s32.totalorder %s19, 0
    %p109 = por %p107, %p108
    %s111 = sadd.s32 %s110, 1
    %p114 = scmp.eq.s32.totalorder %s13, 1
    %p115 = scmp.ne.s32.totalorder %s110, %s112
    %p116 = scmp.eq.s32.totalorder %s13, 0
    %p117 = por %p115, %p116
    %p118 = scmp.ne.s32.totalorder %s110, %s112
    %p119 = scmp.eq.s32.totalorder %s18, 1
    %p120 = por %p118, %p119
    %p121 = scmp.ne.s32.totalorder %s112, %s113
    %p122 = scmp.eq.s32.totalorder %s18, 0
    %p123 = por %p121, %p122
    %p124 = scmp.ne.s32.totalorder %s112, %s113
    %p125 = scmp.eq.s32.totalorder %s19, 1
    %p126 = por %p124, %p125
    %p128 = scmp.ne.s32.totalorder %s113, %s127
    %p129 = scmp.eq.s32.totalorder %s19, 0
    %p130 = por %p128, %p129
    %s131 = ssub.s32 %s13, %s20
    %p132 = scmp.eq.s32.totalorder %s131, 0
    %s134 = sadd.s32 %s133, 1
    %s135 = scalar_select %p132, %s133, %s134
    %p138 = pneg %p132
    %p139 = scmp.eq.s32.totalorder %s13, 1
    %p140 = por %p138, %p139
    %p141 = scmp.ne.s32.totalorder %s133, %s136
    %p142 = scmp.eq.s32.totalorder %s13, 0
    %p143 = por %p141, %p142
    %p144 = scmp.ne.s32.totalorder %s133, %s136
    %p145 = scmp.eq.s32.totalorder %s18, 1
    %p146 = por %p144, %p145
    %p147 = scmp.ne.s32.totalorder %s136, %s137
    %p148 = scmp.eq.s32.totalorder %s18, 0
    %p149 = por %p147, %p148
    %p150 = scmp.ne.s32.totalorder %s136, %s137
    %p151 = scmp.eq.s32.totalorder %s19, 1
    %p152 = por %p150, %p151
    %p154 = scmp.ne.s32.totalorder %s137, %s153
    %p155 = scmp.eq.s32.totalorder %s19, 0
    %p156 = por %p154, %p155
    %s157 = ssub.s32 %s13, %s20
    %p158 = scmp.eq.s32.totalorder %s157, 0
    %s160 = sadd.s32 %s159, 1
    %s161 = scalar_select %p158, %s159, %s160
    %p164 = pneg %p158
    %p165 = scmp.eq.s32.totalorder %s13, 1
    %p166 = por %p164, %p165
    %p167 = scmp.ne.s32.totalorder %s159, %s162
    %p168 = scmp.eq.s32.totalorder %s13, 0
    %p169 = por %p167, %p168
    %p170 = scmp.ne.s32.totalorder %s159, %s162
    %p171 = scmp.eq.s32.totalorder %s18, 1
    %p172 = por %p170, %p171
    %p173 = scmp.ne.s32.totalorder %s162, %s163
    %p174 = scmp.eq.s32.totalorder %s18, 0
    %p175 = por %p173, %p174
    %p176 = scmp.ne.s32.totalorder %s162, %s163
    %p177 = scmp.eq.s32.totalorder %s19, 1
    %p178 = por %p176, %p177
    %p180 = scmp.ne.s32.totalorder %s163, %s179
    %p181 = scmp.eq.s32.totalorder %s19, 0
    %p182 = por %p180, %p181
    %p183 = scmp.le.s32.totalorder 1, %s13
    %p184 = scmp.lt.s32.totalorder %s13, 3
    %p185 = pnand %p183, %p184
    %p186 = pneg %p185
    // Predicated region
    $region9: #{_lambda_.7} parent=5 // pred_check
      _
    $region10: #{_lambda_.7} parent=5 // pred_check_branch
      %188 = sbr.rel (%p185) target = $region12
    $region11: #{_lambda_.7} parent=5 // pred_region
      %s189 = ssub.s32 %s13, 1
      // Predicated region
      $region13: #{_lambda_.7} parent=11 // pred_check
        %p190 = pneg %p60
      $region14: #{_lambda_.7} parent=11 // pred_check_branch
        %192 = sbr.rel (%p190) target = $region16
      $region15: #{_lambda_.7} parent=11 // pred_region
        _
      $region16: #{_lambda_.7} parent=11 // pred_fallthru
        _
      // Predicated region
      $region17: #{_lambda_.7} parent=11 // pred_check
        %p193 = pneg %p81
      $region18: #{_lambda_.7} parent=11 // pred_check_branch
        %195 = sbr.rel (%p193) target = $region20
      $region19: #{_lambda_.7} parent=11 // pred_region
        _
      $region20: #{_lambda_.7} parent=11 // pred_fallthru
        _
      // Predicated region
      $region21: #{_lambda_.7} parent=11 // pred_check
        %p196 = pneg %p102
      $region22: #{_lambda_.7} parent=11 // pred_check_branch
        %198 = sbr.rel (%p196) target = $region24
      $region23: #{_lambda_.7} parent=11 // pred_region
        _
      $region24: #{_lambda_.7} parent=11 // pred_fallthru
        _
      // Predicated region
      $region25: #{_lambda_.7} parent=11 // pred_check
        %p199 = pneg %p123
      $region26: #{_lambda_.7} parent=11 // pred_check_branch
        %201 = sbr.rel (%p199) target = $region28
      $region27: #{_lambda_.7} parent=11 // pred_region
        _
      $region28: #{_lambda_.7} parent=11 // pred_fallthru
        _
    $region12: #{_lambda_.7} parent=5 // pred_fallthru
      _
    %p202 = scmp.lt.s32.totalorder %s13, 2
    // Predicated region
    $region29: #{_lambda_.7} parent=5 // pred_check
      %p203 = pneg %p202
    $region30: #{_lambda_.7} parent=5 // pred_check_branch
      %205 = sbr.rel (%p203) target = $region32
    $region31: #{_lambda_.7} parent=5 // pred_region
      // Predicated region
      $region33: #{_lambda_.7} parent=31 // pred_check
        %p206 = pneg %p33
      $region34: #{_lambda_.7} parent=31 // pred_check_branch
        %208 = sbr.rel (%p206) target = $region36
      $region35: #{_lambda_.7} parent=31 // pred_region
        %p209 = scmp.lt.s32.totalorder %s13, 1
        %s210 = scalar_select %p209, %s13, 1
        %s211 = smul.addr %s210, 4
        %s212 = smul.addr %s211, 4
        %s213 = scalar_lea.vmem %s0, %s212
      $region36: #{_lambda_.7} parent=31 // pred_fallthru
        _
    $region32: #{_lambda_.7} parent=5 // pred_fallthru
      _
    %p214 = scmp.le.s32.totalorder 1, %s13
    %p215 = scmp.lt.s32.totalorder %s13, 3
    %p216 = pnand %p214, %p215
    %p217 = pneg %p216
    // Predicated region
    $region37: #{_lambda_.7} parent=5 // pred_check
      _
    $region38: #{_lambda_.7} parent=5 // pred_check_branch
      %219 = sbr.rel (%p216) target = $region40
    $region39: #{_lambda_.7} parent=5 // pred_region
      %s220 = ssub.s32 %s13, 1
      %p221 = scmp.lt.s32.totalorder %s18, 1
      %s222 = scalar_select %p221, %s18, 1
      %s223 = smul.addr %s222, 4
      %s224 = smul.addr %s223, 4
      %s225 = scalar_lea.vmem %s0, %s224
      %p226 = pneg %p39
      %p227 = pneg %p36
      %p228 = pneg %p60
      %p229 = pneg %p57
      %p230 = pneg %p81
      %p231 = pneg %p78
      %p232 = pneg %p102
      %p233 = pneg %p99
      %p234 = pneg %p123
      %p235 = pneg %p120
      %p236 = pneg %p149
      %p237 = pneg %p146
      %p238 = scmp.lt.s32.totalorder %s18, 1
      %s239 = scalar_select %p238, %s18, 1
      %s240 = smul.addr %s239, 8
      %s241 = smul.addr %s240, 4
      %s242 = scalar_lea.vmem %s5, %s241
      %p243 = pneg %p175
      %p244 = pneg %p172
      %p245 = scmp.lt.s32.totalorder %s18, 1
      %s246 = scalar_select %p245, %s18, 1
      %s247 = smul.addr %s246, 2
      %s248 = scalar_lea.vmem %s6, %s247
      %p249 = scmp.lt.s32.totalorder %s18, 1
      %s250 = scalar_select %p249, %s18, 1
      %s251 = smul.addr %s250, 4
      %s252 = smul.addr %s251, 4
      %s253 = scalar_lea.vmem %s0, %s252
      %p254 = scmp.lt.s32.totalorder %s18, 1
      %s255 = scalar_select %p254, %s18, 1
      %s256 = smul.addr %s255, 8
      %s257 = smul.addr %s256, 4
      %s258 = scalar_lea.vmem %s5, %s257
      %p259 = scmp.lt.s32.totalorder %s18, 1
      %s260 = scalar_select %p259, %s18, 1
      %s261 = smul.addr %s260, 2
      %s262 = scalar_lea.vmem %s6, %s261
      %v263 = vld [vmem:[%s253] sm:$0xf]
      %v264 = vld [vmem:[%s253 + $0x4] sm:$0xf]
      %v265 = vld [vmem:[%s253 + $0x8] sm:$0xf]
      %v266 = vld [vmem:[%s253 + $0xc] sm:$0xf]
      %v267 = vld [vmem:[%s1] sm:$0x1]
      %v269 = vlaneseq
      %v270 = vshrl.u32 %v269, 7
      %v271 = vsub.s32 0, %v270
      %v272 = vrot.slane %v267, %v271
      %v274 = vmul.f32 %v263, %v272
      %v275 = vmul.f32 %v264, %v272
      %v276 = vmul.f32 %v265, %v272
      %v277 = vmul.f32 %v266, %v272
      %v278 = vld [vmem:[%s2] sm:$0x1]
      %v280 = vlaneseq
      %v281 = vshrl.u32 %v280, 7
      %v282 = vsub.s32 0, %v281
      %v283 = vrot.slane %v278, %v282
      %v285 = vadd.f32 %v274, %v283
      %v286 = vadd.f32 %v275, %v283
      %v287 = vadd.f32 %v276, %v283
      %v288 = vadd.f32 %v277, %v283
      %v289 = vmax.f32 %v285, 0.0
      %v290 = vmax.f32 %v286, 0.0
      %v291 = vmax.f32 %v287, 0.0
      %v292 = vmax.f32 %v288, 0.0
      %vm293 = vcmask 261120
      %294 = vst.msk [vmem:[#allocation2] sm:$0xff] %vm293, 0.0
      %vm295 = vcmask 254976
      %296 = vst.msk [vmem:[#allocation2 + $0x8] sm:$0x3] %vm295, 0.0
      %297 = vst.msk [vmem:[#allocation2 + $0x10] sm:$0xff] %vm293, 0.0
      %298 = vst.msk [vmem:[#allocation2 + $0x18] sm:$0x3] %vm295, 0.0
      %299 = vst.msk [vmem:[#allocation2 + $0x20] sm:$0xff] %vm293, 0.0
      %300 = vst.msk [vmem:[#allocation2 + $0x28] sm:$0x3] %vm295, 0.0
      %301 = vst.msk [vmem:[#allocation2 + $0x30] sm:$0xff] %vm293, 0.0
      %302 = vst.msk [vmem:[#allocation2 + $0x38] sm:$0x3] %vm295, 0.0
      %303 = vst.msk [vmem:[#allocation2 + $0x40] sm:$0xff] %vm293, 0.0
      %304 = vst.msk [vmem:[#allocation2 + $0x48] sm:$0x3] %vm295, 0.0
      %305 = vst.msk [vmem:[#allocation2 + $0x50] sm:$0xff] %vm293, 0.0
      %306 = vst.msk [vmem:[#allocation2 + $0x58] sm:$0x3] %vm295, 0.0
      %307 = vst.msk [vmem:[#allocation2 + $0x60] sm:$0xff] %vm293, 0.0
      %308 = vst.msk [vmem:[#allocation2 + $0x68] sm:$0x3] %vm295, 0.0
      %309 = vst.msk [vmem:[#allocation2 + $0x70] sm:$0xff] %vm293, 0.0
      %310 = vst.msk [vmem:[#allocation2 + $0x78] sm:$0x3] %vm295, 0.0
      %311 = vst.msk [vmem:[#allocation2 + $0x80] sm:$0xff] %vm293, 0.0
      %312 = vst.msk [vmem:[#allocation2 + $0x88] sm:$0x3] %vm295, 0.0
      %313 = vst.msk [vmem:[#allocation2 + $0x90] sm:$0xff] %vm293, 0.0
      %314 = vst.msk [vmem:[#allocation2 + $0x98] sm:$0x3] %vm295, 0.0
      %s315 = scalar_lea.vmem [#allocation2], 16
      %vm316 = vcmask 257024
      %317 = vst.msk [vmem:[%s315 + $0x1] sm:$0xf] %vm316, %v289
      %318 = vst.msk [vmem:[%s315 + $0x11] sm:$0xf] %vm316, %v289
      %319 = vst.msk [vmem:[%s315 + $0x21] sm:$0xf] %vm316, %v290
      %320 = vst.msk [vmem:[%s315 + $0x31] sm:$0xf] %vm316, %v290
      %321 = vst.msk [vmem:[%s315 + $0x41] sm:$0xf] %vm316, %v291
      %322 = vst.msk [vmem:[%s315 + $0x51] sm:$0xf] %vm316, %v291
      %323 = vst.msk [vmem:[%s315 + $0x61] sm:$0xf] %vm316, %v292
      %324 = vst.msk [vmem:[%s315 + $0x71] sm:$0xf] %vm316, %v292
      %v325 = vld [vmem:[#allocation2] sm:$0xff]
      %v326 = vld [vmem:[#allocation2 + $0x10] sm:$0xff]
      %v327 = vld [vmem:[#allocation2 + $0x20] sm:$0xff]
      %v328 = vld [vmem:[#allocation2 + $0x30] sm:$0xff]
      %v329 = vld [vmem:[#allocation2 + $0x40] sm:$0xff]
      %v330 = vld [vmem:[#allocation2 + $0x50] sm:$0xff]
      %v331 = vld [vmem:[#allocation2 + $0x60] sm:$0xff]
      %v332 = vld [vmem:[#allocation2 + $0x70] sm:$0xff]
      %v333 = vld [vmem:[#allocation2 + $0x1] sm:$0xff]
      %v334 = vld [vmem:[#allocation2 + $0x11] sm:$0xff]
      %v335 = vld [vmem:[#allocation2 + $0x21] sm:$0xff]
      %v336 = vld [vmem:[#allocation2 + $0x31] sm:$0xff]
      %v337 = vld [vmem:[#allocation2 + $0x41] sm:$0xff]
      %v338 = vld [vmem:[#allocation2 + $0x51] sm:$0xff]
      %v339 = vld [vmem:[#allocation2 + $0x61] sm:$0xff]
      %v340 = vld [vmem:[#allocation2 + $0x71] sm:$0xff]
      %v341 = vld [vmem:[#allocation2 + $0x2] sm:$0xff]
      %v342 = vld [vmem:[#allocation2 + $0x12] sm:$0xff]
      %v343 = vld [vmem:[#allocation2 + $0x22] sm:$0xff]
      %v344 = vld [vmem:[#allocation2 + $0x32] sm:$0xff]
      %v345 = vld [vmem:[#allocation2 + $0x42] sm:$0xff]
      %v346 = vld [vmem:[#allocation2 + $0x52] sm:$0xff]
      %v347 = vld [vmem:[#allocation2 + $0x62] sm:$0xff]
      %v348 = vld [vmem:[#allocation2 + $0x72] sm:$0xff]
      %v349 = vld [vmem:[%s315] sm:$0xff]
      %v350 = vld [vmem:[%s315 + $0x10] sm:$0xff]
      %v351 = vld [vmem:[%s315 + $0x20] sm:$0xff]
      %v352 = vld [vmem:[%s315 + $0x30] sm:$0xff]
      %v353 = vld [vmem:[%s315 + $0x40] sm:$0xff]
      %v354 = vld [vmem:[%s315 + $0x50] sm:$0xff]
      %v355 = vld [vmem:[%s315 + $0x60] sm:$0xff]
      %v356 = vld [vmem:[%s315 + $0x70] sm:$0xff]
      %v357 = vld [vmem:[%s315 + $0x1] sm:$0xff]
      %v358 = vld [vmem:[%s315 + $0x11] sm:$0xff]
      %v359 = vld [vmem:[%s315 + $0x21] sm:$0xff]
      %v360 = vld [vmem:[%s315 + $0x31] sm:$0xff]
      %v361 = vld [vmem:[%s315 + $0x41] sm:$0xff]
      %v362 = vld [vmem:[%s315 + $0x51] sm:$0xff]
      %v363 = vld [vmem:[%s315 + $0x61] sm:$0xff]
      %v364 = vld [vmem:[%s315 + $0x71] sm:$0xff]
      %v365 = vld [vmem:[%s315 + $0x2] sm:$0xff]
      %v366 = vld [vmem:[%s315 + $0x12] sm:$0xff]
      %v367 = vld [vmem:[%s315 + $0x22] sm:$0xff]
      %v368 = vld [vmem:[%s315 + $0x32] sm:$0xff]
      %v369 = vld [vmem:[%s315 + $0x42] sm:$0xff]
      %v370 = vld [vmem:[%s315 + $0x52] sm:$0xff]
      %v371 = vld [vmem:[%s315 + $0x62] sm:$0xff]
      %v372 = vld [vmem:[%s315 + $0x72] sm:$0xff]
      %s373 = scalar_lea.vmem [#allocation2], 32
      %v374 = vld [vmem:[%s373] sm:$0xff]
      %v375 = vld [vmem:[%s373 + $0x10] sm:$0xff]
      %v376 = vld [vmem:[%s373 + $0x20] sm:$0xff]
      %v377 = vld [vmem:[%s373 + $0x30] sm:$0xff]
      %v378 = vld [vmem:[%s373 + $0x40] sm:$0xff]
      %v379 = vld [vmem:[%s373 + $0x50] sm:$0xff]
      %v380 = vld [vmem:[%s373 + $0x60] sm:$0xff]
      %v381 = vld [vmem:[%s373 + $0x70] sm:$0xff]
      %v382 = vld [vmem:[%s373 + $0x1] sm:$0xff]
      %v383 = vld [vmem:[%s373 + $0x11] sm:$0xff]
      %v384 = vld [vmem:[%s373 + $0x21] sm:$0xff]
      %v385 = vld [vmem:[%s373 + $0x31] sm:$0xff]
      %v386 = vld [vmem:[%s373 + $0x41] sm:$0xff]
      %v387 = vld [vmem:[%s373 + $0x51] sm:$0xff]
      %v388 = vld [vmem:[%s373 + $0x61] sm:$0xff]
      %v389 = vld [vmem:[%s373 + $0x71] sm:$0xff]
      %v390 = vld [vmem:[%s373 + $0x2] sm:$0xff]
      %v391 = vld [vmem:[%s373 + $0x12] sm:$0xff]
      %v392 = vld [vmem:[%s373 + $0x22] sm:$0xff]
      %v393 = vld [vmem:[%s373 + $0x32] sm:$0xff]
      %v394 = vld [vmem:[%s373 + $0x42] sm:$0xff]
      %v395 = vld [vmem:[%s373 + $0x52] sm:$0xff]
      %v396 = vld [vmem:[%s373 + $0x62] sm:$0xff]
      %v397 = vld [vmem:[%s373 + $0x72] sm:$0xff]
      %406 = vrot.lane.b32.xlu0 %v333, 32
      %v407 = vpop.permute.xlu0 %406
      %408 = vrot.lane.b32.xlu0 %v334, 32
      %v409 = vpop.permute.xlu0 %408
      %410 = vrot.lane.b32.xlu0 %v335, 32
      %v411 = vpop.permute.xlu0 %410
      %412 = vrot.lane.b32.xlu0 %v336, 32
      %v413 = vpop.permute.xlu0 %412
      %414 = vrot.lane.b32.xlu0 %v337, 32
      %v415 = vpop.permute.xlu0 %414
      %416 = vrot.lane.b32.xlu0 %v338, 32
      %v417 = vpop.permute.xlu0 %416
      %418 = vrot.lane.b32.xlu0 %v339, 32
      %v419 = vpop.permute.xlu0 %418
      %420 = vrot.lane.b32.xlu0 %v340, 32
      %v421 = vpop.permute.xlu0 %420
      %438 = vrot.lane.b32.xlu0 %v341, 64
      %v439 = vpop.permute.xlu0 %438
      %440 = vrot.lane.b32.xlu0 %v342, 64
      %v441 = vpop.permute.xlu0 %440
      %442 = vrot.lane.b32.xlu0 %v343, 64
      %v443 = vpop.permute.xlu0 %442
      %444 = vrot.lane.b32.xlu0 %v344, 64
      %v445 = vpop.permute.xlu0 %444
      %446 = vrot.lane.b32.xlu0 %v345, 64
      %v447 = vpop.permute.xlu0 %446
      %448 = vrot.lane.b32.xlu0 %v346, 64
      %v449 = vpop.permute.xlu0 %448
      %450 = vrot.lane.b32.xlu0 %v347, 64
      %v451 = vpop.permute.xlu0 %450
      %452 = vrot.lane.b32.xlu0 %v348, 64
      %v453 = vpop.permute.xlu0 %452
      %470 = vrot.lane.b32.xlu0 %v349, 96
      %v471 = vpop.permute.xlu0 %470
      %472 = vrot.lane.b32.xlu0 %v350, 96
      %v473 = vpop.permute.xlu0 %472
      %474 = vrot.lane.b32.xlu0 %v351, 96
      %v475 = vpop.permute.xlu0 %474
      %476 = vrot.lane.b32.xlu0 %v352, 96
      %v477 = vpop.permute.xlu0 %476
      %478 = vrot.lane.b32.xlu0 %v353, 96
      %v479 = vpop.permute.xlu0 %478
      %480 = vrot.lane.b32.xlu0 %v354, 96
      %v481 = vpop.permute.xlu0 %480
      %482 = vrot.lane.b32.xlu0 %v355, 96
      %v483 = vpop.permute.xlu0 %482
      %484 = vrot.lane.b32.xlu0 %v356, 96
      %v485 = vpop.permute.xlu0 %484
      %502 = vrot.lane.b32.xlu0 %v365, 32
      %v503 = vpop.permute.xlu0 %502
      %504 = vrot.lane.b32.xlu0 %v366, 32
      %v505 = vpop.permute.xlu0 %504
      %506 = vrot.lane.b32.xlu0 %v367, 32
      %v507 = vpop.permute.xlu0 %506
      %508 = vrot.lane.b32.xlu0 %v368, 32
      %v509 = vpop.permute.xlu0 %508
      %510 = vrot.lane.b32.xlu0 %v369, 32
      %v511 = vpop.permute.xlu0 %510
      %512 = vrot.lane.b32.xlu0 %v370, 32
      %v513 = vpop.permute.xlu0 %512
      %514 = vrot.lane.b32.xlu0 %v371, 32
      %v515 = vpop.permute.xlu0 %514
      %516 = vrot.lane.b32.xlu0 %v372, 32
      %v517 = vpop.permute.xlu0 %516
      %534 = vrot.lane.b32.xlu0 %v374, 64
      %v535 = vpop.permute.xlu0 %534
      %536 = vrot.lane.b32.xlu0 %v375, 64
      %v537 = vpop.permute.xlu0 %536
      %538 = vrot.lane.b32.xlu0 %v376, 64
      %v539 = vpop.permute.xlu0 %538
      %540 = vrot.lane.b32.xlu0 %v377, 64
      %v541 = vpop.permute.xlu0 %540
      %542 = vrot.lane.b32.xlu0 %v378, 64
      %v543 = vpop.permute.xlu0 %542
      %544 = vrot.lane.b32.xlu0 %v379, 64
      %v545 = vpop.permute.xlu0 %544
      %546 = vrot.lane.b32.xlu0 %v380, 64
      %v547 = vpop.permute.xlu0 %546
      %548 = vrot.lane.b32.xlu0 %v381, 64
      %v549 = vpop.permute.xlu0 %548
      %566 = vrot.lane.b32.xlu0 %v382, 96
      %v567 = vpop.permute.xlu0 %566
      %568 = vrot.lane.b32.xlu0 %v383, 96
      %v569 = vpop.permute.xlu0 %568
      %570 = vrot.lane.b32.xlu0 %v384, 96
      %v571 = vpop.permute.xlu0 %570
      %572 = vrot.lane.b32.xlu0 %v385, 96
      %v573 = vpop.permute.xlu0 %572
      %574 = vrot.lane.b32.xlu0 %v386, 96
      %v575 = vpop.permute.xlu0 %574
      %576 = vrot.lane.b32.xlu0 %v387, 96
      %v577 = vpop.permute.xlu0 %576
      %578 = vrot.lane.b32.xlu0 %v388, 96
      %v579 = vpop.permute.xlu0 %578
      %580 = vrot.lane.b32.xlu0 %v389, 96
      %v581 = vpop.permute.xlu0 %580
      %v590 = vsel %vm293, %v325, %v407
      %v591 = vsel %vm293, %v326, %v409
      %v592 = vsel %vm293, %v327, %v411
      %v593 = vsel %vm293, %v328, %v413
      %v594 = vsel %vm293, %v329, %v415
      %v595 = vsel %vm293, %v330, %v417
      %v596 = vsel %vm293, %v331, %v419
      %v597 = vsel %vm293, %v332, %v421
      %vm598 = vcmask 523264
      %v599 = vsel %vm598, %v590, %v439
      %v600 = vsel %vm598, %v591, %v441
      %v601 = vsel %vm598, %v592, %v443
      %v602 = vsel %vm598, %v593, %v445
      %v603 = vsel %vm598, %v594, %v447
      %v604 = vsel %vm598, %v595, %v449
      %v605 = vsel %vm598, %v596, %v451
      %v606 = vsel %vm598, %v597, %v453
      %vm607 = vcmask 785408
      %v608 = vsel %vm607, %v599, %v471
      %v609 = vsel %vm607, %v600, %v473
      %v610 = vsel %vm607, %v601, %v475
      %v611 = vsel %vm607, %v602, %v477
      %v612 = vsel %vm607, %v603, %v479
      %v613 = vsel %vm607, %v604, %v481
      %v614 = vsel %vm607, %v605, %v483
      %v615 = vsel %vm607, %v606, %v485
      %v616 = vsel %vm293, %v357, %v503
      %v617 = vsel %vm293, %v358, %v505
      %v618 = vsel %vm293, %v359, %v507
      %v619 = vsel %vm293, %v360, %v509
      %v620 = vsel %vm293, %v361, %v511
      %v621 = vsel %vm293, %v362, %v513
      %v622 = vsel %vm293, %v363, %v515
      %v623 = vsel %vm293, %v364, %v517
      %v624 = vsel %vm598, %v616, %v535
      %v625 = vsel %vm598, %v617, %v537
      %v626 = vsel %vm598, %v618, %v539
      %v627 = vsel %vm598, %v619, %v541
      %v628 = vsel %vm598, %v620, %v543
      %v629 = vsel %vm598, %v621, %v545
      %v630 = vsel %vm598, %v622, %v547
      %v631 = vsel %vm598, %v623, %v549
      %v632 = vsel %vm607, %v624, %v567
      %v633 = vsel %vm607, %v625, %v569
      %v634 = vsel %vm607, %v626, %v571
      %v635 = vsel %vm607, %v627, %v573
      %v636 = vsel %vm607, %v628, %v575
      %v637 = vsel %vm607, %v629, %v577
      %v638 = vsel %vm607, %v630, %v579
      %v639 = vsel %vm607, %v631, %v581
      %v640 = vld [vmem:[%s3] sm:$0xff]
      %v641 = vld [vmem:[%s3 + $0x8] sm:$0xff]
      %v642 = vld [vmem:[%s3 + $0x10] sm:$0xff]
      %v643 = vld [vmem:[%s3 + $0x18] sm:$0xff]
      %v644 = vld [vmem:[%s3 + $0x20] sm:$0xff]
      %v645 = vld [vmem:[%s3 + $0x28] sm:$0xff]
      %v646 = vld [vmem:[%s3 + $0x30] sm:$0xff]
      %v647 = vld [vmem:[%s3 + $0x38] sm:$0xff]
      %v648 = vld [vmem:[%s3 + $0x40] sm:$0xff]
      %v649 = vld [vmem:[%s3 + $0x48] sm:$0xff]
      %v650 = vld [vmem:[%s3 + $0x50] sm:$0xff]
      %v651 = vld [vmem:[%s3 + $0x58] sm:$0xff]
      %v652 = vld [vmem:[%s3 + $0x60] sm:$0xff]
      %v653 = vld [vmem:[%s3 + $0x68] sm:$0xff]
      %v654 = vld [vmem:[%s3 + $0x70] sm:$0xff]
      %v655 = vld [vmem:[%s3 + $0x78] sm:$0xff]
      %v656 = vld [vmem:[%s3 + $0x80] sm:$0xff]
      %v657 = vld [vmem:[%s3 + $0x88] sm:$0xff]
      %v658 = vld [vmem:[%s3 + $0x90] sm:$0xff]
      %v659 = vld [vmem:[%s3 + $0x98] sm:$0xff]
      %v660 = vld [vmem:[%s3 + $0xa0] sm:$0xff]
      %v661 = vld [vmem:[%s3 + $0xa8] sm:$0xff]
      %v662 = vld [vmem:[%s3 + $0xb0] sm:$0xff]
      %v663 = vld [vmem:[%s3 + $0xb8] sm:$0xff]
      %v664 = vld [vmem:[%s3 + $0xc0] sm:$0xff]
      %v665 = vld [vmem:[%s3 + $0xc8] sm:$0xff]
      %v666 = vld [vmem:[%s3 + $0xd0] sm:$0xff]
      %v667 = vld [vmem:[%s3 + $0xd8] sm:$0xff]
      %v668 = vld [vmem:[%s3 + $0xe0] sm:$0xff]
      %v669 = vld [vmem:[%s3 + $0xe8] sm:$0xff]
      %v670 = vld [vmem:[%s3 + $0xf0] sm:$0xff]
      %v671 = vld [vmem:[%s3 + $0xf8] sm:$0xff]
      %v672 = vld [vmem:[%s3 + $0x100] sm:$0xff]
      %v673 = vld [vmem:[%s3 + $0x108] sm:$0xff]
      %v674 = vld [vmem:[%s3 + $0x110] sm:$0xff]
      %v675 = vld [vmem:[%s3 + $0x118] sm:$0xff]
      %v677 = vsel %vm293, %v390, 0
      %v680 = vsel %vm293, %v391, 0
      %v683 = vsel %vm293, %v392, 0
      %v686 = vsel %vm293, %v393, 0
      %v689 = vsel %vm293, %v394, 0
      %v692 = vsel %vm293, %v395, 0
      %v695 = vsel %vm293, %v396, 0
      %v698 = vsel %vm293, %v397, 0
      %700 = vmatprep.subr.mxu0 0.0
      %701 = vmatpush1.msra.mxu0 %v640
      %702 = vmatprep.subr.mxu0 0.0
      %703 = vmatpush1.msra.mxu0 %v641
      %704 = vmatprep.subr.mxu0 0.0
      %705 = vmatpush1.msra.mxu0 %v642
      %706 = vmatprep.subr.mxu0 0.0
      %707 = vmatpush1.msra.mxu0 %v643
      %708 = vmatprep.subr.mxu0 0.0
      %709 = vmatpush1.msra.mxu0 %v644
      %710 = vmatprep.subr.mxu0 0.0
      %711 = vmatpush1.msra.mxu0 %v645
      %712 = vmatprep.subr.mxu0 0.0
      %713 = vmatpush1.msra.mxu0 %v646
      %714 = vmatprep.subr.mxu0 0.0
      %715 = vmatpush1.msra.mxu0 %v647
      %716 = vmatprep.subr.mxu0 0.0
      %717 = vmatpush1.msra.mxu0 %v648
      %718 = vmatprep.subr.mxu0 0.0
      %719 = vmatpush1.msra.mxu0 %v649
      %720 = vmatprep.subr.mxu0 0.0
      %721 = vmatpush1.msra.mxu0 %v650
      %722 = vmatprep.subr.mxu0 0.0
      %723 = vmatpush1.msra.mxu0 %v651
      %724 = vmatprep.subr.mxu0 0.0
      %725 = vmatpush1.msra.mxu0 %v652
      %726 = vmatprep.subr.mxu0 0.0
      %727 = vmatpush1.msra.mxu0 %v653
      %728 = vmatprep.subr.mxu0 0.0
      %729 = vmatpush1.msra.mxu0 %v654
      %730 = vmatprep.subr.mxu0 0.0
      %731 = vmatpush1.msra.mxu0 %v655
      %732 = vmatprep.subr.mxu0 0.0
      %733 = vmatpush1.msra.mxu0 %v656
      %734 = vmatprep.subr.mxu0 0.0
      %735 = vmatpush1.msra.mxu0 %v657
      %736 = vmatprep.subr.mxu0 0.0
      %737 = vmatpush1.msra.mxu0 %v658
      %738 = vmatprep.subr.mxu0 0.0
      %739 = vmatpush1.msra.mxu0 %v659
      %740 = vmatprep.subr.mxu0 0.0
      %741 = vmatpush1.msra.mxu0 %v660
      %742 = vmatprep.subr.mxu0 0.0
      %743 = vmatpush1.msra.mxu0 %v661
      %744 = vmatprep.subr.mxu0 0.0
      %745 = vmatpush1.msra.mxu0 %v662
      %746 = vmatprep.subr.mxu0 0.0
      %747 = vmatpush1.msra.mxu0 %v663
      %748 = vmatprep.subr.mxu0 0.0
      %749 = vmatpush1.msra.mxu0 %v664
      %750 = vmatprep.subr.mxu0 0.0
      %751 = vmatpush1.msra.mxu0 %v665
      %752 = vmatprep.subr.mxu0 0.0
      %753 = vmatpush1.msra.mxu0 %v666
      %754 = vmatprep.subr.mxu0 0.0
      %755 = vmatpush1.msra.mxu0 %v667
      %756 = vmatprep.subr.mxu0 0.0
      %757 = vmatpush1.msra.mxu0 %v668
      %758 = vmatprep.subr.mxu0 0.0
      %759 = vmatpush1.msra.mxu0 %v669
      %760 = vmatprep.subr.mxu0 0.0
      %761 = vmatpush1.msra.mxu0 %v670
      %762 = vmatprep.subr.mxu0 0.0
      %763 = vmatpush1.msra.mxu0 %v671
      %764 = vmatprep.mubr.f32.mxu0 %v632
      %765 = vmatmul.mubr.f32.gmra.mrb[0].mxu0 %v608
      %v766 = vpop.f32.mrb[0].mxu0
      %v767 = vadd.f32 0.0, %v766
      %v768 = vpop.f32.mrb[0].mxu0
      %769 = vmatprep.mubr.f32.mxu0 %v633
      %770 = vmatmul.mubr.f32.gmra.mrb[0].mxu0 %v609
      %v771 = vpop.f32.mrb[0].mxu0
      %v772 = vadd.f32 0.0, %v771
      %v773 = vpop.f32.mrb[0].mxu0
      %774 = vmatprep.mubr.f32.mxu0 %v634
      %775 = vmatmul.mubr.f32.gmra.mrb[0].mxu0 %v610
      %v776 = vpop.f32.mrb[0].mxu0
      %v777 = vadd.f32 0.0, %v776
      %v778 = vpop.f32.mrb[0].mxu0
      %779 = vmatprep.mubr.f32.mxu0 %v635
      %780 = vmatmul.mubr.f32.gmra.mrb[0].mxu0 %v611
      %v781 = vpop.f32.mrb[0].mxu0
      %v782 = vadd.f32 0.0, %v781
      %v783 = vpop.f32.mrb[0].mxu0
      %784 = vmatprep.mubr.f32.mxu0 %v636
      %785 = vmatmul.mubr.f32.gmra.mrb[0].mxu0 %v612
      %v786 = vpop.f32.mrb[0].mxu0
      %v787 = vadd.f32 0.0, %v786
      %v788 = vpop.f32.mrb[0].mxu0
      %789 = vmatprep.mubr.f32.mxu0 %v637
      %790 = vmatmul.mubr.f32.gmra.mrb[0].mxu0 %v613
      %v791 = vpop.f32.mrb[0].mxu0
      %v792 = vadd.f32 0.0, %v791
      %v793 = vpop.f32.mrb[0].mxu0
      %794 = vmatprep.mubr.f32.mxu0 %v638
      %795 = vmatmul.mubr.f32.gmra.mrb[0].mxu0 %v614
      %v796 = vpop.f32.mrb[0].mxu0
      %v797 = vadd.f32 0.0, %v796
      %v798 = vpop.f32.mrb[0].mxu0
      %799 = vmatprep.mubr.f32.mxu0 %v639
      %800 = vmatmul.mubr.f32.gmra.mrb[0].mxu0 %v615
      %v801 = vpop.f32.mrb[0].mxu0
      %v802 = vadd.f32 0.0, %v801
      %v803 = vpop.f32.mrb[0].mxu0
      %804 = vdwg.mxu0
      %805 = vmatprep.subr.mxu0 0.0
      %806 = vmatpush1.msra.mxu0 %v672
      %807 = vmatprep.subr.mxu0 0.0
      %808 = vmatpush1.msra.mxu0 %v673
      %809 = vmatprep.subr.mxu0 0.0
      %810 = vmatpush1.msra.mxu0 %v674
      %811 = vmatprep.subr.mxu0 0.0
      %812 = vmatpush1.msra.mxu0 %v675
      %813 = vmatprep.subr.mxu0 0.0
      %814 = vmatpush1.msra.mxu0 0.0
      %815 = vmatprep.subr.mxu0 0.0
      %816 = vmatpush1.msra.mxu0 0.0
      %817 = vmatprep.subr.mxu0 0.0
      %818 = vmatpush1.msra.mxu0 0.0
      %819 = vmatprep.subr.mxu0 0.0
      %820 = vmatpush1.msra.mxu0 0.0
      %821 = vmatprep.subr.mxu0 0.0
      %822 = vmatpush1.msra.mxu0 0.0
      %823 = vmatprep.subr.mxu0 0.0
      %824 = vmatpush1.msra.mxu0 0.0
      %825 = vmatprep.subr.mxu0 0.0
      %826 = vmatpush1.msra.mxu0 0.0
      %827 = vmatprep.subr.mxu0 0.0
      %828 = vmatpush1.msra.mxu0 0.0
      %829 = vmatprep.subr.mxu0 0.0
      %830 = vmatpush1.msra.mxu0 0.0
      %831 = vmatprep.subr.mxu0 0.0
      %832 = vmatpush1.msra.mxu0 0.0
      %833 = vmatprep.subr.mxu0 0.0
      %834 = vmatpush1.msra.mxu0 0.0
      %835 = vmatprep.subr.mxu0 0.0
      %836 = vmatpush1.msra.mxu0 0.0
      %837 = vmatprep.subr.mxu0 0.0
      %838 = vmatpush1.msra.mxu0 0.0
      %839 = vmatprep.subr.mxu0 0.0
      %840 = vmatpush1.msra.mxu0 0.0
      %841 = vmatprep.subr.mxu0 0.0
      %842 = vmatpush1.msra.mxu0 0.0
      %843 = vmatprep.subr.mxu0 0.0
      %844 = vmatpush1.msra.mxu0 0.0
      %845 = vmatprep.subr.mxu0 0.0
      %846 = vmatpush1.msra.mxu0 0.0
      %847 = vmatprep.subr.mxu0 0.0
      %848 = vmatpush1.msra.mxu0 0.0
      %849 = vmatprep.subr.mxu0 0.0
      %850 = vmatpush1.msra.mxu0 0.0
      %851 = vmatprep.subr.mxu0 0.0
      %852 = vmatpush1.msra.mxu0 0.0
      %853 = vmatprep.subr.mxu0 0.0
      %854 = vmatpush1.msra.mxu0 0.0
      %855 = vmatprep.subr.mxu0 0.0
      %856 = vmatpush1.msra.mxu0 0.0
      %857 = vmatprep.subr.mxu0 0.0
      %858 = vmatpush1.msra.mxu0 0.0
      %859 = vmatprep.subr.mxu0 0.0
      %860 = vmatpush1.msra.mxu0 0.0
      %861 = vmatprep.subr.mxu0 0.0
      %862 = vmatpush1.msra.mxu0 0.0
      %863 = vmatprep.subr.mxu0 0.0
      %864 = vmatpush1.msra.mxu0 0.0
      %865 = vmatprep.subr.mxu0 0.0
      %866 = vmatpush1.msra.mxu0 0.0
      %867 = vmatprep.subr.mxu0 0.0
      %868 = vmatpush1.msra.mxu0 0.0
      %869 = vmatprep.mubr.f32.mxu0 0.0
      %870 = vmatmul.mubr.f32.gmra.mrb[0].mxu0 %v677
      %v871 = vpop.f32.mrb[0].mxu0
      %v872 = vadd.f32 %v767, %v871
      %v873 = vpop.f32.mrb[0].mxu0
      %874 = vmatprep.mubr.f32.mxu0 0.0
      %875 = vmatmul.mubr.f32.gmra.mrb[0].mxu0 %v680
      %v876 = vpop.f32.mrb[0].mxu0
      %v877 = vadd.f32 %v772, %v876
      %v878 = vpop.f32.mrb[0].mxu0
      %879 = vmatprep.mubr.f32.mxu0 0.0
      %880 = vmatmul.mubr.f32.gmra.mrb[0].mxu0 %v683
      %v881 = vpop.f32.mrb[0].mxu0
      %v882 = vadd.f32 %v777, %v881
      %v883 = vpop.f32.mrb[0].mxu0
      %884 = vmatprep.mubr.f32.mxu0 0.0
      %885 = vmatmul.mubr.f32.gmra.mrb[0].mxu0 %v686
      %v886 = vpop.f32.mrb[0].mxu0
      %v887 = vadd.f32 %v782, %v886
      %v888 = vpop.f32.mrb[0].mxu0
      %889 = vmatprep.mubr.f32.mxu0 0.0
      %890 = vmatmul.mubr.f32.gmra.mrb[0].mxu0 %v689
      %v891 = vpop.f32.mrb[0].mxu0
      %v892 = vadd.f32 %v787, %v891
      %v893 = vpop.f32.mrb[0].mxu0
      %894 = vmatprep.mubr.f32.mxu0 0.0
      %895 = vmatmul.mubr.f32.gmra.mrb[0].mxu0 %v692
      %v896 = vpop.f32.mrb[0].mxu0
      %v897 = vadd.f32 %v792, %v896
      %v898 = vpop.f32.mrb[0].mxu0
      %899 = vmatprep.mubr.f32.mxu0 0.0
      %900 = vmatmul.mubr.f32.gmra.mrb[0].mxu0 %v695
      %v901 = vpop.f32.mrb[0].mxu0
      %v902 = vadd.f32 %v797, %v901
      %v903 = vpop.f32.mrb[0].mxu0
      %904 = vmatprep.mubr.f32.mxu0 0.0
      %905 = vmatmul.mubr.f32.gmra.mrb[0].mxu0 %v698
      %v906 = vpop.f32.mrb[0].mxu0
      %v907 = vadd.f32 %v802, %v906
      %v908 = vpop.f32.mrb[0].mxu0
      %909 = vdwg.mxu0
      %v910 = vld [vmem:[%s4] sm:$0x1]
      %v912 = vlaneseq
      %v913 = vshrl.u32 %v912, 7
      %v914 = vsub.s32 0, %v913
      %v915 = vrot.slane %v910, %v914
      %v917 = vadd.f32 %v872, %v915
      %v918 = vadd.f32 %v877, %v915
      %v919 = vadd.f32 %v882, %v915
      %v920 = vadd.f32 %v887, %v915
      %v921 = vadd.f32 %v892, %v915
      %v922 = vadd.f32 %v897, %v915
      %v923 = vadd.f32 %v902, %v915
      %v924 = vadd.f32 %v907, %v915
      %vm925 = vcmask 519168
      %v926 = vsel %vm925, %v917, 0.0
      %v927 = vsel %vm925, %v918, 0.0
      %v928 = vadd.f32 %v926, %v927
      %v929 = vsel %vm925, %v919, 0.0
      %v930 = vadd.f32 %v928, %v929
      %v931 = vsel %vm925, %v920, 0.0
      %v932 = vadd.f32 %v930, %v931
      %v933 = vsel %vm925, %v921, 0.0
      %v934 = vadd.f32 %v932, %v933
      %v935 = vsel %vm925, %v922, 0.0
      %v936 = vadd.f32 %v934, %v935
      %v937 = vsel %vm925, %v923, 0.0
      %v938 = vadd.f32 %v936, %v937
      %v939 = vsel %vm925, %v924, 0.0
      %v940 = vadd.f32 %v938, %v939
      %v941 = vrot.slane %v940, 4
      %v942 = vadd.f32 %v940, %v941
      %v943 = vrot.slane %v942, 2
      %v944 = vadd.f32 %v942, %v943
      %v945 = vrot.slane %v944, 1
      %v946 = vadd.f32 %v944, %v945
      %vm947 = vcmask 516096
      %948 = vst.msk [vmem:[%s262] sm:$0x1] %vm947, %v946
      %v949 = vmul.f32 %v917, %v917
      %v950 = vmul.f32 %v918, %v918
      %v951 = vmul.f32 %v919, %v919
      %v952 = vmul.f32 %v920, %v920
      %v953 = vmul.f32 %v921, %v921
      %v954 = vmul.f32 %v922, %v922
      %v955 = vmul.f32 %v923, %v923
      %v956 = vmul.f32 %v924, %v924
      %v957 = vsel %vm925, %v949, 0.0
      %v958 = vsel %vm925, %v950, 0.0
      %v959 = vadd.f32 %v957, %v958
      %v960 = vsel %vm925, %v951, 0.0
      %v961 = vadd.f32 %v959, %v960
      %v962 = vsel %vm925, %v952, 0.0
      %v963 = vadd.f32 %v961, %v962
      %v964 = vsel %vm925, %v953, 0.0
      %v965 = vadd.f32 %v963, %v964
      %v966 = vsel %vm925, %v954, 0.0
      %v967 = vadd.f32 %v965, %v966
      %v968 = vsel %vm925, %v955, 0.0
      %v969 = vadd.f32 %v967, %v968
      %v970 = vsel %vm925, %v956, 0.0
      %v971 = vadd.f32 %v969, %v970
      %v972 = vrot.slane %v971, 4
      %v973 = vadd.f32 %v971, %v972
      %v974 = vrot.slane %v973, 2
      %v975 = vadd.f32 %v973, %v974
      %v976 = vrot.slane %v975, 1
      %v977 = vadd.f32 %v975, %v976
      %978 = vst.msk [vmem:[%s262 + $0x1] sm:$0x1] %vm947, %v977
      %979 = vst.msk [vmem:[%s258] sm:$0xf] %vm925, %v917
      %980 = vst.msk [vmem:[%s258 + $0x4] sm:$0xf] %vm925, %v918
      %981 = vst.msk [vmem:[%s258 + $0x8] sm:$0xf] %vm925, %v919
      %982 = vst.msk [vmem:[%s258 + $0xc] sm:$0xf] %vm925, %v920
      %983 = vst.msk [vmem:[%s258 + $0x10] sm:$0xf] %vm925, %v921
      %984 = vst.msk [vmem:[%s258 + $0x14] sm:$0xf] %vm925, %v922
      %985 = vst.msk [vmem:[%s258 + $0x18] sm:$0xf] %vm925, %v923
      %986 = vst.msk [vmem:[%s258 + $0x1c] sm:$0xf] %vm925, %v924
      %p987 = scmp.lt.s32.totalorder %s18, 1
      %s988 = scalar_select %p987, %s18, 1
      %s989 = smul.addr %s988, 8
      %s990 = smul.addr %s989, 4
      %s991 = scalar_lea.vmem %s5, %s990
      %p992 = scmp.lt.s32.totalorder %s18, 1
      %s993 = scalar_select %p992, %s18, 1
      %s994 = smul.addr %s993, 2
      %s995 = scalar_lea.vmem %s6, %s994
      // Predicated region
      $region41: #{_lambda_.7} parent=39 // pred_check
        %p996 = pneg %p146
      $region42: #{_lambda_.7} parent=39 // pred_check_branch
        %998 = sbr.rel (%p996) target = $region44
      $region43: #{_lambda_.7} parent=39 // pred_region
        _
      $region44: #{_lambda_.7} parent=39 // pred_fallthru
        _
      // Predicated region
      $region45: #{_lambda_.7} parent=39 // pred_check
        %p999 = pneg %p172
      $region46: #{_lambda_.7} parent=39 // pred_check_branch
        %1001 = sbr.rel (%p999) target = $region48
      $region47: #{_lambda_.7} parent=39 // pred_region
        _
      $region48: #{_lambda_.7} parent=39 // pred_fallthru
        _
    $region40: #{_lambda_.7} parent=5 // pred_fallthru
      _
    %p1002 = scmp.le.s32.totalorder 2, %s13
    // Predicated region
    $region49: #{_lambda_.7} parent=5 // pred_check
      %p1003 = pneg %p1002
    $region50: #{_lambda_.7} parent=5 // pred_check_branch
      %1005 = sbr.rel (%p1003) target = $region52
    $region51: #{_lambda_.7} parent=5 // pred_region
      %s1006 = ssub.s32 %s13, 2
      // Predicated region
      $region53: #{_lambda_.7} parent=51 // pred_check
        %p1007 = pneg %p152
      $region54: #{_lambda_.7} parent=51 // pred_check_branch
        %1009 = sbr.rel (%p1007) target = $region56
      $region55: #{_lambda_.7} parent=51 // pred_region
        %p1010 = scmp.lt.s32.totalorder %s19, 1
        %s1011 = scalar_select %p1010, %s19, 1
        %s1012 = smul.addr %s1011, 8
        %s1013 = smul.addr %s1012, 4
        %s1014 = scalar_lea.vmem %s5, %s1013
      $region56: #{_lambda_.7} parent=51 // pred_fallthru
        _
      // Predicated region
      $region57: #{_lambda_.7} parent=51 // pred_check
        %p1015 = pneg %p178
      $region58: #{_lambda_.7} parent=51 // pred_check_branch
        %1017 = sbr.rel (%p1015) target = $region60
      $region59: #{_lambda_.7} parent=51 // pred_region
        %p1018 = scmp.lt.s32.totalorder %s19, 1
        %s1019 = scalar_select %p1018, %s19, 1
        %s1020 = smul.addr %s1019, 2
        %s1021 = scalar_lea.vmem %s6, %s1020
      $region60: #{_lambda_.7} parent=51 // pred_fallthru
        _
    $region52: #{_lambda_.7} parent=5 // pred_fallthru
      _
  $region6: #{_lambda_.7} parent=0 // loop_footer
    %s17 = sadd.s32 1, %s13
  $region7: #{_lambda_.7} parent=0 // loop_footer_branch
    %12 = sbr.rel target = $region3
  $region8: #{_lambda_.7} parent=0 // loop_exit
    _

// kernel: _lambda_.8
$region0: #{_lambda_.8}
  #allocation0 [shape = 'u32[]', space=smem, size = 0x4, offset = 0x4, fixed_abs, tag = 'smem constant byte address 0x4 - core index']
  #allocation1 [shape = 'u32[144,128]{1,0:T(1,128)}', space=vmem, size = 0x12000, scoped, tag = 'internal scratch']
  #allocation2 [shape = 'f32[10,10,64]{2,1,0:T(8,128)}', space=vmem, size = 0x14000, scoped, tag = 'scratch operand']
  %s0 = inlined_call_operand.vmem [shape: f32[2,8,4,64], index: 0, kind: input, shape index: {}]
  %s1 = inlined_call_operand.vmem [shape: f32[2,4,4,32], index: 1, kind: input, shape index: {}]
  %s2 = inlined_call_operand.vmem [shape: f32[1,64], index: 2, kind: input, shape index: {}]
  %s3 = inlined_call_operand.vmem [shape: f32[1,64], index: 3, kind: input, shape index: {}]
  %s4 = inlined_call_operand.vmem [shape: f32[576,64], index: 4, kind: input, shape index: {}]
  %s5 = inlined_call_operand.vmem [shape: f32[1,64], index: 5, kind: input, shape index: {}]
  %s6 = inlined_call_operand.vmem [shape: f32[2,8,4,64], index: 6, kind: output, shape index: {0}]
  %s7 = inlined_call_operand.vmem [shape: f32[2,2,64], index: 7, kind: output, shape index: {1}]
  %8 = xla_tuple %s6, %s7
  %s9 = sld [smem:[#allocation0]]
  $region65: #{_lambda_.8} parent=0
    _
  %s11 = ssub.s32 1, %s9
  %s12 = scalar_select 0, %s11, %s9
  loop: start=0, step=1, limit=4
  $region2: #{_lambda_.8} parent=0 // loop_pre_header
    _
  $region3: #{_lambda_.8} parent=0 // loop_header
    %s14 = sphi 0, %s18
    %p15 = scmp.ge.s32.totalorder %s14, 4
    %s24 = sphi 0, %s26
    %s27 = sphi 0, %s24
    %s28 = sphi 0, %s27
    %s44 = sphi 0, %s28
    %s50 = sphi 0, %s52
    %s53 = sphi 0, %s50
    %s54 = sphi 0, %s53
    %s70 = sphi 0, %s54
    %s74 = sphi 0, %s74
    %s76 = sphi 0, %s74
    %s77 = sphi 0, %s76
    %s91 = sphi 0, %s77
    %s95 = sphi 0, %s95
    %s97 = sphi 0, %s95
    %s98 = sphi 0, %s97
    %s112 = sphi 0, %s98
    %s116 = sphi 0, %s116
    %s118 = sphi 0, %s116
    %s119 = sphi 0, %s118
    %s133 = sphi 0, %s119
    %s137 = sphi 0, %s137
    %s139 = sphi 0, %s137
    %s140 = sphi 0, %s139
    %s154 = sphi 0, %s140
    %s160 = sphi 0, %s162
    %s163 = sphi 0, %s160
    %s164 = sphi 0, %s163
    %s180 = sphi 0, %s164
    %s186 = sphi 0, %s188
    %s189 = sphi 0, %s186
    %s190 = sphi 0, %s189
    %s206 = sphi 0, %s190
  $region4: #{_lambda_.8} parent=0 // loop_header_branch
    %17 = sbr.rel (%p15) target = $region8
  $region5: #{_lambda_.8} parent=0 // loop_body
    %s19 = ssub.s32 %s14, 1
    %s20 = ssub.s32 %s14, 2
    %s21 = sadd.s32 %s14, 1
    %s22 = ssub.s32 %s14, %s21
    %p23 = scmp.eq.s32.totalorder %s22, 0
    %s25 = sadd.s32 %s24, 1
    %s26 = scalar_select %p23, %s24, %s25
    %p29 = pneg %p23
    %p30 = scmp.eq.s32.totalorder %s14, 1
    %p31 = por %p29, %p30
    %p32 = scmp.ne.s32.totalorder %s24, %s27
    %p33 = scmp.eq.s32.totalorder %s14, 0
    %p34 = por %p32, %p33
    %p35 = scmp.ne.s32.totalorder %s24, %s27
    %p36 = scmp.eq.s32.totalorder %s19, 1
    %p37 = por %p35, %p36
    %p38 = scmp.ne.s32.totalorder %s27, %s28
    %p39 = scmp.eq.s32.totalorder %s19, 0
    %p40 = por %p38, %p39
    %p41 = scmp.ne.s32.totalorder %s27, %s28
    %p42 = scmp.eq.s32.totalorder %s20, 1
    %p43 = por %p41, %p42
    %p45 = scmp.ne.s32.totalorder %s28, %s44
    %p46 = scmp.eq.s32.totalorder %s20, 0
    %p47 = por %p45, %p46
    %s48 = ssub.s32 %s14, %s21
    %p49 = scmp.eq.s32.totalorder %s48, 0
    %s51 = sadd.s32 %s50, 1
    %s52 = scalar_select %p49, %s50, %s51
    %p55 = pneg %p49
    %p56 = scmp.eq.s32.totalorder %s14, 1
    %p57 = por %p55, %p56
    %p58 = scmp.ne.s32.totalorder %s50, %s53
    %p59 = scmp.eq.s32.totalorder %s14, 0
    %p60 = por %p58, %p59
    %p61 = scmp.ne.s32.totalorder %s50, %s53
    %p62 = scmp.eq.s32.totalorder %s19, 1
    %p63 = por %p61, %p62
    %p64 = scmp.ne.s32.totalorder %s53, %s54
    %p65 = scmp.eq.s32.totalorder %s19, 0
    %p66 = por %p64, %p65
    %p67 = scmp.ne.s32.totalorder %s53, %s54
    %p68 = scmp.eq.s32.totalorder %s20, 1
    %p69 = por %p67, %p68
    %p71 = scmp.ne.s32.totalorder %s54, %s70
    %p72 = scmp.eq.s32.totalorder %s20, 0
    %p73 = por %p71, %p72
    %s75 = sadd.s32 %s74, 1
    %p78 = scmp.eq.s32.totalorder %s14, 1
    %p79 = scmp.ne.s32.totalorder %s74, %s76
    %p80 = scmp.eq.s32.totalorder %s14, 0
    %p81 = por %p79, %p80
    %p82 = scmp.ne.s32.totalorder %s74, %s76
    %p83 = scmp.eq.s32.totalorder %s19, 1
    %p84 = por %p82, %p83
    %p85 = scmp.ne.s32.totalorder %s76, %s77
    %p86 = scmp.eq.s32.totalorder %s19, 0
    %p87 = por %p85, %p86
    %p88 = scmp.ne.s32.totalorder %s76, %s77
    %p89 = scmp.eq.s32.totalorder %s20, 1
    %p90 = por %p88, %p89
    %p92 = scmp.ne.s32.totalorder %s77, %s91
    %p93 = scmp.eq.s32.totalorder %s20, 0
    %p94 = por %p92, %p93
    %s96 = sadd.s32 %s95, 1
    %p99 = scmp.eq.s32.totalorder %s14, 1
    %p100 = scmp.ne.s32.totalorder %s95, %s97
    %p101 = scmp.eq.s32.totalorder %s14, 0
    %p102 = por %p100, %p101
    %p103 = scmp.ne.s32.totalorder %s95, %s97
    %p104 = scmp.eq.s32.totalorder %s19, 1
    %p105 = por %p103, %p104
    %p106 = scmp.ne.s32.totalorder %s97, %s98
    %p107 = scmp.eq.s32.totalorder %s19, 0
    %p108 = por %p106, %p107
    %p109 = scmp.ne.s32.totalorder %s97, %s98
    %p110 = scmp.eq.s32.totalorder %s20, 1
    %p111 = por %p109, %p110
    %p113 = scmp.ne.s32.totalorder %s98, %s112
    %p114 = scmp.eq.s32.totalorder %s20, 0
    %p115 = por %p113, %p114
    %s117 = sadd.s32 %s116, 1
    %p120 = scmp.eq.s32.totalorder %s14, 1
    %p121 = scmp.ne.s32.totalorder %s116, %s118
    %p122 = scmp.eq.s32.totalorder %s14, 0
    %p123 = por %p121, %p122
    %p124 = scmp.ne.s32.totalorder %s116, %s118
    %p125 = scmp.eq.s32.totalorder %s19, 1
    %p126 = por %p124, %p125
    %p127 = scmp.ne.s32.totalorder %s118, %s119
    %p128 = scmp.eq.s32.totalorder %s19, 0
    %p129 = por %p127, %p128
    %p130 = scmp.ne.s32.totalorder %s118, %s119
    %p131 = scmp.eq.s32.totalorder %s20, 1
    %p132 = por %p130, %p131
    %p134 = scmp.ne.s32.totalorder %s119, %s133
    %p135 = scmp.eq.s32.totalorder %s20, 0
    %p136 = por %p134, %p135
    %s138 = sadd.s32 %s137, 1
    %p141 = scmp.eq.s32.totalorder %s14, 1
    %p142 = scmp.ne.s32.totalorder %s137, %s139
    %p143 = scmp.eq.s32.totalorder %s14, 0
    %p144 = por %p142, %p143
    %p145 = scmp.ne.s32.totalorder %s137, %s139
    %p146 = scmp.eq.s32.totalorder %s19, 1
    %p147 = por %p145, %p146
    %p148 = scmp.ne.s32.totalorder %s139, %s140
    %p149 = scmp.eq.s32.totalorder %s19, 0
    %p150 = por %p148, %p149
    %p151 = scmp.ne.s32.totalorder %s139, %s140
    %p152 = scmp.eq.s32.totalorder %s20, 1
    %p153 = por %p151, %p152
    %p155 = scmp.ne.s32.totalorder %s140, %s154
    %p156 = scmp.eq.s32.totalorder %s20, 0
    %p157 = por %p155, %p156
    %s158 = ssub.s32 %s14, %s21
    %p159 = scmp.eq.s32.totalorder %s158, 0
    %s161 = sadd.s32 %s160, 1
    %s162 = scalar_select %p159, %s160, %s161
    %p165 = pneg %p159
    %p166 = scmp.eq.s32.totalorder %s14, 1
    %p167 = por %p165, %p166
    %p168 = scmp.ne.s32.totalorder %s160, %s163
    %p169 = scmp.eq.s32.totalorder %s14, 0
    %p170 = por %p168, %p169
    %p171 = scmp.ne.s32.totalorder %s160, %s163
    %p172 = scmp.eq.s32.totalorder %s19, 1
    %p173 = por %p171, %p172
    %p174 = scmp.ne.s32.totalorder %s163, %s164
    %p175 = scmp.eq.s32.totalorder %s19, 0
    %p176 = por %p174, %p175
    %p177 = scmp.ne.s32.totalorder %s163, %s164
    %p178 = scmp.eq.s32.totalorder %s20, 1
    %p179 = por %p177, %p178
    %p181 = scmp.ne.s32.totalorder %s164, %s180
    %p182 = scmp.eq.s32.totalorder %s20, 0
    %p183 = por %p181, %p182
    %s184 = ssub.s32 %s14, %s21
    %p185 = scmp.eq.s32.totalorder %s184, 0
    %s187 = sadd.s32 %s186, 1
    %s188 = scalar_select %p185, %s186, %s187
    %p191 = pneg %p185
    %p192 = scmp.eq.s32.totalorder %s14, 1
    %p193 = por %p191, %p192
    %p194 = scmp.ne.s32.totalorder %s186, %s189
    %p195 = scmp.eq.s32.totalorder %s14, 0
    %p196 = por %p194, %p195
    %p197 = scmp.ne.s32.totalorder %s186, %s189
    %p198 = scmp.eq.s32.totalorder %s19, 1
    %p199 = por %p197, %p198
    %p200 = scmp.ne.s32.totalorder %s189, %s190
    %p201 = scmp.eq.s32.totalorder %s19, 0
    %p202 = por %p200, %p201
    %p203 = scmp.ne.s32.totalorder %s189, %s190
    %p204 = scmp.eq.s32.totalorder %s20, 1
    %p205 = por %p203, %p204
    %p207 = scmp.ne.s32.totalorder %s190, %s206
    %p208 = scmp.eq.s32.totalorder %s20, 0
    %p209 = por %p207, %p208
    %p210 = scmp.le.s32.totalorder 1, %s14
    %p211 = scmp.lt.s32.totalorder %s14, 3
    %p212 = pnand %p210, %p211
    %p213 = pneg %p212
    // Predicated region
    $region9: #{_lambda_.8} parent=5 // pred_check
      _
    $region10: #{_lambda_.8} parent=5 // pred_check_branch
      %215 = sbr.rel (%p212) target = $region12
    $region11: #{_lambda_.8} parent=5 // pred_region
      %s216 = ssub.s32 %s14, 1
      // Predicated region
      $region13: #{_lambda_.8} parent=11 // pred_check
        %p217 = pneg %p87
      $region14: #{_lambda_.8} parent=11 // pred_check_branch
        %219 = sbr.rel (%p217) target = $region16
      $region15: #{_lambda_.8} parent=11 // pred_region
        _
      $region16: #{_lambda_.8} parent=11 // pred_fallthru
        _
      // Predicated region
      $region17: #{_lambda_.8} parent=11 // pred_check
        %p220 = pneg %p108
      $region18: #{_lambda_.8} parent=11 // pred_check_branch
        %222 = sbr.rel (%p220) target = $region20
      $region19: #{_lambda_.8} parent=11 // pred_region
        _
      $region20: #{_lambda_.8} parent=11 // pred_fallthru
        _
      // Predicated region
      $region21: #{_lambda_.8} parent=11 // pred_check
        %p223 = pneg %p129
      $region22: #{_lambda_.8} parent=11 // pred_check_branch
        %225 = sbr.rel (%p223) target = $region24
      $region23: #{_lambda_.8} parent=11 // pred_region
        _
      $region24: #{_lambda_.8} parent=11 // pred_fallthru
        _
      // Predicated region
      $region25: #{_lambda_.8} parent=11 // pred_check
        %p226 = pneg %p150
      $region26: #{_lambda_.8} parent=11 // pred_check_branch
        %228 = sbr.rel (%p226) target = $region28
      $region27: #{_lambda_.8} parent=11 // pred_region
        _
      $region28: #{_lambda_.8} parent=11 // pred_fallthru
        _
    $region12: #{_lambda_.8} parent=5 // pred_fallthru
      _
    %p229 = scmp.lt.s32.totalorder %s14, 2
    // Predicated region
    $region29: #{_lambda_.8} parent=5 // pred_check
      %p230 = pneg %p229
    $region30: #{_lambda_.8} parent=5 // pred_check_branch
      %232 = sbr.rel (%p230) target = $region32
    $region31: #{_lambda_.8} parent=5 // pred_region
      // Predicated region
      $region33: #{_lambda_.8} parent=31 // pred_check
        %p233 = pneg %p34
      $region34: #{_lambda_.8} parent=31 // pred_check_branch
        %235 = sbr.rel (%p233) target = $region36
      $region35: #{_lambda_.8} parent=31 // pred_region
        %p236 = scmp.lt.s32.totalorder %s14, 1
        %s237 = scalar_select %p236, %s14, 1
        %s238 = smul.addr %s237, 8
        %s239 = smul.addr %s238, 4
        %s240 = scalar_lea.vmem %s0, %s239
      $region36: #{_lambda_.8} parent=31 // pred_fallthru
        _
      // Predicated region
      $region37: #{_lambda_.8} parent=31 // pred_check
        %p241 = pneg %p60
      $region38: #{_lambda_.8} parent=31 // pred_check_branch
        %243 = sbr.rel (%p241) target = $region40
      $region39: #{_lambda_.8} parent=31 // pred_region
        %p244 = scmp.lt.s32.totalorder %s14, 1
        %s245 = scalar_select %p244, %s14, 1
        %s246 = smul.addr %s245, 4
        %s247 = smul.addr %s246, 4
        %s248 = scalar_lea.vmem %s1, %s247
      $region40: #{_lambda_.8} parent=31 // pred_fallthru
        _
    $region32: #{_lambda_.8} parent=5 // pred_fallthru
      _
    %p249 = scmp.le.s32.totalorder 1, %s14
    %p250 = scmp.lt.s32.totalorder %s14, 3
    %p251 = pnand %p249, %p250
    %p252 = pneg %p251
    // Predicated region
    $region41: #{_lambda_.8} parent=5 // pred_check
      _
    $region42: #{_lambda_.8} parent=5 // pred_check_branch
      %254 = sbr.rel (%p251) target = $region44
    $region43: #{_lambda_.8} parent=5 // pred_region
      %s255 = ssub.s32 %s14, 1
      %p256 = scmp.lt.s32.totalorder %s19, 1
      %s257 = scalar_select %p256, %s19, 1
      %s258 = smul.addr %s257, 8
      %s259 = smul.addr %s258, 4
      %s260 = scalar_lea.vmem %s0, %s259
      %p261 = pneg %p40
      %p262 = pneg %p37
      %p263 = scmp.lt.s32.totalorder %s19, 1
      %s264 = scalar_select %p263, %s19, 1
      %s265 = smul.addr %s264, 4
      %s266 = smul.addr %s265, 4
      %s267 = scalar_lea.vmem %s1, %s266
      %p268 = pneg %p66
      %p269 = pneg %p63
      %p270 = pneg %p87
      %p271 = pneg %p84
      %p272 = pneg %p108
      %p273 = pneg %p105
      %p274 = pneg %p129
      %p275 = pneg %p126
      %p276 = pneg %p150
      %p277 = pneg %p147
      %p278 = pneg %p176
      %p279 = pneg %p173
      %p280 = scmp.lt.s32.totalorder %s19, 1
      %s281 = scalar_select %p280, %s19, 1
      %s282 = smul.addr %s281, 8
      %s283 = smul.addr %s282, 4
      %s284 = scalar_lea.vmem %s6, %s283
      %p285 = pneg %p202
      %p286 = pneg %p199
      %p287 = scmp.lt.s32.totalorder %s19, 1
      %s288 = scalar_select %p287, %s19, 1
      %s289 = smul.addr %s288, 2
      %s290 = scalar_lea.vmem %s7, %s289
      %p291 = scmp.lt.s32.totalorder %s19, 1
      %s292 = scalar_select %p291, %s19, 1
      %s293 = smul.addr %s292, 8
      %s294 = smul.addr %s293, 4
      %s295 = scalar_lea.vmem %s0, %s294
      %p296 = scmp.lt.s32.totalorder %s19, 1
      %s297 = scalar_select %p296, %s19, 1
      %s298 = smul.addr %s297, 4
      %s299 = smul.addr %s298, 4
      %s300 = scalar_lea.vmem %s1, %s299
      %p301 = scmp.lt.s32.totalorder %s19, 1
      %s302 = scalar_select %p301, %s19, 1
      %s303 = smul.addr %s302, 8
      %s304 = smul.addr %s303, 4
      %s305 = scalar_lea.vmem %s6, %s304
      %p306 = scmp.lt.s32.totalorder %s19, 1
      %s307 = scalar_select %p306, %s19, 1
      %s308 = smul.addr %s307, 2
      %s309 = scalar_lea.vmem %s7, %s308
      %v310 = vld [vmem:[%s295] sm:$0xf]
      %v311 = vld [vmem:[%s295 + $0x4] sm:$0xf]
      %v312 = vld [vmem:[%s295 + $0x8] sm:$0xf]
      %v313 = vld [vmem:[%s295 + $0xc] sm:$0xf]
      %v314 = vld [vmem:[%s295 + $0x10] sm:$0xf]
      %v315 = vld [vmem:[%s295 + $0x14] sm:$0xf]
      %v316 = vld [vmem:[%s295 + $0x18] sm:$0xf]
      %v317 = vld [vmem:[%s295 + $0x1c] sm:$0xf]
      %v318 = vld [vmem:[%s2] sm:$0x1]
      %v320 = vlaneseq
      %v321 = vshrl.u32 %v320, 7
      %v322 = vsub.s32 0, %v321
      %v323 = vrot.slane %v318, %v322
      %v325 = vmul.f32 %v310, %v323
      %v326 = vmul.f32 %v311, %v323
      %v327 = vmul.f32 %v312, %v323
      %v328 = vmul.f32 %v313, %v323
      %v329 = vmul.f32 %v314, %v323
      %v330 = vmul.f32 %v315, %v323
      %v331 = vmul.f32 %v316, %v323
      %v332 = vmul.f32 %v317, %v323
      %v333 = vld [vmem:[%s3] sm:$0x1]
      %v335 = vlaneseq
      %v336 = vshrl.u32 %v335, 7
      %v337 = vsub.s32 0, %v336
      %v338 = vrot.slane %v333, %v337
      %v340 = vadd.f32 %v325, %v338
      %v341 = vadd.f32 %v326, %v338
      %v342 = vadd.f32 %v327, %v338
      %v343 = vadd.f32 %v328, %v338
      %v344 = vadd.f32 %v329, %v338
      %v345 = vadd.f32 %v330, %v338
      %v346 = vadd.f32 %v331, %v338
      %v347 = vadd.f32 %v332, %v338
      %v348 = vmax.f32 %v340, 0.0
      %v349 = vmax.f32 %v341, 0.0
      %v350 = vmax.f32 %v342, 0.0
      %v351 = vmax.f32 %v343, 0.0
      %v352 = vmax.f32 %v344, 0.0
      %v353 = vmax.f32 %v345, 0.0
      %v354 = vmax.f32 %v346, 0.0
      %v355 = vmax.f32 %v347, 0.0
      %vm356 = vcmask 523264
      %357 = vst.msk [vmem:[#allocation2] sm:$0xff] %vm356, 0.0
      %vm358 = vcmask 517120
      %359 = vst.msk [vmem:[#allocation2 + $0x8] sm:$0x3] %vm358, 0.0
      %360 = vst.msk [vmem:[#allocation2 + $0x10] sm:$0xff] %vm356, 0.0
      %361 = vst.msk [vmem:[#allocation2 + $0x18] sm:$0x3] %vm358, 0.0
      %362 = vst.msk [vmem:[#allocation2 + $0x20] sm:$0xff] %vm356, 0.0
      %363 = vst.msk [vmem:[#allocation2 + $0x28] sm:$0x3] %vm358, 0.0
      %364 = vst.msk [vmem:[#allocation2 + $0x30] sm:$0xff] %vm356, 0.0
      %365 = vst.msk [vmem:[#allocation2 + $0x38] sm:$0x3] %vm358, 0.0
      %366 = vst.msk [vmem:[#allocation2 + $0x40] sm:$0xff] %vm356, 0.0
      %367 = vst.msk [vmem:[#allocation2 + $0x48] sm:$0x3] %vm358, 0.0
      %368 = vst.msk [vmem:[#allocation2 + $0x50] sm:$0xff] %vm356, 0.0
      %369 = vst.msk [vmem:[#allocation2 + $0x58] sm:$0x3] %vm358, 0.0
      %370 = vst.msk [vmem:[#allocation2 + $0x60] sm:$0xff] %vm356, 0.0
      %371 = vst.msk [vmem:[#allocation2 + $0x68] sm:$0x3] %vm358, 0.0
      %372 = vst.msk [vmem:[#allocation2 + $0x70] sm:$0xff] %vm356, 0.0
      %373 = vst.msk [vmem:[#allocation2 + $0x78] sm:$0x3] %vm358, 0.0
      %374 = vst.msk [vmem:[#allocation2 + $0x80] sm:$0xff] %vm356, 0.0
      %375 = vst.msk [vmem:[#allocation2 + $0x88] sm:$0x3] %vm358, 0.0
      %376 = vst.msk [vmem:[#allocation2 + $0x90] sm:$0xff] %vm356, 0.0
      %377 = vst.msk [vmem:[#allocation2 + $0x98] sm:$0x3] %vm358, 0.0
      %s378 = scalar_lea.vmem [#allocation2], 16
      %vm379 = vcmask 519168
      %380 = vst.msk [vmem:[%s378 + $0x1] sm:$0xf] %vm379, %v348
      %381 = vst.msk [vmem:[%s378 + $0x11] sm:$0xf] %vm379, %v349
      %382 = vst.msk [vmem:[%s378 + $0x21] sm:$0xf] %vm379, %v350
      %383 = vst.msk [vmem:[%s378 + $0x31] sm:$0xf] %vm379, %v351
      %384 = vst.msk [vmem:[%s378 + $0x41] sm:$0xf] %vm379, %v352
      %385 = vst.msk [vmem:[%s378 + $0x51] sm:$0xf] %vm379, %v353
      %386 = vst.msk [vmem:[%s378 + $0x61] sm:$0xf] %vm379, %v354
      %387 = vst.msk [vmem:[%s378 + $0x71] sm:$0xf] %vm379, %v355
      %v388 = vld [vmem:[#allocation2] sm:$0xff]
      %v389 = vld [vmem:[#allocation2 + $0x10] sm:$0xff]
      %v390 = vld [vmem:[#allocation2 + $0x20] sm:$0xff]
      %v391 = vld [vmem:[#allocation2 + $0x30] sm:$0xff]
      %v392 = vld [vmem:[#allocation2 + $0x40] sm:$0xff]
      %v393 = vld [vmem:[#allocation2 + $0x50] sm:$0xff]
      %v394 = vld [vmem:[#allocation2 + $0x60] sm:$0xff]
      %v395 = vld [vmem:[#allocation2 + $0x70] sm:$0xff]
      %v396 = vld [vmem:[#allocation2 + $0x1] sm:$0xff]
      %v397 = vld [vmem:[#allocation2 + $0x11] sm:$0xff]
      %v398 = vld [vmem:[#allocation2 + $0x21] sm:$0xff]
      %v399 = vld [vmem:[#allocation2 + $0x31] sm:$0xff]
      %v400 = vld [vmem:[#allocation2 + $0x41] sm:$0xff]
      %v401 = vld [vmem:[#allocation2 + $0x51] sm:$0xff]
      %v402 = vld [vmem:[#allocation2 + $0x61] sm:$0xff]
      %v403 = vld [vmem:[#allocation2 + $0x71] sm:$0xff]
      %v404 = vld [vmem:[#allocation2 + $0x2] sm:$0xff]
      %v405 = vld [vmem:[#allocation2 + $0x12] sm:$0xff]
      %v406 = vld [vmem:[#allocation2 + $0x22] sm:$0xff]
      %v407 = vld [vmem:[#allocation2 + $0x32] sm:$0xff]
      %v408 = vld [vmem:[#allocation2 + $0x42] sm:$0xff]
      %v409 = vld [vmem:[#allocation2 + $0x52] sm:$0xff]
      %v410 = vld [vmem:[#allocation2 + $0x62] sm:$0xff]
      %v411 = vld [vmem:[#allocation2 + $0x72] sm:$0xff]
      %v412 = vld [vmem:[%s378] sm:$0xff]
      %v413 = vld [vmem:[%s378 + $0x10] sm:$0xff]
      %v414 = vld [vmem:[%s378 + $0x20] sm:$0xff]
      %v415 = vld [vmem:[%s378 + $0x30] sm:$0xff]
      %v416 = vld [vmem:[%s378 + $0x40] sm:$0xff]
      %v417 = vld [vmem:[%s378 + $0x50] sm:$0xff]
      %v418 = vld [vmem:[%s378 + $0x60] sm:$0xff]
      %v419 = vld [vmem:[%s378 + $0x70] sm:$0xff]
      %v420 = vld [vmem:[%s378 + $0x1] sm:$0xff]
      %v421 = vld [vmem:[%s378 + $0x11] sm:$0xff]
      %v422 = vld [vmem:[%s378 + $0x21] sm:$0xff]
      %v423 = vld [vmem:[%s378 + $0x31] sm:$0xff]
      %v424 = vld [vmem:[%s378 + $0x41] sm:$0xff]
      %v425 = vld [vmem:[%s378 + $0x51] sm:$0xff]
      %v426 = vld [vmem:[%s378 + $0x61] sm:$0xff]
      %v427 = vld [vmem:[%s378 + $0x71] sm:$0xff]
      %v428 = vld [vmem:[%s378 + $0x2] sm:$0xff]
      %v429 = vld [vmem:[%s378 + $0x12] sm:$0xff]
      %v430 = vld [vmem:[%s378 + $0x22] sm:$0xff]
      %v431 = vld [vmem:[%s378 + $0x32] sm:$0xff]
      %v432 = vld [vmem:[%s378 + $0x42] sm:$0xff]
      %v433 = vld [vmem:[%s378 + $0x52] sm:$0xff]
      %v434 = vld [vmem:[%s378 + $0x62] sm:$0xff]
      %v435 = vld [vmem:[%s378 + $0x72] sm:$0xff]
      %s436 = scalar_lea.vmem [#allocation2], 32
      %v437 = vld [vmem:[%s436] sm:$0xff]
      %v438 = vld [vmem:[%s436 + $0x10] sm:$0xff]
      %v439 = vld [vmem:[%s436 + $0x20] sm:$0xff]
      %v440 = vld [vmem:[%s436 + $0x30] sm:$0xff]
      %v441 = vld [vmem:[%s436 + $0x40] sm:$0xff]
      %v442 = vld [vmem:[%s436 + $0x50] sm:$0xff]
      %v443 = vld [vmem:[%s436 + $0x60] sm:$0xff]
      %v444 = vld [vmem:[%s436 + $0x70] sm:$0xff]
      %v445 = vld [vmem:[%s436 + $0x1] sm:$0xff]
      %v446 = vld [vmem:[%s436 + $0x11] sm:$0xff]
      %v447 = vld [vmem:[%s436 + $0x21] sm:$0xff]
      %v448 = vld [vmem:[%s436 + $0x31] sm:$0xff]
      %v449 = vld [vmem:[%s436 + $0x41] sm:$0xff]
      %v450 = vld [vmem:[%s436 + $0x51] sm:$0xff]
      %v451 = vld [vmem:[%s436 + $0x61] sm:$0xff]
      %v452 = vld [vmem:[%s436 + $0x71] sm:$0xff]
      %v453 = vld [vmem:[%s436 + $0x2] sm:$0xff]
      %v454 = vld [vmem:[%s436 + $0x12] sm:$0xff]
      %v455 = vld [vmem:[%s436 + $0x22] sm:$0xff]
      %v456 = vld [vmem:[%s436 + $0x32] sm:$0xff]
      %v457 = vld [vmem:[%s436 + $0x42] sm:$0xff]
      %v458 = vld [vmem:[%s436 + $0x52] sm:$0xff]
      %v459 = vld [vmem:[%s436 + $0x62] sm:$0xff]
      %v460 = vld [vmem:[%s436 + $0x72] sm:$0xff]
      %469 = vrot.lane.b32.xlu0 %v396, 64
      %v470 = vpop.permute.xlu0 %469
      %471 = vrot.lane.b32.xlu0 %v397, 64
      %v472 = vpop.permute.xlu0 %471
      %473 = vrot.lane.b32.xlu0 %v398, 64
      %v474 = vpop.permute.xlu0 %473
      %475 = vrot.lane.b32.xlu0 %v399, 64
      %v476 = vpop.permute.xlu0 %475
      %477 = vrot.lane.b32.xlu0 %v400, 64
      %v478 = vpop.permute.xlu0 %477
      %479 = vrot.lane.b32.xlu0 %v401, 64
      %v480 = vpop.permute.xlu0 %479
      %481 = vrot.lane.b32.xlu0 %v402, 64
      %v482 = vpop.permute.xlu0 %481
      %483 = vrot.lane.b32.xlu0 %v403, 64
      %v484 = vpop.permute.xlu0 %483
      %501 = vrot.lane.b32.xlu0 %v412, 64
      %v502 = vpop.permute.xlu0 %501
      %503 = vrot.lane.b32.xlu0 %v413, 64
      %v504 = vpop.permute.xlu0 %503
      %505 = vrot.lane.b32.xlu0 %v414, 64
      %v506 = vpop.permute.xlu0 %505
      %507 = vrot.lane.b32.xlu0 %v415, 64
      %v508 = vpop.permute.xlu0 %507
      %509 = vrot.lane.b32.xlu0 %v416, 64
      %v510 = vpop.permute.xlu0 %509
      %511 = vrot.lane.b32.xlu0 %v417, 64
      %v512 = vpop.permute.xlu0 %511
      %513 = vrot.lane.b32.xlu0 %v418, 64
      %v514 = vpop.permute.xlu0 %513
      %515 = vrot.lane.b32.xlu0 %v419, 64
      %v516 = vpop.permute.xlu0 %515
      %533 = vrot.lane.b32.xlu0 %v428, 64
      %v534 = vpop.permute.xlu0 %533
      %535 = vrot.lane.b32.xlu0 %v429, 64
      %v536 = vpop.permute.xlu0 %535
      %537 = vrot.lane.b32.xlu0 %v430, 64
      %v538 = vpop.permute.xlu0 %537
      %539 = vrot.lane.b32.xlu0 %v431, 64
      %v540 = vpop.permute.xlu0 %539
      %541 = vrot.lane.b32.xlu0 %v432, 64
      %v542 = vpop.permute.xlu0 %541
      %543 = vrot.lane.b32.xlu0 %v433, 64
      %v544 = vpop.permute.xlu0 %543
      %545 = vrot.lane.b32.xlu0 %v434, 64
      %v546 = vpop.permute.xlu0 %545
      %547 = vrot.lane.b32.xlu0 %v435, 64
      %v548 = vpop.permute.xlu0 %547
      %565 = vrot.lane.b32.xlu0 %v445, 64
      %v566 = vpop.permute.xlu0 %565
      %567 = vrot.lane.b32.xlu0 %v446, 64
      %v568 = vpop.permute.xlu0 %567
      %569 = vrot.lane.b32.xlu0 %v447, 64
      %v570 = vpop.permute.xlu0 %569
      %571 = vrot.lane.b32.xlu0 %v448, 64
      %v572 = vpop.permute.xlu0 %571
      %573 = vrot.lane.b32.xlu0 %v449, 64
      %v574 = vpop.permute.xlu0 %573
      %575 = vrot.lane.b32.xlu0 %v450, 64
      %v576 = vpop.permute.xlu0 %575
      %577 = vrot.lane.b32.xlu0 %v451, 64
      %v578 = vpop.permute.xlu0 %577
      %579 = vrot.lane.b32.xlu0 %v452, 64
      %v580 = vpop.permute.xlu0 %579
      %v589 = vsel %vm356, %v388, %v470
      %v590 = vsel %vm356, %v389, %v472
      %v591 = vsel %vm356, %v390, %v474
      %v592 = vsel %vm356, %v391, %v476
      %v593 = vsel %vm356, %v392, %v478
      %v594 = vsel %vm356, %v393, %v480
      %v595 = vsel %vm356, %v394, %v482
      %v596 = vsel %vm356, %v395, %v484
      %v597 = vsel %vm356, %v404, %v502
      %v598 = vsel %vm356, %v405, %v504
      %v599 = vsel %vm356, %v406, %v506
      %v600 = vsel %vm356, %v407, %v508
      %v601 = vsel %vm356, %v408, %v510
      %v602 = vsel %vm356, %v409, %v512
      %v603 = vsel %vm356, %v410, %v514
      %v604 = vsel %vm356, %v411, %v516
      %v605 = vsel %vm356, %v420, %v534
      %v606 = vsel %vm356, %v421, %v536
      %v607 = vsel %vm356, %v422, %v538
      %v608 = vsel %vm356, %v423, %v540
      %v609 = vsel %vm356, %v424, %v542
      %v610 = vsel %vm356, %v425, %v544
      %v611 = vsel %vm356, %v426, %v546
      %v612 = vsel %vm356, %v427, %v548
      %v613 = vsel %vm356, %v437, %v566
      %v614 = vsel %vm356, %v438, %v568
      %v615 = vsel %vm356, %v439, %v570
      %v616 = vsel %vm356, %v440, %v572
      %v617 = vsel %vm356, %v441, %v574
      %v618 = vsel %vm356, %v442, %v576
      %v619 = vsel %vm356, %v443, %v578
      %v620 = vsel %vm356, %v444, %v580
      %v621 = vld [vmem:[%s4] sm:$0xff]
      %v622 = vld [vmem:[%s4 + $0x8] sm:$0xff]
      %v623 = vld [vmem:[%s4 + $0x10] sm:$0xff]
      %v624 = vld [vmem:[%s4 + $0x18] sm:$0xff]
      %v625 = vld [vmem:[%s4 + $0x20] sm:$0xff]
      %v626 = vld [vmem:[%s4 + $0x28] sm:$0xff]
      %v627 = vld [vmem:[%s4 + $0x30] sm:$0xff]
      %v628 = vld [vmem:[%s4 + $0x38] sm:$0xff]
      %v629 = vld [vmem:[%s4 + $0x40] sm:$0xff]
      %v630 = vld [vmem:[%s4 + $0x48] sm:$0xff]
      %v631 = vld [vmem:[%s4 + $0x50] sm:$0xff]
      %v632 = vld [vmem:[%s4 + $0x58] sm:$0xff]
      %v633 = vld [vmem:[%s4 + $0x60] sm:$0xff]
      %v634 = vld [vmem:[%s4 + $0x68] sm:$0xff]
      %v635 = vld [vmem:[%s4 + $0x70] sm:$0xff]
      %v636 = vld [vmem:[%s4 + $0x78] sm:$0xff]
      %v637 = vld [vmem:[%s4 + $0x80] sm:$0xff]
      %v638 = vld [vmem:[%s4 + $0x88] sm:$0xff]
      %v639 = vld [vmem:[%s4 + $0x90] sm:$0xff]
      %v640 = vld [vmem:[%s4 + $0x98] sm:$0xff]
      %v641 = vld [vmem:[%s4 + $0xa0] sm:$0xff]
      %v642 = vld [vmem:[%s4 + $0xa8] sm:$0xff]
      %v643 = vld [vmem:[%s4 + $0xb0] sm:$0xff]
      %v644 = vld [vmem:[%s4 + $0xb8] sm:$0xff]
      %v645 = vld [vmem:[%s4 + $0xc0] sm:$0xff]
      %v646 = vld [vmem:[%s4 + $0xc8] sm:$0xff]
      %v647 = vld [vmem:[%s4 + $0xd0] sm:$0xff]
      %v648 = vld [vmem:[%s4 + $0xd8] sm:$0xff]
      %v649 = vld [vmem:[%s4 + $0xe0] sm:$0xff]
      %v650 = vld [vmem:[%s4 + $0xe8] sm:$0xff]
      %v651 = vld [vmem:[%s4 + $0xf0] sm:$0xff]
      %v652 = vld [vmem:[%s4 + $0xf8] sm:$0xff]
      %v653 = vld [vmem:[%s4 + $0x100] sm:$0xff]
      %v654 = vld [vmem:[%s4 + $0x108] sm:$0xff]
      %v655 = vld [vmem:[%s4 + $0x110] sm:$0xff]
      %v656 = vld [vmem:[%s4 + $0x118] sm:$0xff]
      %v657 = vld [vmem:[%s4 + $0x120] sm:$0xff]
      %v658 = vld [vmem:[%s4 + $0x128] sm:$0xff]
      %v659 = vld [vmem:[%s4 + $0x130] sm:$0xff]
      %v660 = vld [vmem:[%s4 + $0x138] sm:$0xff]
      %v661 = vld [vmem:[%s4 + $0x140] sm:$0xff]
      %v662 = vld [vmem:[%s4 + $0x148] sm:$0xff]
      %v663 = vld [vmem:[%s4 + $0x150] sm:$0xff]
      %v664 = vld [vmem:[%s4 + $0x158] sm:$0xff]
      %v665 = vld [vmem:[%s4 + $0x160] sm:$0xff]
      %v666 = vld [vmem:[%s4 + $0x168] sm:$0xff]
      %v667 = vld [vmem:[%s4 + $0x170] sm:$0xff]
      %v668 = vld [vmem:[%s4 + $0x178] sm:$0xff]
      %v669 = vld [vmem:[%s4 + $0x180] sm:$0xff]
      %v670 = vld [vmem:[%s4 + $0x188] sm:$0xff]
      %v671 = vld [vmem:[%s4 + $0x190] sm:$0xff]
      %v672 = vld [vmem:[%s4 + $0x198] sm:$0xff]
      %v673 = vld [vmem:[%s4 + $0x1a0] sm:$0xff]
      %v674 = vld [vmem:[%s4 + $0x1a8] sm:$0xff]
      %v675 = vld [vmem:[%s4 + $0x1b0] sm:$0xff]
      %v676 = vld [vmem:[%s4 + $0x1b8] sm:$0xff]
      %v677 = vld [vmem:[%s4 + $0x1c0] sm:$0xff]
      %v678 = vld [vmem:[%s4 + $0x1c8] sm:$0xff]
      %v679 = vld [vmem:[%s4 + $0x1d0] sm:$0xff]
      %v680 = vld [vmem:[%s4 + $0x1d8] sm:$0xff]
      %v681 = vld [vmem:[%s4 + $0x1e0] sm:$0xff]
      %v682 = vld [vmem:[%s4 + $0x1e8] sm:$0xff]
      %v683 = vld [vmem:[%s4 + $0x1f0] sm:$0xff]
      %v684 = vld [vmem:[%s4 + $0x1f8] sm:$0xff]
      %v685 = vld [vmem:[%s4 + $0x200] sm:$0xff]
      %v686 = vld [vmem:[%s4 + $0x208] sm:$0xff]
      %v687 = vld [vmem:[%s4 + $0x210] sm:$0xff]
      %v688 = vld [vmem:[%s4 + $0x218] sm:$0xff]
      %v689 = vld [vmem:[%s4 + $0x220] sm:$0xff]
      %v690 = vld [vmem:[%s4 + $0x228] sm:$0xff]
      %v691 = vld [vmem:[%s4 + $0x230] sm:$0xff]
      %v692 = vld [vmem:[%s4 + $0x238] sm:$0xff]
      %v694 = vsel %vm356, %v453, 0
      %v697 = vsel %vm356, %v454, 0
      %v700 = vsel %vm356, %v455, 0
      %v703 = vsel %vm356, %v456, 0
      %v706 = vsel %vm356, %v457, 0
      %v709 = vsel %vm356, %v458, 0
      %v712 = vsel %vm356, %v459, 0
      %v715 = vsel %vm356, %v460, 0
      %717 = vmatprep.subr.mxu0 0.0
      %718 = vmatpush1.msra.mxu0 %v621
      %719 = vmatprep.subr.mxu0 0.0
      %720 = vmatpush1.msra.mxu0 %v622
      %721 = vmatprep.subr.mxu0 0.0
      %722 = vmatpush1.msra.mxu0 %v623
      %723 = vmatprep.subr.mxu0 0.0
      %724 = vmatpush1.msra.mxu0 %v624
      %725 = vmatprep.subr.mxu0 0.0
      %726 = vmatpush1.msra.mxu0 %v625
      %727 = vmatprep.subr.mxu0 0.0
      %728 = vmatpush1.msra.mxu0 %v626
      %729 = vmatprep.subr.mxu0 0.0
      %730 = vmatpush1.msra.mxu0 %v627
      %731 = vmatprep.subr.mxu0 0.0
      %732 = vmatpush1.msra.mxu0 %v628
      %733 = vmatprep.subr.mxu0 0.0
      %734 = vmatpush1.msra.mxu0 %v629
      %735 = vmatprep.subr.mxu0 0.0
      %736 = vmatpush1.msra.mxu0 %v630
      %737 = vmatprep.subr.mxu0 0.0
      %738 = vmatpush1.msra.mxu0 %v631
      %739 = vmatprep.subr.mxu0 0.0
      %740 = vmatpush1.msra.mxu0 %v632
      %741 = vmatprep.subr.mxu0 0.0
      %742 = vmatpush1.msra.mxu0 %v633
      %743 = vmatprep.subr.mxu0 0.0
      %744 = vmatpush1.msra.mxu0 %v634
      %745 = vmatprep.subr.mxu0 0.0
      %746 = vmatpush1.msra.mxu0 %v635
      %747 = vmatprep.subr.mxu0 0.0
      %748 = vmatpush1.msra.mxu0 %v636
      %749 = vmatprep.subr.mxu0 0.0
      %750 = vmatpush1.msra.mxu0 %v637
      %751 = vmatprep.subr.mxu0 0.0
      %752 = vmatpush1.msra.mxu0 %v638
      %753 = vmatprep.subr.mxu0 0.0
      %754 = vmatpush1.msra.mxu0 %v639
      %755 = vmatprep.subr.mxu0 0.0
      %756 = vmatpush1.msra.mxu0 %v640
      %757 = vmatprep.subr.mxu0 0.0
      %758 = vmatpush1.msra.mxu0 %v641
      %759 = vmatprep.subr.mxu0 0.0
      %760 = vmatpush1.msra.mxu0 %v642
      %761 = vmatprep.subr.mxu0 0.0
      %762 = vmatpush1.msra.mxu0 %v643
      %763 = vmatprep.subr.mxu0 0.0
      %764 = vmatpush1.msra.mxu0 %v644
      %765 = vmatprep.subr.mxu0 0.0
      %766 = vmatpush1.msra.mxu0 %v645
      %767 = vmatprep.subr.mxu0 0.0
      %768 = vmatpush1.msra.mxu0 %v646
      %769 = vmatprep.subr.mxu0 0.0
      %770 = vmatpush1.msra.mxu0 %v647
      %771 = vmatprep.subr.mxu0 0.0
      %772 = vmatpush1.msra.mxu0 %v648
      %773 = vmatprep.subr.mxu0 0.0
      %774 = vmatpush1.msra.mxu0 %v649
      %775 = vmatprep.subr.mxu0 0.0
      %776 = vmatpush1.msra.mxu0 %v650
      %777 = vmatprep.subr.mxu0 0.0
      %778 = vmatpush1.msra.mxu0 %v651
      %779 = vmatprep.subr.mxu0 0.0
      %780 = vmatpush1.msra.mxu0 %v652
      %781 = vmatprep.mubr.f32.mxu0 %v597
      %782 = vmatmul.mubr.f32.gmra.mrb[0].mxu0 %v589
      %v783 = vpop.f32.mrb[0].mxu0
      %v784 = vadd.f32 0.0, %v783
      %v785 = vpop.f32.mrb[0].mxu0
      %786 = vmatprep.mubr.f32.mxu0 %v598
      %787 = vmatmul.mubr.f32.gmra.mrb[0].mxu0 %v590
      %v788 = vpop.f32.mrb[0].mxu0
      %v789 = vadd.f32 0.0, %v788
      %v790 = vpop.f32.mrb[0].mxu0
      %791 = vmatprep.mubr.f32.mxu0 %v599
      %792 = vmatmul.mubr.f32.gmra.mrb[0].mxu0 %v591
      %v793 = vpop.f32.mrb[0].mxu0
      %v794 = vadd.f32 0.0, %v793
      %v795 = vpop.f32.mrb[0].mxu0
      %796 = vmatprep.mubr.f32.mxu0 %v600
      %797 = vmatmul.mubr.f32.gmra.mrb[0].mxu0 %v592
      %v798 = vpop.f32.mrb[0].mxu0
      %v799 = vadd.f32 0.0, %v798
      %v800 = vpop.f32.mrb[0].mxu0
      %801 = vmatprep.mubr.f32.mxu0 %v601
      %802 = vmatmul.mubr.f32.gmra.mrb[0].mxu0 %v593
      %v803 = vpop.f32.mrb[0].mxu0
      %v804 = vadd.f32 0.0, %v803
      %v805 = vpop.f32.mrb[0].mxu0
      %806 = vmatprep.mubr.f32.mxu0 %v602
      %807 = vmatmul.mubr.f32.gmra.mrb[0].mxu0 %v594
      %v808 = vpop.f32.mrb[0].mxu0
      %v809 = vadd.f32 0.0, %v808
      %v810 = vpop.f32.mrb[0].mxu0
      %811 = vmatprep.mubr.f32.mxu0 %v603
      %812 = vmatmul.mubr.f32.gmra.mrb[0].mxu0 %v595
      %v813 = vpop.f32.mrb[0].mxu0
      %v814 = vadd.f32 0.0, %v813
      %v815 = vpop.f32.mrb[0].mxu0
      %816 = vmatprep.mubr.f32.mxu0 %v604
      %817 = vmatmul.mubr.f32.gmra.mrb[0].mxu0 %v596
      %v818 = vpop.f32.mrb[0].mxu0
      %v819 = vadd.f32 0.0, %v818
      %v820 = vpop.f32.mrb[0].mxu0
      %821 = vdwg.mxu0
      %822 = vmatprep.subr.mxu0 0.0
      %823 = vmatpush1.msra.mxu0 %v653
      %824 = vmatprep.subr.mxu0 0.0
      %825 = vmatpush1.msra.mxu0 %v654
      %826 = vmatprep.subr.mxu0 0.0
      %827 = vmatpush1.msra.mxu0 %v655
      %828 = vmatprep.subr.mxu0 0.0
      %829 = vmatpush1.msra.mxu0 %v656
      %830 = vmatprep.subr.mxu0 0.0
      %831 = vmatpush1.msra.mxu0 %v657
      %832 = vmatprep.subr.mxu0 0.0
      %833 = vmatpush1.msra.mxu0 %v658
      %834 = vmatprep.subr.mxu0 0.0
      %835 = vmatpush1.msra.mxu0 %v659
      %836 = vmatprep.subr.mxu0 0.0
      %837 = vmatpush1.msra.mxu0 %v660
      %838 = vmatprep.subr.mxu0 0.0
      %839 = vmatpush1.msra.mxu0 %v661
      %840 = vmatprep.subr.mxu0 0.0
      %841 = vmatpush1.msra.mxu0 %v662
      %842 = vmatprep.subr.mxu0 0.0
      %843 = vmatpush1.msra.mxu0 %v663
      %844 = vmatprep.subr.mxu0 0.0
      %845 = vmatpush1.msra.mxu0 %v664
      %846 = vmatprep.subr.mxu0 0.0
      %847 = vmatpush1.msra.mxu0 %v665
      %848 = vmatprep.subr.mxu0 0.0
      %849 = vmatpush1.msra.mxu0 %v666
      %850 = vmatprep.subr.mxu0 0.0
      %851 = vmatpush1.msra.mxu0 %v667
      %852 = vmatprep.subr.mxu0 0.0
      %853 = vmatpush1.msra.mxu0 %v668
      %854 = vmatprep.subr.mxu0 0.0
      %855 = vmatpush1.msra.mxu0 %v669
      %856 = vmatprep.subr.mxu0 0.0
      %857 = vmatpush1.msra.mxu0 %v670
      %858 = vmatprep.subr.mxu0 0.0
      %859 = vmatpush1.msra.mxu0 %v671
      %860 = vmatprep.subr.mxu0 0.0
      %861 = vmatpush1.msra.mxu0 %v672
      %862 = vmatprep.subr.mxu0 0.0
      %863 = vmatpush1.msra.mxu0 %v673
      %864 = vmatprep.subr.mxu0 0.0
      %865 = vmatpush1.msra.mxu0 %v674
      %866 = vmatprep.subr.mxu0 0.0
      %867 = vmatpush1.msra.mxu0 %v675
      %868 = vmatprep.subr.mxu0 0.0
      %869 = vmatpush1.msra.mxu0 %v676
      %870 = vmatprep.subr.mxu0 0.0
      %871 = vmatpush1.msra.mxu0 %v677
      %872 = vmatprep.subr.mxu0 0.0
      %873 = vmatpush1.msra.mxu0 %v678
      %874 = vmatprep.subr.mxu0 0.0
      %875 = vmatpush1.msra.mxu0 %v679
      %876 = vmatprep.subr.mxu0 0.0
      %877 = vmatpush1.msra.mxu0 %v680
      %878 = vmatprep.subr.mxu0 0.0
      %879 = vmatpush1.msra.mxu0 %v681
      %880 = vmatprep.subr.mxu0 0.0
      %881 = vmatpush1.msra.mxu0 %v682
      %882 = vmatprep.subr.mxu0 0.0
      %883 = vmatpush1.msra.mxu0 %v683
      %884 = vmatprep.subr.mxu0 0.0
      %885 = vmatpush1.msra.mxu0 %v684
      %886 = vmatprep.mubr.f32.mxu0 %v613
      %887 = vmatmul.mubr.f32.gmra.mrb[0].mxu0 %v605
      %v888 = vpop.f32.mrb[0].mxu0
      %v889 = vadd.f32 %v784, %v888
      %v890 = vpop.f32.mrb[0].mxu0
      %891 = vmatprep.mubr.f32.mxu0 %v614
      %892 = vmatmul.mubr.f32.gmra.mrb[0].mxu0 %v606
      %v893 = vpop.f32.mrb[0].mxu0
      %v894 = vadd.f32 %v789, %v893
      %v895 = vpop.f32.mrb[0].mxu0
      %896 = vmatprep.mubr.f32.mxu0 %v615
      %897 = vmatmul.mubr.f32.gmra.mrb[0].mxu0 %v607
      %v898 = vpop.f32.mrb[0].mxu0
      %v899 = vadd.f32 %v794, %v898
      %v900 = vpop.f32.mrb[0].mxu0
      %901 = vmatprep.mubr.f32.mxu0 %v616
      %902 = vmatmul.mubr.f32.gmra.mrb[0].mxu0 %v608
      %v903 = vpop.f32.mrb[0].mxu0
      %v904 = vadd.f32 %v799, %v903
      %v905 = vpop.f32.mrb[0].mxu0
      %906 = vmatprep.mubr.f32.mxu0 %v617
      %907 = vmatmul.mubr.f32.gmra.mrb[0].mxu0 %v609
      %v908 = vpop.f32.mrb[0].mxu0
      %v909 = vadd.f32 %v804, %v908
      %v910 = vpop.f32.mrb[0].mxu0
      %911 = vmatprep.mubr.f32.mxu0 %v618
      %912 = vmatmul.mubr.f32.gmra.mrb[0].mxu0 %v610
      %v913 = vpop.f32.mrb[0].mxu0
      %v914 = vadd.f32 %v809, %v913
      %v915 = vpop.f32.mrb[0].mxu0
      %916 = vmatprep.mubr.f32.mxu0 %v619
      %917 = vmatmul.mubr.f32.gmra.mrb[0].mxu0 %v611
      %v918 = vpop.f32.mrb[0].mxu0
      %v919 = vadd.f32 %v814, %v918
      %v920 = vpop.f32.mrb[0].mxu0
      %921 = vmatprep.mubr.f32.mxu0 %v620
      %922 = vmatmul.mubr.f32.gmra.mrb[0].mxu0 %v612
      %v923 = vpop.f32.mrb[0].mxu0
      %v924 = vadd.f32 %v819, %v923
      %v925 = vpop.f32.mrb[0].mxu0
      %926 = vdwg.mxu0
      %927 = vmatprep.subr.mxu0 0.0
      %928 = vmatpush1.msra.mxu0 %v685
      %929 = vmatprep.subr.mxu0 0.0
      %930 = vmatpush1.msra.mxu0 %v686
      %931 = vmatprep.subr.mxu0 0.0
      %932 = vmatpush1.msra.mxu0 %v687
      %933 = vmatprep.subr.mxu0 0.0
      %934 = vmatpush1.msra.mxu0 %v688
      %935 = vmatprep.subr.mxu0 0.0
      %936 = vmatpush1.msra.mxu0 %v689
      %937 = vmatprep.subr.mxu0 0.0
      %938 = vmatpush1.msra.mxu0 %v690
      %939 = vmatprep.subr.mxu0 0.0
      %940 = vmatpush1.msra.mxu0 %v691
      %941 = vmatprep.subr.mxu0 0.0
      %942 = vmatpush1.msra.mxu0 %v692
      %943 = vmatprep.subr.mxu0 0.0
      %944 = vmatpush1.msra.mxu0 0.0
      %945 = vmatprep.subr.mxu0 0.0
      %946 = vmatpush1.msra.mxu0 0.0
      %947 = vmatprep.subr.mxu0 0.0
      %948 = vmatpush1.msra.mxu0 0.0
      %949 = vmatprep.subr.mxu0 0.0
      %950 = vmatpush1.msra.mxu0 0.0
      %951 = vmatprep.subr.mxu0 0.0
      %952 = vmatpush1.msra.mxu0 0.0
      %953 = vmatprep.subr.mxu0 0.0
      %954 = vmatpush1.msra.mxu0 0.0
      %955 = vmatprep.subr.mxu0 0.0
      %956 = vmatpush1.msra.mxu0 0.0
      %957 = vmatprep.subr.mxu0 0.0
      %958 = vmatpush1.msra.mxu0 0.0
      %959 = vmatprep.subr.mxu0 0.0
      %960 = vmatpush1.msra.mxu0 0.0
      %961 = vmatprep.subr.mxu0 0.0
      %962 = vmatpush1.msra.mxu0 0.0
      %963 = vmatprep.subr.mxu0 0.0
      %964 = vmatpush1.msra.mxu0 0.0
      %965 = vmatprep.subr.mxu0 0.0
      %966 = vmatpush1.msra.mxu0 0.0
      %967 = vmatprep.subr.mxu0 0.0
      %968 = vmatpush1.msra.mxu0 0.0
      %969 = vmatprep.subr.mxu0 0.0
      %970 = vmatpush1.msra.mxu0 0.0
      %971 = vmatprep.subr.mxu0 0.0
      %972 = vmatpush1.msra.mxu0 0.0
      %973 = vmatprep.subr.mxu0 0.0
      %974 = vmatpush1.msra.mxu0 0.0
      %975 = vmatprep.subr.mxu0 0.0
      %976 = vmatpush1.msra.mxu0 0.0
      %977 = vmatprep.subr.mxu0 0.0
      %978 = vmatpush1.msra.mxu0 0.0
      %979 = vmatprep.subr.mxu0 0.0
      %980 = vmatpush1.msra.mxu0 0.0
      %981 = vmatprep.subr.mxu0 0.0
      %982 = vmatpush1.msra.mxu0 0.0
      %983 = vmatprep.subr.mxu0 0.0
      %984 = vmatpush1.msra.mxu0 0.0
      %985 = vmatprep.subr.mxu0 0.0
      %986 = vmatpush1.msra.mxu0 0.0
      %987 = vmatprep.subr.mxu0 0.0
      %988 = vmatpush1.msra.mxu0 0.0
      %989 = vmatprep.subr.mxu0 0.0
      %990 = vmatpush1.msra.mxu0 0.0
      %991 = vmatprep.mubr.f32.mxu0 0.0
      %992 = vmatmul.mubr.f32.gmra.mrb[0].mxu0 %v694
      %v993 = vpop.f32.mrb[0].mxu0
      %v994 = vadd.f32 %v889, %v993
      %v995 = vpop.f32.mrb[0].mxu0
      %996 = vmatprep.mubr.f32.mxu0 0.0
      %997 = vmatmul.mubr.f32.gmra.mrb[0].mxu0 %v697
      %v998 = vpop.f32.mrb[0].mxu0
      %v999 = vadd.f32 %v894, %v998
      %v1000 = vpop.f32.mrb[0].mxu0
      %1001 = vmatprep.mubr.f32.mxu0 0.0
      %1002 = vmatmul.mubr.f32.gmra.mrb[0].mxu0 %v700
      %v1003 = vpop.f32.mrb[0].mxu0
      %v1004 = vadd.f32 %v899, %v1003
      %v1005 = vpop.f32.mrb[0].mxu0
      %1006 = vmatprep.mubr.f32.mxu0 0.0
      %1007 = vmatmul.mubr.f32.gmra.mrb[0].mxu0 %v703
      %v1008 = vpop.f32.mrb[0].mxu0
      %v1009 = vadd.f32 %v904, %v1008
      %v1010 = vpop.f32.mrb[0].mxu0
      %1011 = vmatprep.mubr.f32.mxu0 0.0
      %1012 = vmatmul.mubr.f32.gmra.mrb[0].mxu0 %v706
      %v1013 = vpop.f32.mrb[0].mxu0
      %v1014 = vadd.f32 %v909, %v1013
      %v1015 = vpop.f32.mrb[0].mxu0
      %1016 = vmatprep.mubr.f32.mxu0 0.0
      %1017 = vmatmul.mubr.f32.gmra.mrb[0].mxu0 %v709
      %v1018 = vpop.f32.mrb[0].mxu0
      %v1019 = vadd.f32 %v914, %v1018
      %v1020 = vpop.f32.mrb[0].mxu0
      %1021 = vmatprep.mubr.f32.mxu0 0.0
      %1022 = vmatmul.mubr.f32.gmra.mrb[0].mxu0 %v712
      %v1023 = vpop.f32.mrb[0].mxu0
      %v1024 = vadd.f32 %v919, %v1023
      %v1025 = vpop.f32.mrb[0].mxu0
      %1026 = vmatprep.mubr.f32.mxu0 0.0
      %1027 = vmatmul.mubr.f32.gmra.mrb[0].mxu0 %v715
      %v1028 = vpop.f32.mrb[0].mxu0
      %v1029 = vadd.f32 %v924, %v1028
      %v1030 = vpop.f32.mrb[0].mxu0
      %1031 = vdwg.mxu0
      %v1032 = vld [vmem:[%s5] sm:$0x1]
      %v1034 = vlaneseq
      %v1035 = vshrl.u32 %v1034, 7
      %v1036 = vsub.s32 0, %v1035
      %v1037 = vrot.slane %v1032, %v1036
      %v1039 = vadd.f32 %v994, %v1037
      %v1040 = vadd.f32 %v999, %v1037
      %v1041 = vadd.f32 %v1004, %v1037
      %v1042 = vadd.f32 %v1009, %v1037
      %v1043 = vadd.f32 %v1014, %v1037
      %v1044 = vadd.f32 %v1019, %v1037
      %v1045 = vadd.f32 %v1024, %v1037
      %v1046 = vadd.f32 %v1029, %v1037
      %v1047 = vld [vmem:[%s300] sm:$0xf]
      %v1048 = vld [vmem:[%s300 + $0x4] sm:$0xf]
      %v1049 = vld [vmem:[%s300 + $0x8] sm:$0xf]
      %v1050 = vld [vmem:[%s300 + $0xc] sm:$0xf]
      %1055 = vrot.lane.b32.xlu0 %v1047, 32
      %v1056 = vpop.permute.xlu0 %1055
      %1057 = vrot.lane.b32.xlu0 %v1048, 32
      %v1058 = vpop.permute.xlu0 %1057
      %1059 = vrot.lane.b32.xlu0 %v1049, 32
      %v1060 = vpop.permute.xlu0 %1059
      %1061 = vrot.lane.b32.xlu0 %v1050, 32
      %v1062 = vpop.permute.xlu0 %1061
      %vm1067 = vcmask 261120
      %v1068 = vsel %vm1067, %v1047, %v1056
      %v1069 = vsel %vm1067, %v1048, %v1058
      %v1070 = vsel %vm1067, %v1049, %v1060
      %v1071 = vsel %vm1067, %v1050, %v1062
      %v1072 = vadd.f32 %v1039, %v1068
      %v1073 = vadd.f32 %v1040, %v1068
      %v1074 = vadd.f32 %v1041, %v1069
      %v1075 = vadd.f32 %v1042, %v1069
      %v1076 = vadd.f32 %v1043, %v1070
      %v1077 = vadd.f32 %v1044, %v1070
      %v1078 = vadd.f32 %v1045, %v1071
      %v1079 = vadd.f32 %v1046, %v1071
      %v1080 = vsel %vm379, %v1072, 0.0
      %v1081 = vsel %vm379, %v1073, 0.0
      %v1082 = vadd.f32 %v1080, %v1081
      %v1083 = vsel %vm379, %v1074, 0.0
      %v1084 = vadd.f32 %v1082, %v1083
      %v1085 = vsel %vm379, %v1075, 0.0
      %v1086 = vadd.f32 %v1084, %v1085
      %v1087 = vsel %vm379, %v1076, 0.0
      %v1088 = vadd.f32 %v1086, %v1087
      %v1089 = vsel %vm379, %v1077, 0.0
      %v1090 = vadd.f32 %v1088, %v1089
      %v1091 = vsel %vm379, %v1078, 0.0
      %v1092 = vadd.f32 %v1090, %v1091
      %v1093 = vsel %vm379, %v1079, 0.0
      %v1094 = vadd.f32 %v1092, %v1093
      %v1095 = vrot.slane %v1094, 4
      %v1096 = vadd.f32 %v1094, %v1095
      %v1097 = vrot.slane %v1096, 2
      %v1098 = vadd.f32 %v1096, %v1097
      %v1099 = vrot.slane %v1098, 1
      %v1100 = vadd.f32 %v1098, %v1099
      %vm1101 = vcmask 516096
      %1102 = vst.msk [vmem:[%s309] sm:$0x1] %vm1101, %v1100
      %v1103 = vmul.f32 %v1072, %v1072
      %v1104 = vmul.f32 %v1073, %v1073
      %v1105 = vmul.f32 %v1074, %v1074
      %v1106 = vmul.f32 %v1075, %v1075
      %v1107 = vmul.f32 %v1076, %v1076
      %v1108 = vmul.f32 %v1077, %v1077
      %v1109 = vmul.f32 %v1078, %v1078
      %v1110 = vmul.f32 %v1079, %v1079
      %v1111 = vsel %vm379, %v1103, 0.0
      %v1112 = vsel %vm379, %v1104, 0.0
      %v1113 = vadd.f32 %v1111, %v1112
      %v1114 = vsel %vm379, %v1105, 0.0
      %v1115 = vadd.f32 %v1113, %v1114
      %v1116 = vsel %vm379, %v1106, 0.0
      %v1117 = vadd.f32 %v1115, %v1116
      %v1118 = vsel %vm379, %v1107, 0.0
      %v1119 = vadd.f32 %v1117, %v1118
      %v1120 = vsel %vm379, %v1108, 0.0
      %v1121 = vadd.f32 %v1119, %v1120
      %v1122 = vsel %vm379, %v1109, 0.0
      %v1123 = vadd.f32 %v1121, %v1122
      %v1124 = vsel %vm379, %v1110, 0.0
      %v1125 = vadd.f32 %v1123, %v1124
      %v1126 = vrot.slane %v1125, 4
      %v1127 = vadd.f32 %v1125, %v1126
      %v1128 = vrot.slane %v1127, 2
      %v1129 = vadd.f32 %v1127, %v1128
      %v1130 = vrot.slane %v1129, 1
      %v1131 = vadd.f32 %v1129, %v1130
      %1132 = vst.msk [vmem:[%s309 + $0x1] sm:$0x1] %vm1101, %v1131
      %1133 = vst.msk [vmem:[%s305] sm:$0xf] %vm379, %v1072
      %1134 = vst.msk [vmem:[%s305 + $0x4] sm:$0xf] %vm379, %v1073
      %1135 = vst.msk [vmem:[%s305 + $0x8] sm:$0xf] %vm379, %v1074
      %1136 = vst.msk [vmem:[%s305 + $0xc] sm:$0xf] %vm379, %v1075
      %1137 = vst.msk [vmem:[%s305 + $0x10] sm:$0xf] %vm379, %v1076
      %1138 = vst.msk [vmem:[%s305 + $0x14] sm:$0xf] %vm379, %v1077
      %1139 = vst.msk [vmem:[%s305 + $0x18] sm:$0xf] %vm379, %v1078
      %1140 = vst.msk [vmem:[%s305 + $0x1c] sm:$0xf] %vm379, %v1079
      %p1141 = scmp.lt.s32.totalorder %s19, 1
      %s1142 = scalar_select %p1141, %s19, 1
      %s1143 = smul.addr %s1142, 8
      %s1144 = smul.addr %s1143, 4
      %s1145 = scalar_lea.vmem %s6, %s1144
      %p1146 = scmp.lt.s32.totalorder %s19, 1
      %s1147 = scalar_select %p1146, %s19, 1
      %s1148 = smul.addr %s1147, 2
      %s1149 = scalar_lea.vmem %s7, %s1148
      // Predicated region
      $region45: #{_lambda_.8} parent=43 // pred_check
        %p1150 = pneg %p173
      $region46: #{_lambda_.8} parent=43 // pred_check_branch
        %1152 = sbr.rel (%p1150) target = $region48
      $region47: #{_lambda_.8} parent=43 // pred_region
        _
      $region48: #{_lambda_.8} parent=43 // pred_fallthru
        _
      // Predicated region
      $region49: #{_lambda_.8} parent=43 // pred_check
        %p1153 = pneg %p199
      $region50: #{_lambda_.8} parent=43 // pred_check_branch
        %1155 = sbr.rel (%p1153) target = $region52
      $region51: #{_lambda_.8} parent=43 // pred_region
        _
      $region52: #{_lambda_.8} parent=43 // pred_fallthru
        _
    $region44: #{_lambda_.8} parent=5 // pred_fallthru
      _
    %p1156 = scmp.le.s32.totalorder 2, %s14
    // Predicated region
    $region53: #{_lambda_.8} parent=5 // pred_check
      %p1157 = pneg %p1156
    $region54: #{_lambda_.8} parent=5 // pred_check_branch
      %1159 = sbr.rel (%p1157) target = $region56
    $region55: #{_lambda_.8} parent=5 // pred_region
      %s1160 = ssub.s32 %s14, 2
      // Predicated region
      $region57: #{_lambda_.8} parent=55 // pred_check
        %p1161 = pneg %p179
      $region58: #{_lambda_.8} parent=55 // pred_check_branch
        %1163 = sbr.rel (%p1161) target = $region60
      $region59: #{_lambda_.8} parent=55 // pred_region
        %p1164 = scmp.lt.s32.totalorder %s20, 1
        %s1165 = scalar_select %p1164, %s20, 1
        %s1166 = smul.addr %s1165, 8
        %s1167 = smul.addr %s1166, 4
        %s1168 = scalar_lea.vmem %s6, %s1167
      $region60: #{_lambda_.8} parent=55 // pred_fallthru
        _
      // Predicated region
      $region61: #{_lambda_.8} parent=55 // pred_check
        %p1169 = pneg %p205
      $region62: #{_lambda_.8} parent=55 // pred_check_branch
        %1171 = sbr.rel (%p1169) target = $region64
      $region63: #{_lambda_.8} parent=55 // pred_region
        %p1172 = scmp.lt.s32.totalorder %s20, 1
        %s1173 = scalar_select %p1172, %s20, 1
        %s1174 = smul.addr %s1173, 2
        %s1175 = scalar_lea.vmem %s7, %s1174
      $region64: #{_lambda_.8} parent=55 // pred_fallthru
        _
    $region56: #{_lambda_.8} parent=5 // pred_fallthru
      _
  $region6: #{_lambda_.8} parent=0 // loop_footer
    %s18 = sadd.s32 1, %s14
  $region7: #{_lambda_.8} parent=0 // loop_footer_branch
    %13 = sbr.rel target = $region3
  $region8: #{_lambda_.8} parent=0 // loop_exit
    _

// kernel: _lambda_.9
$region0: #{_lambda_.9}
  #allocation0 [shape = 'u32[]', space=smem, size = 0x4, offset = 0x4, fixed_abs, tag = 'smem constant byte address 0x4 - core index']
  #allocation1 [shape = 'u32[144,128]{1,0:T(1,128)}', space=vmem, size = 0x12000, scoped, tag = 'internal scratch']
  #allocation2 [shape = 'f32[18,10,32]{2,1,0:T(8,128)}', space=vmem, size = 0x24000, scoped, tag = 'scratch operand']
  %s0 = inlined_call_operand.vmem [shape: f32[2,8,8,32], index: 0, kind: input, shape index: {}]
  %s1 = inlined_call_operand.vmem [shape: f32[1,32], index: 1, kind: input, shape index: {}]
  %s2 = inlined_call_operand.vmem [shape: f32[1,32], index: 2, kind: input, shape index: {}]
  %s3 = inlined_call_operand.vmem [shape: f32[288,64], index: 3, kind: input, shape index: {}]
  %s4 = inlined_call_operand.vmem [shape: f32[1,64], index: 4, kind: input, shape index: {}]
  %s5 = inlined_call_operand.vmem [shape: f32[2,16,8,64], index: 5, kind: output, shape index: {0}]
  %s6 = inlined_call_operand.vmem [shape: f32[2,2,64], index: 6, kind: output, shape index: {1}]
  %7 = xla_tuple %s5, %s6
  %s8 = sld [smem:[#allocation0]]
  $region61: #{_lambda_.9} parent=0
    _
  %s10 = ssub.s32 1, %s8
  %s11 = scalar_select 0, %s10, %s8
  loop: start=0, step=1, limit=4
  $region2: #{_lambda_.9} parent=0 // loop_pre_header
    _
  $region3: #{_lambda_.9} parent=0 // loop_header
    %s13 = sphi 0, %s17
    %p14 = scmp.ge.s32.totalorder %s13, 4
    %s23 = sphi 0, %s25
    %s26 = sphi 0, %s23
    %s27 = sphi 0, %s26
    %s43 = sphi 0, %s27
    %s47 = sphi 0, %s47
    %s49 = sphi 0, %s47
    %s50 = sphi 0, %s49
    %s64 = sphi 0, %s50
    %s68 = sphi 0, %s68
    %s70 = sphi 0, %s68
    %s71 = sphi 0, %s70
    %s85 = sphi 0, %s71
    %s89 = sphi 0, %s89
    %s91 = sphi 0, %s89
    %s92 = sphi 0, %s91
    %s106 = sphi 0, %s92
    %s110 = sphi 0, %s110
    %s112 = sphi 0, %s110
    %s113 = sphi 0, %s112
    %s127 = sphi 0, %s113
    %s133 = sphi 0, %s135
    %s136 = sphi 0, %s133
    %s137 = sphi 0, %s136
    %s153 = sphi 0, %s137
    %s159 = sphi 0, %s161
    %s162 = sphi 0, %s159
    %s163 = sphi 0, %s162
    %s179 = sphi 0, %s163
  $region4: #{_lambda_.9} parent=0 // loop_header_branch
    %16 = sbr.rel (%p14) target = $region8
  $region5: #{_lambda_.9} parent=0 // loop_body
    %s18 = ssub.s32 %s13, 1
    %s19 = ssub.s32 %s13, 2
    %s20 = sadd.s32 %s13, 1
    %s21 = ssub.s32 %s13, %s20
    %p22 = scmp.eq.s32.totalorder %s21, 0
    %s24 = sadd.s32 %s23, 1
    %s25 = scalar_select %p22, %s23, %s24
    %p28 = pneg %p22
    %p29 = scmp.eq.s32.totalorder %s13, 1
    %p30 = por %p28, %p29
    %p31 = scmp.ne.s32.totalorder %s23, %s26
    %p32 = scmp.eq.s32.totalorder %s13, 0
    %p33 = por %p31, %p32
    %p34 = scmp.ne.s32.totalorder %s23, %s26
    %p35 = scmp.eq.s32.totalorder %s18, 1
    %p36 = por %p34, %p35
    %p37 = scmp.ne.s32.totalorder %s26, %s27
    %p38 = scmp.eq.s32.totalorder %s18, 0
    %p39 = por %p37, %p38
    %p40 = scmp.ne.s32.totalorder %s26, %s27
    %p41 = scmp.eq.s32.totalorder %s19, 1
    %p42 = por %p40, %p41
    %p44 = scmp.ne.s32.totalorder %s27, %s43
    %p45 = scmp.eq.s32.totalorder %s19, 0
    %p46 = por %p44, %p45
    %s48 = sadd.s32 %s47, 1
    %p51 = scmp.eq.s32.totalorder %s13, 1
    %p52 = scmp.ne.s32.totalorder %s47, %s49
    %p53 = scmp.eq.s32.totalorder %s13, 0
    %p54 = por %p52, %p53
    %p55 = scmp.ne.s32.totalorder %s47, %s49
    %p56 = scmp.eq.s32.totalorder %s18, 1
    %p57 = por %p55, %p56
    %p58 = scmp.ne.s32.totalorder %s49, %s50
    %p59 = scmp.eq.s32.totalorder %s18, 0
    %p60 = por %p58, %p59
    %p61 = scmp.ne.s32.totalorder %s49, %s50
    %p62 = scmp.eq.s32.totalorder %s19, 1
    %p63 = por %p61, %p62
    %p65 = scmp.ne.s32.totalorder %s50, %s64
    %p66 = scmp.eq.s32.totalorder %s19, 0
    %p67 = por %p65, %p66
    %s69 = sadd.s32 %s68, 1
    %p72 = scmp.eq.s32.totalorder %s13, 1
    %p73 = scmp.ne.s32.totalorder %s68, %s70
    %p74 = scmp.eq.s32.totalorder %s13, 0
    %p75 = por %p73, %p74
    %p76 = scmp.ne.s32.totalorder %s68, %s70
    %p77 = scmp.eq.s32.totalorder %s18, 1
    %p78 = por %p76, %p77
    %p79 = scmp.ne.s32.totalorder %s70, %s71
    %p80 = scmp.eq.s32.totalorder %s18, 0
    %p81 = por %p79, %p80
    %p82 = scmp.ne.s32.totalorder %s70, %s71
    %p83 = scmp.eq.s32.totalorder %s19, 1
    %p84 = por %p82, %p83
    %p86 = scmp.ne.s32.totalorder %s71, %s85
    %p87 = scmp.eq.s32.totalorder %s19, 0
    %p88 = por %p86, %p87
    %s90 = sadd.s32 %s89, 1
    %p93 = scmp.eq.s32.totalorder %s13, 1
    %p94 = scmp.ne.s32.totalorder %s89, %s91
    %p95 = scmp.eq.s32.totalorder %s13, 0
    %p96 = por %p94, %p95
    %p97 = scmp.ne.s32.totalorder %s89, %s91
    %p98 = scmp.eq.s32.totalorder %s18, 1
    %p99 = por %p97, %p98
    %p100 = scmp.ne.s32.totalorder %s91, %s92
    %p101 = scmp.eq.s32.totalorder %s18, 0
    %p102 = por %p100, %p101
    %p103 = scmp.ne.s32.totalorder %s91, %s92
    %p104 = scmp.eq.s32.totalorder %s19, 1
    %p105 = por %p103, %p104
    %p107 = scmp.ne.s32.totalorder %s92, %s106
    %p108 = scmp.eq.s32.totalorder %s19, 0
    %p109 = por %p107, %p108
    %s111 = sadd.s32 %s110, 1
    %p114 = scmp.eq.s32.totalorder %s13, 1
    %p115 = scmp.ne.s32.totalorder %s110, %s112
    %p116 = scmp.eq.s32.totalorder %s13, 0
    %p117 = por %p115, %p116
    %p118 = scmp.ne.s32.totalorder %s110, %s112
    %p119 = scmp.eq.s32.totalorder %s18, 1
    %p120 = por %p118, %p119
    %p121 = scmp.ne.s32.totalorder %s112, %s113
    %p122 = scmp.eq.s32.totalorder %s18, 0
    %p123 = por %p121, %p122
    %p124 = scmp.ne.s32.totalorder %s112, %s113
    %p125 = scmp.eq.s32.totalorder %s19, 1
    %p126 = por %p124, %p125
    %p128 = scmp.ne.s32.totalorder %s113, %s127
    %p129 = scmp.eq.s32.totalorder %s19, 0
    %p130 = por %p128, %p129
    %s131 = ssub.s32 %s13, %s20
    %p132 = scmp.eq.s32.totalorder %s131, 0
    %s134 = sadd.s32 %s133, 1
    %s135 = scalar_select %p132, %s133, %s134
    %p138 = pneg %p132
    %p139 = scmp.eq.s32.totalorder %s13, 1
    %p140 = por %p138, %p139
    %p141 = scmp.ne.s32.totalorder %s133, %s136
    %p142 = scmp.eq.s32.totalorder %s13, 0
    %p143 = por %p141, %p142
    %p144 = scmp.ne.s32.totalorder %s133, %s136
    %p145 = scmp.eq.s32.totalorder %s18, 1
    %p146 = por %p144, %p145
    %p147 = scmp.ne.s32.totalorder %s136, %s137
    %p148 = scmp.eq.s32.totalorder %s18, 0
    %p149 = por %p147, %p148
    %p150 = scmp.ne.s32.totalorder %s136, %s137
    %p151 = scmp.eq.s32.totalorder %s19, 1
    %p152 = por %p150, %p151
    %p154 = scmp.ne.s32.totalorder %s137, %s153
    %p155 = scmp.eq.s32.totalorder %s19, 0
    %p156 = por %p154, %p155
    %s157 = ssub.s32 %s13, %s20
    %p158 = scmp.eq.s32.totalorder %s157, 0
    %s160 = sadd.s32 %s159, 1
    %s161 = scalar_select %p158, %s159, %s160
    %p164 = pneg %p158
    %p165 = scmp.eq.s32.totalorder %s13, 1
    %p166 = por %p164, %p165
    %p167 = scmp.ne.s32.totalorder %s159, %s162
    %p168 = scmp.eq.s32.totalorder %s13, 0
    %p169 = por %p167, %p168
    %p170 = scmp.ne.s32.totalorder %s159, %s162
    %p171 = scmp.eq.s32.totalorder %s18, 1
    %p172 = por %p170, %p171
    %p173 = scmp.ne.s32.totalorder %s162, %s163
    %p174 = scmp.eq.s32.totalorder %s18, 0
    %p175 = por %p173, %p174
    %p176 = scmp.ne.s32.totalorder %s162, %s163
    %p177 = scmp.eq.s32.totalorder %s19, 1
    %p178 = por %p176, %p177
    %p180 = scmp.ne.s32.totalorder %s163, %s179
    %p181 = scmp.eq.s32.totalorder %s19, 0
    %p182 = por %p180, %p181
    %p183 = scmp.le.s32.totalorder 1, %s13
    %p184 = scmp.lt.s32.totalorder %s13, 3
    %p185 = pnand %p183, %p184
    %p186 = pneg %p185
    // Predicated region
    $region9: #{_lambda_.9} parent=5 // pred_check
      _
    $region10: #{_lambda_.9} parent=5 // pred_check_branch
      %188 = sbr.rel (%p185) target = $region12
    $region11: #{_lambda_.9} parent=5 // pred_region
      %s189 = ssub.s32 %s13, 1
      // Predicated region
      $region13: #{_lambda_.9} parent=11 // pred_check
        %p190 = pneg %p60
      $region14: #{_lambda_.9} parent=11 // pred_check_branch
        %192 = sbr.rel (%p190) target = $region16
      $region15: #{_lambda_.9} parent=11 // pred_region
        _
      $region16: #{_lambda_.9} parent=11 // pred_fallthru
        _
      // Predicated region
      $region17: #{_lambda_.9} parent=11 // pred_check
        %p193 = pneg %p81
      $region18: #{_lambda_.9} parent=11 // pred_check_branch
        %195 = sbr.rel (%p193) target = $region20
      $region19: #{_lambda_.9} parent=11 // pred_region
        _
      $region20: #{_lambda_.9} parent=11 // pred_fallthru
        _
      // Predicated region
      $region21: #{_lambda_.9} parent=11 // pred_check
        %p196 = pneg %p102
      $region22: #{_lambda_.9} parent=11 // pred_check_branch
        %198 = sbr.rel (%p196) target = $region24
      $region23: #{_lambda_.9} parent=11 // pred_region
        _
      $region24: #{_lambda_.9} parent=11 // pred_fallthru
        _
      // Predicated region
      $region25: #{_lambda_.9} parent=11 // pred_check
        %p199 = pneg %p123
      $region26: #{_lambda_.9} parent=11 // pred_check_branch
        %201 = sbr.rel (%p199) target = $region28
      $region27: #{_lambda_.9} parent=11 // pred_region
        _
      $region28: #{_lambda_.9} parent=11 // pred_fallthru
        _
    $region12: #{_lambda_.9} parent=5 // pred_fallthru
      _
    %p202 = scmp.lt.s32.totalorder %s13, 2
    // Predicated region
    $region29: #{_lambda_.9} parent=5 // pred_check
      %p203 = pneg %p202
    $region30: #{_lambda_.9} parent=5 // pred_check_branch
      %205 = sbr.rel (%p203) target = $region32
    $region31: #{_lambda_.9} parent=5 // pred_region
      // Predicated region
      $region33: #{_lambda_.9} parent=31 // pred_check
        %p206 = pneg %p33
      $region34: #{_lambda_.9} parent=31 // pred_check_branch
        %208 = sbr.rel (%p206) target = $region36
      $region35: #{_lambda_.9} parent=31 // pred_region
        %p209 = scmp.lt.s32.totalorder %s13, 1
        %s210 = scalar_select %p209, %s13, 1
        %s211 = smul.addr %s210, 8
        %s212 = smul.addr %s211, 8
        %s213 = scalar_lea.vmem %s0, %s212
      $region36: #{_lambda_.9} parent=31 // pred_fallthru
        _
    $region32: #{_lambda_.9} parent=5 // pred_fallthru
      _
    %p214 = scmp.le.s32.totalorder 1, %s13
    %p215 = scmp.lt.s32.totalorder %s13, 3
    %p216 = pnand %p214, %p215
    %p217 = pneg %p216
    // Predicated region
    $region37: #{_lambda_.9} parent=5 // pred_check
      _
    $region38: #{_lambda_.9} parent=5 // pred_check_branch
      %219 = sbr.rel (%p216) target = $region40
    $region39: #{_lambda_.9} parent=5 // pred_region
      %s220 = ssub.s32 %s13, 1
      %p221 = scmp.lt.s32.totalorder %s18, 1
      %s222 = scalar_select %p221, %s18, 1
      %s223 = smul.addr %s222, 8
      %s224 = smul.addr %s223, 8
      %s225 = scalar_lea.vmem %s0, %s224
      %p226 = pneg %p39
      %p227 = pneg %p36
      %p228 = pneg %p60
      %p229 = pneg %p57
      %p230 = pneg %p81
      %p231 = pneg %p78
      %p232 = pneg %p102
      %p233 = pneg %p99
      %p234 = pneg %p123
      %p235 = pneg %p120
      %p236 = pneg %p149
      %p237 = pneg %p146
      %p238 = scmp.lt.s32.totalorder %s18, 1
      %s239 = scalar_select %p238, %s18, 1
      %s240 = smul.addr %s239, 16
      %s241 = smul.addr %s240, 8
      %s242 = scalar_lea.vmem %s5, %s241
      %p243 = pneg %p175
      %p244 = pneg %p172
      %p245 = scmp.lt.s32.totalorder %s18, 1
      %s246 = scalar_select %p245, %s18, 1
      %s247 = smul.addr %s246, 2
      %s248 = scalar_lea.vmem %s6, %s247
      %p249 = scmp.lt.s32.totalorder %s18, 1
      %s250 = scalar_select %p249, %s18, 1
      %s251 = smul.addr %s250, 8
      %s252 = smul.addr %s251, 8
      %s253 = scalar_lea.vmem %s0, %s252
      %p254 = scmp.lt.s32.totalorder %s18, 1
      %s255 = scalar_select %p254, %s18, 1
      %s256 = smul.addr %s255, 16
      %s257 = smul.addr %s256, 8
      %s258 = scalar_lea.vmem %s5, %s257
      %p259 = scmp.lt.s32.totalorder %s18, 1
      %s260 = scalar_select %p259, %s18, 1
      %s261 = smul.addr %s260, 2
      %s262 = scalar_lea.vmem %s6, %s261
      %v263 = vld [vmem:[%s253] sm:$0xff]
      %v264 = vld [vmem:[%s253 + $0x8] sm:$0xff]
      %v265 = vld [vmem:[%s253 + $0x10] sm:$0xff]
      %v266 = vld [vmem:[%s253 + $0x18] sm:$0xff]
      %v267 = vld [vmem:[%s253 + $0x20] sm:$0xff]
      %v268 = vld [vmem:[%s253 + $0x28] sm:$0xff]
      %v269 = vld [vmem:[%s253 + $0x30] sm:$0xff]
      %v270 = vld [vmem:[%s253 + $0x38] sm:$0xff]
      %v271 = vld [vmem:[%s1] sm:$0x1]
      %v273 = vlaneseq
      %v274 = vshrl.u32 %v273, 7
      %v275 = vsub.s32 0, %v274
      %v276 = vrot.slane %v271, %v275
      %v278 = vmul.f32 %v263, %v276
      %v279 = vmul.f32 %v264, %v276
      %v280 = vmul.f32 %v265, %v276
      %v281 = vmul.f32 %v266, %v276
      %v282 = vmul.f32 %v267, %v276
      %v283 = vmul.f32 %v268, %v276
      %v284 = vmul.f32 %v269, %v276
      %v285 = vmul.f32 %v270, %v276
      %v286 = vld [vmem:[%s2] sm:$0x1]
      %v288 = vlaneseq
      %v289 = vshrl.u32 %v288, 7
      %v290 = vsub.s32 0, %v289
      %v291 = vrot.slane %v286, %v290
      %v293 = vadd.f32 %v278, %v291
      %v294 = vadd.f32 %v279, %v291
      %v295 = vadd.f32 %v280, %v291
      %v296 = vadd.f32 %v281, %v291
      %v297 = vadd.f32 %v282, %v291
      %v298 = vadd.f32 %v283, %v291
      %v299 = vadd.f32 %v284, %v291
      %v300 = vadd.f32 %v285, %v291
      %v301 = vmax.f32 %v293, 0.0
      %v302 = vmax.f32 %v294, 0.0
      %v303 = vmax.f32 %v295, 0.0
      %v304 = vmax.f32 %v296, 0.0
      %v305 = vmax.f32 %v297, 0.0
      %v306 = vmax.f32 %v298, 0.0
      %v307 = vmax.f32 %v299, 0.0
      %v308 = vmax.f32 %v300, 0.0
      %vm309 = vcmask 261120
      %310 = vst.msk [vmem:[#allocation2] sm:$0xff] %vm309, 0.0
      %vm311 = vcmask 254976
      %312 = vst.msk [vmem:[#allocation2 + $0x8] sm:$0x3] %vm311, 0.0
      %313 = vst.msk [vmem:[#allocation2 + $0x10] sm:$0xff] %vm309, 0.0
      %314 = vst.msk [vmem:[#allocation2 + $0x18] sm:$0x3] %vm311, 0.0
      %315 = vst.msk [vmem:[#allocation2 + $0x20] sm:$0xff] %vm309, 0.0
      %316 = vst.msk [vmem:[#allocation2 + $0x28] sm:$0x3] %vm311, 0.0
      %317 = vst.msk [vmem:[#allocation2 + $0x30] sm:$0xff] %vm309, 0.0
      %318 = vst.msk [vmem:[#allocation2 + $0x38] sm:$0x3] %vm311, 0.0
      %319 = vst.msk [vmem:[#allocation2 + $0x40] sm:$0xff] %vm309, 0.0
      %320 = vst.msk [vmem:[#allocation2 + $0x48] sm:$0x3] %vm311, 0.0
      %321 = vst.msk [vmem:[#allocation2 + $0x50] sm:$0xff] %vm309, 0.0
      %322 = vst.msk [vmem:[#allocation2 + $0x58] sm:$0x3] %vm311, 0.0
      %323 = vst.msk [vmem:[#allocation2 + $0x60] sm:$0xff] %vm309, 0.0
      %324 = vst.msk [vmem:[#allocation2 + $0x68] sm:$0x3] %vm311, 0.0
      %325 = vst.msk [vmem:[#allocation2 + $0x70] sm:$0xff] %vm309, 0.0
      %326 = vst.msk [vmem:[#allocation2 + $0x78] sm:$0x3] %vm311, 0.0
      %327 = vst.msk [vmem:[#allocation2 + $0x80] sm:$0xff] %vm309, 0.0
      %328 = vst.msk [vmem:[#allocation2 + $0x88] sm:$0x3] %vm311, 0.0
      %329 = vst.msk [vmem:[#allocation2 + $0x90] sm:$0xff] %vm309, 0.0
      %330 = vst.msk [vmem:[#allocation2 + $0x98] sm:$0x3] %vm311, 0.0
      %331 = vst.msk [vmem:[#allocation2 + $0xa0] sm:$0xff] %vm309, 0.0
      %332 = vst.msk [vmem:[#allocation2 + $0xa8] sm:$0x3] %vm311, 0.0
      %333 = vst.msk [vmem:[#allocation2 + $0xb0] sm:$0xff] %vm309, 0.0
      %334 = vst.msk [vmem:[#allocation2 + $0xb8] sm:$0x3] %vm311, 0.0
      %335 = vst.msk [vmem:[#allocation2 + $0xc0] sm:$0xff] %vm309, 0.0
      %336 = vst.msk [vmem:[#allocation2 + $0xc8] sm:$0x3] %vm311, 0.0
      %337 = vst.msk [vmem:[#allocation2 + $0xd0] sm:$0xff] %vm309, 0.0
      %338 = vst.msk [vmem:[#allocation2 + $0xd8] sm:$0x3] %vm311, 0.0
      %339 = vst.msk [vmem:[#allocation2 + $0xe0] sm:$0xff] %vm309, 0.0
      %340 = vst.msk [vmem:[#allocation2 + $0xe8] sm:$0x3] %vm311, 0.0
      %341 = vst.msk [vmem:[#allocation2 + $0xf0] sm:$0xff] %vm309, 0.0
      %342 = vst.msk [vmem:[#allocation2 + $0xf8] sm:$0x3] %vm311, 0.0
      %343 = vst.msk [vmem:[#allocation2 + $0x100] sm:$0xff] %vm309, 0.0
      %344 = vst.msk [vmem:[#allocation2 + $0x108] sm:$0x3] %vm311, 0.0
      %345 = vst.msk [vmem:[#allocation2 + $0x110] sm:$0xff] %vm309, 0.0
      %346 = vst.msk [vmem:[#allocation2 + $0x118] sm:$0x3] %vm311, 0.0
      %s347 = scalar_lea.vmem [#allocation2], 16
      %348 = vst.msk [vmem:[%s347 + $0x1] sm:$0xff] %vm309, %v301
      %349 = vst.msk [vmem:[%s347 + $0x11] sm:$0xff] %vm309, %v301
      %350 = vst.msk [vmem:[%s347 + $0x21] sm:$0xff] %vm309, %v302
      %351 = vst.msk [vmem:[%s347 + $0x31] sm:$0xff] %vm309, %v302
      %352 = vst.msk [vmem:[%s347 + $0x41] sm:$0xff] %vm309, %v303
      %353 = vst.msk [vmem:[%s347 + $0x51] sm:$0xff] %vm309, %v303
      %354 = vst.msk [vmem:[%s347 + $0x61] sm:$0xff] %vm309, %v304
      %355 = vst.msk [vmem:[%s347 + $0x71] sm:$0xff] %vm309, %v304
      %356 = vst.msk [vmem:[%s347 + $0x81] sm:$0xff] %vm309, %v305
      %357 = vst.msk [vmem:[%s347 + $0x91] sm:$0xff] %vm309, %v305
      %358 = vst.msk [vmem:[%s347 + $0xa1] sm:$0xff] %vm309, %v306
      %359 = vst.msk [vmem:[%s347 + $0xb1] sm:$0xff] %vm309, %v306
      %360 = vst.msk [vmem:[%s347 + $0xc1] sm:$0xff] %vm309, %v307
      %361 = vst.msk [vmem:[%s347 + $0xd1] sm:$0xff] %vm309, %v307
      %362 = vst.msk [vmem:[%s347 + $0xe1] sm:$0xff] %vm309, %v308
      %363 = vst.msk [vmem:[%s347 + $0xf1] sm:$0xff] %vm309, %v308
      %v364 = vld [vmem:[#allocation2] sm:$0xff]
      %v365 = vld [vmem:[#allocation2 + $0x10] sm:$0xff]
      %v366 = vld [vmem:[#allocation2 + $0x20] sm:$0xff]
      %v367 = vld [vmem:[#allocation2 + $0x30] sm:$0xff]
      %v368 = vld [vmem:[#allocation2 + $0x40] sm:$0xff]
      %v369 = vld [vmem:[#allocation2 + $0x50] sm:$0xff]
      %v370 = vld [vmem:[#allocation2 + $0x60] sm:$0xff]
      %v371 = vld [vmem:[#allocation2 + $0x70] sm:$0xff]
      %v372 = vld [vmem:[#allocation2 + $0x80] sm:$0xff]
      %v373 = vld [vmem:[#allocation2 + $0x90] sm:$0xff]
      %v374 = vld [vmem:[#allocation2 + $0xa0] sm:$0xff]
      %v375 = vld [vmem:[#allocation2 + $0xb0] sm:$0xff]
      %v376 = vld [vmem:[#allocation2 + $0xc0] sm:$0xff]
      %v377 = vld [vmem:[#allocation2 + $0xd0] sm:$0xff]
      %v378 = vld [vmem:[#allocation2 + $0xe0] sm:$0xff]
      %v379 = vld [vmem:[#allocation2 + $0xf0] sm:$0xff]
      %v380 = vld [vmem:[#allocation2 + $0x1] sm:$0xff]
      %v381 = vld [vmem:[#allocation2 + $0x11] sm:$0xff]
      %v382 = vld [vmem:[#allocation2 + $0x21] sm:$0xff]
      %v383 = vld [vmem:[#allocation2 + $0x31] sm:$0xff]
      %v384 = vld [vmem:[#allocation2 + $0x41] sm:$0xff]
      %v385 = vld [vmem:[#allocation2 + $0x51] sm:$0xff]
      %v386 = vld [vmem:[#allocation2 + $0x61] sm:$0xff]
      %v387 = vld [vmem:[#allocation2 + $0x71] sm:$0xff]
      %v388 = vld [vmem:[#allocation2 + $0x81] sm:$0xff]
      %v389 = vld [vmem:[#allocation2 + $0x91] sm:$0xff]
      %v390 = vld [vmem:[#allocation2 + $0xa1] sm:$0xff]
      %v391 = vld [vmem:[#allocation2 + $0xb1] sm:$0xff]
      %v392 = vld [vmem:[#allocation2 + $0xc1] sm:$0xff]
      %v393 = vld [vmem:[#allocation2 + $0xd1] sm:$0xff]
      %v394 = vld [vmem:[#allocation2 + $0xe1] sm:$0xff]
      %v395 = vld [vmem:[#allocation2 + $0xf1] sm:$0xff]
      %v396 = vld [vmem:[#allocation2 + $0x2] sm:$0xff]
      %v397 = vld [vmem:[#allocation2 + $0x12] sm:$0xff]
      %v398 = vld [vmem:[#allocation2 + $0x22] sm:$0xff]
      %v399 = vld [vmem:[#allocation2 + $0x32] sm:$0xff]
      %v400 = vld [vmem:[#allocation2 + $0x42] sm:$0xff]
      %v401 = vld [vmem:[#allocation2 + $0x52] sm:$0xff]
      %v402 = vld [vmem:[#allocation2 + $0x62] sm:$0xff]
      %v403 = vld [vmem:[#allocation2 + $0x72] sm:$0xff]
      %v404 = vld [vmem:[#allocation2 + $0x82] sm:$0xff]
      %v405 = vld [vmem:[#allocation2 + $0x92] sm:$0xff]
      %v406 = vld [vmem:[#allocation2 + $0xa2] sm:$0xff]
      %v407 = vld [vmem:[#allocation2 + $0xb2] sm:$0xff]
      %v408 = vld [vmem:[#allocation2 + $0xc2] sm:$0xff]
      %v409 = vld [vmem:[#allocation2 + $0xd2] sm:$0xff]
      %v410 = vld [vmem:[#allocation2 + $0xe2] sm:$0xff]
      %v411 = vld [vmem:[#allocation2 + $0xf2] sm:$0xff]
      %v412 = vld [vmem:[%s347] sm:$0xff]
      %v413 = vld [vmem:[%s347 + $0x10] sm:$0xff]
      %v414 = vld [vmem:[%s347 + $0x20] sm:$0xff]
      %v415 = vld [vmem:[%s347 + $0x30] sm:$0xff]
      %v416 = vld [vmem:[%s347 + $0x40] sm:$0xff]
      %v417 = vld [vmem:[%s347 + $0x50] sm:$0xff]
      %v418 = vld [vmem:[%s347 + $0x60] sm:$0xff]
      %v419 = vld [vmem:[%s347 + $0x70] sm:$0xff]
      %v420 = vld [vmem:[%s347 + $0x80] sm:$0xff]
      %v421 = vld [vmem:[%s347 + $0x90] sm:$0xff]
      %v422 = vld [vmem:[%s347 + $0xa0] sm:$0xff]
      %v423 = vld [vmem:[%s347 + $0xb0] sm:$0xff]
      %v424 = vld [vmem:[%s347 + $0xc0] sm:$0xff]
      %v425 = vld [vmem:[%s347 + $0xd0] sm:$0xff]
      %v426 = vld [vmem:[%s347 + $0xe0] sm:$0xff]
      %v427 = vld [vmem:[%s347 + $0xf0] sm:$0xff]
      %v428 = vld [vmem:[%s347 + $0x1] sm:$0xff]
      %v429 = vld [vmem:[%s347 + $0x11] sm:$0xff]
      %v430 = vld [vmem:[%s347 + $0x21] sm:$0xff]
      %v431 = vld [vmem:[%s347 + $0x31] sm:$0xff]
      %v432 = vld [vmem:[%s347 + $0x41] sm:$0xff]
      %v433 = vld [vmem:[%s347 + $0x51] sm:$0xff]
      %v434 = vld [vmem:[%s347 + $0x61] sm:$0xff]
      %v435 = vld [vmem:[%s347 + $0x71] sm:$0xff]
      %v436 = vld [vmem:[%s347 + $0x81] sm:$0xff]
      %v437 = vld [vmem:[%s347 + $0x91] sm:$0xff]
      %v438 = vld [vmem:[%s347 + $0xa1] sm:$0xff]
      %v439 = vld [vmem:[%s347 + $0xb1] sm:$0xff]
      %v440 = vld [vmem:[%s347 + $0xc1] sm:$0xff]
      %v441 = vld [vmem:[%s347 + $0xd1] sm:$0xff]
      %v442 = vld [vmem:[%s347 + $0xe1] sm:$0xff]
      %v443 = vld [vmem:[%s347 + $0xf1] sm:$0xff]
      %v444 = vld [vmem:[%s347 + $0x2] sm:$0xff]
      %v445 = vld [vmem:[%s347 + $0x12] sm:$0xff]
      %v446 = vld [vmem:[%s347 + $0x22] sm:$0xff]
      %v447 = vld [vmem:[%s347 + $0x32] sm:$0xff]
      %v448 = vld [vmem:[%s347 + $0x42] sm:$0xff]
      %v449 = vld [vmem:[%s347 + $0x52] sm:$0xff]
      %v450 = vld [vmem:[%s347 + $0x62] sm:$0xff]
      %v451 = vld [vmem:[%s347 + $0x72] sm:$0xff]
      %v452 = vld [vmem:[%s347 + $0x82] sm:$0xff]
      %v453 = vld [vmem:[%s347 + $0x92] sm:$0xff]
      %v454 = vld [vmem:[%s347 + $0xa2] sm:$0xff]
      %v455 = vld [vmem:[%s347 + $0xb2] sm:$0xff]
      %v456 = vld [vmem:[%s347 + $0xc2] sm:$0xff]
      %v457 = vld [vmem:[%s347 + $0xd2] sm:$0xff]
      %v458 = vld [vmem:[%s347 + $0xe2] sm:$0xff]
      %v459 = vld [vmem:[%s347 + $0xf2] sm:$0xff]
      %s460 = scalar_lea.vmem [#allocation2], 32
      %v461 = vld [vmem:[%s460] sm:$0xff]
      %v462 = vld [vmem:[%s460 + $0x10] sm:$0xff]
      %v463 = vld [vmem:[%s460 + $0x20] sm:$0xff]
      %v464 = vld [vmem:[%s460 + $0x30] sm:$0xff]
      %v465 = vld [vmem:[%s460 + $0x40] sm:$0xff]
      %v466 = vld [vmem:[%s460 + $0x50] sm:$0xff]
      %v467 = vld [vmem:[%s460 + $0x60] sm:$0xff]
      %v468 = vld [vmem:[%s460 + $0x70] sm:$0xff]
      %v469 = vld [vmem:[%s460 + $0x80] sm:$0xff]
      %v470 = vld [vmem:[%s460 + $0x90] sm:$0xff]
      %v471 = vld [vmem:[%s460 + $0xa0] sm:$0xff]
      %v472 = vld [vmem:[%s460 + $0xb0] sm:$0xff]
      %v473 = vld [vmem:[%s460 + $0xc0] sm:$0xff]
      %v474 = vld [vmem:[%s460 + $0xd0] sm:$0xff]
      %v475 = vld [vmem:[%s460 + $0xe0] sm:$0xff]
      %v476 = vld [vmem:[%s460 + $0xf0] sm:$0xff]
      %v477 = vld [vmem:[%s460 + $0x1] sm:$0xff]
      %v478 = vld [vmem:[%s460 + $0x11] sm:$0xff]
      %v479 = vld [vmem:[%s460 + $0x21] sm:$0xff]
      %v480 = vld [vmem:[%s460 + $0x31] sm:$0xff]
      %v481 = vld [vmem:[%s460 + $0x41] sm:$0xff]
      %v482 = vld [vmem:[%s460 + $0x51] sm:$0xff]
      %v483 = vld [vmem:[%s460 + $0x61] sm:$0xff]
      %v484 = vld [vmem:[%s460 + $0x71] sm:$0xff]
      %v485 = vld [vmem:[%s460 + $0x81] sm:$0xff]
      %v486 = vld [vmem:[%s460 + $0x91] sm:$0xff]
      %v487 = vld [vmem:[%s460 + $0xa1] sm:$0xff]
      %v488 = vld [vmem:[%s460 + $0xb1] sm:$0xff]
      %v489 = vld [vmem:[%s460 + $0xc1] sm:$0xff]
      %v490 = vld [vmem:[%s460 + $0xd1] sm:$0xff]
      %v491 = vld [vmem:[%s460 + $0xe1] sm:$0xff]
      %v492 = vld [vmem:[%s460 + $0xf1] sm:$0xff]
      %v493 = vld [vmem:[%s460 + $0x2] sm:$0xff]
      %v494 = vld [vmem:[%s460 + $0x12] sm:$0xff]
      %v495 = vld [vmem:[%s460 + $0x22] sm:$0xff]
      %v496 = vld [vmem:[%s460 + $0x32] sm:$0xff]
      %v497 = vld [vmem:[%s460 + $0x42] sm:$0xff]
      %v498 = vld [vmem:[%s460 + $0x52] sm:$0xff]
      %v499 = vld [vmem:[%s460 + $0x62] sm:$0xff]
      %v500 = vld [vmem:[%s460 + $0x72] sm:$0xff]
      %v501 = vld [vmem:[%s460 + $0x82] sm:$0xff]
      %v502 = vld [vmem:[%s460 + $0x92] sm:$0xff]
      %v503 = vld [vmem:[%s460 + $0xa2] sm:$0xff]
      %v504 = vld [vmem:[%s460 + $0xb2] sm:$0xff]
      %v505 = vld [vmem:[%s460 + $0xc2] sm:$0xff]
      %v506 = vld [vmem:[%s460 + $0xd2] sm:$0xff]
      %v507 = vld [vmem:[%s460 + $0xe2] sm:$0xff]
      %v508 = vld [vmem:[%s460 + $0xf2] sm:$0xff]
      %525 = vrot.lane.b32.xlu0 %v380, 32
      %v526 = vpop.permute.xlu0 %525
      %527 = vrot.lane.b32.xlu0 %v381, 32
      %v528 = vpop.permute.xlu0 %527
      %529 = vrot.lane.b32.xlu0 %v382, 32
      %v530 = vpop.permute.xlu0 %529
      %531 = vrot.lane.b32.xlu0 %v383, 32
      %v532 = vpop.permute.xlu0 %531
      %533 = vrot.lane.b32.xlu0 %v384, 32
      %v534 = vpop.permute.xlu0 %533
      %535 = vrot.lane.b32.xlu0 %v385, 32
      %v536 = vpop.permute.xlu0 %535
      %537 = vrot.lane.b32.xlu0 %v386, 32
      %v538 = vpop.permute.xlu0 %537
      %539 = vrot.lane.b32.xlu0 %v387, 32
      %v540 = vpop.permute.xlu0 %539
      %541 = vrot.lane.b32.xlu0 %v388, 32
      %v542 = vpop.permute.xlu0 %541
      %543 = vrot.lane.b32.xlu0 %v389, 32
      %v544 = vpop.permute.xlu0 %543
      %545 = vrot.lane.b32.xlu0 %v390, 32
      %v546 = vpop.permute.xlu0 %545
      %547 = vrot.lane.b32.xlu0 %v391, 32
      %v548 = vpop.permute.xlu0 %547
      %549 = vrot.lane.b32.xlu0 %v392, 32
      %v550 = vpop.permute.xlu0 %549
      %551 = vrot.lane.b32.xlu0 %v393, 32
      %v552 = vpop.permute.xlu0 %551
      %553 = vrot.lane.b32.xlu0 %v394, 32
      %v554 = vpop.permute.xlu0 %553
      %555 = vrot.lane.b32.xlu0 %v395, 32
      %v556 = vpop.permute.xlu0 %555
      %589 = vrot.lane.b32.xlu0 %v396, 64
      %v590 = vpop.permute.xlu0 %589
      %591 = vrot.lane.b32.xlu0 %v397, 64
      %v592 = vpop.permute.xlu0 %591
      %593 = vrot.lane.b32.xlu0 %v398, 64
      %v594 = vpop.permute.xlu0 %593
      %595 = vrot.lane.b32.xlu0 %v399, 64
      %v596 = vpop.permute.xlu0 %595
      %597 = vrot.lane.b32.xlu0 %v400, 64
      %v598 = vpop.permute.xlu0 %597
      %599 = vrot.lane.b32.xlu0 %v401, 64
      %v600 = vpop.permute.xlu0 %599
      %601 = vrot.lane.b32.xlu0 %v402, 64
      %v602 = vpop.permute.xlu0 %601
      %603 = vrot.lane.b32.xlu0 %v403, 64
      %v604 = vpop.permute.xlu0 %603
      %605 = vrot.lane.b32.xlu0 %v404, 64
      %v606 = vpop.permute.xlu0 %605
      %607 = vrot.lane.b32.xlu0 %v405, 64
      %v608 = vpop.permute.xlu0 %607
      %609 = vrot.lane.b32.xlu0 %v406, 64
      %v610 = vpop.permute.xlu0 %609
      %611 = vrot.lane.b32.xlu0 %v407, 64
      %v612 = vpop.permute.xlu0 %611
      %613 = vrot.lane.b32.xlu0 %v408, 64
      %v614 = vpop.permute.xlu0 %613
      %615 = vrot.lane.b32.xlu0 %v409, 64
      %v616 = vpop.permute.xlu0 %615
      %617 = vrot.lane.b32.xlu0 %v410, 64
      %v618 = vpop.permute.xlu0 %617
      %619 = vrot.lane.b32.xlu0 %v411, 64
      %v620 = vpop.permute.xlu0 %619
      %653 = vrot.lane.b32.xlu0 %v412, 96
      %v654 = vpop.permute.xlu0 %653
      %655 = vrot.lane.b32.xlu0 %v413, 96
      %v656 = vpop.permute.xlu0 %655
      %657 = vrot.lane.b32.xlu0 %v414, 96
      %v658 = vpop.permute.xlu0 %657
      %659 = vrot.lane.b32.xlu0 %v415, 96
      %v660 = vpop.permute.xlu0 %659
      %661 = vrot.lane.b32.xlu0 %v416, 96
      %v662 = vpop.permute.xlu0 %661
      %663 = vrot.lane.b32.xlu0 %v417, 96
      %v664 = vpop.permute.xlu0 %663
      %665 = vrot.lane.b32.xlu0 %v418, 96
      %v666 = vpop.permute.xlu0 %665
      %667 = vrot.lane.b32.xlu0 %v419, 96
      %v668 = vpop.permute.xlu0 %667
      %669 = vrot.lane.b32.xlu0 %v420, 96
      %v670 = vpop.permute.xlu0 %669
      %671 = vrot.lane.b32.xlu0 %v421, 96
      %v672 = vpop.permute.xlu0 %671
      %673 = vrot.lane.b32.xlu0 %v422, 96
      %v674 = vpop.permute.xlu0 %673
      %675 = vrot.lane.b32.xlu0 %v423, 96
      %v676 = vpop.permute.xlu0 %675
      %677 = vrot.lane.b32.xlu0 %v424, 96
      %v678 = vpop.permute.xlu0 %677
      %679 = vrot.lane.b32.xlu0 %v425, 96
      %v680 = vpop.permute.xlu0 %679
      %681 = vrot.lane.b32.xlu0 %v426, 96
      %v682 = vpop.permute.xlu0 %681
      %683 = vrot.lane.b32.xlu0 %v427, 96
      %v684 = vpop.permute.xlu0 %683
      %717 = vrot.lane.b32.xlu0 %v444, 32
      %v718 = vpop.permute.xlu0 %717
      %719 = vrot.lane.b32.xlu0 %v445, 32
      %v720 = vpop.permute.xlu0 %719
      %721 = vrot.lane.b32.xlu0 %v446, 32
      %v722 = vpop.permute.xlu0 %721
      %723 = vrot.lane.b32.xlu0 %v447, 32
      %v724 = vpop.permute.xlu0 %723
      %725 = vrot.lane.b32.xlu0 %v448, 32
      %v726 = vpop.permute.xlu0 %725
      %727 = vrot.lane.b32.xlu0 %v449, 32
      %v728 = vpop.permute.xlu0 %727
      %729 = vrot.lane.b32.xlu0 %v450, 32
      %v730 = vpop.permute.xlu0 %729
      %731 = vrot.lane.b32.xlu0 %v451, 32
      %v732 = vpop.permute.xlu0 %731
      %733 = vrot.lane.b32.xlu0 %v452, 32
      %v734 = vpop.permute.xlu0 %733
      %735 = vrot.lane.b32.xlu0 %v453, 32
      %v736 = vpop.permute.xlu0 %735
      %737 = vrot.lane.b32.xlu0 %v454, 32
      %v738 = vpop.permute.xlu0 %737
      %739 = vrot.lane.b32.xlu0 %v455, 32
      %v740 = vpop.permute.xlu0 %739
      %741 = vrot.lane.b32.xlu0 %v456, 32
      %v742 = vpop.permute.xlu0 %741
      %743 = vrot.lane.b32.xlu0 %v457, 32
      %v744 = vpop.permute.xlu0 %743
      %745 = vrot.lane.b32.xlu0 %v458, 32
      %v746 = vpop.permute.xlu0 %745
      %747 = vrot.lane.b32.xlu0 %v459, 32
      %v748 = vpop.permute.xlu0 %747
      %781 = vrot.lane.b32.xlu0 %v461, 64
      %v782 = vpop.permute.xlu0 %781
      %783 = vrot.lane.b32.xlu0 %v462, 64
      %v784 = vpop.permute.xlu0 %783
      %785 = vrot.lane.b32.xlu0 %v463, 64
      %v786 = vpop.permute.xlu0 %785
      %787 = vrot.lane.b32.xlu0 %v464, 64
      %v788 = vpop.permute.xlu0 %787
      %789 = vrot.lane.b32.xlu0 %v465, 64
      %v790 = vpop.permute.xlu0 %789
      %791 = vrot.lane.b32.xlu0 %v466, 64
      %v792 = vpop.permute.xlu0 %791
      %793 = vrot.lane.b32.xlu0 %v467, 64
      %v794 = vpop.permute.xlu0 %793
      %795 = vrot.lane.b32.xlu0 %v468, 64
      %v796 = vpop.permute.xlu0 %795
      %797 = vrot.lane.b32.xlu0 %v469, 64
      %v798 = vpop.permute.xlu0 %797
      %799 = vrot.lane.b32.xlu0 %v470, 64
      %v800 = vpop.permute.xlu0 %799
      %801 = vrot.lane.b32.xlu0 %v471, 64
      %v802 = vpop.permute.xlu0 %801
      %803 = vrot.lane.b32.xlu0 %v472, 64
      %v804 = vpop.permute.xlu0 %803
      %805 = vrot.lane.b32.xlu0 %v473, 64
      %v806 = vpop.permute.xlu0 %805
      %807 = vrot.lane.b32.xlu0 %v474, 64
      %v808 = vpop.permute.xlu0 %807
      %809 = vrot.lane.b32.xlu0 %v475, 64
      %v810 = vpop.permute.xlu0 %809
      %811 = vrot.lane.b32.xlu0 %v476, 64
      %v812 = vpop.permute.xlu0 %811
      %845 = vrot.lane.b32.xlu0 %v477, 96
      %v846 = vpop.permute.xlu0 %845
      %847 = vrot.lane.b32.xlu0 %v478, 96
      %v848 = vpop.permute.xlu0 %847
      %849 = vrot.lane.b32.xlu0 %v479, 96
      %v850 = vpop.permute.xlu0 %849
      %851 = vrot.lane.b32.xlu0 %v480, 96
      %v852 = vpop.permute.xlu0 %851
      %853 = vrot.lane.b32.xlu0 %v481, 96
      %v854 = vpop.permute.xlu0 %853
      %855 = vrot.lane.b32.xlu0 %v482, 96
      %v856 = vpop.permute.xlu0 %855
      %857 = vrot.lane.b32.xlu0 %v483, 96
      %v858 = vpop.permute.xlu0 %857
      %859 = vrot.lane.b32.xlu0 %v484, 96
      %v860 = vpop.permute.xlu0 %859
      %861 = vrot.lane.b32.xlu0 %v485, 96
      %v862 = vpop.permute.xlu0 %861
      %863 = vrot.lane.b32.xlu0 %v486, 96
      %v864 = vpop.permute.xlu0 %863
      %865 = vrot.lane.b32.xlu0 %v487, 96
      %v866 = vpop.permute.xlu0 %865
      %867 = vrot.lane.b32.xlu0 %v488, 96
      %v868 = vpop.permute.xlu0 %867
      %869 = vrot.lane.b32.xlu0 %v489, 96
      %v870 = vpop.permute.xlu0 %869
      %871 = vrot.lane.b32.xlu0 %v490, 96
      %v872 = vpop.permute.xlu0 %871
      %873 = vrot.lane.b32.xlu0 %v491, 96
      %v874 = vpop.permute.xlu0 %873
      %875 = vrot.lane.b32.xlu0 %v492, 96
      %v876 = vpop.permute.xlu0 %875
      %v893 = vsel %vm309, %v364, %v526
      %v894 = vsel %vm309, %v365, %v528
      %v895 = vsel %vm309, %v366, %v530
      %v896 = vsel %vm309, %v367, %v532
      %v897 = vsel %vm309, %v368, %v534
      %v898 = vsel %vm309, %v369, %v536
      %v899 = vsel %vm309, %v370, %v538
      %v900 = vsel %vm309, %v371, %v540
      %v901 = vsel %vm309, %v372, %v542
      %v902 = vsel %vm309, %v373, %v544
      %v903 = vsel %vm309, %v374, %v546
      %v904 = vsel %vm309, %v375, %v548
      %v905 = vsel %vm309, %v376, %v550
      %v906 = vsel %vm309, %v377, %v552
      %v907 = vsel %vm309, %v378, %v554
      %v908 = vsel %vm309, %v379, %v556
      %vm909 = vcmask 523264
      %v910 = vsel %vm909, %v893, %v590
      %v911 = vsel %vm909, %v894, %v592
      %v912 = vsel %vm909, %v895, %v594
      %v913 = vsel %vm909, %v896, %v596
      %v914 = vsel %vm909, %v897, %v598
      %v915 = vsel %vm909, %v898, %v600
      %v916 = vsel %vm909, %v899, %v602
      %v917 = vsel %vm909, %v900, %v604
      %v918 = vsel %vm909, %v901, %v606
      %v919 = vsel %vm909, %v902, %v608
      %v920 = vsel %vm909, %v903, %v610
      %v921 = vsel %vm909, %v904, %v612
      %v922 = vsel %vm909, %v905, %v614
      %v923 = vsel %vm909, %v906, %v616
      %v924 = vsel %vm909, %v907, %v618
      %v925 = vsel %vm909, %v908, %v620
      %vm926 = vcmask 785408
      %v927 = vsel %vm926, %v910, %v654
      %v928 = vsel %vm926, %v911, %v656
      %v929 = vsel %vm926, %v912, %v658
      %v930 = vsel %vm926, %v913, %v660
      %v931 = vsel %vm926, %v914, %v662
      %v932 = vsel %vm926, %v915, %v664
      %v933 = vsel %vm926, %v916, %v666
      %v934 = vsel %vm926, %v917, %v668
      %v935 = vsel %vm926, %v918, %v670
      %v936 = vsel %vm926, %v919, %v672
      %v937 = vsel %vm926, %v920, %v674
      %v938 = vsel %vm926, %v921, %v676
      %v939 = vsel %vm926, %v922, %v678
      %v940 = vsel %vm926, %v923, %v680
      %v941 = vsel %vm926, %v924, %v682
      %v942 = vsel %vm926, %v925, %v684
      %v943 = vsel %vm309, %v428, %v718
      %v944 = vsel %vm309, %v429, %v720
      %v945 = vsel %vm309, %v430, %v722
      %v946 = vsel %vm309, %v431, %v724
      %v947 = vsel %vm309, %v432, %v726
      %v948 = vsel %vm309, %v433, %v728
      %v949 = vsel %vm309, %v434, %v730
      %v950 = vsel %vm309, %v435, %v732
      %v951 = vsel %vm309, %v436, %v734
      %v952 = vsel %vm309, %v437, %v736
      %v953 = vsel %vm309, %v438, %v738
      %v954 = vsel %vm309, %v439, %v740
      %v955 = vsel %vm309, %v440, %v742
      %v956 = vsel %vm309, %v441, %v744
      %v957 = vsel %vm309, %v442, %v746
      %v958 = vsel %vm309, %v443, %v748
      %v959 = vsel %vm909, %v943, %v782
      %v960 = vsel %vm909, %v944, %v784
      %v961 = vsel %vm909, %v945, %v786
      %v962 = vsel %vm909, %v946, %v788
      %v963 = vsel %vm909, %v947, %v790
      %v964 = vsel %vm909, %v948, %v792
      %v965 = vsel %vm909, %v949, %v794
      %v966 = vsel %vm909, %v950, %v796
      %v967 = vsel %vm909, %v951, %v798
      %v968 = vsel %vm909, %v952, %v800
      %v969 = vsel %vm909, %v953, %v802
      %v970 = vsel %vm909, %v954, %v804
      %v971 = vsel %vm909, %v955, %v806
      %v972 = vsel %vm909, %v956, %v808
      %v973 = vsel %vm909, %v957, %v810
      %v974 = vsel %vm909, %v958, %v812
      %v975 = vsel %vm926, %v959, %v846
      %v976 = vsel %vm926, %v960, %v848
      %v977 = vsel %vm926, %v961, %v850
      %v978 = vsel %vm926, %v962, %v852
      %v979 = vsel %vm926, %v963, %v854
      %v980 = vsel %vm926, %v964, %v856
      %v981 = vsel %vm926, %v965, %v858
      %v982 = vsel %vm926, %v966, %v860
      %v983 = vsel %vm926, %v967, %v862
      %v984 = vsel %vm926, %v968, %v864
      %v985 = vsel %vm926, %v969, %v866
      %v986 = vsel %vm926, %v970, %v868
      %v987 = vsel %vm926, %v971, %v870
      %v988 = vsel %vm926, %v972, %v872
      %v989 = vsel %vm926, %v973, %v874
      %v990 = vsel %vm926, %v974, %v876
      %v991 = vld [vmem:[%s3] sm:$0xff]
      %v992 = vld [vmem:[%s3 + $0x8] sm:$0xff]
      %v993 = vld [vmem:[%s3 + $0x10] sm:$0xff]
      %v994 = vld [vmem:[%s3 + $0x18] sm:$0xff]
      %v995 = vld [vmem:[%s3 + $0x20] sm:$0xff]
      %v996 = vld [vmem:[%s3 + $0x28] sm:$0xff]
      %v997 = vld [vmem:[%s3 + $0x30] sm:$0xff]
      %v998 = vld [vmem:[%s3 + $0x38] sm:$0xff]
      %v999 = vld [vmem:[%s3 + $0x40] sm:$0xff]
      %v1000 = vld [vmem:[%s3 + $0x48] sm:$0xff]
      %v1001 = vld [vmem:[%s3 + $0x50] sm:$0xff]
      %v1002 = vld [vmem:[%s3 + $0x58] sm:$0xff]
      %v1003 = vld [vmem:[%s3 + $0x60] sm:$0xff]
      %v1004 = vld [vmem:[%s3 + $0x68] sm:$0xff]
      %v1005 = vld [vmem:[%s3 + $0x70] sm:$0xff]
      %v1006 = vld [vmem:[%s3 + $0x78] sm:$0xff]
      %v1007 = vld [vmem:[%s3 + $0x80] sm:$0xff]
      %v1008 = vld [vmem:[%s3 + $0x88] sm:$0xff]
      %v1009 = vld [vmem:[%s3 + $0x90] sm:$0xff]
      %v1010 = vld [vmem:[%s3 + $0x98] sm:$0xff]
      %v1011 = vld [vmem:[%s3 + $0xa0] sm:$0xff]
      %v1012 = vld [vmem:[%s3 + $0xa8] sm:$0xff]
      %v1013 = vld [vmem:[%s3 + $0xb0] sm:$0xff]
      %v1014 = vld [vmem:[%s3 + $0xb8] sm:$0xff]
      %v1015 = vld [vmem:[%s3 + $0xc0] sm:$0xff]
      %v1016 = vld [vmem:[%s3 + $0xc8] sm:$0xff]
      %v1017 = vld [vmem:[%s3 + $0xd0] sm:$0xff]
      %v1018 = vld [vmem:[%s3 + $0xd8] sm:$0xff]
      %v1019 = vld [vmem:[%s3 + $0xe0] sm:$0xff]
      %v1020 = vld [vmem:[%s3 + $0xe8] sm:$0xff]
      %v1021 = vld [vmem:[%s3 + $0xf0] sm:$0xff]
      %v1022 = vld [vmem:[%s3 + $0xf8] sm:$0xff]
      %v1023 = vld [vmem:[%s3 + $0x100] sm:$0xff]
      %v1024 = vld [vmem:[%s3 + $0x108] sm:$0xff]
      %v1025 = vld [vmem:[%s3 + $0x110] sm:$0xff]
      %v1026 = vld [vmem:[%s3 + $0x118] sm:$0xff]
      %v1028 = vsel %vm309, %v493, 0
      %v1031 = vsel %vm309, %v494, 0
      %v1034 = vsel %vm309, %v495, 0
      %v1037 = vsel %vm309, %v496, 0
      %v1040 = vsel %vm309, %v497, 0
      %v1043 = vsel %vm309, %v498, 0
      %v1046 = vsel %vm309, %v499, 0
      %v1049 = vsel %vm309, %v500, 0
      %v1052 = vsel %vm309, %v501, 0
      %v1055 = vsel %vm309, %v502, 0
      %v1058 = vsel %vm309, %v503, 0
      %v1061 = vsel %vm309, %v504, 0
      %v1064 = vsel %vm309, %v505, 0
      %v1067 = vsel %vm309, %v506, 0
      %v1070 = vsel %vm309, %v507, 0
      %v1073 = vsel %vm309, %v508, 0
      %1075 = vmatprep.subr.mxu0 0.0
      %1076 = vmatpush1.msra.mxu0 %v991
      %1077 = vmatprep.subr.mxu0 0.0
      %1078 = vmatpush1.msra.mxu0 %v992
      %1079 = vmatprep.subr.mxu0 0.0
      %1080 = vmatpush1.msra.mxu0 %v993
      %1081 = vmatprep.subr.mxu0 0.0
      %1082 = vmatpush1.msra.mxu0 %v994
      %1083 = vmatprep.subr.mxu0 0.0
      %1084 = vmatpush1.msra.mxu0 %v995
      %1085 = vmatprep.subr.mxu0 0.0
      %1086 = vmatpush1.msra.mxu0 %v996
      %1087 = vmatprep.subr.mxu0 0.0
      %1088 = vmatpush1.msra.mxu0 %v997
      %1089 = vmatprep.subr.mxu0 0.0
      %1090 = vmatpush1.msra.mxu0 %v998
      %1091 = vmatprep.subr.mxu0 0.0
      %1092 = vmatpush1.msra.mxu0 %v999
      %1093 = vmatprep.subr.mxu0 0.0
      %1094 = vmatpush1.msra.mxu0 %v1000
      %1095 = vmatprep.subr.mxu0 0.0
      %1096 = vmatpush1.msra.mxu0 %v1001
      %1097 = vmatprep.subr.mxu0 0.0
      %1098 = vmatpush1.msra.mxu0 %v1002
      %1099 = vmatprep.subr.mxu0 0.0
      %1100 = vmatpush1.msra.mxu0 %v1003
      %1101 = vmatprep.subr.mxu0 0.0
      %1102 = vmatpush1.msra.mxu0 %v1004
      %1103 = vmatprep.subr.mxu0 0.0
      %1104 = vmatpush1.msra.mxu0 %v1005
      %1105 = vmatprep.subr.mxu0 0.0
      %1106 = vmatpush1.msra.mxu0 %v1006
      %1107 = vmatprep.subr.mxu0 0.0
      %1108 = vmatpush1.msra.mxu0 %v1007
      %1109 = vmatprep.subr.mxu0 0.0
      %1110 = vmatpush1.msra.mxu0 %v1008
      %1111 = vmatprep.subr.mxu0 0.0
      %1112 = vmatpush1.msra.mxu0 %v1009
      %1113 = vmatprep.subr.mxu0 0.0
      %1114 = vmatpush1.msra.mxu0 %v1010
      %1115 = vmatprep.subr.mxu0 0.0
      %1116 = vmatpush1.msra.mxu0 %v1011
      %1117 = vmatprep.subr.mxu0 0.0
      %1118 = vmatpush1.msra.mxu0 %v1012
      %1119 = vmatprep.subr.mxu0 0.0
      %1120 = vmatpush1.msra.mxu0 %v1013
      %1121 = vmatprep.subr.mxu0 0.0
      %1122 = vmatpush1.msra.mxu0 %v1014
      %1123 = vmatprep.subr.mxu0 0.0
      %1124 = vmatpush1.msra.mxu0 %v1015
      %1125 = vmatprep.subr.mxu0 0.0
      %1126 = vmatpush1.msra.mxu0 %v1016
      %1127 = vmatprep.subr.mxu0 0.0
      %1128 = vmatpush1.msra.mxu0 %v1017
      %1129 = vmatprep.subr.mxu0 0.0
      %1130 = vmatpush1.msra.mxu0 %v1018
      %1131 = vmatprep.subr.mxu0 0.0
      %1132 = vmatpush1.msra.mxu0 %v1019
      %1133 = vmatprep.subr.mxu0 0.0
      %1134 = vmatpush1.msra.mxu0 %v1020
      %1135 = vmatprep.subr.mxu0 0.0
      %1136 = vmatpush1.msra.mxu0 %v1021
      %1137 = vmatprep.subr.mxu0 0.0
      %1138 = vmatpush1.msra.mxu0 %v1022
      %1139 = vmatprep.mubr.f32.mxu0 %v975
      %1140 = vmatmul.mubr.f32.gmra.mrb[0].mxu0 %v927
      %v1141 = vpop.f32.mrb[0].mxu0
      %v1142 = vadd.f32 0.0, %v1141
      %v1143 = vpop.f32.mrb[0].mxu0
      %1144 = vmatprep.mubr.f32.mxu0 %v976
      %1145 = vmatmul.mubr.f32.gmra.mrb[0].mxu0 %v928
      %v1146 = vpop.f32.mrb[0].mxu0
      %v1147 = vadd.f32 0.0, %v1146
      %v1148 = vpop.f32.mrb[0].mxu0
      %1149 = vmatprep.mubr.f32.mxu0 %v977
      %1150 = vmatmul.mubr.f32.gmra.mrb[0].mxu0 %v929
      %v1151 = vpop.f32.mrb[0].mxu0
      %v1152 = vadd.f32 0.0, %v1151
      %v1153 = vpop.f32.mrb[0].mxu0
      %1154 = vmatprep.mubr.f32.mxu0 %v978
      %1155 = vmatmul.mubr.f32.gmra.mrb[0].mxu0 %v930
      %v1156 = vpop.f32.mrb[0].mxu0
      %v1157 = vadd.f32 0.0, %v1156
      %v1158 = vpop.f32.mrb[0].mxu0
      %1159 = vmatprep.mubr.f32.mxu0 %v979
      %1160 = vmatmul.mubr.f32.gmra.mrb[0].mxu0 %v931
      %v1161 = vpop.f32.mrb[0].mxu0
      %v1162 = vadd.f32 0.0, %v1161
      %v1163 = vpop.f32.mrb[0].mxu0
      %1164 = vmatprep.mubr.f32.mxu0 %v980
      %1165 = vmatmul.mubr.f32.gmra.mrb[0].mxu0 %v932
      %v1166 = vpop.f32.mrb[0].mxu0
      %v1167 = vadd.f32 0.0, %v1166
      %v1168 = vpop.f32.mrb[0].mxu0
      %1169 = vmatprep.mubr.f32.mxu0 %v981
      %1170 = vmatmul.mubr.f32.gmra.mrb[0].mxu0 %v933
      %v1171 = vpop.f32.mrb[0].mxu0
      %v1172 = vadd.f32 0.0, %v1171
      %v1173 = vpop.f32.mrb[0].mxu0
      %1174 = vmatprep.mubr.f32.mxu0 %v982
      %1175 = vmatmul.mubr.f32.gmra.mrb[0].mxu0 %v934
      %v1176 = vpop.f32.mrb[0].mxu0
      %v1177 = vadd.f32 0.0, %v1176
      %v1178 = vpop.f32.mrb[0].mxu0
      %1179 = vmatprep.mubr.f32.mxu0 %v983
      %1180 = vmatmul.mubr.f32.gmra.mrb[0].mxu0 %v935
      %v1181 = vpop.f32.mrb[0].mxu0
      %v1182 = vadd.f32 0.0, %v1181
      %v1183 = vpop.f32.mrb[0].mxu0
      %1184 = vmatprep.mubr.f32.mxu0 %v984
      %1185 = vmatmul.mubr.f32.gmra.mrb[0].mxu0 %v936
      %v1186 = vpop.f32.mrb[0].mxu0
      %v1187 = vadd.f32 0.0, %v1186
      %v1188 = vpop.f32.mrb[0].mxu0
      %1189 = vmatprep.mubr.f32.mxu0 %v985
      %1190 = vmatmul.mubr.f32.gmra.mrb[0].mxu0 %v937
      %v1191 = vpop.f32.mrb[0].mxu0
      %v1192 = vadd.f32 0.0, %v1191
      %v1193 = vpop.f32.mrb[0].mxu0
      %1194 = vmatprep.mubr.f32.mxu0 %v986
      %1195 = vmatmul.mubr.f32.gmra.mrb[0].mxu0 %v938
      %v1196 = vpop.f32.mrb[0].mxu0
      %v1197 = vadd.f32 0.0, %v1196
      %v1198 = vpop.f32.mrb[0].mxu0
      %1199 = vmatprep.mubr.f32.mxu0 %v987
      %1200 = vmatmul.mubr.f32.gmra.mrb[0].mxu0 %v939
      %v1201 = vpop.f32.mrb[0].mxu0
      %v1202 = vadd.f32 0.0, %v1201
      %v1203 = vpop.f32.mrb[0].mxu0
      %1204 = vmatprep.mubr.f32.mxu0 %v988
      %1205 = vmatmul.mubr.f32.gmra.mrb[0].mxu0 %v940
      %v1206 = vpop.f32.mrb[0].mxu0
      %v1207 = vadd.f32 0.0, %v1206
      %v1208 = vpop.f32.mrb[0].mxu0
      %1209 = vmatprep.mubr.f32.mxu0 %v989
      %1210 = vmatmul.mubr.f32.gmra.mrb[0].mxu0 %v941
      %v1211 = vpop.f32.mrb[0].mxu0
      %v1212 = vadd.f32 0.0, %v1211
      %v1213 = vpop.f32.mrb[0].mxu0
      %1214 = vmatprep.mubr.f32.mxu0 %v990
      %1215 = vmatmul.mubr.f32.gmra.mrb[0].mxu0 %v942
      %v1216 = vpop.f32.mrb[0].mxu0
      %v1217 = vadd.f32 0.0, %v1216
      %v1218 = vpop.f32.mrb[0].mxu0
      %1219 = vdwg.mxu0
      %1220 = vmatprep.subr.mxu0 0.0
      %1221 = vmatpush1.msra.mxu0 %v1023
      %1222 = vmatprep.subr.mxu0 0.0
      %1223 = vmatpush1.msra.mxu0 %v1024
      %1224 = vmatprep.subr.mxu0 0.0
      %1225 = vmatpush1.msra.mxu0 %v1025
      %1226 = vmatprep.subr.mxu0 0.0
      %1227 = vmatpush1.msra.mxu0 %v1026
      %1228 = vmatprep.subr.mxu0 0.0
      %1229 = vmatpush1.msra.mxu0 0.0
      %1230 = vmatprep.subr.mxu0 0.0
      %1231 = vmatpush1.msra.mxu0 0.0
      %1232 = vmatprep.subr.mxu0 0.0
      %1233 = vmatpush1.msra.mxu0 0.0
      %1234 = vmatprep.subr.mxu0 0.0
      %1235 = vmatpush1.msra.mxu0 0.0
      %1236 = vmatprep.subr.mxu0 0.0
      %1237 = vmatpush1.msra.mxu0 0.0
      %1238 = vmatprep.subr.mxu0 0.0
      %1239 = vmatpush1.msra.mxu0 0.0
      %1240 = vmatprep.subr.mxu0 0.0
      %1241 = vmatpush1.msra.mxu0 0.0
      %1242 = vmatprep.subr.mxu0 0.0
      %1243 = vmatpush1.msra.mxu0 0.0
      %1244 = vmatprep.subr.mxu0 0.0
      %1245 = vmatpush1.msra.mxu0 0.0
      %1246 = vmatprep.subr.mxu0 0.0
      %1247 = vmatpush1.msra.mxu0 0.0
      %1248 = vmatprep.subr.mxu0 0.0
      %1249 = vmatpush1.msra.mxu0 0.0
      %1250 = vmatprep.subr.mxu0 0.0
      %1251 = vmatpush1.msra.mxu0 0.0
      %1252 = vmatprep.subr.mxu0 0.0
      %1253 = vmatpush1.msra.mxu0 0.0
      %1254 = vmatprep.subr.mxu0 0.0
      %1255 = vmatpush1.msra.mxu0 0.0
      %1256 = vmatprep.subr.mxu0 0.0
      %1257 = vmatpush1.msra.mxu0 0.0
      %1258 = vmatprep.subr.mxu0 0.0
      %1259 = vmatpush1.msra.mxu0 0.0
      %1260 = vmatprep.subr.mxu0 0.0
      %1261 = vmatpush1.msra.mxu0 0.0
      %1262 = vmatprep.subr.mxu0 0.0
      %1263 = vmatpush1.msra.mxu0 0.0
      %1264 = vmatprep.subr.mxu0 0.0
      %1265 = vmatpush1.msra.mxu0 0.0
      %1266 = vmatprep.subr.mxu0 0.0
      %1267 = vmatpush1.msra.mxu0 0.0
      %1268 = vmatprep.subr.mxu0 0.0
      %1269 = vmatpush1.msra.mxu0 0.0
      %1270 = vmatprep.subr.mxu0 0.0
      %1271 = vmatpush1.msra.mxu0 0.0
      %1272 = vmatprep.subr.mxu0 0.0
      %1273 = vmatpush1.msra.mxu0 0.0
      %1274 = vmatprep.subr.mxu0 0.0
      %1275 = vmatpush1.msra.mxu0 0.0
      %1276 = vmatprep.subr.mxu0 0.0
      %1277 = vmatpush1.msra.mxu0 0.0
      %1278 = vmatprep.subr.mxu0 0.0
      %1279 = vmatpush1.msra.mxu0 0.0
      %1280 = vmatprep.subr.mxu0 0.0
      %1281 = vmatpush1.msra.mxu0 0.0
      %1282 = vmatprep.subr.mxu0 0.0
      %1283 = vmatpush1.msra.mxu0 0.0
      %1284 = vmatprep.mubr.f32.mxu0 0.0
      %1285 = vmatmul.mubr.f32.gmra.mrb[0].mxu0 %v1028
      %v1286 = vpop.f32.mrb[0].mxu0
      %v1287 = vadd.f32 %v1142, %v1286
      %v1288 = vpop.f32.mrb[0].mxu0
      %1289 = vmatprep.mubr.f32.mxu0 0.0
      %1290 = vmatmul.mubr.f32.gmra.mrb[0].mxu0 %v1031
      %v1291 = vpop.f32.mrb[0].mxu0
      %v1292 = vadd.f32 %v1147, %v1291
      %v1293 = vpop.f32.mrb[0].mxu0
      %1294 = vmatprep.mubr.f32.mxu0 0.0
      %1295 = vmatmul.mubr.f32.gmra.mrb[0].mxu0 %v1034
      %v1296 = vpop.f32.mrb[0].mxu0
      %v1297 = vadd.f32 %v1152, %v1296
      %v1298 = vpop.f32.mrb[0].mxu0
      %1299 = vmatprep.mubr.f32.mxu0 0.0
      %1300 = vmatmul.mubr.f32.gmra.mrb[0].mxu0 %v1037
      %v1301 = vpop.f32.mrb[0].mxu0
      %v1302 = vadd.f32 %v1157, %v1301
      %v1303 = vpop.f32.mrb[0].mxu0
      %1304 = vmatprep.mubr.f32.mxu0 0.0
      %1305 = vmatmul.mubr.f32.gmra.mrb[0].mxu0 %v1040
      %v1306 = vpop.f32.mrb[0].mxu0
      %v1307 = vadd.f32 %v1162, %v1306
      %v1308 = vpop.f32.mrb[0].mxu0
      %1309 = vmatprep.mubr.f32.mxu0 0.0
      %1310 = vmatmul.mubr.f32.gmra.mrb[0].mxu0 %v1043
      %v1311 = vpop.f32.mrb[0].mxu0
      %v1312 = vadd.f32 %v1167, %v1311
      %v1313 = vpop.f32.mrb[0].mxu0
      %1314 = vmatprep.mubr.f32.mxu0 0.0
      %1315 = vmatmul.mubr.f32.gmra.mrb[0].mxu0 %v1046
      %v1316 = vpop.f32.mrb[0].mxu0
      %v1317 = vadd.f32 %v1172, %v1316
      %v1318 = vpop.f32.mrb[0].mxu0
      %1319 = vmatprep.mubr.f32.mxu0 0.0
      %1320 = vmatmul.mubr.f32.gmra.mrb[0].mxu0 %v1049
      %v1321 = vpop.f32.mrb[0].mxu0
      %v1322 = vadd.f32 %v1177, %v1321
      %v1323 = vpop.f32.mrb[0].mxu0
      %1324 = vmatprep.mubr.f32.mxu0 0.0
      %1325 = vmatmul.mubr.f32.gmra.mrb[0].mxu0 %v1052
      %v1326 = vpop.f32.mrb[0].mxu0
      %v1327 = vadd.f32 %v1182, %v1326
      %v1328 = vpop.f32.mrb[0].mxu0
      %1329 = vmatprep.mubr.f32.mxu0 0.0
      %1330 = vmatmul.mubr.f32.gmra.mrb[0].mxu0 %v1055
      %v1331 = vpop.f32.mrb[0].mxu0
      %v1332 = vadd.f32 %v1187, %v1331
      %v1333 = vpop.f32.mrb[0].mxu0
      %1334 = vmatprep.mubr.f32.mxu0 0.0
      %1335 = vmatmul.mubr.f32.gmra.mrb[0].mxu0 %v1058
      %v1336 = vpop.f32.mrb[0].mxu0
      %v1337 = vadd.f32 %v1192, %v1336
      %v1338 = vpop.f32.mrb[0].mxu0
      %1339 = vmatprep.mubr.f32.mxu0 0.0
      %1340 = vmatmul.mubr.f32.gmra.mrb[0].mxu0 %v1061
      %v1341 = vpop.f32.mrb[0].mxu0
      %v1342 = vadd.f32 %v1197, %v1341
      %v1343 = vpop.f32.mrb[0].mxu0
      %1344 = vmatprep.mubr.f32.mxu0 0.0
      %1345 = vmatmul.mubr.f32.gmra.mrb[0].mxu0 %v1064
      %v1346 = vpop.f32.mrb[0].mxu0
      %v1347 = vadd.f32 %v1202, %v1346
      %v1348 = vpop.f32.mrb[0].mxu0
      %1349 = vmatprep.mubr.f32.mxu0 0.0
      %1350 = vmatmul.mubr.f32.gmra.mrb[0].mxu0 %v1067
      %v1351 = vpop.f32.mrb[0].mxu0
      %v1352 = vadd.f32 %v1207, %v1351
      %v1353 = vpop.f32.mrb[0].mxu0
      %1354 = vmatprep.mubr.f32.mxu0 0.0
      %1355 = vmatmul.mubr.f32.gmra.mrb[0].mxu0 %v1070
      %v1356 = vpop.f32.mrb[0].mxu0
      %v1357 = vadd.f32 %v1212, %v1356
      %v1358 = vpop.f32.mrb[0].mxu0
      %1359 = vmatprep.mubr.f32.mxu0 0.0
      %1360 = vmatmul.mubr.f32.gmra.mrb[0].mxu0 %v1073
      %v1361 = vpop.f32.mrb[0].mxu0
      %v1362 = vadd.f32 %v1217, %v1361
      %v1363 = vpop.f32.mrb[0].mxu0
      %1364 = vdwg.mxu0
      %v1365 = vld [vmem:[%s4] sm:$0x1]
      %v1367 = vlaneseq
      %v1368 = vshrl.u32 %v1367, 7
      %v1369 = vsub.s32 0, %v1368
      %v1370 = vrot.slane %v1365, %v1369
      %v1372 = vadd.f32 %v1287, %v1370
      %v1373 = vadd.f32 %v1292, %v1370
      %v1374 = vadd.f32 %v1297, %v1370
      %v1375 = vadd.f32 %v1302, %v1370
      %v1376 = vadd.f32 %v1307, %v1370
      %v1377 = vadd.f32 %v1312, %v1370
      %v1378 = vadd.f32 %v1317, %v1370
      %v1379 = vadd.f32 %v1322, %v1370
      %v1380 = vadd.f32 %v1327, %v1370
      %v1381 = vadd.f32 %v1332, %v1370
      %v1382 = vadd.f32 %v1337, %v1370
      %v1383 = vadd.f32 %v1342, %v1370
      %v1384 = vadd.f32 %v1347, %v1370
      %v1385 = vadd.f32 %v1352, %v1370
      %v1386 = vadd.f32 %v1357, %v1370
      %v1387 = vadd.f32 %v1362, %v1370
      %v1388 = vsel %vm909, %v1372, 0.0
      %v1389 = vsel %vm909, %v1373, 0.0
      %v1390 = vadd.f32 %v1388, %v1389
      %v1391 = vsel %vm909, %v1374, 0.0
      %v1392 = vadd.f32 %v1390, %v1391
      %v1393 = vsel %vm909, %v1375, 0.0
      %v1394 = vadd.f32 %v1392, %v1393
      %v1395 = vsel %vm909, %v1376, 0.0
      %v1396 = vadd.f32 %v1394, %v1395
      %v1397 = vsel %vm909, %v1377, 0.0
      %v1398 = vadd.f32 %v1396, %v1397
      %v1399 = vsel %vm909, %v1378, 0.0
      %v1400 = vadd.f32 %v1398, %v1399
      %v1401 = vsel %vm909, %v1379, 0.0
      %v1402 = vadd.f32 %v1400, %v1401
      %v1403 = vsel %vm909, %v1380, 0.0
      %v1404 = vadd.f32 %v1402, %v1403
      %v1405 = vsel %vm909, %v1381, 0.0
      %v1406 = vadd.f32 %v1404, %v1405
      %v1407 = vsel %vm909, %v1382, 0.0
      %v1408 = vadd.f32 %v1406, %v1407
      %v1409 = vsel %vm909, %v1383, 0.0
      %v1410 = vadd.f32 %v1408, %v1409
      %v1411 = vsel %vm909, %v1384, 0.0
      %v1412 = vadd.f32 %v1410, %v1411
      %v1413 = vsel %vm909, %v1385, 0.0
      %v1414 = vadd.f32 %v1412, %v1413
      %v1415 = vsel %vm909, %v1386, 0.0
      %v1416 = vadd.f32 %v1414, %v1415
      %v1417 = vsel %vm909, %v1387, 0.0
      %v1418 = vadd.f32 %v1416, %v1417
      %v1419 = vrot.slane %v1418, 4
      %v1420 = vadd.f32 %v1418, %v1419
      %v1421 = vrot.slane %v1420, 2
      %v1422 = vadd.f32 %v1420, %v1421
      %v1423 = vrot.slane %v1422, 1
      %v1424 = vadd.f32 %v1422, %v1423
      %vm1425 = vcmask 516096
      %1426 = vst.msk [vmem:[%s262] sm:$0x1] %vm1425, %v1424
      %v1427 = vmul.f32 %v1372, %v1372
      %v1428 = vmul.f32 %v1373, %v1373
      %v1429 = vmul.f32 %v1374, %v1374
      %v1430 = vmul.f32 %v1375, %v1375
      %v1431 = vmul.f32 %v1376, %v1376
      %v1432 = vmul.f32 %v1377, %v1377
      %v1433 = vmul.f32 %v1378, %v1378
      %v1434 = vmul.f32 %v1379, %v1379
      %v1435 = vmul.f32 %v1380, %v1380
      %v1436 = vmul.f32 %v1381, %v1381
      %v1437 = vmul.f32 %v1382, %v1382
      %v1438 = vmul.f32 %v1383, %v1383
      %v1439 = vmul.f32 %v1384, %v1384
      %v1440 = vmul.f32 %v1385, %v1385
      %v1441 = vmul.f32 %v1386, %v1386
      %v1442 = vmul.f32 %v1387, %v1387
      %v1443 = vsel %vm909, %v1427, 0.0
      %v1444 = vsel %vm909, %v1428, 0.0
      %v1445 = vadd.f32 %v1443, %v1444
      %v1446 = vsel %vm909, %v1429, 0.0
      %v1447 = vadd.f32 %v1445, %v1446
      %v1448 = vsel %vm909, %v1430, 0.0
      %v1449 = vadd.f32 %v1447, %v1448
      %v1450 = vsel %vm909, %v1431, 0.0
      %v1451 = vadd.f32 %v1449, %v1450
      %v1452 = vsel %vm909, %v1432, 0.0
      %v1453 = vadd.f32 %v1451, %v1452
      %v1454 = vsel %vm909, %v1433, 0.0
      %v1455 = vadd.f32 %v1453, %v1454
      %v1456 = vsel %vm909, %v1434, 0.0
      %v1457 = vadd.f32 %v1455, %v1456
      %v1458 = vsel %vm909, %v1435, 0.0
      %v1459 = vadd.f32 %v1457, %v1458
      %v1460 = vsel %vm909, %v1436, 0.0
      %v1461 = vadd.f32 %v1459, %v1460
      %v1462 = vsel %vm909, %v1437, 0.0
      %v1463 = vadd.f32 %v1461, %v1462
      %v1464 = vsel %vm909, %v1438, 0.0
      %v1465 = vadd.f32 %v1463, %v1464
      %v1466 = vsel %vm909, %v1439, 0.0
      %v1467 = vadd.f32 %v1465, %v1466
      %v1468 = vsel %vm909, %v1440, 0.0
      %v1469 = vadd.f32 %v1467, %v1468
      %v1470 = vsel %vm909, %v1441, 0.0
      %v1471 = vadd.f32 %v1469, %v1470
      %v1472 = vsel %vm909, %v1442, 0.0
      %v1473 = vadd.f32 %v1471, %v1472
      %v1474 = vrot.slane %v1473, 4
      %v1475 = vadd.f32 %v1473, %v1474
      %v1476 = vrot.slane %v1475, 2
      %v1477 = vadd.f32 %v1475, %v1476
      %v1478 = vrot.slane %v1477, 1
      %v1479 = vadd.f32 %v1477, %v1478
      %1480 = vst.msk [vmem:[%s262 + $0x1] sm:$0x1] %vm1425, %v1479
      %1481 = vst.msk [vmem:[%s258] sm:$0xff] %vm909, %v1372
      %1482 = vst.msk [vmem:[%s258 + $0x8] sm:$0xff] %vm909, %v1373
      %1483 = vst.msk [vmem:[%s258 + $0x10] sm:$0xff] %vm909, %v1374
      %1484 = vst.msk [vmem:[%s258 + $0x18] sm:$0xff] %vm909, %v1375
      %1485 = vst.msk [vmem:[%s258 + $0x20] sm:$0xff] %vm909, %v1376
      %1486 = vst.msk [vmem:[%s258 + $0x28] sm:$0xff] %vm909, %v1377
      %1487 = vst.msk [vmem:[%s258 + $0x30] sm:$0xff] %vm909, %v1378
      %1488 = vst.msk [vmem:[%s258 + $0x38] sm:$0xff] %vm909, %v1379
      %1489 = vst.msk [vmem:[%s258 + $0x40] sm:$0xff] %vm909, %v1380
      %1490 = vst.msk [vmem:[%s258 + $0x48] sm:$0xff] %vm909, %v1381
      %1491 = vst.msk [vmem:[%s258 + $0x50] sm:$0xff] %vm909, %v1382
      %1492 = vst.msk [vmem:[%s258 + $0x58] sm:$0xff] %vm909, %v1383
      %1493 = vst.msk [vmem:[%s258 + $0x60] sm:$0xff] %vm909, %v1384
      %1494 = vst.msk [vmem:[%s258 + $0x68] sm:$0xff] %vm909, %v1385
      %1495 = vst.msk [vmem:[%s258 + $0x70] sm:$0xff] %vm909, %v1386
      %1496 = vst.msk [vmem:[%s258 + $0x78] sm:$0xff] %vm909, %v1387
      %p1497 = scmp.lt.s32.totalorder %s18, 1
      %s1498 = scalar_select %p1497, %s18, 1
      %s1499 = smul.addr %s1498, 16
      %s1500 = smul.addr %s1499, 8
      %s1501 = scalar_lea.vmem %s5, %s1500
      %p1502 = scmp.lt.s32.totalorder %s18, 1
      %s1503 = scalar_select %p1502, %s18, 1
      %s1504 = smul.addr %s1503, 2
      %s1505 = scalar_lea.vmem %s6, %s1504
      // Predicated region
      $region41: #{_lambda_.9} parent=39 // pred_check
        %p1506 = pneg %p146
      $region42: #{_lambda_.9} parent=39 // pred_check_branch
        %1508 = sbr.rel (%p1506) target = $region44
      $region43: #{_lambda_.9} parent=39 // pred_region
        _
      $region44: #{_lambda_.9} parent=39 // pred_fallthru
        _
      // Predicated region
      $region45: #{_lambda_.9} parent=39 // pred_check
        %p1509 = pneg %p172
      $region46: #{_lambda_.9} parent=39 // pred_check_branch
        %1511 = sbr.rel (%p1509) target = $region48
      $region47: #{_lambda_.9} parent=39 // pred_region
        _
      $region48: #{_lambda_.9} parent=39 // pred_fallthru
        _
    $region40: #{_lambda_.9} parent=5 // pred_fallthru
      _
    %p1512 = scmp.le.s32.totalorder 2, %s13
    // Predicated region
    $region49: #{_lambda_.9} parent=5 // pred_check
      %p1513 = pneg %p1512
    $region50: #{_lambda_.9} parent=5 // pred_check_branch
      %1515 = sbr.rel (%p1513) target = $region52
    $region51: #{_lambda_.9} parent=5 // pred_region
      %s1516 = ssub.s32 %s13, 2
      // Predicated region
      $region53: #{_lambda_.9} parent=51 // pred_check
        %p1517 = pneg %p152
      $region54: #{_lambda_.9} parent=51 // pred_check_branch
        %1519 = sbr.rel (%p1517) target = $region56
      $region55: #{_lambda_.9} parent=51 // pred_region
        %p1520 = scmp.lt.s32.totalorder %s19, 1
        %s1521 = scalar_select %p1520, %s19, 1
        %s1522 = smul.addr %s1521, 16
        %s1523 = smul.addr %s1522, 8
        %s1524 = scalar_lea.vmem %s5, %s1523
      $region56: #{_lambda_.9} parent=51 // pred_fallthru
        _
      // Predicated region
      $region57: #{_lambda_.9} parent=51 // pred_check
        %p1525 = pneg %p178
      $region58: #{_lambda_.9} parent=51 // pred_check_branch
        %1527 = sbr.rel (%p1525) target = $region60
      $region59: #{_lambda_.9} parent=51 // pred_region
        %p1528 = scmp.lt.s32.totalorder %s19, 1
        %s1529 = scalar_select %p1528, %s19, 1
        %s1530 = smul.addr %s1529, 2
        %s1531 = scalar_lea.vmem %s6, %s1530
      $region60: #{_lambda_.9} parent=51 // pred_fallthru
        _
    $region52: #{_lambda_.9} parent=5 // pred_fallthru
      _
  $region6: #{_lambda_.9} parent=0 // loop_footer
    %s17 = sadd.s32 1, %s13
  $region7: #{_lambda_.9} parent=0 // loop_footer_branch
    %12 = sbr.rel target = $region3
  $region8: #{_lambda_.9} parent=0 // loop_exit
    _

// kernel: _lambda_.10
$region0: #{_lambda_.10}
  #allocation0 [shape = 'u32[]', space=smem, size = 0x4, offset = 0x4, fixed_abs, tag = 'smem constant byte address 0x4 - core index']
  #allocation1 [shape = 'u32[144,128]{1,0:T(1,128)}', space=vmem, size = 0x12000, scoped, tag = 'internal scratch']
  #allocation2 [shape = 'f32[18,10,64]{2,1,0:T(8,128)}', space=vmem, size = 0x24000, scoped, tag = 'scratch operand']
  %s0 = inlined_call_operand.vmem [shape: f32[2,16,8,64], index: 0, kind: input, shape index: {}]
  %s1 = inlined_call_operand.vmem [shape: f32[2,8,8,32], index: 1, kind: input, shape index: {}]
  %s2 = inlined_call_operand.vmem [shape: f32[1,64], index: 2, kind: input, shape index: {}]
  %s3 = inlined_call_operand.vmem [shape: f32[1,64], index: 3, kind: input, shape index: {}]
  %s4 = inlined_call_operand.vmem [shape: f32[576,64], index: 4, kind: input, shape index: {}]
  %s5 = inlined_call_operand.vmem [shape: f32[1,64], index: 5, kind: input, shape index: {}]
  %s6 = inlined_call_operand.vmem [shape: f32[2,16,8,64], index: 6, kind: output, shape index: {0}]
  %s7 = inlined_call_operand.hbm [shape: f32[2,2,64], index: 7, kind: output, shape index: {1}]
  %8 = xla_tuple %s6, %s7
  %s9 = sld [smem:[#allocation0]]
  $region65: #{_lambda_.10} parent=0
    _
  %s11 = ssub.s32 1, %s9
  %s12 = scalar_select 0, %s11, %s9
  $region1: #{_lambda_.10} parent=0
    #allocation3 [shape = 'u8[2048]{0}', space=vmem, size = 0x800, scoped, tag = 'output window, operand 1']
    #allocation4 [shape = 's32[2]{0}', space=sflag, size = 0x8, scoped, tag = 'scoped memory for _lambda_.10']
    %13 = vsyncpa [#allocation4], 0
    %s14 = scalar_lea.sflag [#allocation4], 1
    %15 = vsyncpa %s14, 0
    loop: start=0, step=1, limit=4
    $region2: #{_lambda_.10} parent=1 // loop_pre_header
      _
    $region3: #{_lambda_.10} parent=1 // loop_header
      %s17 = sphi 0, %s21
      %p18 = scmp.ge.s32.totalorder %s17, 4
      %s27 = sphi 0, %s29
      %s30 = sphi 0, %s27
      %s31 = sphi 0, %s30
      %s47 = sphi 0, %s31
      %s53 = sphi 0, %s55
      %s56 = sphi 0, %s53
      %s57 = sphi 0, %s56
      %s73 = sphi 0, %s57
      %s77 = sphi 0, %s77
      %s79 = sphi 0, %s77
      %s80 = sphi 0, %s79
      %s94 = sphi 0, %s80
      %s98 = sphi 0, %s98
      %s100 = sphi 0, %s98
      %s101 = sphi 0, %s100
      %s115 = sphi 0, %s101
      %s119 = sphi 0, %s119
      %s121 = sphi 0, %s119
      %s122 = sphi 0, %s121
      %s136 = sphi 0, %s122
      %s140 = sphi 0, %s140
      %s142 = sphi 0, %s140
      %s143 = sphi 0, %s142
      %s157 = sphi 0, %s143
      %s163 = sphi 0, %s165
      %s166 = sphi 0, %s163
      %s167 = sphi 0, %s166
      %s183 = sphi 0, %s167
      %s189 = sphi 0, %s191
      %s192 = sphi 0, %s189
      %s193 = sphi 0, %s192
      %s209 = sphi 0, %s193
    $region4: #{_lambda_.10} parent=1 // loop_header_branch
      %20 = sbr.rel (%p18) target = $region8
    $region5: #{_lambda_.10} parent=1 // loop_body
      %s22 = ssub.s32 %s17, 1
      %s23 = ssub.s32 %s17, 2
      %s24 = sadd.s32 %s17, 1
      %s25 = ssub.s32 %s17, %s24
      %p26 = scmp.eq.s32.totalorder %s25, 0
      %s28 = sadd.s32 %s27, 1
      %s29 = scalar_select %p26, %s27, %s28
      %p32 = pneg %p26
      %p33 = scmp.eq.s32.totalorder %s17, 1
      %p34 = por %p32, %p33
      %p35 = scmp.ne.s32.totalorder %s27, %s30
      %p36 = scmp.eq.s32.totalorder %s17, 0
      %p37 = por %p35, %p36
      %p38 = scmp.ne.s32.totalorder %s27, %s30
      %p39 = scmp.eq.s32.totalorder %s22, 1
      %p40 = por %p38, %p39
      %p41 = scmp.ne.s32.totalorder %s30, %s31
      %p42 = scmp.eq.s32.totalorder %s22, 0
      %p43 = por %p41, %p42
      %p44 = scmp.ne.s32.totalorder %s30, %s31
      %p45 = scmp.eq.s32.totalorder %s23, 1
      %p46 = por %p44, %p45
      %p48 = scmp.ne.s32.totalorder %s31, %s47
      %p49 = scmp.eq.s32.totalorder %s23, 0
      %p50 = por %p48, %p49
      %s51 = ssub.s32 %s17, %s24
      %p52 = scmp.eq.s32.totalorder %s51, 0
      %s54 = sadd.s32 %s53, 1
      %s55 = scalar_select %p52, %s53, %s54
      %p58 = pneg %p52
      %p59 = scmp.eq.s32.totalorder %s17, 1
      %p60 = por %p58, %p59
      %p61 = scmp.ne.s32.totalorder %s53, %s56
      %p62 = scmp.eq.s32.totalorder %s17, 0
      %p63 = por %p61, %p62
      %p64 = scmp.ne.s32.totalorder %s53, %s56
      %p65 = scmp.eq.s32.totalorder %s22, 1
      %p66 = por %p64, %p65
      %p67 = scmp.ne.s32.totalorder %s56, %s57
      %p68 = scmp.eq.s32.totalorder %s22, 0
      %p69 = por %p67, %p68
      %p70 = scmp.ne.s32.totalorder %s56, %s57
      %p71 = scmp.eq.s32.totalorder %s23, 1
      %p72 = por %p70, %p71
      %p74 = scmp.ne.s32.totalorder %s57, %s73
      %p75 = scmp.eq.s32.totalorder %s23, 0
      %p76 = por %p74, %p75
      %s78 = sadd.s32 %s77, 1
      %p81 = scmp.eq.s32.totalorder %s17, 1
      %p82 = scmp.ne.s32.totalorder %s77, %s79
      %p83 = scmp.eq.s32.totalorder %s17, 0
      %p84 = por %p82, %p83
      %p85 = scmp.ne.s32.totalorder %s77, %s79
      %p86 = scmp.eq.s32.totalorder %s22, 1
      %p87 = por %p85, %p86
      %p88 = scmp.ne.s32.totalorder %s79, %s80
      %p89 = scmp.eq.s32.totalorder %s22, 0
      %p90 = por %p88, %p89
      %p91 = scmp.ne.s32.totalorder %s79, %s80
      %p92 = scmp.eq.s32.totalorder %s23, 1
      %p93 = por %p91, %p92
      %p95 = scmp.ne.s32.totalorder %s80, %s94
      %p96 = scmp.eq.s32.totalorder %s23, 0
      %p97 = por %p95, %p96
      %s99 = sadd.s32 %s98, 1
      %p102 = scmp.eq.s32.totalorder %s17, 1
      %p103 = scmp.ne.s32.totalorder %s98, %s100
      %p104 = scmp.eq.s32.totalorder %s17, 0
      %p105 = por %p103, %p104
      %p106 = scmp.ne.s32.totalorder %s98, %s100
      %p107 = scmp.eq.s32.totalorder %s22, 1
      %p108 = por %p106, %p107
      %p109 = scmp.ne.s32.totalorder %s100, %s101
      %p110 = scmp.eq.s32.totalorder %s22, 0
      %p111 = por %p109, %p110
      %p112 = scmp.ne.s32.totalorder %s100, %s101
      %p113 = scmp.eq.s32.totalorder %s23, 1
      %p114 = por %p112, %p113
      %p116 = scmp.ne.s32.totalorder %s101, %s115
      %p117 = scmp.eq.s32.totalorder %s23, 0
      %p118 = por %p116, %p117
      %s120 = sadd.s32 %s119, 1
      %p123 = scmp.eq.s32.totalorder %s17, 1
      %p124 = scmp.ne.s32.totalorder %s119, %s121
      %p125 = scmp.eq.s32.totalorder %s17, 0
      %p126 = por %p124, %p125
      %p127 = scmp.ne.s32.totalorder %s119, %s121
      %p128 = scmp.eq.s32.totalorder %s22, 1
      %p129 = por %p127, %p128
      %p130 = scmp.ne.s32.totalorder %s121, %s122
      %p131 = scmp.eq.s32.totalorder %s22, 0
      %p132 = por %p130, %p131
      %p133 = scmp.ne.s32.totalorder %s121, %s122
      %p134 = scmp.eq.s32.totalorder %s23, 1
      %p135 = por %p133, %p134
      %p137 = scmp.ne.s32.totalorder %s122, %s136
      %p138 = scmp.eq.s32.totalorder %s23, 0
      %p139 = por %p137, %p138
      %s141 = sadd.s32 %s140, 1
      %p144 = scmp.eq.s32.totalorder %s17, 1
      %p145 = scmp.ne.s32.totalorder %s140, %s142
      %p146 = scmp.eq.s32.totalorder %s17, 0
      %p147 = por %p145, %p146
      %p148 = scmp.ne.s32.totalorder %s140, %s142
      %p149 = scmp.eq.s32.totalorder %s22, 1
      %p150 = por %p148, %p149
      %p151 = scmp.ne.s32.totalorder %s142, %s143
      %p152 = scmp.eq.s32.totalorder %s22, 0
      %p153 = por %p151, %p152
      %p154 = scmp.ne.s32.totalorder %s142, %s143
      %p155 = scmp.eq.s32.totalorder %s23, 1
      %p156 = por %p154, %p155
      %p158 = scmp.ne.s32.totalorder %s143, %s157
      %p159 = scmp.eq.s32.totalorder %s23, 0
      %p160 = por %p158, %p159
      %s161 = ssub.s32 %s17, %s24
      %p162 = scmp.eq.s32.totalorder %s161, 0
      %s164 = sadd.s32 %s163, 1
      %s165 = scalar_select %p162, %s163, %s164
      %p168 = pneg %p162
      %p169 = scmp.eq.s32.totalorder %s17, 1
      %p170 = por %p168, %p169
      %p171 = scmp.ne.s32.totalorder %s163, %s166
      %p172 = scmp.eq.s32.totalorder %s17, 0
      %p173 = por %p171, %p172
      %p174 = scmp.ne.s32.totalorder %s163, %s166
      %p175 = scmp.eq.s32.totalorder %s22, 1
      %p176 = por %p174, %p175
      %p177 = scmp.ne.s32.totalorder %s166, %s167
      %p178 = scmp.eq.s32.totalorder %s22, 0
      %p179 = por %p177, %p178
      %p180 = scmp.ne.s32.totalorder %s166, %s167
      %p181 = scmp.eq.s32.totalorder %s23, 1
      %p182 = por %p180, %p181
      %p184 = scmp.ne.s32.totalorder %s167, %s183
      %p185 = scmp.eq.s32.totalorder %s23, 0
      %p186 = por %p184, %p185
      %s187 = ssub.s32 %s17, %s24
      %p188 = scmp.eq.s32.totalorder %s187, 0
      %s190 = sadd.s32 %s189, 1
      %s191 = scalar_select %p188, %s189, %s190
      %p194 = pneg %p188
      %p195 = scmp.eq.s32.totalorder %s17, 1
      %p196 = por %p194, %p195
      %p197 = scmp.ne.s32.totalorder %s189, %s192
      %p198 = scmp.eq.s32.totalorder %s17, 0
      %p199 = por %p197, %p198
      %p200 = scmp.ne.s32.totalorder %s189, %s192
      %p201 = scmp.eq.s32.totalorder %s22, 1
      %p202 = por %p200, %p201
      %p203 = scmp.ne.s32.totalorder %s192, %s193
      %p204 = scmp.eq.s32.totalorder %s22, 0
      %p205 = por %p203, %p204
      %p206 = scmp.ne.s32.totalorder %s192, %s193
      %p207 = scmp.eq.s32.totalorder %s23, 1
      %p208 = por %p206, %p207
      %p210 = scmp.ne.s32.totalorder %s193, %s209
      %p211 = scmp.eq.s32.totalorder %s23, 0
      %p212 = por %p210, %p211
      %p213 = scmp.le.s32.totalorder 1, %s17
      %p214 = scmp.lt.s32.totalorder %s17, 3
      %p215 = pnand %p213, %p214
      %p216 = pneg %p215
      // Predicated region
      $region9: #{_lambda_.10} parent=5 // pred_check
        _
      $region10: #{_lambda_.10} parent=5 // pred_check_branch
        %218 = sbr.rel (%p215) target = $region12
      $region11: #{_lambda_.10} parent=5 // pred_region
        %s219 = ssub.s32 %s17, 1
        // Predicated region
        $region13: #{_lambda_.10} parent=11 // pred_check
          %p220 = pneg %p90
        $region14: #{_lambda_.10} parent=11 // pred_check_branch
          %222 = sbr.rel (%p220) target = $region16
        $region15: #{_lambda_.10} parent=11 // pred_region
          _
        $region16: #{_lambda_.10} parent=11 // pred_fallthru
          _
        // Predicated region
        $region17: #{_lambda_.10} parent=11 // pred_check
          %p223 = pneg %p111
        $region18: #{_lambda_.10} parent=11 // pred_check_branch
          %225 = sbr.rel (%p223) target = $region20
        $region19: #{_lambda_.10} parent=11 // pred_region
          _
        $region20: #{_lambda_.10} parent=11 // pred_fallthru
          _
        // Predicated region
        $region21: #{_lambda_.10} parent=11 // pred_check
          %p226 = pneg %p132
        $region22: #{_lambda_.10} parent=11 // pred_check_branch
          %228 = sbr.rel (%p226) target = $region24
        $region23: #{_lambda_.10} parent=11 // pred_region
          _
        $region24: #{_lambda_.10} parent=11 // pred_fallthru
          _
        // Predicated region
        $region25: #{_lambda_.10} parent=11 // pred_check
          %p229 = pneg %p153
        $region26: #{_lambda_.10} parent=11 // pred_check_branch
          %231 = sbr.rel (%p229) target = $region28
        $region27: #{_lambda_.10} parent=11 // pred_region
          _
        $region28: #{_lambda_.10} parent=11 // pred_fallthru
          _
      $region12: #{_lambda_.10} parent=5 // pred_fallthru
        _
      %p232 = scmp.lt.s32.totalorder %s17, 2
      // Predicated region
      $region29: #{_lambda_.10} parent=5 // pred_check
        %p233 = pneg %p232
      $region30: #{_lambda_.10} parent=5 // pred_check_branch
        %235 = sbr.rel (%p233) target = $region32
      $region31: #{_lambda_.10} parent=5 // pred_region
        // Predicated region
        $region33: #{_lambda_.10} parent=31 // pred_check
          %p236 = pneg %p37
        $region34: #{_lambda_.10} parent=31 // pred_check_branch
          %238 = sbr.rel (%p236) target = $region36
        $region35: #{_lambda_.10} parent=31 // pred_region
          %p239 = scmp.lt.s32.totalorder %s17, 1
          %s240 = scalar_select %p239, %s17, 1
          %s241 = smul.addr %s240, 16
          %s242 = smul.addr %s241, 8
          %s243 = scalar_lea.vmem %s0, %s242
        $region36: #{_lambda_.10} parent=31 // pred_fallthru
          _
        // Predicated region
        $region37: #{_lambda_.10} parent=31 // pred_check
          %p244 = pneg %p63
        $region38: #{_lambda_.10} parent=31 // pred_check_branch
          %246 = sbr.rel (%p244) target = $region40
        $region39: #{_lambda_.10} parent=31 // pred_region
          %p247 = scmp.lt.s32.totalorder %s17, 1
          %s248 = scalar_select %p247, %s17, 1
          %s249 = smul.addr %s248, 8
          %s250 = smul.addr %s249, 8
          %s251 = scalar_lea.vmem %s1, %s250
        $region40: #{_lambda_.10} parent=31 // pred_fallthru
          _
      $region32: #{_lambda_.10} parent=5 // pred_fallthru
        _
      %p252 = scmp.le.s32.totalorder 1, %s17
      %p253 = scmp.lt.s32.totalorder %s17, 3
      %p254 = pnand %p252, %p253
      %p255 = pneg %p254
      // Predicated region
      $region41: #{_lambda_.10} parent=5 // pred_check
        _
      $region42: #{_lambda_.10} parent=5 // pred_check_branch
        %257 = sbr.rel (%p254) target = $region44
      $region43: #{_lambda_.10} parent=5 // pred_region
        %s258 = ssub.s32 %s17, 1
        %p259 = scmp.lt.s32.totalorder %s22, 1
        %s260 = scalar_select %p259, %s22, 1
        %s261 = smul.addr %s260, 16
        %s262 = smul.addr %s261, 8
        %s263 = scalar_lea.vmem %s0, %s262
        %p264 = pneg %p43
        %p265 = pneg %p40
        %p266 = scmp.lt.s32.totalorder %s22, 1
        %s267 = scalar_select %p266, %s22, 1
        %s268 = smul.addr %s267, 8
        %s269 = smul.addr %s268, 8
        %s270 = scalar_lea.vmem %s1, %s269
        %p271 = pneg %p69
        %p272 = pneg %p66
        %p273 = pneg %p90
        %p274 = pneg %p87
        %p275 = pneg %p111
        %p276 = pneg %p108
        %p277 = pneg %p132
        %p278 = pneg %p129
        %p279 = pneg %p153
        %p280 = pneg %p150
        %p281 = pneg %p179
        %p282 = pneg %p176
        %p283 = scmp.lt.s32.totalorder %s22, 1
        %s284 = scalar_select %p283, %s22, 1
        %s285 = smul.addr %s284, 16
        %s286 = smul.addr %s285, 8
        %s287 = scalar_lea.vmem %s6, %s286
        %p288 = pneg %p205
        %p289 = pneg %p202
        %s290 = sand.u32 %s192, 1
        %s291 = scalar_lea.sflag [#allocation4], %s290
        %s292 = sand.u32 %s192, 1
        %s293 = smul.addr %s292, 2
        %s294 = scalar_lea.vmem [#allocation3], %s293
        %p295 = scmp.lt.s32.totalorder %s22, 1
        %s296 = scalar_select %p295, %s22, 1
        %s297 = smul.addr %s296, 16
        %s298 = smul.addr %s297, 8
        %s299 = scalar_lea.vmem %s0, %s298
        %p300 = scmp.lt.s32.totalorder %s22, 1
        %s301 = scalar_select %p300, %s22, 1
        %s302 = smul.addr %s301, 8
        %s303 = smul.addr %s302, 8
        %s304 = scalar_lea.vmem %s1, %s303
        %p305 = scmp.lt.s32.totalorder %s22, 1
        %s306 = scalar_select %p305, %s22, 1
        %s307 = smul.addr %s306, 16
        %s308 = smul.addr %s307, 8
        %s309 = scalar_lea.vmem %s6, %s308
        %v310 = vld [vmem:[%s299] sm:$0xff]
        %v311 = vld [vmem:[%s299 + $0x8] sm:$0xff]
        %v312 = vld [vmem:[%s299 + $0x10] sm:$0xff]
        %v313 = vld [vmem:[%s299 + $0x18] sm:$0xff]
        %v314 = vld [vmem:[%s299 + $0x20] sm:$0xff]
        %v315 = vld [vmem:[%s299 + $0x28] sm:$0xff]
        %v316 = vld [vmem:[%s299 + $0x30] sm:$0xff]
        %v317 = vld [vmem:[%s299 + $0x38] sm:$0xff]
        %v318 = vld [vmem:[%s299 + $0x40] sm:$0xff]
        %v319 = vld [vmem:[%s299 + $0x48] sm:$0xff]
        %v320 = vld [vmem:[%s299 + $0x50] sm:$0xff]
        %v321 = vld [vmem:[%s299 + $0x58] sm:$0xff]
        %v322 = vld [vmem:[%s299 + $0x60] sm:$0xff]
        %v323 = vld [vmem:[%s299 + $0x68] sm:$0xff]
        %v324 = vld [vmem:[%s299 + $0x70] sm:$0xff]
        %v325 = vld [vmem:[%s299 + $0x78] sm:$0xff]
        %v326 = vld [vmem:[%s2] sm:$0x1]
        %v328 = vlaneseq
        %v329 = vshrl.u32 %v328, 7
        %v330 = vsub.s32 0, %v329
        %v331 = vrot.slane %v326, %v330
        %v333 = vmul.f32 %v310, %v331
        %v334 = vmul.f32 %v311, %v331
        %v335 = vmul.f32 %v312, %v331
        %v336 = vmul.f32 %v313, %v331
        %v337 = vmul.f32 %v314, %v331
        %v338 = vmul.f32 %v315, %v331
        %v339 = vmul.f32 %v316, %v331
        %v340 = vmul.f32 %v317, %v331
        %v341 = vmul.f32 %v318, %v331
        %v342 = vmul.f32 %v319, %v331
        %v343 = vmul.f32 %v320, %v331
        %v344 = vmul.f32 %v321, %v331
        %v345 = vmul.f32 %v322, %v331
        %v346 = vmul.f32 %v323, %v331
        %v347 = vmul.f32 %v324, %v331
        %v348 = vmul.f32 %v325, %v331
        %v349 = vld [vmem:[%s3] sm:$0x1]
        %v351 = vlaneseq
        %v352 = vshrl.u32 %v351, 7
        %v353 = vsub.s32 0, %v352
        %v354 = vrot.slane %v349, %v353
        %v356 = vadd.f32 %v333, %v354
        %v357 = vadd.f32 %v334, %v354
        %v358 = vadd.f32 %v335, %v354
        %v359 = vadd.f32 %v336, %v354
        %v360 = vadd.f32 %v337, %v354
        %v361 = vadd.f32 %v338, %v354
        %v362 = vadd.f32 %v339, %v354
        %v363 = vadd.f32 %v340, %v354
        %v364 = vadd.f32 %v341, %v354
        %v365 = vadd.f32 %v342, %v354
        %v366 = vadd.f32 %v343, %v354
        %v367 = vadd.f32 %v344, %v354
        %v368 = vadd.f32 %v345, %v354
        %v369 = vadd.f32 %v346, %v354
        %v370 = vadd.f32 %v347, %v354
        %v371 = vadd.f32 %v348, %v354
        %v372 = vmax.f32 %v356, 0.0
        %v373 = vmax.f32 %v357, 0.0
        %v374 = vmax.f32 %v358, 0.0
        %v375 = vmax.f32 %v359, 0.0
        %v376 = vmax.f32 %v360, 0.0
        %v377 = vmax.f32 %v361, 0.0
        %v378 = vmax.f32 %v362, 0.0
        %v379 = vmax.f32 %v363, 0.0
        %v380 = vmax.f32 %v364, 0.0
        %v381 = vmax.f32 %v365, 0.0
        %v382 = vmax.f32 %v366, 0.0
        %v383 = vmax.f32 %v367, 0.0
        %v384 = vmax.f32 %v368, 0.0
        %v385 = vmax.f32 %v369, 0.0
        %v386 = vmax.f32 %v370, 0.0
        %v387 = vmax.f32 %v371, 0.0
        %vm388 = vcmask 523264
        %389 = vst.msk [vmem:[#allocation2] sm:$0xff] %vm388, 0.0
        %vm390 = vcmask 517120
        %391 = vst.msk [vmem:[#allocation2 + $0x8] sm:$0x3] %vm390, 0.0
        %392 = vst.msk [vmem:[#allocation2 + $0x10] sm:$0xff] %vm388, 0.0
        %393 = vst.msk [vmem:[#allocation2 + $0x18] sm:$0x3] %vm390, 0.0
        %394 = vst.msk [vmem:[#allocation2 + $0x20] sm:$0xff] %vm388, 0.0
        %395 = vst.msk [vmem:[#allocation2 + $0x28] sm:$0x3] %vm390, 0.0
        %396 = vst.msk [vmem:[#allocation2 + $0x30] sm:$0xff] %vm388, 0.0
        %397 = vst.msk [vmem:[#allocation2 + $0x38] sm:$0x3] %vm390, 0.0
        %398 = vst.msk [vmem:[#allocation2 + $0x40] sm:$0xff] %vm388, 0.0
        %399 = vst.msk [vmem:[#allocation2 + $0x48] sm:$0x3] %vm390, 0.0
        %400 = vst.msk [vmem:[#allocation2 + $0x50] sm:$0xff] %vm388, 0.0
        %401 = vst.msk [vmem:[#allocation2 + $0x58] sm:$0x3] %vm390, 0.0
        %402 = vst.msk [vmem:[#allocation2 + $0x60] sm:$0xff] %vm388, 0.0
        %403 = vst.msk [vmem:[#allocation2 + $0x68] sm:$0x3] %vm390, 0.0
        %404 = vst.msk [vmem:[#allocation2 + $0x70] sm:$0xff] %vm388, 0.0
        %405 = vst.msk [vmem:[#allocation2 + $0x78] sm:$0x3] %vm390, 0.0
        %406 = vst.msk [vmem:[#allocation2 + $0x80] sm:$0xff] %vm388, 0.0
        %407 = vst.msk [vmem:[#allocation2 + $0x88] sm:$0x3] %vm390, 0.0
        %408 = vst.msk [vmem:[#allocation2 + $0x90] sm:$0xff] %vm388, 0.0
        %409 = vst.msk [vmem:[#allocation2 + $0x98] sm:$0x3] %vm390, 0.0
        %410 = vst.msk [vmem:[#allocation2 + $0xa0] sm:$0xff] %vm388, 0.0
        %411 = vst.msk [vmem:[#allocation2 + $0xa8] sm:$0x3] %vm390, 0.0
        %412 = vst.msk [vmem:[#allocation2 + $0xb0] sm:$0xff] %vm388, 0.0
        %413 = vst.msk [vmem:[#allocation2 + $0xb8] sm:$0x3] %vm390, 0.0
        %414 = vst.msk [vmem:[#allocation2 + $0xc0] sm:$0xff] %vm388, 0.0
        %415 = vst.msk [vmem:[#allocation2 + $0xc8] sm:$0x3] %vm390, 0.0
        %416 = vst.msk [vmem:[#allocation2 + $0xd0] sm:$0xff] %vm388, 0.0
        %417 = vst.msk [vmem:[#allocation2 + $0xd8] sm:$0x3] %vm390, 0.0
        %418 = vst.msk [vmem:[#allocation2 + $0xe0] sm:$0xff] %vm388, 0.0
        %419 = vst.msk [vmem:[#allocation2 + $0xe8] sm:$0x3] %vm390, 0.0
        %420 = vst.msk [vmem:[#allocation2 + $0xf0] sm:$0xff] %vm388, 0.0
        %421 = vst.msk [vmem:[#allocation2 + $0xf8] sm:$0x3] %vm390, 0.0
        %422 = vst.msk [vmem:[#allocation2 + $0x100] sm:$0xff] %vm388, 0.0
        %423 = vst.msk [vmem:[#allocation2 + $0x108] sm:$0x3] %vm390, 0.0
        %424 = vst.msk [vmem:[#allocation2 + $0x110] sm:$0xff] %vm388, 0.0
        %425 = vst.msk [vmem:[#allocation2 + $0x118] sm:$0x3] %vm390, 0.0
        %s426 = scalar_lea.vmem [#allocation2], 16
        %427 = vst.msk [vmem:[%s426 + $0x1] sm:$0xff] %vm388, %v372
        %428 = vst.msk [vmem:[%s426 + $0x11] sm:$0xff] %vm388, %v373
        %429 = vst.msk [vmem:[%s426 + $0x21] sm:$0xff] %vm388, %v374
        %430 = vst.msk [vmem:[%s426 + $0x31] sm:$0xff] %vm388, %v375
        %431 = vst.msk [vmem:[%s426 + $0x41] sm:$0xff] %vm388, %v376
        %432 = vst.msk [vmem:[%s426 + $0x51] sm:$0xff] %vm388, %v377
        %433 = vst.msk [vmem:[%s426 + $0x61] sm:$0xff] %vm388, %v378
        %434 = vst.msk [vmem:[%s426 + $0x71] sm:$0xff] %vm388, %v379
        %435 = vst.msk [vmem:[%s426 + $0x81] sm:$0xff] %vm388, %v380
        %436 = vst.msk [vmem:[%s426 + $0x91] sm:$0xff] %vm388, %v381
        %437 = vst.msk [vmem:[%s426 + $0xa1] sm:$0xff] %vm388, %v382
        %438 = vst.msk [vmem:[%s426 + $0xb1] sm:$0xff] %vm388, %v383
        %439 = vst.msk [vmem:[%s426 + $0xc1] sm:$0xff] %vm388, %v384
        %440 = vst.msk [vmem:[%s426 + $0xd1] sm:$0xff] %vm388, %v385
        %441 = vst.msk [vmem:[%s426 + $0xe1] sm:$0xff] %vm388, %v386
        %442 = vst.msk [vmem:[%s426 + $0xf1] sm:$0xff] %vm388, %v387
        %v443 = vld [vmem:[#allocation2] sm:$0xff]
        %v444 = vld [vmem:[#allocation2 + $0x10] sm:$0xff]
        %v445 = vld [vmem:[#allocation2 + $0x20] sm:$0xff]
        %v446 = vld [vmem:[#allocation2 + $0x30] sm:$0xff]
        %v447 = vld [vmem:[#allocation2 + $0x40] sm:$0xff]
        %v448 = vld [vmem:[#allocation2 + $0x50] sm:$0xff]
        %v449 = vld [vmem:[#allocation2 + $0x60] sm:$0xff]
        %v450 = vld [vmem:[#allocation2 + $0x70] sm:$0xff]
        %v451 = vld [vmem:[#allocation2 + $0x80] sm:$0xff]
        %v452 = vld [vmem:[#allocation2 + $0x90] sm:$0xff]
        %v453 = vld [vmem:[#allocation2 + $0xa0] sm:$0xff]
        %v454 = vld [vmem:[#allocation2 + $0xb0] sm:$0xff]
        %v455 = vld [vmem:[#allocation2 + $0xc0] sm:$0xff]
        %v456 = vld [vmem:[#allocation2 + $0xd0] sm:$0xff]
        %v457 = vld [vmem:[#allocation2 + $0xe0] sm:$0xff]
        %v458 = vld [vmem:[#allocation2 + $0xf0] sm:$0xff]
        %v459 = vld [vmem:[#allocation2 + $0x1] sm:$0xff]
        %v460 = vld [vmem:[#allocation2 + $0x11] sm:$0xff]
        %v461 = vld [vmem:[#allocation2 + $0x21] sm:$0xff]
        %v462 = vld [vmem:[#allocation2 + $0x31] sm:$0xff]
        %v463 = vld [vmem:[#allocation2 + $0x41] sm:$0xff]
        %v464 = vld [vmem:[#allocation2 + $0x51] sm:$0xff]
        %v465 = vld [vmem:[#allocation2 + $0x61] sm:$0xff]
        %v466 = vld [vmem:[#allocation2 + $0x71] sm:$0xff]
        %v467 = vld [vmem:[#allocation2 + $0x81] sm:$0xff]
        %v468 = vld [vmem:[#allocation2 + $0x91] sm:$0xff]
        %v469 = vld [vmem:[#allocation2 + $0xa1] sm:$0xff]
        %v470 = vld [vmem:[#allocation2 + $0xb1] sm:$0xff]
        %v471 = vld [vmem:[#allocation2 + $0xc1] sm:$0xff]
        %v472 = vld [vmem:[#allocation2 + $0xd1] sm:$0xff]
        %v473 = vld [vmem:[#allocation2 + $0xe1] sm:$0xff]
        %v474 = vld [vmem:[#allocation2 + $0xf1] sm:$0xff]
        %v475 = vld [vmem:[#allocation2 + $0x2] sm:$0xff]
        %v476 = vld [vmem:[#allocation2 + $0x12] sm:$0xff]
        %v477 = vld [vmem:[#allocation2 + $0x22] sm:$0xff]
        %v478 = vld [vmem:[#allocation2 + $0x32] sm:$0xff]
        %v479 = vld [vmem:[#allocation2 + $0x42] sm:$0xff]
        %v480 = vld [vmem:[#allocation2 + $0x52] sm:$0xff]
        %v481 = vld [vmem:[#allocation2 + $0x62] sm:$0xff]
        %v482 = vld [vmem:[#allocation2 + $0x72] sm:$0xff]
        %v483 = vld [vmem:[#allocation2 + $0x82] sm:$0xff]
        %v484 = vld [vmem:[#allocation2 + $0x92] sm:$0xff]
        %v485 = vld [vmem:[#allocation2 + $0xa2] sm:$0xff]
        %v486 = vld [vmem:[#allocation2 + $0xb2] sm:$0xff]
        %v487 = vld [vmem:[#allocation2 + $0xc2] sm:$0xff]
        %v488 = vld [vmem:[#allocation2 + $0xd2] sm:$0xff]
        %v489 = vld [vmem:[#allocation2 + $0xe2] sm:$0xff]
        %v490 = vld [vmem:[#allocation2 + $0xf2] sm:$0xff]
        %v491 = vld [vmem:[%s426] sm:$0xff]
        %v492 = vld [vmem:[%s426 + $0x10] sm:$0xff]
        %v493 = vld [vmem:[%s426 + $0x20] sm:$0xff]
        %v494 = vld [vmem:[%s426 + $0x30] sm:$0xff]
        %v495 = vld [vmem:[%s426 + $0x40] sm:$0xff]
        %v496 = vld [vmem:[%s426 + $0x50] sm:$0xff]
        %v497 = vld [vmem:[%s426 + $0x60] sm:$0xff]
        %v498 = vld [vmem:[%s426 + $0x70] sm:$0xff]
        %v499 = vld [vmem:[%s426 + $0x80] sm:$0xff]
        %v500 = vld [vmem:[%s426 + $0x90] sm:$0xff]
        %v501 = vld [vmem:[%s426 + $0xa0] sm:$0xff]
        %v502 = vld [vmem:[%s426 + $0xb0] sm:$0xff]
        %v503 = vld [vmem:[%s426 + $0xc0] sm:$0xff]
        %v504 = vld [vmem:[%s426 + $0xd0] sm:$0xff]
        %v505 = vld [vmem:[%s426 + $0xe0] sm:$0xff]
        %v506 = vld [vmem:[%s426 + $0xf0] sm:$0xff]
        %v507 = vld [vmem:[%s426 + $0x1] sm:$0xff]
        %v508 = vld [vmem:[%s426 + $0x11] sm:$0xff]
        %v509 = vld [vmem:[%s426 + $0x21] sm:$0xff]
        %v510 = vld [vmem:[%s426 + $0x31] sm:$0xff]
        %v511 = vld [vmem:[%s426 + $0x41] sm:$0xff]
        %v512 = vld [vmem:[%s426 + $0x51] sm:$0xff]
        %v513 = vld [vmem:[%s426 + $0x61] sm:$0xff]
        %v514 = vld [vmem:[%s426 + $0x71] sm:$0xff]
        %v515 = vld [vmem:[%s426 + $0x81] sm:$0xff]
        %v516 = vld [vmem:[%s426 + $0x91] sm:$0xff]
        %v517 = vld [vmem:[%s426 + $0xa1] sm:$0xff]
        %v518 = vld [vmem:[%s426 + $0xb1] sm:$0xff]
        %v519 = vld [vmem:[%s426 + $0xc1] sm:$0xff]
        %v520 = vld [vmem:[%s426 + $0xd1] sm:$0xff]
        %v521 = vld [vmem:[%s426 + $0xe1] sm:$0xff]
        %v522 = vld [vmem:[%s426 + $0xf1] sm:$0xff]
        %v523 = vld [vmem:[%s426 + $0x2] sm:$0xff]
        %v524 = vld [vmem:[%s426 + $0x12] sm:$0xff]
        %v525 = vld [vmem:[%s426 + $0x22] sm:$0xff]
        %v526 = vld [vmem:[%s426 + $0x32] sm:$0xff]
        %v527 = vld [vmem:[%s426 + $0x42] sm:$0xff]
        %v528 = vld [vmem:[%s426 + $0x52] sm:$0xff]
        %v529 = vld [vmem:[%s426 + $0x62] sm:$0xff]
        %v530 = vld [vmem:[%s426 + $0x72] sm:$0xff]
        %v531 = vld [vmem:[%s426 + $0x82] sm:$0xff]
        %v532 = vld [vmem:[%s426 + $0x92] sm:$0xff]
        %v533 = vld [vmem:[%s426 + $0xa2] sm:$0xff]
        %v534 = vld [vmem:[%s426 + $0xb2] sm:$0xff]
        %v535 = vld [vmem:[%s426 + $0xc2] sm:$0xff]
        %v536 = vld [vmem:[%s426 + $0xd2] sm:$0xff]
        %v537 = vld [vmem:[%s426 + $0xe2] sm:$0xff]
        %v538 = vld [vmem:[%s426 + $0xf2] sm:$0xff]
        %s539 = scalar_lea.vmem [#allocation2], 32
        %v540 = vld [vmem:[%s539] sm:$0xff]
        %v541 = vld [vmem:[%s539 + $0x10] sm:$0xff]
        %v542 = vld [vmem:[%s539 + $0x20] sm:$0xff]
        %v543 = vld [vmem:[%s539 + $0x30] sm:$0xff]
        %v544 = vld [vmem:[%s539 + $0x40] sm:$0xff]
        %v545 = vld [vmem:[%s539 + $0x50] sm:$0xff]
        %v546 = vld [vmem:[%s539 + $0x60] sm:$0xff]
        %v547 = vld [vmem:[%s539 + $0x70] sm:$0xff]
        %v548 = vld [vmem:[%s539 + $0x80] sm:$0xff]
        %v549 = vld [vmem:[%s539 + $0x90] sm:$0xff]
        %v550 = vld [vmem:[%s539 + $0xa0] sm:$0xff]
        %v551 = vld [vmem:[%s539 + $0xb0] sm:$0xff]
        %v552 = vld [vmem:[%s539 + $0xc0] sm:$0xff]
        %v553 = vld [vmem:[%s539 + $0xd0] sm:$0xff]
        %v554 = vld [vmem:[%s539 + $0xe0] sm:$0xff]
        %v555 = vld [vmem:[%s539 + $0xf0] sm:$0xff]
        %v556 = vld [vmem:[%s539 + $0x1] sm:$0xff]
        %v557 = vld [vmem:[%s539 + $0x11] sm:$0xff]
        %v558 = vld [vmem:[%s539 + $0x21] sm:$0xff]
        %v559 = vld [vmem:[%s539 + $0x31] sm:$0xff]
        %v560 = vld [vmem:[%s539 + $0x41] sm:$0xff]
        %v561 = vld [vmem:[%s539 + $0x51] sm:$0xff]
        %v562 = vld [vmem:[%s539 + $0x61] sm:$0xff]
        %v563 = vld [vmem:[%s539 + $0x71] sm:$0xff]
        %v564 = vld [vmem:[%s539 + $0x81] sm:$0xff]
        %v565 = vld [vmem:[%s539 + $0x91] sm:$0xff]
        %v566 = vld [vmem:[%s539 + $0xa1] sm:$0xff]
        %v567 = vld [vmem:[%s539 + $0xb1] sm:$0xff]
        %v568 = vld [vmem:[%s539 + $0xc1] sm:$0xff]
        %v569 = vld [vmem:[%s539 + $0xd1] sm:$0xff]
        %v570 = vld [vmem:[%s539 + $0xe1] sm:$0xff]
        %v571 = vld [vmem:[%s539 + $0xf1] sm:$0xff]
        %v572 = vld [vmem:[%s539 + $0x2] sm:$0xff]
        %v573 = vld [vmem:[%s539 + $0x12] sm:$0xff]
        %v574 = vld [vmem:[%s539 + $0x22] sm:$0xff]
        %v575 = vld [vmem:[%s539 + $0x32] sm:$0xff]
        %v576 = vld [vmem:[%s539 + $0x42] sm:$0xff]
        %v577 = vld [vmem:[%s539 + $0x52] sm:$0xff]
        %v578 = vld [vmem:[%s539 + $0x62] sm:$0xff]
        %v579 = vld [vmem:[%s539 + $0x72] sm:$0xff]
        %v580 = vld [vmem:[%s539 + $0x82] sm:$0xff]
        %v581 = vld [vmem:[%s539 + $0x92] sm:$0xff]
        %v582 = vld [vmem:[%s539 + $0xa2] sm:$0xff]
        %v583 = vld [vmem:[%s539 + $0xb2] sm:$0xff]
        %v584 = vld [vmem:[%s539 + $0xc2] sm:$0xff]
        %v585 = vld [vmem:[%s539 + $0xd2] sm:$0xff]
        %v586 = vld [vmem:[%s539 + $0xe2] sm:$0xff]
        %v587 = vld [vmem:[%s539 + $0xf2] sm:$0xff]
        %604 = vrot.lane.b32.xlu0 %v459, 64
        %v605 = vpop.permute.xlu0 %604
        %606 = vrot.lane.b32.xlu0 %v460, 64
        %v607 = vpop.permute.xlu0 %606
        %608 = vrot.lane.b32.xlu0 %v461, 64
        %v609 = vpop.permute.xlu0 %608
        %610 = vrot.lane.b32.xlu0 %v462, 64
        %v611 = vpop.permute.xlu0 %610
        %612 = vrot.lane.b32.xlu0 %v463, 64
        %v613 = vpop.permute.xlu0 %612
        %614 = vrot.lane.b32.xlu0 %v464, 64
        %v615 = vpop.permute.xlu0 %614
        %616 = vrot.lane.b32.xlu0 %v465, 64
        %v617 = vpop.permute.xlu0 %616
        %618 = vrot.lane.b32.xlu0 %v466, 64
        %v619 = vpop.permute.xlu0 %618
        %620 = vrot.lane.b32.xlu0 %v467, 64
        %v621 = vpop.permute.xlu0 %620
        %622 = vrot.lane.b32.xlu0 %v468, 64
        %v623 = vpop.permute.xlu0 %622
        %624 = vrot.lane.b32.xlu0 %v469, 64
        %v625 = vpop.permute.xlu0 %624
        %626 = vrot.lane.b32.xlu0 %v470, 64
        %v627 = vpop.permute.xlu0 %626
        %628 = vrot.lane.b32.xlu0 %v471, 64
        %v629 = vpop.permute.xlu0 %628
        %630 = vrot.lane.b32.xlu0 %v472, 64
        %v631 = vpop.permute.xlu0 %630
        %632 = vrot.lane.b32.xlu0 %v473, 64
        %v633 = vpop.permute.xlu0 %632
        %634 = vrot.lane.b32.xlu0 %v474, 64
        %v635 = vpop.permute.xlu0 %634
        %668 = vrot.lane.b32.xlu0 %v491, 64
        %v669 = vpop.permute.xlu0 %668
        %670 = vrot.lane.b32.xlu0 %v492, 64
        %v671 = vpop.permute.xlu0 %670
        %672 = vrot.lane.b32.xlu0 %v493, 64
        %v673 = vpop.permute.xlu0 %672
        %674 = vrot.lane.b32.xlu0 %v494, 64
        %v675 = vpop.permute.xlu0 %674
        %676 = vrot.lane.b32.xlu0 %v495, 64
        %v677 = vpop.permute.xlu0 %676
        %678 = vrot.lane.b32.xlu0 %v496, 64
        %v679 = vpop.permute.xlu0 %678
        %680 = vrot.lane.b32.xlu0 %v497, 64
        %v681 = vpop.permute.xlu0 %680
        %682 = vrot.lane.b32.xlu0 %v498, 64
        %v683 = vpop.permute.xlu0 %682
        %684 = vrot.lane.b32.xlu0 %v499, 64
        %v685 = vpop.permute.xlu0 %684
        %686 = vrot.lane.b32.xlu0 %v500, 64
        %v687 = vpop.permute.xlu0 %686
        %688 = vrot.lane.b32.xlu0 %v501, 64
        %v689 = vpop.permute.xlu0 %688
        %690 = vrot.lane.b32.xlu0 %v502, 64
        %v691 = vpop.permute.xlu0 %690
        %692 = vrot.lane.b32.xlu0 %v503, 64
        %v693 = vpop.permute.xlu0 %692
        %694 = vrot.lane.b32.xlu0 %v504, 64
        %v695 = vpop.permute.xlu0 %694
        %696 = vrot.lane.b32.xlu0 %v505, 64
        %v697 = vpop.permute.xlu0 %696
        %698 = vrot.lane.b32.xlu0 %v506, 64
        %v699 = vpop.permute.xlu0 %698
        %732 = vrot.lane.b32.xlu0 %v523, 64
        %v733 = vpop.permute.xlu0 %732
        %734 = vrot.lane.b32.xlu0 %v524, 64
        %v735 = vpop.permute.xlu0 %734
        %736 = vrot.lane.b32.xlu0 %v525, 64
        %v737 = vpop.permute.xlu0 %736
        %738 = vrot.lane.b32.xlu0 %v526, 64
        %v739 = vpop.permute.xlu0 %738
        %740 = vrot.lane.b32.xlu0 %v527, 64
        %v741 = vpop.permute.xlu0 %740
        %742 = vrot.lane.b32.xlu0 %v528, 64
        %v743 = vpop.permute.xlu0 %742
        %744 = vrot.lane.b32.xlu0 %v529, 64
        %v745 = vpop.permute.xlu0 %744
        %746 = vrot.lane.b32.xlu0 %v530, 64
        %v747 = vpop.permute.xlu0 %746
        %748 = vrot.lane.b32.xlu0 %v531, 64
        %v749 = vpop.permute.xlu0 %748
        %750 = vrot.lane.b32.xlu0 %v532, 64
        %v751 = vpop.permute.xlu0 %750
        %752 = vrot.lane.b32.xlu0 %v533, 64
        %v753 = vpop.permute.xlu0 %752
        %754 = vrot.lane.b32.xlu0 %v534, 64
        %v755 = vpop.permute.xlu0 %754
        %756 = vrot.lane.b32.xlu0 %v535, 64
        %v757 = vpop.permute.xlu0 %756
        %758 = vrot.lane.b32.xlu0 %v536, 64
        %v759 = vpop.permute.xlu0 %758
        %760 = vrot.lane.b32.xlu0 %v537, 64
        %v761 = vpop.permute.xlu0 %760
        %762 = vrot.lane.b32.xlu0 %v538, 64
        %v763 = vpop.permute.xlu0 %762
        %796 = vrot.lane.b32.xlu0 %v556, 64
        %v797 = vpop.permute.xlu0 %796
        %798 = vrot.lane.b32.xlu0 %v557, 64
        %v799 = vpop.permute.xlu0 %798
        %800 = vrot.lane.b32.xlu0 %v558, 64
        %v801 = vpop.permute.xlu0 %800
        %802 = vrot.lane.b32.xlu0 %v559, 64
        %v803 = vpop.permute.xlu0 %802
        %804 = vrot.lane.b32.xlu0 %v560, 64
        %v805 = vpop.permute.xlu0 %804
        %806 = vrot.lane.b32.xlu0 %v561, 64
        %v807 = vpop.permute.xlu0 %806
        %808 = vrot.lane.b32.xlu0 %v562, 64
        %v809 = vpop.permute.xlu0 %808
        %810 = vrot.lane.b32.xlu0 %v563, 64
        %v811 = vpop.permute.xlu0 %810
        %812 = vrot.lane.b32.xlu0 %v564, 64
        %v813 = vpop.permute.xlu0 %812
        %814 = vrot.lane.b32.xlu0 %v565, 64
        %v815 = vpop.permute.xlu0 %814
        %816 = vrot.lane.b32.xlu0 %v566, 64
        %v817 = vpop.permute.xlu0 %816
        %818 = vrot.lane.b32.xlu0 %v567, 64
        %v819 = vpop.permute.xlu0 %818
        %820 = vrot.lane.b32.xlu0 %v568, 64
        %v821 = vpop.permute.xlu0 %820
        %822 = vrot.lane.b32.xlu0 %v569, 64
        %v823 = vpop.permute.xlu0 %822
        %824 = vrot.lane.b32.xlu0 %v570, 64
        %v825 = vpop.permute.xlu0 %824
        %826 = vrot.lane.b32.xlu0 %v571, 64
        %v827 = vpop.permute.xlu0 %826
        %v844 = vsel %vm388, %v443, %v605
        %v845 = vsel %vm388, %v444, %v607
        %v846 = vsel %vm388, %v445, %v609
        %v847 = vsel %vm388, %v446, %v611
        %v848 = vsel %vm388, %v447, %v613
        %v849 = vsel %vm388, %v448, %v615
        %v850 = vsel %vm388, %v449, %v617
        %v851 = vsel %vm388, %v450, %v619
        %v852 = vsel %vm388, %v451, %v621
        %v853 = vsel %vm388, %v452, %v623
        %v854 = vsel %vm388, %v453, %v625
        %v855 = vsel %vm388, %v454, %v627
        %v856 = vsel %vm388, %v455, %v629
        %v857 = vsel %vm388, %v456, %v631
        %v858 = vsel %vm388, %v457, %v633
        %v859 = vsel %vm388, %v458, %v635
        %v860 = vsel %vm388, %v475, %v669
        %v861 = vsel %vm388, %v476, %v671
        %v862 = vsel %vm388, %v477, %v673
        %v863 = vsel %vm388, %v478, %v675
        %v864 = vsel %vm388, %v479, %v677
        %v865 = vsel %vm388, %v480, %v679
        %v866 = vsel %vm388, %v481, %v681
        %v867 = vsel %vm388, %v482, %v683
        %v868 = vsel %vm388, %v483, %v685
        %v869 = vsel %vm388, %v484, %v687
        %v870 = vsel %vm388, %v485, %v689
        %v871 = vsel %vm388, %v486, %v691
        %v872 = vsel %vm388, %v487, %v693
        %v873 = vsel %vm388, %v488, %v695
        %v874 = vsel %vm388, %v489, %v697
        %v875 = vsel %vm388, %v490, %v699
        %v876 = vsel %vm388, %v507, %v733
        %v877 = vsel %vm388, %v508, %v735
        %v878 = vsel %vm388, %v509, %v737
        %v879 = vsel %vm388, %v510, %v739
        %v880 = vsel %vm388, %v511, %v741
        %v881 = vsel %vm388, %v512, %v743
        %v882 = vsel %vm388, %v513, %v745
        %v883 = vsel %vm388, %v514, %v747
        %v884 = vsel %vm388, %v515, %v749
        %v885 = vsel %vm388, %v516, %v751
        %v886 = vsel %vm388, %v517, %v753
        %v887 = vsel %vm388, %v518, %v755
        %v888 = vsel %vm388, %v519, %v757
        %v889 = vsel %vm388, %v520, %v759
        %v890 = vsel %vm388, %v521, %v761
        %v891 = vsel %vm388, %v522, %v763
        %v892 = vsel %vm388, %v540, %v797
        %v893 = vsel %vm388, %v541, %v799
        %v894 = vsel %vm388, %v542, %v801
        %v895 = vsel %vm388, %v543, %v803
        %v896 = vsel %vm388, %v544, %v805
        %v897 = vsel %vm388, %v545, %v807
        %v898 = vsel %vm388, %v546, %v809
        %v899 = vsel %vm388, %v547, %v811
        %v900 = vsel %vm388, %v548, %v813
        %v901 = vsel %vm388, %v549, %v815
        %v902 = vsel %vm388, %v550, %v817
        %v903 = vsel %vm388, %v551, %v819
        %v904 = vsel %vm388, %v552, %v821
        %v905 = vsel %vm388, %v553, %v823
        %v906 = vsel %vm388, %v554, %v825
        %v907 = vsel %vm388, %v555, %v827
        %v908 = vld [vmem:[%s4] sm:$0xff]
        %v909 = vld [vmem:[%s4 + $0x8] sm:$0xff]
        %v910 = vld [vmem:[%s4 + $0x10] sm:$0xff]
        %v911 = vld [vmem:[%s4 + $0x18] sm:$0xff]
        %v912 = vld [vmem:[%s4 + $0x20] sm:$0xff]
        %v913 = vld [vmem:[%s4 + $0x28] sm:$0xff]
        %v914 = vld [vmem:[%s4 + $0x30] sm:$0xff]
        %v915 = vld [vmem:[%s4 + $0x38] sm:$0xff]
        %v916 = vld [vmem:[%s4 + $0x40] sm:$0xff]
        %v917 = vld [vmem:[%s4 + $0x48] sm:$0xff]
        %v918 = vld [vmem:[%s4 + $0x50] sm:$0xff]
        %v919 = vld [vmem:[%s4 + $0x58] sm:$0xff]
        %v920 = vld [vmem:[%s4 + $0x60] sm:$0xff]
        %v921 = vld [vmem:[%s4 + $0x68] sm:$0xff]
        %v922 = vld [vmem:[%s4 + $0x70] sm:$0xff]
        %v923 = vld [vmem:[%s4 + $0x78] sm:$0xff]
        %v924 = vld [vmem:[%s4 + $0x80] sm:$0xff]
        %v925 = vld [vmem:[%s4 + $0x88] sm:$0xff]
        %v926 = vld [vmem:[%s4 + $0x90] sm:$0xff]
        %v927 = vld [vmem:[%s4 + $0x98] sm:$0xff]
        %v928 = vld [vmem:[%s4 + $0xa0] sm:$0xff]
        %v929 = vld [vmem:[%s4 + $0xa8] sm:$0xff]
        %v930 = vld [vmem:[%s4 + $0xb0] sm:$0xff]
        %v931 = vld [vmem:[%s4 + $0xb8] sm:$0xff]
        %v932 = vld [vmem:[%s4 + $0xc0] sm:$0xff]
        %v933 = vld [vmem:[%s4 + $0xc8] sm:$0xff]
        %v934 = vld [vmem:[%s4 + $0xd0] sm:$0xff]
        %v935 = vld [vmem:[%s4 + $0xd8] sm:$0xff]
        %v936 = vld [vmem:[%s4 + $0xe0] sm:$0xff]
        %v937 = vld [vmem:[%s4 + $0xe8] sm:$0xff]
        %v938 = vld [vmem:[%s4 + $0xf0] sm:$0xff]
        %v939 = vld [vmem:[%s4 + $0xf8] sm:$0xff]
        %v940 = vld [vmem:[%s4 + $0x100] sm:$0xff]
        %v941 = vld [vmem:[%s4 + $0x108] sm:$0xff]
        %v942 = vld [vmem:[%s4 + $0x110] sm:$0xff]
        %v943 = vld [vmem:[%s4 + $0x118] sm:$0xff]
        %v944 = vld [vmem:[%s4 + $0x120] sm:$0xff]
        %v945 = vld [vmem:[%s4 + $0x128] sm:$0xff]
        %v946 = vld [vmem:[%s4 + $0x130] sm:$0xff]
        %v947 = vld [vmem:[%s4 + $0x138] sm:$0xff]
        %v948 = vld [vmem:[%s4 + $0x140] sm:$0xff]
        %v949 = vld [vmem:[%s4 + $0x148] sm:$0xff]
        %v950 = vld [vmem:[%s4 + $0x150] sm:$0xff]
        %v951 = vld [vmem:[%s4 + $0x158] sm:$0xff]
        %v952 = vld [vmem:[%s4 + $0x160] sm:$0xff]
        %v953 = vld [vmem:[%s4 + $0x168] sm:$0xff]
        %v954 = vld [vmem:[%s4 + $0x170] sm:$0xff]
        %v955 = vld [vmem:[%s4 + $0x178] sm:$0xff]
        %v956 = vld [vmem:[%s4 + $0x180] sm:$0xff]
        %v957 = vld [vmem:[%s4 + $0x188] sm:$0xff]
        %v958 = vld [vmem:[%s4 + $0x190] sm:$0xff]
        %v959 = vld [vmem:[%s4 + $0x198] sm:$0xff]
        %v960 = vld [vmem:[%s4 + $0x1a0] sm:$0xff]
        %v961 = vld [vmem:[%s4 + $0x1a8] sm:$0xff]
        %v962 = vld [vmem:[%s4 + $0x1b0] sm:$0xff]
        %v963 = vld [vmem:[%s4 + $0x1b8] sm:$0xff]
        %v964 = vld [vmem:[%s4 + $0x1c0] sm:$0xff]
        %v965 = vld [vmem:[%s4 + $0x1c8] sm:$0xff]
        %v966 = vld [vmem:[%s4 + $0x1d0] sm:$0xff]
        %v967 = vld [vmem:[%s4 + $0x1d8] sm:$0xff]
        %v968 = vld [vmem:[%s4 + $0x1e0] sm:$0xff]
        %v969 = vld [vmem:[%s4 + $0x1e8] sm:$0xff]
        %v970 = vld [vmem:[%s4 + $0x1f0] sm:$0xff]
        %v971 = vld [vmem:[%s4 + $0x1f8] sm:$0xff]
        %v972 = vld [vmem:[%s4 + $0x200] sm:$0xff]
        %v973 = vld [vmem:[%s4 + $0x208] sm:$0xff]
        %v974 = vld [vmem:[%s4 + $0x210] sm:$0xff]
        %v975 = vld [vmem:[%s4 + $0x218] sm:$0xff]
        %v976 = vld [vmem:[%s4 + $0x220] sm:$0xff]
        %v977 = vld [vmem:[%s4 + $0x228] sm:$0xff]
        %v978 = vld [vmem:[%s4 + $0x230] sm:$0xff]
        %v979 = vld [vmem:[%s4 + $0x238] sm:$0xff]
        %v981 = vsel %vm388, %v572, 0
        %v984 = vsel %vm388, %v573, 0
        %v987 = vsel %vm388, %v574, 0
        %v990 = vsel %vm388, %v575, 0
        %v993 = vsel %vm388, %v576, 0
        %v996 = vsel %vm388, %v577, 0
        %v999 = vsel %vm388, %v578, 0
        %v1002 = vsel %vm388, %v579, 0
        %v1005 = vsel %vm388, %v580, 0
        %v1008 = vsel %vm388, %v581, 0
        %v1011 = vsel %vm388, %v582, 0
        %v1014 = vsel %vm388, %v583, 0
        %v1017 = vsel %vm388, %v584, 0
        %v1020 = vsel %vm388, %v585, 0
        %v1023 = vsel %vm388, %v586, 0
        %v1026 = vsel %vm388, %v587, 0
        %1028 = vmatprep.subr.mxu0 0.0
        %1029 = vmatpush1.msra.mxu0 %v908
        %1030 = vmatprep.subr.mxu0 0.0
        %1031 = vmatpush1.msra.mxu0 %v909
        %1032 = vmatprep.subr.mxu0 0.0
        %1033 = vmatpush1.msra.mxu0 %v910
        %1034 = vmatprep.subr.mxu0 0.0
        %1035 = vmatpush1.msra.mxu0 %v911
        %1036 = vmatprep.subr.mxu0 0.0
        %1037 = vmatpush1.msra.mxu0 %v912
        %1038 = vmatprep.subr.mxu0 0.0
        %1039 = vmatpush1.msra.mxu0 %v913
        %1040 = vmatprep.subr.mxu0 0.0
        %1041 = vmatpush1.msra.mxu0 %v914
        %1042 = vmatprep.subr.mxu0 0.0
        %1043 = vmatpush1.msra.mxu0 %v915
        %1044 = vmatprep.subr.mxu0 0.0
        %1045 = vmatpush1.msra.mxu0 %v916
        %1046 = vmatprep.subr.mxu0 0.0
        %1047 = vmatpush1.msra.mxu0 %v917
        %1048 = vmatprep.subr.mxu0 0.0
        %1049 = vmatpush1.msra.mxu0 %v918
        %1050 = vmatprep.subr.mxu0 0.0
        %1051 = vmatpush1.msra.mxu0 %v919
        %1052 = vmatprep.subr.mxu0 0.0
        %1053 = vmatpush1.msra.mxu0 %v920
        %1054 = vmatprep.subr.mxu0 0.0
        %1055 = vmatpush1.msra.mxu0 %v921
        %1056 = vmatprep.subr.mxu0 0.0
        %1057 = vmatpush1.msra.mxu0 %v922
        %1058 = vmatprep.subr.mxu0 0.0
        %1059 = vmatpush1.msra.mxu0 %v923
        %1060 = vmatprep.subr.mxu0 0.0
        %1061 = vmatpush1.msra.mxu0 %v924
        %1062 = vmatprep.subr.mxu0 0.0
        %1063 = vmatpush1.msra.mxu0 %v925
        %1064 = vmatprep.subr.mxu0 0.0
        %1065 = vmatpush1.msra.mxu0 %v926
        %1066 = vmatprep.subr.mxu0 0.0
        %1067 = vmatpush1.msra.mxu0 %v927
        %1068 = vmatprep.subr.mxu0 0.0
        %1069 = vmatpush1.msra.mxu0 %v928
        %1070 = vmatprep.subr.mxu0 0.0
        %1071 = vmatpush1.msra.mxu0 %v929
        %1072 = vmatprep.subr.mxu0 0.0
        %1073 = vmatpush1.msra.mxu0 %v930
        %1074 = vmatprep.subr.mxu0 0.0
        %1075 = vmatpush1.msra.mxu0 %v931
        %1076 = vmatprep.subr.mxu0 0.0
        %1077 = vmatpush1.msra.mxu0 %v932
        %1078 = vmatprep.subr.mxu0 0.0
        %1079 = vmatpush1.msra.mxu0 %v933
        %1080 = vmatprep.subr.mxu0 0.0
        %1081 = vmatpush1.msra.mxu0 %v934
        %1082 = vmatprep.subr.mxu0 0.0
        %1083 = vmatpush1.msra.mxu0 %v935
        %1084 = vmatprep.subr.mxu0 0.0
        %1085 = vmatpush1.msra.mxu0 %v936
        %1086 = vmatprep.subr.mxu0 0.0
        %1087 = vmatpush1.msra.mxu0 %v937
        %1088 = vmatprep.subr.mxu0 0.0
        %1089 = vmatpush1.msra.mxu0 %v938
        %1090 = vmatprep.subr.mxu0 0.0
        %1091 = vmatpush1.msra.mxu0 %v939
        %1092 = vmatprep.mubr.f32.mxu0 %v860
        %1093 = vmatmul.mubr.f32.gmra.mrb[0].mxu0 %v844
        %v1094 = vpop.f32.mrb[0].mxu0
        %v1095 = vadd.f32 0.0, %v1094
        %v1096 = vpop.f32.mrb[0].mxu0
        %1097 = vmatprep.mubr.f32.mxu0 %v861
        %1098 = vmatmul.mubr.f32.gmra.mrb[0].mxu0 %v845
        %v1099 = vpop.f32.mrb[0].mxu0
        %v1100 = vadd.f32 0.0, %v1099
        %v1101 = vpop.f32.mrb[0].mxu0
        %1102 = vmatprep.mubr.f32.mxu0 %v862
        %1103 = vmatmul.mubr.f32.gmra.mrb[0].mxu0 %v846
        %v1104 = vpop.f32.mrb[0].mxu0
        %v1105 = vadd.f32 0.0, %v1104
        %v1106 = vpop.f32.mrb[0].mxu0
        %1107 = vmatprep.mubr.f32.mxu0 %v863
        %1108 = vmatmul.mubr.f32.gmra.mrb[0].mxu0 %v847
        %v1109 = vpop.f32.mrb[0].mxu0
        %v1110 = vadd.f32 0.0, %v1109
        %v1111 = vpop.f32.mrb[0].mxu0
        %1112 = vmatprep.mubr.f32.mxu0 %v864
        %1113 = vmatmul.mubr.f32.gmra.mrb[0].mxu0 %v848
        %v1114 = vpop.f32.mrb[0].mxu0
        %v1115 = vadd.f32 0.0, %v1114
        %v1116 = vpop.f32.mrb[0].mxu0
        %1117 = vmatprep.mubr.f32.mxu0 %v865
        %1118 = vmatmul.mubr.f32.gmra.mrb[0].mxu0 %v849
        %v1119 = vpop.f32.mrb[0].mxu0
        %v1120 = vadd.f32 0.0, %v1119
        %v1121 = vpop.f32.mrb[0].mxu0
        %1122 = vmatprep.mubr.f32.mxu0 %v866
        %1123 = vmatmul.mubr.f32.gmra.mrb[0].mxu0 %v850
        %v1124 = vpop.f32.mrb[0].mxu0
        %v1125 = vadd.f32 0.0, %v1124
        %v1126 = vpop.f32.mrb[0].mxu0
        %1127 = vmatprep.mubr.f32.mxu0 %v867
        %1128 = vmatmul.mubr.f32.gmra.mrb[0].mxu0 %v851
        %v1129 = vpop.f32.mrb[0].mxu0
        %v1130 = vadd.f32 0.0, %v1129
        %v1131 = vpop.f32.mrb[0].mxu0
        %1132 = vmatprep.mubr.f32.mxu0 %v868
        %1133 = vmatmul.mubr.f32.gmra.mrb[0].mxu0 %v852
        %v1134 = vpop.f32.mrb[0].mxu0
        %v1135 = vadd.f32 0.0, %v1134
        %v1136 = vpop.f32.mrb[0].mxu0
        %1137 = vmatprep.mubr.f32.mxu0 %v869
        %1138 = vmatmul.mubr.f32.gmra.mrb[0].mxu0 %v853
        %v1139 = vpop.f32.mrb[0].mxu0
        %v1140 = vadd.f32 0.0, %v1139
        %v1141 = vpop.f32.mrb[0].mxu0
        %1142 = vmatprep.mubr.f32.mxu0 %v870
        %1143 = vmatmul.mubr.f32.gmra.mrb[0].mxu0 %v854
        %v1144 = vpop.f32.mrb[0].mxu0
        %v1145 = vadd.f32 0.0, %v1144
        %v1146 = vpop.f32.mrb[0].mxu0
        %1147 = vmatprep.mubr.f32.mxu0 %v871
        %1148 = vmatmul.mubr.f32.gmra.mrb[0].mxu0 %v855
        %v1149 = vpop.f32.mrb[0].mxu0
        %v1150 = vadd.f32 0.0, %v1149
        %v1151 = vpop.f32.mrb[0].mxu0
        %1152 = vmatprep.mubr.f32.mxu0 %v872
        %1153 = vmatmul.mubr.f32.gmra.mrb[0].mxu0 %v856
        %v1154 = vpop.f32.mrb[0].mxu0
        %v1155 = vadd.f32 0.0, %v1154
        %v1156 = vpop.f32.mrb[0].mxu0
        %1157 = vmatprep.mubr.f32.mxu0 %v873
        %1158 = vmatmul.mubr.f32.gmra.mrb[0].mxu0 %v857
        %v1159 = vpop.f32.mrb[0].mxu0
        %v1160 = vadd.f32 0.0, %v1159
        %v1161 = vpop.f32.mrb[0].mxu0
        %1162 = vmatprep.mubr.f32.mxu0 %v874
        %1163 = vmatmul.mubr.f32.gmra.mrb[0].mxu0 %v858
        %v1164 = vpop.f32.mrb[0].mxu0
        %v1165 = vadd.f32 0.0, %v1164
        %v1166 = vpop.f32.mrb[0].mxu0
        %1167 = vmatprep.mubr.f32.mxu0 %v875
        %1168 = vmatmul.mubr.f32.gmra.mrb[0].mxu0 %v859
        %v1169 = vpop.f32.mrb[0].mxu0
        %v1170 = vadd.f32 0.0, %v1169
        %v1171 = vpop.f32.mrb[0].mxu0
        %1172 = vdwg.mxu0
        %1173 = vmatprep.subr.mxu0 0.0
        %1174 = vmatpush1.msra.mxu0 %v940
        %1175 = vmatprep.subr.mxu0 0.0
        %1176 = vmatpush1.msra.mxu0 %v941
        %1177 = vmatprep.subr.mxu0 0.0
        %1178 = vmatpush1.msra.mxu0 %v942
        %1179 = vmatprep.subr.mxu0 0.0
        %1180 = vmatpush1.msra.mxu0 %v943
        %1181 = vmatprep.subr.mxu0 0.0
        %1182 = vmatpush1.msra.mxu0 %v944
        %1183 = vmatprep.subr.mxu0 0.0
        %1184 = vmatpush1.msra.mxu0 %v945
        %1185 = vmatprep.subr.mxu0 0.0
        %1186 = vmatpush1.msra.mxu0 %v946
        %1187 = vmatprep.subr.mxu0 0.0
        %1188 = vmatpush1.msra.mxu0 %v947
        %1189 = vmatprep.subr.mxu0 0.0
        %1190 = vmatpush1.msra.mxu0 %v948
        %1191 = vmatprep.subr.mxu0 0.0
        %1192 = vmatpush1.msra.mxu0 %v949
        %1193 = vmatprep.subr.mxu0 0.0
        %1194 = vmatpush1.msra.mxu0 %v950
        %1195 = vmatprep.subr.mxu0 0.0
        %1196 = vmatpush1.msra.mxu0 %v951
        %1197 = vmatprep.subr.mxu0 0.0
        %1198 = vmatpush1.msra.mxu0 %v952
        %1199 = vmatprep.subr.mxu0 0.0
        %1200 = vmatpush1.msra.mxu0 %v953
        %1201 = vmatprep.subr.mxu0 0.0
        %1202 = vmatpush1.msra.mxu0 %v954
        %1203 = vmatprep.subr.mxu0 0.0
        %1204 = vmatpush1.msra.mxu0 %v955
        %1205 = vmatprep.subr.mxu0 0.0
        %1206 = vmatpush1.msra.mxu0 %v956
        %1207 = vmatprep.subr.mxu0 0.0
        %1208 = vmatpush1.msra.mxu0 %v957
        %1209 = vmatprep.subr.mxu0 0.0
        %1210 = vmatpush1.msra.mxu0 %v958
        %1211 = vmatprep.subr.mxu0 0.0
        %1212 = vmatpush1.msra.mxu0 %v959
        %1213 = vmatprep.subr.mxu0 0.0
        %1214 = vmatpush1.msra.mxu0 %v960
        %1215 = vmatprep.subr.mxu0 0.0
        %1216 = vmatpush1.msra.mxu0 %v961
        %1217 = vmatprep.subr.mxu0 0.0
        %1218 = vmatpush1.msra.mxu0 %v962
        %1219 = vmatprep.subr.mxu0 0.0
        %1220 = vmatpush1.msra.mxu0 %v963
        %1221 = vmatprep.subr.mxu0 0.0
        %1222 = vmatpush1.msra.mxu0 %v964
        %1223 = vmatprep.subr.mxu0 0.0
        %1224 = vmatpush1.msra.mxu0 %v965
        %1225 = vmatprep.subr.mxu0 0.0
        %1226 = vmatpush1.msra.mxu0 %v966
        %1227 = vmatprep.subr.mxu0 0.0
        %1228 = vmatpush1.msra.mxu0 %v967
        %1229 = vmatprep.subr.mxu0 0.0
        %1230 = vmatpush1.msra.mxu0 %v968
        %1231 = vmatprep.subr.mxu0 0.0
        %1232 = vmatpush1.msra.mxu0 %v969
        %1233 = vmatprep.subr.mxu0 0.0
        %1234 = vmatpush1.msra.mxu0 %v970
        %1235 = vmatprep.subr.mxu0 0.0
        %1236 = vmatpush1.msra.mxu0 %v971
        %1237 = vmatprep.mubr.f32.mxu0 %v892
        %1238 = vmatmul.mubr.f32.gmra.mrb[0].mxu0 %v876
        %v1239 = vpop.f32.mrb[0].mxu0
        %v1240 = vadd.f32 %v1095, %v1239
        %v1241 = vpop.f32.mrb[0].mxu0
        %1242 = vmatprep.mubr.f32.mxu0 %v893
        %1243 = vmatmul.mubr.f32.gmra.mrb[0].mxu0 %v877
        %v1244 = vpop.f32.mrb[0].mxu0
        %v1245 = vadd.f32 %v1100, %v1244
        %v1246 = vpop.f32.mrb[0].mxu0
        %1247 = vmatprep.mubr.f32.mxu0 %v894
        %1248 = vmatmul.mubr.f32.gmra.mrb[0].mxu0 %v878
        %v1249 = vpop.f32.mrb[0].mxu0
        %v1250 = vadd.f32 %v1105, %v1249
        %v1251 = vpop.f32.mrb[0].mxu0
        %1252 = vmatprep.mubr.f32.mxu0 %v895
        %1253 = vmatmul.mubr.f32.gmra.mrb[0].mxu0 %v879
        %v1254 = vpop.f32.mrb[0].mxu0
        %v1255 = vadd.f32 %v1110, %v1254
        %v1256 = vpop.f32.mrb[0].mxu0
        %1257 = vmatprep.mubr.f32.mxu0 %v896
        %1258 = vmatmul.mubr.f32.gmra.mrb[0].mxu0 %v880
        %v1259 = vpop.f32.mrb[0].mxu0
        %v1260 = vadd.f32 %v1115, %v1259
        %v1261 = vpop.f32.mrb[0].mxu0
        %1262 = vmatprep.mubr.f32.mxu0 %v897
        %1263 = vmatmul.mubr.f32.gmra.mrb[0].mxu0 %v881
        %v1264 = vpop.f32.mrb[0].mxu0
        %v1265 = vadd.f32 %v1120, %v1264
        %v1266 = vpop.f32.mrb[0].mxu0
        %1267 = vmatprep.mubr.f32.mxu0 %v898
        %1268 = vmatmul.mubr.f32.gmra.mrb[0].mxu0 %v882
        %v1269 = vpop.f32.mrb[0].mxu0
        %v1270 = vadd.f32 %v1125, %v1269
        %v1271 = vpop.f32.mrb[0].mxu0
        %1272 = vmatprep.mubr.f32.mxu0 %v899
        %1273 = vmatmul.mubr.f32.gmra.mrb[0].mxu0 %v883
        %v1274 = vpop.f32.mrb[0].mxu0
        %v1275 = vadd.f32 %v1130, %v1274
        %v1276 = vpop.f32.mrb[0].mxu0
        %1277 = vmatprep.mubr.f32.mxu0 %v900
        %1278 = vmatmul.mubr.f32.gmra.mrb[0].mxu0 %v884
        %v1279 = vpop.f32.mrb[0].mxu0
        %v1280 = vadd.f32 %v1135, %v1279
        %v1281 = vpop.f32.mrb[0].mxu0
        %1282 = vmatprep.mubr.f32.mxu0 %v901
        %1283 = vmatmul.mubr.f32.gmra.mrb[0].mxu0 %v885
        %v1284 = vpop.f32.mrb[0].mxu0
        %v1285 = vadd.f32 %v1140, %v1284
        %v1286 = vpop.f32.mrb[0].mxu0
        %1287 = vmatprep.mubr.f32.mxu0 %v902
        %1288 = vmatmul.mubr.f32.gmra.mrb[0].mxu0 %v886
        %v1289 = vpop.f32.mrb[0].mxu0
        %v1290 = vadd.f32 %v1145, %v1289
        %v1291 = vpop.f32.mrb[0].mxu0
        %1292 = vmatprep.mubr.f32.mxu0 %v903
        %1293 = vmatmul.mubr.f32.gmra.mrb[0].mxu0 %v887
        %v1294 = vpop.f32.mrb[0].mxu0
        %v1295 = vadd.f32 %v1150, %v1294
        %v1296 = vpop.f32.mrb[0].mxu0
        %1297 = vmatprep.mubr.f32.mxu0 %v904
        %1298 = vmatmul.mubr.f32.gmra.mrb[0].mxu0 %v888
        %v1299 = vpop.f32.mrb[0].mxu0
        %v1300 = vadd.f32 %v1155, %v1299
        %v1301 = vpop.f32.mrb[0].mxu0
        %1302 = vmatprep.mubr.f32.mxu0 %v905
        %1303 = vmatmul.mubr.f32.gmra.mrb[0].mxu0 %v889
        %v1304 = vpop.f32.mrb[0].mxu0
        %v1305 = vadd.f32 %v1160, %v1304
        %v1306 = vpop.f32.mrb[0].mxu0
        %1307 = vmatprep.mubr.f32.mxu0 %v906
        %1308 = vmatmul.mubr.f32.gmra.mrb[0].mxu0 %v890
        %v1309 = vpop.f32.mrb[0].mxu0
        %v1310 = vadd.f32 %v1165, %v1309
        %v1311 = vpop.f32.mrb[0].mxu0
        %1312 = vmatprep.mubr.f32.mxu0 %v907
        %1313 = vmatmul.mubr.f32.gmra.mrb[0].mxu0 %v891
        %v1314 = vpop.f32.mrb[0].mxu0
        %v1315 = vadd.f32 %v1170, %v1314
        %v1316 = vpop.f32.mrb[0].mxu0
        %1317 = vdwg.mxu0
        %1318 = vmatprep.subr.mxu0 0.0
        %1319 = vmatpush1.msra.mxu0 %v972
        %1320 = vmatprep.subr.mxu0 0.0
        %1321 = vmatpush1.msra.mxu0 %v973
        %1322 = vmatprep.subr.mxu0 0.0
        %1323 = vmatpush1.msra.mxu0 %v974
        %1324 = vmatprep.subr.mxu0 0.0
        %1325 = vmatpush1.msra.mxu0 %v975
        %1326 = vmatprep.subr.mxu0 0.0
        %1327 = vmatpush1.msra.mxu0 %v976
        %1328 = vmatprep.subr.mxu0 0.0
        %1329 = vmatpush1.msra.mxu0 %v977
        %1330 = vmatprep.subr.mxu0 0.0
        %1331 = vmatpush1.msra.mxu0 %v978
        %1332 = vmatprep.subr.mxu0 0.0
        %1333 = vmatpush1.msra.mxu0 %v979
        %1334 = vmatprep.subr.mxu0 0.0
        %1335 = vmatpush1.msra.mxu0 0.0
        %1336 = vmatprep.subr.mxu0 0.0
        %1337 = vmatpush1.msra.mxu0 0.0
        %1338 = vmatprep.subr.mxu0 0.0
        %1339 = vmatpush1.msra.mxu0 0.0
        %1340 = vmatprep.subr.mxu0 0.0
        %1341 = vmatpush1.msra.mxu0 0.0
        %1342 = vmatprep.subr.mxu0 0.0
        %1343 = vmatpush1.msra.mxu0 0.0
        %1344 = vmatprep.subr.mxu0 0.0
        %1345 = vmatpush1.msra.mxu0 0.0
        %1346 = vmatprep.subr.mxu0 0.0
        %1347 = vmatpush1.msra.mxu0 0.0
        %1348 = vmatprep.subr.mxu0 0.0
        %1349 = vmatpush1.msra.mxu0 0.0
        %1350 = vmatprep.subr.mxu0 0.0
        %1351 = vmatpush1.msra.mxu0 0.0
        %1352 = vmatprep.subr.mxu0 0.0
        %1353 = vmatpush1.msra.mxu0 0.0
        %1354 = vmatprep.subr.mxu0 0.0
        %1355 = vmatpush1.msra.mxu0 0.0
        %1356 = vmatprep.subr.mxu0 0.0
        %1357 = vmatpush1.msra.mxu0 0.0
        %1358 = vmatprep.subr.mxu0 0.0
        %1359 = vmatpush1.msra.mxu0 0.0
        %1360 = vmatprep.subr.mxu0 0.0
        %1361 = vmatpush1.msra.mxu0 0.0
        %1362 = vmatprep.subr.mxu0 0.0
        %1363 = vmatpush1.msra.mxu0 0.0
        %1364 = vmatprep.subr.mxu0 0.0
        %1365 = vmatpush1.msra.mxu0 0.0
        %1366 = vmatprep.subr.mxu0 0.0
        %1367 = vmatpush1.msra.mxu0 0.0
        %1368 = vmatprep.subr.mxu0 0.0
        %1369 = vmatpush1.msra.mxu0 0.0
        %1370 = vmatprep.subr.mxu0 0.0
        %1371 = vmatpush1.msra.mxu0 0.0
        %1372 = vmatprep.subr.mxu0 0.0
        %1373 = vmatpush1.msra.mxu0 0.0
        %1374 = vmatprep.subr.mxu0 0.0
        %1375 = vmatpush1.msra.mxu0 0.0
        %1376 = vmatprep.subr.mxu0 0.0
        %1377 = vmatpush1.msra.mxu0 0.0
        %1378 = vmatprep.subr.mxu0 0.0
        %1379 = vmatpush1.msra.mxu0 0.0
        %1380 = vmatprep.subr.mxu0 0.0
        %1381 = vmatpush1.msra.mxu0 0.0
        %1382 = vmatprep.mubr.f32.mxu0 0.0
        %1383 = vmatmul.mubr.f32.gmra.mrb[0].mxu0 %v981
        %v1384 = vpop.f32.mrb[0].mxu0
        %v1385 = vadd.f32 %v1240, %v1384
        %v1386 = vpop.f32.mrb[0].mxu0
        %1387 = vmatprep.mubr.f32.mxu0 0.0
        %1388 = vmatmul.mubr.f32.gmra.mrb[0].mxu0 %v984
        %v1389 = vpop.f32.mrb[0].mxu0
        %v1390 = vadd.f32 %v1245, %v1389
        %v1391 = vpop.f32.mrb[0].mxu0
        %1392 = vmatprep.mubr.f32.mxu0 0.0
        %1393 = vmatmul.mubr.f32.gmra.mrb[0].mxu0 %v987
        %v1394 = vpop.f32.mrb[0].mxu0
        %v1395 = vadd.f32 %v1250, %v1394
        %v1396 = vpop.f32.mrb[0].mxu0
        %1397 = vmatprep.mubr.f32.mxu0 0.0
        %1398 = vmatmul.mubr.f32.gmra.mrb[0].mxu0 %v990
        %v1399 = vpop.f32.mrb[0].mxu0
        %v1400 = vadd.f32 %v1255, %v1399
        %v1401 = vpop.f32.mrb[0].mxu0
        %1402 = vmatprep.mubr.f32.mxu0 0.0
        %1403 = vmatmul.mubr.f32.gmra.mrb[0].mxu0 %v993
        %v1404 = vpop.f32.mrb[0].mxu0
        %v1405 = vadd.f32 %v1260, %v1404
        %v1406 = vpop.f32.mrb[0].mxu0
        %1407 = vmatprep.mubr.f32.mxu0 0.0
        %1408 = vmatmul.mubr.f32.gmra.mrb[0].mxu0 %v996
        %v1409 = vpop.f32.mrb[0].mxu0
        %v1410 = vadd.f32 %v1265, %v1409
        %v1411 = vpop.f32.mrb[0].mxu0
        %1412 = vmatprep.mubr.f32.mxu0 0.0
        %1413 = vmatmul.mubr.f32.gmra.mrb[0].mxu0 %v999
        %v1414 = vpop.f32.mrb[0].mxu0
        %v1415 = vadd.f32 %v1270, %v1414
        %v1416 = vpop.f32.mrb[0].mxu0
        %1417 = vmatprep.mubr.f32.mxu0 0.0
        %1418 = vmatmul.mubr.f32.gmra.mrb[0].mxu0 %v1002
        %v1419 = vpop.f32.mrb[0].mxu0
        %v1420 = vadd.f32 %v1275, %v1419
        %v1421 = vpop.f32.mrb[0].mxu0
        %1422 = vmatprep.mubr.f32.mxu0 0.0
        %1423 = vmatmul.mubr.f32.gmra.mrb[0].mxu0 %v1005
        %v1424 = vpop.f32.mrb[0].mxu0
        %v1425 = vadd.f32 %v1280, %v1424
        %v1426 = vpop.f32.mrb[0].mxu0
        %1427 = vmatprep.mubr.f32.mxu0 0.0
        %1428 = vmatmul.mubr.f32.gmra.mrb[0].mxu0 %v1008
        %v1429 = vpop.f32.mrb[0].mxu0
        %v1430 = vadd.f32 %v1285, %v1429
        %v1431 = vpop.f32.mrb[0].mxu0
        %1432 = vmatprep.mubr.f32.mxu0 0.0
        %1433 = vmatmul.mubr.f32.gmra.mrb[0].mxu0 %v1011
        %v1434 = vpop.f32.mrb[0].mxu0
        %v1435 = vadd.f32 %v1290, %v1434
        %v1436 = vpop.f32.mrb[0].mxu0
        %1437 = vmatprep.mubr.f32.mxu0 0.0
        %1438 = vmatmul.mubr.f32.gmra.mrb[0].mxu0 %v1014
        %v1439 = vpop.f32.mrb[0].mxu0
        %v1440 = vadd.f32 %v1295, %v1439
        %v1441 = vpop.f32.mrb[0].mxu0
        %1442 = vmatprep.mubr.f32.mxu0 0.0
        %1443 = vmatmul.mubr.f32.gmra.mrb[0].mxu0 %v1017
        %v1444 = vpop.f32.mrb[0].mxu0
        %v1445 = vadd.f32 %v1300, %v1444
        %v1446 = vpop.f32.mrb[0].mxu0
        %1447 = vmatprep.mubr.f32.mxu0 0.0
        %1448 = vmatmul.mubr.f32.gmra.mrb[0].mxu0 %v1020
        %v1449 = vpop.f32.mrb[0].mxu0
        %v1450 = vadd.f32 %v1305, %v1449
        %v1451 = vpop.f32.mrb[0].mxu0
        %1452 = vmatprep.mubr.f32.mxu0 0.0
        %1453 = vmatmul.mubr.f32.gmra.mrb[0].mxu0 %v1023
        %v1454 = vpop.f32.mrb[0].mxu0
        %v1455 = vadd.f32 %v1310, %v1454
        %v1456 = vpop.f32.mrb[0].mxu0
        %1457 = vmatprep.mubr.f32.mxu0 0.0
        %1458 = vmatmul.mubr.f32.gmra.mrb[0].mxu0 %v1026
        %v1459 = vpop.f32.mrb[0].mxu0
        %v1460 = vadd.f32 %v1315, %v1459
        %v1461 = vpop.f32.mrb[0].mxu0
        %1462 = vdwg.mxu0
        %v1463 = vld [vmem:[%s5] sm:$0x1]
        %v1465 = vlaneseq
        %v1466 = vshrl.u32 %v1465, 7
        %v1467 = vsub.s32 0, %v1466
        %v1468 = vrot.slane %v1463, %v1467
        %v1470 = vadd.f32 %v1385, %v1468
        %v1471 = vadd.f32 %v1390, %v1468
        %v1472 = vadd.f32 %v1395, %v1468
        %v1473 = vadd.f32 %v1400, %v1468
        %v1474 = vadd.f32 %v1405, %v1468
        %v1475 = vadd.f32 %v1410, %v1468
        %v1476 = vadd.f32 %v1415, %v1468
        %v1477 = vadd.f32 %v1420, %v1468
        %v1478 = vadd.f32 %v1425, %v1468
        %v1479 = vadd.f32 %v1430, %v1468
        %v1480 = vadd.f32 %v1435, %v1468
        %v1481 = vadd.f32 %v1440, %v1468
        %v1482 = vadd.f32 %v1445, %v1468
        %v1483 = vadd.f32 %v1450, %v1468
        %v1484 = vadd.f32 %v1455, %v1468
        %v1485 = vadd.f32 %v1460, %v1468
        %v1486 = vld [vmem:[%s304] sm:$0xff]
        %v1487 = vld [vmem:[%s304 + $0x8] sm:$0xff]
        %v1488 = vld [vmem:[%s304 + $0x10] sm:$0xff]
        %v1489 = vld [vmem:[%s304 + $0x18] sm:$0xff]
        %v1490 = vld [vmem:[%s304 + $0x20] sm:$0xff]
        %v1491 = vld [vmem:[%s304 + $0x28] sm:$0xff]
        %v1492 = vld [vmem:[%s304 + $0x30] sm:$0xff]
        %v1493 = vld [vmem:[%s304 + $0x38] sm:$0xff]
        %1502 = vrot.lane.b32.xlu0 %v1486, 32
        %v1503 = vpop.permute.xlu0 %1502
        %1504 = vrot.lane.b32.xlu0 %v1487, 32
        %v1505 = vpop.permute.xlu0 %1504
        %1506 = vrot.lane.b32.xlu0 %v1488, 32
        %v1507 = vpop.permute.xlu0 %1506
        %1508 = vrot.lane.b32.xlu0 %v1489, 32
        %v1509 = vpop.permute.xlu0 %1508
        %1510 = vrot.lane.b32.xlu0 %v1490, 32
        %v1511 = vpop.permute.xlu0 %1510
        %1512 = vrot.lane.b32.xlu0 %v1491, 32
        %v1513 = vpop.permute.xlu0 %1512
        %1514 = vrot.lane.b32.xlu0 %v1492, 32
        %v1515 = vpop.permute.xlu0 %1514
        %1516 = vrot.lane.b32.xlu0 %v1493, 32
        %v1517 = vpop.permute.xlu0 %1516
        %vm1526 = vcmask 261120
        %v1527 = vsel %vm1526, %v1486, %v1503
        %v1528 = vsel %vm1526, %v1487, %v1505
        %v1529 = vsel %vm1526, %v1488, %v1507
        %v1530 = vsel %vm1526, %v1489, %v1509
        %v1531 = vsel %vm1526, %v1490, %v1511
        %v1532 = vsel %vm1526, %v1491, %v1513
        %v1533 = vsel %vm1526, %v1492, %v1515
        %v1534 = vsel %vm1526, %v1493, %v1517
        %v1535 = vadd.f32 %v1470, %v1527
        %v1536 = vadd.f32 %v1471, %v1527
        %v1537 = vadd.f32 %v1472, %v1528
        %v1538 = vadd.f32 %v1473, %v1528
        %v1539 = vadd.f32 %v1474, %v1529
        %v1540 = vadd.f32 %v1475, %v1529
        %v1541 = vadd.f32 %v1476, %v1530
        %v1542 = vadd.f32 %v1477, %v1530
        %v1543 = vadd.f32 %v1478, %v1531
        %v1544 = vadd.f32 %v1479, %v1531
        %v1545 = vadd.f32 %v1480, %v1532
        %v1546 = vadd.f32 %v1481, %v1532
        %v1547 = vadd.f32 %v1482, %v1533
        %v1548 = vadd.f32 %v1483, %v1533
        %v1549 = vadd.f32 %v1484, %v1534
        %v1550 = vadd.f32 %v1485, %v1534
        %v1551 = vsel %vm388, %v1535, 0.0
        %v1552 = vsel %vm388, %v1536, 0.0
        %v1553 = vadd.f32 %v1551, %v1552
        %v1554 = vsel %vm388, %v1537, 0.0
        %v1555 = vadd.f32 %v1553, %v1554
        %v1556 = vsel %vm388, %v1538, 0.0
        %v1557 = vadd.f32 %v1555, %v1556
        %v1558 = vsel %vm388, %v1539, 0.0
        %v1559 = vadd.f32 %v1557, %v1558
        %v1560 = vsel %vm388, %v1540, 0.0
        %v1561 = vadd.f32 %v1559, %v1560
        %v1562 = vsel %vm388, %v1541, 0.0
        %v1563 = vadd.f32 %v1561, %v1562
        %v1564 = vsel %vm388, %v1542, 0.0
        %v1565 = vadd.f32 %v1563, %v1564
        %v1566 = vsel %vm388, %v1543, 0.0
        %v1567 = vadd.f32 %v1565, %v1566
        %v1568 = vsel %vm388, %v1544, 0.0
        %v1569 = vadd.f32 %v1567, %v1568
        %v1570 = vsel %vm388, %v1545, 0.0
        %v1571 = vadd.f32 %v1569, %v1570
        %v1572 = vsel %vm388, %v1546, 0.0
        %v1573 = vadd.f32 %v1571, %v1572
        %v1574 = vsel %vm388, %v1547, 0.0
        %v1575 = vadd.f32 %v1573, %v1574
        %v1576 = vsel %vm388, %v1548, 0.0
        %v1577 = vadd.f32 %v1575, %v1576
        %v1578 = vsel %vm388, %v1549, 0.0
        %v1579 = vadd.f32 %v1577, %v1578
        %v1580 = vsel %vm388, %v1550, 0.0
        %v1581 = vadd.f32 %v1579, %v1580
        %v1582 = vrot.slane %v1581, 4
        %v1583 = vadd.f32 %v1581, %v1582
        %v1584 = vrot.slane %v1583, 2
        %v1585 = vadd.f32 %v1583, %v1584
        %v1586 = vrot.slane %v1585, 1
        %v1587 = vadd.f32 %v1585, %v1586
        %vm1588 = vcmask 516096
        %1589 = vst.msk [vmem:[%s294] sm:$0x1] %vm1588, %v1587
        %v1590 = vmul.f32 %v1535, %v1535
        %v1591 = vmul.f32 %v1536, %v1536
        %v1592 = vmul.f32 %v1537, %v1537
        %v1593 = vmul.f32 %v1538, %v1538
        %v1594 = vmul.f32 %v1539, %v1539
        %v1595 = vmul.f32 %v1540, %v1540
        %v1596 = vmul.f32 %v1541, %v1541
        %v1597 = vmul.f32 %v1542, %v1542
        %v1598 = vmul.f32 %v1543, %v1543
        %v1599 = vmul.f32 %v1544, %v1544
        %v1600 = vmul.f32 %v1545, %v1545
        %v1601 = vmul.f32 %v1546, %v1546
        %v1602 = vmul.f32 %v1547, %v1547
        %v1603 = vmul.f32 %v1548, %v1548
        %v1604 = vmul.f32 %v1549, %v1549
        %v1605 = vmul.f32 %v1550, %v1550
        %v1606 = vsel %vm388, %v1590, 0.0
        %v1607 = vsel %vm388, %v1591, 0.0
        %v1608 = vadd.f32 %v1606, %v1607
        %v1609 = vsel %vm388, %v1592, 0.0
        %v1610 = vadd.f32 %v1608, %v1609
        %v1611 = vsel %vm388, %v1593, 0.0
        %v1612 = vadd.f32 %v1610, %v1611
        %v1613 = vsel %vm388, %v1594, 0.0
        %v1614 = vadd.f32 %v1612, %v1613
        %v1615 = vsel %vm388, %v1595, 0.0
        %v1616 = vadd.f32 %v1614, %v1615
        %v1617 = vsel %vm388, %v1596, 0.0
        %v1618 = vadd.f32 %v1616, %v1617
        %v1619 = vsel %vm388, %v1597, 0.0
        %v1620 = vadd.f32 %v1618, %v1619
        %v1621 = vsel %vm388, %v1598, 0.0
        %v1622 = vadd.f32 %v1620, %v1621
        %v1623 = vsel %vm388, %v1599, 0.0
        %v1624 = vadd.f32 %v1622, %v1623
        %v1625 = vsel %vm388, %v1600, 0.0
        %v1626 = vadd.f32 %v1624, %v1625
        %v1627 = vsel %vm388, %v1601, 0.0
        %v1628 = vadd.f32 %v1626, %v1627
        %v1629 = vsel %vm388, %v1602, 0.0
        %v1630 = vadd.f32 %v1628, %v1629
        %v1631 = vsel %vm388, %v1603, 0.0
        %v1632 = vadd.f32 %v1630, %v1631
        %v1633 = vsel %vm388, %v1604, 0.0
        %v1634 = vadd.f32 %v1632, %v1633
        %v1635 = vsel %vm388, %v1605, 0.0
        %v1636 = vadd.f32 %v1634, %v1635
        %v1637 = vrot.slane %v1636, 4
        %v1638 = vadd.f32 %v1636, %v1637
        %v1639 = vrot.slane %v1638, 2
        %v1640 = vadd.f32 %v1638, %v1639
        %v1641 = vrot.slane %v1640, 1
        %v1642 = vadd.f32 %v1640, %v1641
        %1643 = vst.msk [vmem:[%s294 + $0x1] sm:$0x1] %vm1588, %v1642
        %1644 = vst.msk [vmem:[%s309] sm:$0xff] %vm388, %v1535
        %1645 = vst.msk [vmem:[%s309 + $0x8] sm:$0xff] %vm388, %v1536
        %1646 = vst.msk [vmem:[%s309 + $0x10] sm:$0xff] %vm388, %v1537
        %1647 = vst.msk [vmem:[%s309 + $0x18] sm:$0xff] %vm388, %v1538
        %1648 = vst.msk [vmem:[%s309 + $0x20] sm:$0xff] %vm388, %v1539
        %1649 = vst.msk [vmem:[%s309 + $0x28] sm:$0xff] %vm388, %v1540
        %1650 = vst.msk [vmem:[%s309 + $0x30] sm:$0xff] %vm388, %v1541
        %1651 = vst.msk [vmem:[%s309 + $0x38] sm:$0xff] %vm388, %v1542
        %1652 = vst.msk [vmem:[%s309 + $0x40] sm:$0xff] %vm388, %v1543
        %1653 = vst.msk [vmem:[%s309 + $0x48] sm:$0xff] %vm388, %v1544
        %1654 = vst.msk [vmem:[%s309 + $0x50] sm:$0xff] %vm388, %v1545
        %1655 = vst.msk [vmem:[%s309 + $0x58] sm:$0xff] %vm388, %v1546
        %1656 = vst.msk [vmem:[%s309 + $0x60] sm:$0xff] %vm388, %v1547
        %1657 = vst.msk [vmem:[%s309 + $0x68] sm:$0xff] %vm388, %v1548
        %1658 = vst.msk [vmem:[%s309 + $0x70] sm:$0xff] %vm388, %v1549
        %1659 = vst.msk [vmem:[%s309 + $0x78] sm:$0xff] %vm388, %v1550
        %p1660 = scmp.lt.s32.totalorder %s22, 1
        %s1661 = scalar_select %p1660, %s22, 1
        %s1662 = smul.addr %s1661, 16
        %s1663 = smul.addr %s1662, 8
        %s1664 = scalar_lea.vmem %s6, %s1663
        %s1665 = sand.u32 %s192, 1
        %s1666 = scalar_lea.sflag [#allocation4], %s1665
        %s1667 = sand.u32 %s192, 1
        %s1668 = smul.addr %s1667, 2
        %s1669 = scalar_lea.vmem [#allocation3], %s1668
        // Predicated region
        $region45: #{_lambda_.10} parent=43 // pred_check
          %p1670 = pneg %p176
        $region46: #{_lambda_.10} parent=43 // pred_check_branch
          %1672 = sbr.rel (%p1670) target = $region48
        $region47: #{_lambda_.10} parent=43 // pred_region
          _
        $region48: #{_lambda_.10} parent=43 // pred_fallthru
          _
        // Predicated region
        $region49: #{_lambda_.10} parent=43 // pred_check
          %p1673 = pneg %p202
        $region50: #{_lambda_.10} parent=43 // pred_check_branch
          %1675 = sbr.rel (%p1673) target = $region52
        $region51: #{_lambda_.10} parent=43 // pred_region
          %s1677 = ssub.s32 32, 32
          %1678 = vsyncadd %s1666, %s1677
          %s1679 = smul.addr %s22, 32
          %s1680 = scalar_lea.hbm %s7, %s1679
          %s1682 = sshll.u32 %s1669, 4
          %s1683 = int_to_ptr.vmem [resolvable:$true] %s1682
          %1685 = dma.vmem_to_hbm [thread:$0]  %s1683, 32, %s1680, %s1666
        $region52: #{_lambda_.10} parent=43 // pred_fallthru
          _
      $region44: #{_lambda_.10} parent=5 // pred_fallthru
        _
      %p1686 = scmp.le.s32.totalorder 2, %s17
      // Predicated region
      $region53: #{_lambda_.10} parent=5 // pred_check
        %p1687 = pneg %p1686
      $region54: #{_lambda_.10} parent=5 // pred_check_branch
        %1689 = sbr.rel (%p1687) target = $region56
      $region55: #{_lambda_.10} parent=5 // pred_region
        %s1690 = ssub.s32 %s17, 2
        // Predicated region
        $region57: #{_lambda_.10} parent=55 // pred_check
          %p1691 = pneg %p182
        $region58: #{_lambda_.10} parent=55 // pred_check_branch
          %1693 = sbr.rel (%p1691) target = $region60
        $region59: #{_lambda_.10} parent=55 // pred_region
          %p1694 = scmp.lt.s32.totalorder %s23, 1
          %s1695 = scalar_select %p1694, %s23, 1
          %s1696 = smul.addr %s1695, 16
          %s1697 = smul.addr %s1696, 8
          %s1698 = scalar_lea.vmem %s6, %s1697
        $region60: #{_lambda_.10} parent=55 // pred_fallthru
          _
        // Predicated region
        $region61: #{_lambda_.10} parent=55 // pred_check
          %p1699 = pneg %p208
        $region62: #{_lambda_.10} parent=55 // pred_check_branch
          %1701 = sbr.rel (%p1699) target = $region64
        $region63: #{_lambda_.10} parent=55 // pred_region
          %s1702 = sand.u32 %s193, 1
          %s1703 = scalar_lea.sflag [#allocation4], %s1702
          %s1704 = sand.u32 %s193, 1
          %s1705 = smul.addr %s1704, 2
          %s1706 = scalar_lea.vmem [#allocation3], %s1705
          %1707 = dma.done %s1703, 32
        $region64: #{_lambda_.10} parent=55 // pred_fallthru
          _
      $region56: #{_lambda_.10} parent=5 // pred_fallthru
        _
    $region6: #{_lambda_.10} parent=1 // loop_footer
      %s21 = sadd.s32 1, %s17
    $region7: #{_lambda_.10} parent=1 // loop_footer_branch
      %16 = sbr.rel target = $region3
    $region8: #{_lambda_.10} parent=1 // loop_exit
      _
    %1708 = vsyncpa [#allocation4], 1
    %s1709 = scalar_lea.sflag [#allocation4], 1
    %1710 = vsyncpa %s1709, 1

// kernel: _lambda_.11
$region0: #{_lambda_.11}
  #allocation0 [shape = 'u32[]', space=smem, size = 0x4, offset = 0x4, fixed_abs, tag = 'smem constant byte address 0x4 - core index']
  #allocation1 [shape = 'u32[144,128]{1,0:T(1,128)}', space=vmem, size = 0x12000, scoped, tag = 'internal scratch']
  #allocation2 [shape = 'f32[18,18,32]{2,1,0:T(8,128)}', space=vmem, size = 0x36000, scoped, tag = 'scratch operand']
  %s0 = inlined_call_operand.vmem [shape: f32[2,16,16,32], index: 0, kind: input, shape index: {}]
  %s1 = inlined_call_operand.vmem [shape: f32[288,4], index: 1, kind: input, shape index: {}]
  %s2 = inlined_call_operand.vmem [shape: f32[1,4], index: 2, kind: input, shape index: {}]
  %s3 = inlined_call_operand.vmem [shape: f32[2,16,16,4], index: 3, kind: output, shape index: {}]
  %s4 = sld [smem:[#allocation0]]
  $region45: #{_lambda_.11} parent=0
    _
  %s6 = ssub.s32 1, %s4
  %s7 = scalar_select 0, %s6, %s4
  loop: start=0, step=1, limit=4
  $region2: #{_lambda_.11} parent=0 // loop_pre_header
    _
  $region3: #{_lambda_.11} parent=0 // loop_header
    %s9 = sphi 0, %s13
    %p10 = scmp.ge.s32.totalorder %s9, 4
    %s19 = sphi 0, %s21
    %s22 = sphi 0, %s19
    %s23 = sphi 0, %s22
    %s39 = sphi 0, %s23
    %s43 = sphi 0, %s43
    %s45 = sphi 0, %s43
    %s46 = sphi 0, %s45
    %s60 = sphi 0, %s46
    %s64 = sphi 0, %s64
    %s66 = sphi 0, %s64
    %s67 = sphi 0, %s66
    %s81 = sphi 0, %s67
    %s87 = sphi 0, %s89
    %s90 = sphi 0, %s87
    %s91 = sphi 0, %s90
    %s107 = sphi 0, %s91
  $region4: #{_lambda_.11} parent=0 // loop_header_branch
    %12 = sbr.rel (%p10) target = $region8
  $region5: #{_lambda_.11} parent=0 // loop_body
    %s14 = ssub.s32 %s9, 1
    %s15 = ssub.s32 %s9, 2
    %s16 = sadd.s32 %s9, 1
    %s17 = ssub.s32 %s9, %s16
    %p18 = scmp.eq.s32.totalorder %s17, 0
    %s20 = sadd.s32 %s19, 1
    %s21 = scalar_select %p18, %s19, %s20
    %p24 = pneg %p18
    %p25 = scmp.eq.s32.totalorder %s9, 1
    %p26 = por %p24, %p25
    %p27 = scmp.ne.s32.totalorder %s19, %s22
    %p28 = scmp.eq.s32.totalorder %s9, 0
    %p29 = por %p27, %p28
    %p30 = scmp.ne.s32.totalorder %s19, %s22
    %p31 = scmp.eq.s32.totalorder %s14, 1
    %p32 = por %p30, %p31
    %p33 = scmp.ne.s32.totalorder %s22, %s23
    %p34 = scmp.eq.s32.totalorder %s14, 0
    %p35 = por %p33, %p34
    %p36 = scmp.ne.s32.totalorder %s22, %s23
    %p37 = scmp.eq.s32.totalorder %s15, 1
    %p38 = por %p36, %p37
    %p40 = scmp.ne.s32.totalorder %s23, %s39
    %p41 = scmp.eq.s32.totalorder %s15, 0
    %p42 = por %p40, %p41
    %s44 = sadd.s32 %s43, 1
    %p47 = scmp.eq.s32.totalorder %s9, 1
    %p48 = scmp.ne.s32.totalorder %s43, %s45
    %p49 = scmp.eq.s32.totalorder %s9, 0
    %p50 = por %p48, %p49
    %p51 = scmp.ne.s32.totalorder %s43, %s45
    %p52 = scmp.eq.s32.totalorder %s14, 1
    %p53 = por %p51, %p52
    %p54 = scmp.ne.s32.totalorder %s45, %s46
    %p55 = scmp.eq.s32.totalorder %s14, 0
    %p56 = por %p54, %p55
    %p57 = scmp.ne.s32.totalorder %s45, %s46
    %p58 = scmp.eq.s32.totalorder %s15, 1
    %p59 = por %p57, %p58
    %p61 = scmp.ne.s32.totalorder %s46, %s60
    %p62 = scmp.eq.s32.totalorder %s15, 0
    %p63 = por %p61, %p62
    %s65 = sadd.s32 %s64, 1
    %p68 = scmp.eq.s32.totalorder %s9, 1
    %p69 = scmp.ne.s32.totalorder %s64, %s66
    %p70 = scmp.eq.s32.totalorder %s9, 0
    %p71 = por %p69, %p70
    %p72 = scmp.ne.s32.totalorder %s64, %s66
    %p73 = scmp.eq.s32.totalorder %s14, 1
    %p74 = por %p72, %p73
    %p75 = scmp.ne.s32.totalorder %s66, %s67
    %p76 = scmp.eq.s32.totalorder %s14, 0
    %p77 = por %p75, %p76
    %p78 = scmp.ne.s32.totalorder %s66, %s67
    %p79 = scmp.eq.s32.totalorder %s15, 1
    %p80 = por %p78, %p79
    %p82 = scmp.ne.s32.totalorder %s67, %s81
    %p83 = scmp.eq.s32.totalorder %s15, 0
    %p84 = por %p82, %p83
    %s85 = ssub.s32 %s9, %s16
    %p86 = scmp.eq.s32.totalorder %s85, 0
    %s88 = sadd.s32 %s87, 1
    %s89 = scalar_select %p86, %s87, %s88
    %p92 = pneg %p86
    %p93 = scmp.eq.s32.totalorder %s9, 1
    %p94 = por %p92, %p93
    %p95 = scmp.ne.s32.totalorder %s87, %s90
    %p96 = scmp.eq.s32.totalorder %s9, 0
    %p97 = por %p95, %p96
    %p98 = scmp.ne.s32.totalorder %s87, %s90
    %p99 = scmp.eq.s32.totalorder %s14, 1
    %p100 = por %p98, %p99
    %p101 = scmp.ne.s32.totalorder %s90, %s91
    %p102 = scmp.eq.s32.totalorder %s14, 0
    %p103 = por %p101, %p102
    %p104 = scmp.ne.s32.totalorder %s90, %s91
    %p105 = scmp.eq.s32.totalorder %s15, 1
    %p106 = por %p104, %p105
    %p108 = scmp.ne.s32.totalorder %s91, %s107
    %p109 = scmp.eq.s32.totalorder %s15, 0
    %p110 = por %p108, %p109
    %p111 = scmp.le.s32.totalorder 1, %s9
    %p112 = scmp.lt.s32.totalorder %s9, 3
    %p113 = pnand %p111, %p112
    %p114 = pneg %p113
    // Predicated region
    $region9: #{_lambda_.11} parent=5 // pred_check
      _
    $region10: #{_lambda_.11} parent=5 // pred_check_branch
      %116 = sbr.rel (%p113) target = $region12
    $region11: #{_lambda_.11} parent=5 // pred_region
      %s117 = ssub.s32 %s9, 1
      // Predicated region
      $region13: #{_lambda_.11} parent=11 // pred_check
        %p118 = pneg %p56
      $region14: #{_lambda_.11} parent=11 // pred_check_branch
        %120 = sbr.rel (%p118) target = $region16
      $region15: #{_lambda_.11} parent=11 // pred_region
        _
      $region16: #{_lambda_.11} parent=11 // pred_fallthru
        _
      // Predicated region
      $region17: #{_lambda_.11} parent=11 // pred_check
        %p121 = pneg %p77
      $region18: #{_lambda_.11} parent=11 // pred_check_branch
        %123 = sbr.rel (%p121) target = $region20
      $region19: #{_lambda_.11} parent=11 // pred_region
        _
      $region20: #{_lambda_.11} parent=11 // pred_fallthru
        _
    $region12: #{_lambda_.11} parent=5 // pred_fallthru
      _
    %p124 = scmp.lt.s32.totalorder %s9, 2
    // Predicated region
    $region21: #{_lambda_.11} parent=5 // pred_check
      %p125 = pneg %p124
    $region22: #{_lambda_.11} parent=5 // pred_check_branch
      %127 = sbr.rel (%p125) target = $region24
    $region23: #{_lambda_.11} parent=5 // pred_region
      // Predicated region
      $region25: #{_lambda_.11} parent=23 // pred_check
        %p128 = pneg %p29
      $region26: #{_lambda_.11} parent=23 // pred_check_branch
        %130 = sbr.rel (%p128) target = $region28
      $region27: #{_lambda_.11} parent=23 // pred_region
        %p131 = scmp.lt.s32.totalorder %s9, 1
        %s132 = scalar_select %p131, %s9, 1
        %s133 = smul.addr %s132, 32
        %s134 = smul.addr %s133, 8
        %s135 = scalar_lea.vmem %s0, %s134
      $region28: #{_lambda_.11} parent=23 // pred_fallthru
        _
    $region24: #{_lambda_.11} parent=5 // pred_fallthru
      _
    %p136 = scmp.le.s32.totalorder 1, %s9
    %p137 = scmp.lt.s32.totalorder %s9, 3
    %p138 = pnand %p136, %p137
    %p139 = pneg %p138
    // Predicated region
    $region29: #{_lambda_.11} parent=5 // pred_check
      _
    $region30: #{_lambda_.11} parent=5 // pred_check_branch
      %141 = sbr.rel (%p138) target = $region32
    $region31: #{_lambda_.11} parent=5 // pred_region
      %s142 = ssub.s32 %s9, 1
      %p143 = scmp.lt.s32.totalorder %s14, 1
      %s144 = scalar_select %p143, %s14, 1
      %s145 = smul.addr %s144, 32
      %s146 = smul.addr %s145, 8
      %s147 = scalar_lea.vmem %s0, %s146
      %p148 = pneg %p35
      %p149 = pneg %p32
      %p150 = pneg %p56
      %p151 = pneg %p53
      %p152 = pneg %p77
      %p153 = pneg %p74
      %p154 = pneg %p103
      %p155 = pneg %p100
      %p156 = scmp.lt.s32.totalorder %s14, 1
      %s157 = scalar_select %p156, %s14, 1
      %s158 = smul.addr %s157, 32
      %s159 = smul.addr %s158, 8
      %s160 = scalar_lea.vmem %s3, %s159
      %p161 = scmp.lt.s32.totalorder %s14, 1
      %s162 = scalar_select %p161, %s14, 1
      %s163 = smul.addr %s162, 32
      %s164 = smul.addr %s163, 8
      %s165 = scalar_lea.vmem %s0, %s164
      %p166 = scmp.lt.s32.totalorder %s14, 1
      %s167 = scalar_select %p166, %s14, 1
      %s168 = smul.addr %s167, 32
      %s169 = smul.addr %s168, 8
      %s170 = scalar_lea.vmem %s3, %s169
      %vm171 = vcmask 261120
      %172 = vst.msk [vmem:[#allocation2] sm:$0xff] %vm171, 0.0
      %173 = vst.msk [vmem:[#allocation2 + $0x8] sm:$0xff] %vm171, 0.0
      %vm174 = vcmask 254976
      %175 = vst.msk [vmem:[#allocation2 + $0x10] sm:$0x3] %vm174, 0.0
      %176 = vst.msk [vmem:[#allocation2 + $0x18] sm:$0xff] %vm171, 0.0
      %177 = vst.msk [vmem:[#allocation2 + $0x20] sm:$0xff] %vm171, 0.0
      %178 = vst.msk [vmem:[#allocation2 + $0x28] sm:$0x3] %vm174, 0.0
      %179 = vst.msk [vmem:[#allocation2 + $0x30] sm:$0xff] %vm171, 0.0
      %180 = vst.msk [vmem:[#allocation2 + $0x38] sm:$0xff] %vm171, 0.0
      %181 = vst.msk [vmem:[#allocation2 + $0x40] sm:$0x3] %vm174, 0.0
      %182 = vst.msk [vmem:[#allocation2 + $0x48] sm:$0xff] %vm171, 0.0
      %183 = vst.msk [vmem:[#allocation2 + $0x50] sm:$0xff] %vm171, 0.0
      %184 = vst.msk [vmem:[#allocation2 + $0x58] sm:$0x3] %vm174, 0.0
      %185 = vst.msk [vmem:[#allocation2 + $0x60] sm:$0xff] %vm171, 0.0
      %186 = vst.msk [vmem:[#allocation2 + $0x68] sm:$0xff] %vm171, 0.0
      %187 = vst.msk [vmem:[#allocation2 + $0x70] sm:$0x3] %vm174, 0.0
      %188 = vst.msk [vmem:[#allocation2 + $0x78] sm:$0xff] %vm171, 0.0
      %189 = vst.msk [vmem:[#allocation2 + $0x80] sm:$0xff] %vm171, 0.0
      %190 = vst.msk [vmem:[#allocation2 + $0x88] sm:$0x3] %vm174, 0.0
      %191 = vst.msk [vmem:[#allocation2 + $0x90] sm:$0xff] %vm171, 0.0
      %192 = vst.msk [vmem:[#allocation2 + $0x98] sm:$0xff] %vm171, 0.0
      %193 = vst.msk [vmem:[#allocation2 + $0xa0] sm:$0x3] %vm174, 0.0
      %194 = vst.msk [vmem:[#allocation2 + $0xa8] sm:$0xff] %vm171, 0.0
      %195 = vst.msk [vmem:[#allocation2 + $0xb0] sm:$0xff] %vm171, 0.0
      %196 = vst.msk [vmem:[#allocation2 + $0xb8] sm:$0x3] %vm174, 0.0
      %197 = vst.msk [vmem:[#allocation2 + $0xc0] sm:$0xff] %vm171, 0.0
      %198 = vst.msk [vmem:[#allocation2 + $0xc8] sm:$0xff] %vm171, 0.0
      %199 = vst.msk [vmem:[#allocation2 + $0xd0] sm:$0x3] %vm174, 0.0
      %200 = vst.msk [vmem:[#allocation2 + $0xd8] sm:$0xff] %vm171, 0.0
      %201 = vst.msk [vmem:[#allocation2 + $0xe0] sm:$0xff] %vm171, 0.0
      %202 = vst.msk [vmem:[#allocation2 + $0xe8] sm:$0x3] %vm174, 0.0
      %203 = vst.msk [vmem:[#allocation2 + $0xf0] sm:$0xff] %vm171, 0.0
      %204 = vst.msk [vmem:[#allocation2 + $0xf8] sm:$0xff] %vm171, 0.0
      %205 = vst.msk [vmem:[#allocation2 + $0x100] sm:$0x3] %vm174, 0.0
      %206 = vst.msk [vmem:[#allocation2 + $0x108] sm:$0xff] %vm171, 0.0
      %207 = vst.msk [vmem:[#allocation2 + $0x110] sm:$0xff] %vm171, 0.0
      %208 = vst.msk [vmem:[#allocation2 + $0x118] sm:$0x3] %vm174, 0.0
      %209 = vst.msk [vmem:[#allocation2 + $0x120] sm:$0xff] %vm171, 0.0
      %210 = vst.msk [vmem:[#allocation2 + $0x128] sm:$0xff] %vm171, 0.0
      %211 = vst.msk [vmem:[#allocation2 + $0x130] sm:$0x3] %vm174, 0.0
      %212 = vst.msk [vmem:[#allocation2 + $0x138] sm:$0xff] %vm171, 0.0
      %213 = vst.msk [vmem:[#allocation2 + $0x140] sm:$0xff] %vm171, 0.0
      %214 = vst.msk [vmem:[#allocation2 + $0x148] sm:$0x3] %vm174, 0.0
      %215 = vst.msk [vmem:[#allocation2 + $0x150] sm:$0xff] %vm171, 0.0
      %216 = vst.msk [vmem:[#allocation2 + $0x158] sm:$0xff] %vm171, 0.0
      %217 = vst.msk [vmem:[#allocation2 + $0x160] sm:$0x3] %vm174, 0.0
      %218 = vst.msk [vmem:[#allocation2 + $0x168] sm:$0xff] %vm171, 0.0
      %219 = vst.msk [vmem:[#allocation2 + $0x170] sm:$0xff] %vm171, 0.0
      %220 = vst.msk [vmem:[#allocation2 + $0x178] sm:$0x3] %vm174, 0.0
      %221 = vst.msk [vmem:[#allocation2 + $0x180] sm:$0xff] %vm171, 0.0
      %222 = vst.msk [vmem:[#allocation2 + $0x188] sm:$0xff] %vm171, 0.0
      %223 = vst.msk [vmem:[#allocation2 + $0x190] sm:$0x3] %vm174, 0.0
      %224 = vst.msk [vmem:[#allocation2 + $0x198] sm:$0xff] %vm171, 0.0
      %225 = vst.msk [vmem:[#allocation2 + $0x1a0] sm:$0xff] %vm171, 0.0
      %226 = vst.msk [vmem:[#allocation2 + $0x1a8] sm:$0x3] %vm174, 0.0
      %v227 = vld [vmem:[%s165] sm:$0xff]
      %v228 = vld [vmem:[%s165 + $0x8] sm:$0xff]
      %v229 = vld [vmem:[%s165 + $0x10] sm:$0xff]
      %v230 = vld [vmem:[%s165 + $0x18] sm:$0xff]
      %v231 = vld [vmem:[%s165 + $0x20] sm:$0xff]
      %v232 = vld [vmem:[%s165 + $0x28] sm:$0xff]
      %v233 = vld [vmem:[%s165 + $0x30] sm:$0xff]
      %v234 = vld [vmem:[%s165 + $0x38] sm:$0xff]
      %v235 = vld [vmem:[%s165 + $0x40] sm:$0xff]
      %v236 = vld [vmem:[%s165 + $0x48] sm:$0xff]
      %v237 = vld [vmem:[%s165 + $0x50] sm:$0xff]
      %v238 = vld [vmem:[%s165 + $0x58] sm:$0xff]
      %v239 = vld [vmem:[%s165 + $0x60] sm:$0xff]
      %v240 = vld [vmem:[%s165 + $0x68] sm:$0xff]
      %v241 = vld [vmem:[%s165 + $0x70] sm:$0xff]
      %v242 = vld [vmem:[%s165 + $0x78] sm:$0xff]
      %v243 = vld [vmem:[%s165 + $0x80] sm:$0xff]
      %v244 = vld [vmem:[%s165 + $0x88] sm:$0xff]
      %v245 = vld [vmem:[%s165 + $0x90] sm:$0xff]
      %v246 = vld [vmem:[%s165 + $0x98] sm:$0xff]
      %v247 = vld [vmem:[%s165 + $0xa0] sm:$0xff]
      %v248 = vld [vmem:[%s165 + $0xa8] sm:$0xff]
      %v249 = vld [vmem:[%s165 + $0xb0] sm:$0xff]
      %v250 = vld [vmem:[%s165 + $0xb8] sm:$0xff]
      %v251 = vld [vmem:[%s165 + $0xc0] sm:$0xff]
      %v252 = vld [vmem:[%s165 + $0xc8] sm:$0xff]
      %v253 = vld [vmem:[%s165 + $0xd0] sm:$0xff]
      %v254 = vld [vmem:[%s165 + $0xd8] sm:$0xff]
      %v255 = vld [vmem:[%s165 + $0xe0] sm:$0xff]
      %v256 = vld [vmem:[%s165 + $0xe8] sm:$0xff]
      %v257 = vld [vmem:[%s165 + $0xf0] sm:$0xff]
      %v258 = vld [vmem:[%s165 + $0xf8] sm:$0xff]
      %s259 = scalar_lea.vmem [#allocation2], 24
      %260 = vst.msk [vmem:[%s259 + $0x1] sm:$0xff] %vm171, %v227
      %261 = vst.msk [vmem:[%s259 + $0x9] sm:$0xff] %vm171, %v228
      %262 = vst.msk [vmem:[%s259 + $0x19] sm:$0xff] %vm171, %v229
      %263 = vst.msk [vmem:[%s259 + $0x21] sm:$0xff] %vm171, %v230
      %264 = vst.msk [vmem:[%s259 + $0x31] sm:$0xff] %vm171, %v231
      %265 = vst.msk [vmem:[%s259 + $0x39] sm:$0xff] %vm171, %v232
      %266 = vst.msk [vmem:[%s259 + $0x49] sm:$0xff] %vm171, %v233
      %267 = vst.msk [vmem:[%s259 + $0x51] sm:$0xff] %vm171, %v234
      %268 = vst.msk [vmem:[%s259 + $0x61] sm:$0xff] %vm171, %v235
      %269 = vst.msk [vmem:[%s259 + $0x69] sm:$0xff] %vm171, %v236
      %270 = vst.msk [vmem:[%s259 + $0x79] sm:$0xff] %vm171, %v237
      %271 = vst.msk [vmem:[%s259 + $0x81] sm:$0xff] %vm171, %v238
      %272 = vst.msk [vmem:[%s259 + $0x91] sm:$0xff] %vm171, %v239
      %273 = vst.msk [vmem:[%s259 + $0x99] sm:$0xff] %vm171, %v240
      %274 = vst.msk [vmem:[%s259 + $0xa9] sm:$0xff] %vm171, %v241
      %275 = vst.msk [vmem:[%s259 + $0xb1] sm:$0xff] %vm171, %v242
      %276 = vst.msk [vmem:[%s259 + $0xc1] sm:$0xff] %vm171, %v243
      %277 = vst.msk [vmem:[%s259 + $0xc9] sm:$0xff] %vm171, %v244
      %278 = vst.msk [vmem:[%s259 + $0xd9] sm:$0xff] %vm171, %v245
      %279 = vst.msk [vmem:[%s259 + $0xe1] sm:$0xff] %vm171, %v246
      %280 = vst.msk [vmem:[%s259 + $0xf1] sm:$0xff] %vm171, %v247
      %281 = vst.msk [vmem:[%s259 + $0xf9] sm:$0xff] %vm171, %v248
      %282 = vst.msk [vmem:[%s259 + $0x109] sm:$0xff] %vm171, %v249
      %283 = vst.msk [vmem:[%s259 + $0x111] sm:$0xff] %vm171, %v250
      %284 = vst.msk [vmem:[%s259 + $0x121] sm:$0xff] %vm171, %v251
      %285 = vst.msk [vmem:[%s259 + $0x129] sm:$0xff] %vm171, %v252
      %286 = vst.msk [vmem:[%s259 + $0x139] sm:$0xff] %vm171, %v253
      %287 = vst.msk [vmem:[%s259 + $0x141] sm:$0xff] %vm171, %v254
      %288 = vst.msk [vmem:[%s259 + $0x151] sm:$0xff] %vm171, %v255
      %289 = vst.msk [vmem:[%s259 + $0x159] sm:$0xff] %vm171, %v256
      %290 = vst.msk [vmem:[%s259 + $0x169] sm:$0xff] %vm171, %v257
      %291 = vst.msk [vmem:[%s259 + $0x171] sm:$0xff] %vm171, %v258
      %v292 = vld [vmem:[#allocation2] sm:$0xff]
      %v293 = vld [vmem:[#allocation2 + $0x8] sm:$0xff]
      %v294 = vld [vmem:[#allocation2 + $0x18] sm:$0xff]
      %v295 = vld [vmem:[#allocation2 + $0x20] sm:$0xff]
      %v296 = vld [vmem:[#allocation2 + $0x30] sm:$0xff]
      %v297 = vld [vmem:[#allocation2 + $0x38] sm:$0xff]
      %v298 = vld [vmem:[#allocation2 + $0x48] sm:$0xff]
      %v299 = vld [vmem:[#allocation2 + $0x50] sm:$0xff]
      %v300 = vld [vmem:[#allocation2 + $0x60] sm:$0xff]
      %v301 = vld [vmem:[#allocation2 + $0x68] sm:$0xff]
      %v302 = vld [vmem:[#allocation2 + $0x78] sm:$0xff]
      %v303 = vld [vmem:[#allocation2 + $0x80] sm:$0xff]
      %v304 = vld [vmem:[#allocation2 + $0x90] sm:$0xff]
      %v305 = vld [vmem:[#allocation2 + $0x98] sm:$0xff]
      %v306 = vld [vmem:[#allocation2 + $0xa8] sm:$0xff]
      %v307 = vld [vmem:[#allocation2 + $0xb0] sm:$0xff]
      %v308 = vld [vmem:[#allocation2 + $0xc0] sm:$0xff]
      %v309 = vld [vmem:[#allocation2 + $0xc8] sm:$0xff]
      %v310 = vld [vmem:[#allocation2 + $0xd8] sm:$0xff]
      %v311 = vld [vmem:[#allocation2 + $0xe0] sm:$0xff]
      %v312 = vld [vmem:[#allocation2 + $0xf0] sm:$0xff]
      %v313 = vld [vmem:[#allocation2 + $0xf8] sm:$0xff]
      %v314 = vld [vmem:[#allocation2 + $0x108] sm:$0xff]
      %v315 = vld [vmem:[#allocation2 + $0x110] sm:$0xff]
      %v316 = vld [vmem:[#allocation2 + $0x120] sm:$0xff]
      %v317 = vld [vmem:[#allocation2 + $0x128] sm:$0xff]
      %v318 = vld [vmem:[#allocation2 + $0x138] sm:$0xff]
      %v319 = vld [vmem:[#allocation2 + $0x140] sm:$0xff]
      %v320 = vld [vmem:[#allocation2 + $0x150] sm:$0xff]
      %v321 = vld [vmem:[#allocation2 + $0x158] sm:$0xff]
      %v322 = vld [vmem:[#allocation2 + $0x168] sm:$0xff]
      %v323 = vld [vmem:[#allocation2 + $0x170] sm:$0xff]
      %v324 = vld [vmem:[#allocation2 + $0x1] sm:$0xff]
      %v325 = vld [vmem:[#allocation2 + $0x9] sm:$0xff]
      %v326 = vld [vmem:[#allocation2 + $0x19] sm:$0xff]
      %v327 = vld [vmem:[#allocation2 + $0x21] sm:$0xff]
      %v328 = vld [vmem:[#allocation2 + $0x31] sm:$0xff]
      %v329 = vld [vmem:[#allocation2 + $0x39] sm:$0xff]
      %v330 = vld [vmem:[#allocation2 + $0x49] sm:$0xff]
      %v331 = vld [vmem:[#allocation2 + $0x51] sm:$0xff]
      %v332 = vld [vmem:[#allocation2 + $0x61] sm:$0xff]
      %v333 = vld [vmem:[#allocation2 + $0x69] sm:$0xff]
      %v334 = vld [vmem:[#allocation2 + $0x79] sm:$0xff]
      %v335 = vld [vmem:[#allocation2 + $0x81] sm:$0xff]
      %v336 = vld [vmem:[#allocation2 + $0x91] sm:$0xff]
      %v337 = vld [vmem:[#allocation2 + $0x99] sm:$0xff]
      %v338 = vld [vmem:[#allocation2 + $0xa9] sm:$0xff]
      %v339 = vld [vmem:[#allocation2 + $0xb1] sm:$0xff]
      %v340 = vld [vmem:[#allocation2 + $0xc1] sm:$0xff]
      %v341 = vld [vmem:[#allocation2 + $0xc9] sm:$0xff]
      %v342 = vld [vmem:[#allocation2 + $0xd9] sm:$0xff]
      %v343 = vld [vmem:[#allocation2 + $0xe1] sm:$0xff]
      %v344 = vld [vmem:[#allocation2 + $0xf1] sm:$0xff]
      %v345 = vld [vmem:[#allocation2 + $0xf9] sm:$0xff]
      %v346 = vld [vmem:[#allocation2 + $0x109] sm:$0xff]
      %v347 = vld [vmem:[#allocation2 + $0x111] sm:$0xff]
      %v348 = vld [vmem:[#allocation2 + $0x121] sm:$0xff]
      %v349 = vld [vmem:[#allocation2 + $0x129] sm:$0xff]
      %v350 = vld [vmem:[#allocation2 + $0x139] sm:$0xff]
      %v351 = vld [vmem:[#allocation2 + $0x141] sm:$0xff]
      %v352 = vld [vmem:[#allocation2 + $0x151] sm:$0xff]
      %v353 = vld [vmem:[#allocation2 + $0x159] sm:$0xff]
      %v354 = vld [vmem:[#allocation2 + $0x169] sm:$0xff]
      %v355 = vld [vmem:[#allocation2 + $0x171] sm:$0xff]
      %v356 = vld [vmem:[#allocation2 + $0x2] sm:$0xff]
      %v357 = vld [vmem:[#allocation2 + $0xa] sm:$0xff]
      %v358 = vld [vmem:[#allocation2 + $0x1a] sm:$0xff]
      %v359 = vld [vmem:[#allocation2 + $0x22] sm:$0xff]
      %v360 = vld [vmem:[#allocation2 + $0x32] sm:$0xff]
      %v361 = vld [vmem:[#allocation2 + $0x3a] sm:$0xff]
      %v362 = vld [vmem:[#allocation2 + $0x4a] sm:$0xff]
      %v363 = vld [vmem:[#allocation2 + $0x52] sm:$0xff]
      %v364 = vld [vmem:[#allocation2 + $0x62] sm:$0xff]
      %v365 = vld [vmem:[#allocation2 + $0x6a] sm:$0xff]
      %v366 = vld [vmem:[#allocation2 + $0x7a] sm:$0xff]
      %v367 = vld [vmem:[#allocation2 + $0x82] sm:$0xff]
      %v368 = vld [vmem:[#allocation2 + $0x92] sm:$0xff]
      %v369 = vld [vmem:[#allocation2 + $0x9a] sm:$0xff]
      %v370 = vld [vmem:[#allocation2 + $0xaa] sm:$0xff]
      %v371 = vld [vmem:[#allocation2 + $0xb2] sm:$0xff]
      %v372 = vld [vmem:[#allocation2 + $0xc2] sm:$0xff]
      %v373 = vld [vmem:[#allocation2 + $0xca] sm:$0xff]
      %v374 = vld [vmem:[#allocation2 + $0xda] sm:$0xff]
      %v375 = vld [vmem:[#allocation2 + $0xe2] sm:$0xff]
      %v376 = vld [vmem:[#allocation2 + $0xf2] sm:$0xff]
      %v377 = vld [vmem:[#allocation2 + $0xfa] sm:$0xff]
      %v378 = vld [vmem:[#allocation2 + $0x10a] sm:$0xff]
      %v379 = vld [vmem:[#allocation2 + $0x112] sm:$0xff]
      %v380 = vld [vmem:[#allocation2 + $0x122] sm:$0xff]
      %v381 = vld [vmem:[#allocation2 + $0x12a] sm:$0xff]
      %v382 = vld [vmem:[#allocation2 + $0x13a] sm:$0xff]
      %v383 = vld [vmem:[#allocation2 + $0x142] sm:$0xff]
      %v384 = vld [vmem:[#allocation2 + $0x152] sm:$0xff]
      %v385 = vld [vmem:[#allocation2 + $0x15a] sm:$0xff]
      %v386 = vld [vmem:[#allocation2 + $0x16a] sm:$0xff]
      %v387 = vld [vmem:[#allocation2 + $0x172] sm:$0xff]
      %v388 = vld [vmem:[%s259] sm:$0xff]
      %v389 = vld [vmem:[%s259 + $0x8] sm:$0xff]
      %v390 = vld [vmem:[%s259 + $0x18] sm:$0xff]
      %v391 = vld [vmem:[%s259 + $0x20] sm:$0xff]
      %v392 = vld [vmem:[%s259 + $0x30] sm:$0xff]
      %v393 = vld [vmem:[%s259 + $0x38] sm:$0xff]
      %v394 = vld [vmem:[%s259 + $0x48] sm:$0xff]
      %v395 = vld [vmem:[%s259 + $0x50] sm:$0xff]
      %v396 = vld [vmem:[%s259 + $0x60] sm:$0xff]
      %v397 = vld [vmem:[%s259 + $0x68] sm:$0xff]
      %v398 = vld [vmem:[%s259 + $0x78] sm:$0xff]
      %v399 = vld [vmem:[%s259 + $0x80] sm:$0xff]
      %v400 = vld [vmem:[%s259 + $0x90] sm:$0xff]
      %v401 = vld [vmem:[%s259 + $0x98] sm:$0xff]
      %v402 = vld [vmem:[%s259 + $0xa8] sm:$0xff]
      %v403 = vld [vmem:[%s259 + $0xb0] sm:$0xff]
      %v404 = vld [vmem:[%s259 + $0xc0] sm:$0xff]
      %v405 = vld [vmem:[%s259 + $0xc8] sm:$0xff]
      %v406 = vld [vmem:[%s259 + $0xd8] sm:$0xff]
      %v407 = vld [vmem:[%s259 + $0xe0] sm:$0xff]
      %v408 = vld [vmem:[%s259 + $0xf0] sm:$0xff]
      %v409 = vld [vmem:[%s259 + $0xf8] sm:$0xff]
      %v410 = vld [vmem:[%s259 + $0x108] sm:$0xff]
      %v411 = vld [vmem:[%s259 + $0x110] sm:$0xff]
      %v412 = vld [vmem:[%s259 + $0x120] sm:$0xff]
      %v413 = vld [vmem:[%s259 + $0x128] sm:$0xff]
      %v414 = vld [vmem:[%s259 + $0x138] sm:$0xff]
      %v415 = vld [vmem:[%s259 + $0x140] sm:$0xff]
      %v416 = vld [vmem:[%s259 + $0x150] sm:$0xff]
      %v417 = vld [vmem:[%s259 + $0x158] sm:$0xff]
      %v418 = vld [vmem:[%s259 + $0x168] sm:$0xff]
      %v419 = vld [vmem:[%s259 + $0x170] sm:$0xff]
      %v420 = vld [vmem:[%s259 + $0x1] sm:$0xff]
      %v421 = vld [vmem:[%s259 + $0x9] sm:$0xff]
      %v422 = vld [vmem:[%s259 + $0x19] sm:$0xff]
      %v423 = vld [vmem:[%s259 + $0x21] sm:$0xff]
      %v424 = vld [vmem:[%s259 + $0x31] sm:$0xff]
      %v425 = vld [vmem:[%s259 + $0x39] sm:$0xff]
      %v426 = vld [vmem:[%s259 + $0x49] sm:$0xff]
      %v427 = vld [vmem:[%s259 + $0x51] sm:$0xff]
      %v428 = vld [vmem:[%s259 + $0x61] sm:$0xff]
      %v429 = vld [vmem:[%s259 + $0x69] sm:$0xff]
      %v430 = vld [vmem:[%s259 + $0x79] sm:$0xff]
      %v431 = vld [vmem:[%s259 + $0x81] sm:$0xff]
      %v432 = vld [vmem:[%s259 + $0x91] sm:$0xff]
      %v433 = vld [vmem:[%s259 + $0x99] sm:$0xff]
      %v434 = vld [vmem:[%s259 + $0xa9] sm:$0xff]
      %v435 = vld [vmem:[%s259 + $0xb1] sm:$0xff]
      %v436 = vld [vmem:[%s259 + $0xc1] sm:$0xff]
      %v437 = vld [vmem:[%s259 + $0xc9] sm:$0xff]
      %v438 = vld [vmem:[%s259 + $0xd9] sm:$0xff]
      %v439 = vld [vmem:[%s259 + $0xe1] sm:$0xff]
      %v440 = vld [vmem:[%s259 + $0xf1] sm:$0xff]
      %v441 = vld [vmem:[%s259 + $0xf9] sm:$0xff]
      %v442 = vld [vmem:[%s259 + $0x109] sm:$0xff]
      %v443 = vld [vmem:[%s259 + $0x111] sm:$0xff]
      %v444 = vld [vmem:[%s259 + $0x121] sm:$0xff]
      %v445 = vld [vmem:[%s259 + $0x129] sm:$0xff]
      %v446 = vld [vmem:[%s259 + $0x139] sm:$0xff]
      %v447 = vld [vmem:[%s259 + $0x141] sm:$0xff]
      %v448 = vld [vmem:[%s259 + $0x151] sm:$0xff]
      %v449 = vld [vmem:[%s259 + $0x159] sm:$0xff]
      %v450 = vld [vmem:[%s259 + $0x169] sm:$0xff]
      %v451 = vld [vmem:[%s259 + $0x171] sm:$0xff]
      %v452 = vld [vmem:[%s259 + $0x2] sm:$0xff]
      %v453 = vld [vmem:[%s259 + $0xa] sm:$0xff]
      %v454 = vld [vmem:[%s259 + $0x1a] sm:$0xff]
      %v455 = vld [vmem:[%s259 + $0x22] sm:$0xff]
      %v456 = vld [vmem:[%s259 + $0x32] sm:$0xff]
      %v457 = vld [vmem:[%s259 + $0x3a] sm:$0xff]
      %v458 = vld [vmem:[%s259 + $0x4a] sm:$0xff]
      %v459 = vld [vmem:[%s259 + $0x52] sm:$0xff]
      %v460 = vld [vmem:[%s259 + $0x62] sm:$0xff]
      %v461 = vld [vmem:[%s259 + $0x6a] sm:$0xff]
      %v462 = vld [vmem:[%s259 + $0x7a] sm:$0xff]
      %v463 = vld [vmem:[%s259 + $0x82] sm:$0xff]
      %v464 = vld [vmem:[%s259 + $0x92] sm:$0xff]
      %v465 = vld [vmem:[%s259 + $0x9a] sm:$0xff]
      %v466 = vld [vmem:[%s259 + $0xaa] sm:$0xff]
      %v467 = vld [vmem:[%s259 + $0xb2] sm:$0xff]
      %v468 = vld [vmem:[%s259 + $0xc2] sm:$0xff]
      %v469 = vld [vmem:[%s259 + $0xca] sm:$0xff]
      %v470 = vld [vmem:[%s259 + $0xda] sm:$0xff]
      %v471 = vld [vmem:[%s259 + $0xe2] sm:$0xff]
      %v472 = vld [vmem:[%s259 + $0xf2] sm:$0xff]
      %v473 = vld [vmem:[%s259 + $0xfa] sm:$0xff]
      %v474 = vld [vmem:[%s259 + $0x10a] sm:$0xff]
      %v475 = vld [vmem:[%s259 + $0x112] sm:$0xff]
      %v476 = vld [vmem:[%s259 + $0x122] sm:$0xff]
      %v477 = vld [vmem:[%s259 + $0x12a] sm:$0xff]
      %v478 = vld [vmem:[%s259 + $0x13a] sm:$0xff]
      %v479 = vld [vmem:[%s259 + $0x142] sm:$0xff]
      %v480 = vld [vmem:[%s259 + $0x152] sm:$0xff]
      %v481 = vld [vmem:[%s259 + $0x15a] sm:$0xff]
      %v482 = vld [vmem:[%s259 + $0x16a] sm:$0xff]
      %v483 = vld [vmem:[%s259 + $0x172] sm:$0xff]
      %s484 = scalar_lea.vmem [#allocation2], 48
      %v485 = vld [vmem:[%s484] sm:$0xff]
      %v486 = vld [vmem:[%s484 + $0x8] sm:$0xff]
      %v487 = vld [vmem:[%s484 + $0x18] sm:$0xff]
      %v488 = vld [vmem:[%s484 + $0x20] sm:$0xff]
      %v489 = vld [vmem:[%s484 + $0x30] sm:$0xff]
      %v490 = vld [vmem:[%s484 + $0x38] sm:$0xff]
      %v491 = vld [vmem:[%s484 + $0x48] sm:$0xff]
      %v492 = vld [vmem:[%s484 + $0x50] sm:$0xff]
      %v493 = vld [vmem:[%s484 + $0x60] sm:$0xff]
      %v494 = vld [vmem:[%s484 + $0x68] sm:$0xff]
      %v495 = vld [vmem:[%s484 + $0x78] sm:$0xff]
      %v496 = vld [vmem:[%s484 + $0x80] sm:$0xff]
      %v497 = vld [vmem:[%s484 + $0x90] sm:$0xff]
      %v498 = vld [vmem:[%s484 + $0x98] sm:$0xff]
      %v499 = vld [vmem:[%s484 + $0xa8] sm:$0xff]
      %v500 = vld [vmem:[%s484 + $0xb0] sm:$0xff]
      %v501 = vld [vmem:[%s484 + $0xc0] sm:$0xff]
      %v502 = vld [vmem:[%s484 + $0xc8] sm:$0xff]
      %v503 = vld [vmem:[%s484 + $0xd8] sm:$0xff]
      %v504 = vld [vmem:[%s484 + $0xe0] sm:$0xff]
      %v505 = vld [vmem:[%s484 + $0xf0] sm:$0xff]
      %v506 = vld [vmem:[%s484 + $0xf8] sm:$0xff]
      %v507 = vld [vmem:[%s484 + $0x108] sm:$0xff]
      %v508 = vld [vmem:[%s484 + $0x110] sm:$0xff]
      %v509 = vld [vmem:[%s484 + $0x120] sm:$0xff]
      %v510 = vld [vmem:[%s484 + $0x128] sm:$0xff]
      %v511 = vld [vmem:[%s484 + $0x138] sm:$0xff]
      %v512 = vld [vmem:[%s484 + $0x140] sm:$0xff]
      %v513 = vld [vmem:[%s484 + $0x150] sm:$0xff]
      %v514 = vld [vmem:[%s484 + $0x158] sm:$0xff]
      %v515 = vld [vmem:[%s484 + $0x168] sm:$0xff]
      %v516 = vld [vmem:[%s484 + $0x170] sm:$0xff]
      %v517 = vld [vmem:[%s484 + $0x1] sm:$0xff]
      %v518 = vld [vmem:[%s484 + $0x9] sm:$0xff]
      %v519 = vld [vmem:[%s484 + $0x19] sm:$0xff]
      %v520 = vld [vmem:[%s484 + $0x21] sm:$0xff]
      %v521 = vld [vmem:[%s484 + $0x31] sm:$0xff]
      %v522 = vld [vmem:[%s484 + $0x39] sm:$0xff]
      %v523 = vld [vmem:[%s484 + $0x49] sm:$0xff]
      %v524 = vld [vmem:[%s484 + $0x51] sm:$0xff]
      %v525 = vld [vmem:[%s484 + $0x61] sm:$0xff]
      %v526 = vld [vmem:[%s484 + $0x69] sm:$0xff]
      %v527 = vld [vmem:[%s484 + $0x79] sm:$0xff]
      %v528 = vld [vmem:[%s484 + $0x81] sm:$0xff]
      %v529 = vld [vmem:[%s484 + $0x91] sm:$0xff]
      %v530 = vld [vmem:[%s484 + $0x99] sm:$0xff]
      %v531 = vld [vmem:[%s484 + $0xa9] sm:$0xff]
      %v532 = vld [vmem:[%s484 + $0xb1] sm:$0xff]
      %v533 = vld [vmem:[%s484 + $0xc1] sm:$0xff]
      %v534 = vld [vmem:[%s484 + $0xc9] sm:$0xff]
      %v535 = vld [vmem:[%s484 + $0xd9] sm:$0xff]
      %v536 = vld [vmem:[%s484 + $0xe1] sm:$0xff]
      %v537 = vld [vmem:[%s484 + $0xf1] sm:$0xff]
      %v538 = vld [vmem:[%s484 + $0xf9] sm:$0xff]
      %v539 = vld [vmem:[%s484 + $0x109] sm:$0xff]
      %v540 = vld [vmem:[%s484 + $0x111] sm:$0xff]
      %v541 = vld [vmem:[%s484 + $0x121] sm:$0xff]
      %v542 = vld [vmem:[%s484 + $0x129] sm:$0xff]
      %v543 = vld [vmem:[%s484 + $0x139] sm:$0xff]
      %v544 = vld [vmem:[%s484 + $0x141] sm:$0xff]
      %v545 = vld [vmem:[%s484 + $0x151] sm:$0xff]
      %v546 = vld [vmem:[%s484 + $0x159] sm:$0xff]
      %v547 = vld [vmem:[%s484 + $0x169] sm:$0xff]
      %v548 = vld [vmem:[%s484 + $0x171] sm:$0xff]
      %v549 = vld [vmem:[%s484 + $0x2] sm:$0xff]
      %v550 = vld [vmem:[%s484 + $0xa] sm:$0xff]
      %v551 = vld [vmem:[%s484 + $0x1a] sm:$0xff]
      %v552 = vld [vmem:[%s484 + $0x22] sm:$0xff]
      %v553 = vld [vmem:[%s484 + $0x32] sm:$0xff]
      %v554 = vld [vmem:[%s484 + $0x3a] sm:$0xff]
      %v555 = vld [vmem:[%s484 + $0x4a] sm:$0xff]
      %v556 = vld [vmem:[%s484 + $0x52] sm:$0xff]
      %v557 = vld [vmem:[%s484 + $0x62] sm:$0xff]
      %v558 = vld [vmem:[%s484 + $0x6a] sm:$0xff]
      %v559 = vld [vmem:[%s484 + $0x7a] sm:$0xff]
      %v560 = vld [vmem:[%s484 + $0x82] sm:$0xff]
      %v561 = vld [vmem:[%s484 + $0x92] sm:$0xff]
      %v562 = vld [vmem:[%s484 + $0x9a] sm:$0xff]
      %v563 = vld [vmem:[%s484 + $0xaa] sm:$0xff]
      %v564 = vld [vmem:[%s484 + $0xb2] sm:$0xff]
      %v565 = vld [vmem:[%s484 + $0xc2] sm:$0xff]
      %v566 = vld [vmem:[%s484 + $0xca] sm:$0xff]
      %v567 = vld [vmem:[%s484 + $0xda] sm:$0xff]
      %v568 = vld [vmem:[%s484 + $0xe2] sm:$0xff]
      %v569 = vld [vmem:[%s484 + $0xf2] sm:$0xff]
      %v570 = vld [vmem:[%s484 + $0xfa] sm:$0xff]
      %v571 = vld [vmem:[%s484 + $0x10a] sm:$0xff]
      %v572 = vld [vmem:[%s484 + $0x112] sm:$0xff]
      %v573 = vld [vmem:[%s484 + $0x122] sm:$0xff]
      %v574 = vld [vmem:[%s484 + $0x12a] sm:$0xff]
      %v575 = vld [vmem:[%s484 + $0x13a] sm:$0xff]
      %v576 = vld [vmem:[%s484 + $0x142] sm:$0xff]
      %v577 = vld [vmem:[%s484 + $0x152] sm:$0xff]
      %v578 = vld [vmem:[%s484 + $0x15a] sm:$0xff]
      %v579 = vld [vmem:[%s484 + $0x16a] sm:$0xff]
      %v580 = vld [vmem:[%s484 + $0x172] sm:$0xff]
      %613 = vrot.lane.b32.xlu0 %v324, 32
      %v614 = vpop.permute.xlu0 %613
      %615 = vrot.lane.b32.xlu0 %v325, 32
      %v616 = vpop.permute.xlu0 %615
      %617 = vrot.lane.b32.xlu0 %v326, 32
      %v618 = vpop.permute.xlu0 %617
      %619 = vrot.lane.b32.xlu0 %v327, 32
      %v620 = vpop.permute.xlu0 %619
      %621 = vrot.lane.b32.xlu0 %v328, 32
      %v622 = vpop.permute.xlu0 %621
      %623 = vrot.lane.b32.xlu0 %v329, 32
      %v624 = vpop.permute.xlu0 %623
      %625 = vrot.lane.b32.xlu0 %v330, 32
      %v626 = vpop.permute.xlu0 %625
      %627 = vrot.lane.b32.xlu0 %v331, 32
      %v628 = vpop.permute.xlu0 %627
      %629 = vrot.lane.b32.xlu0 %v332, 32
      %v630 = vpop.permute.xlu0 %629
      %631 = vrot.lane.b32.xlu0 %v333, 32
      %v632 = vpop.permute.xlu0 %631
      %633 = vrot.lane.b32.xlu0 %v334, 32
      %v634 = vpop.permute.xlu0 %633
      %635 = vrot.lane.b32.xlu0 %v335, 32
      %v636 = vpop.permute.xlu0 %635
      %637 = vrot.lane.b32.xlu0 %v336, 32
      %v638 = vpop.permute.xlu0 %637
      %639 = vrot.lane.b32.xlu0 %v337, 32
      %v640 = vpop.permute.xlu0 %639
      %641 = vrot.lane.b32.xlu0 %v338, 32
      %v642 = vpop.permute.xlu0 %641
      %643 = vrot.lane.b32.xlu0 %v339, 32
      %v644 = vpop.permute.xlu0 %643
      %645 = vrot.lane.b32.xlu0 %v340, 32
      %v646 = vpop.permute.xlu0 %645
      %647 = vrot.lane.b32.xlu0 %v341, 32
      %v648 = vpop.permute.xlu0 %647
      %649 = vrot.lane.b32.xlu0 %v342, 32
      %v650 = vpop.permute.xlu0 %649
      %651 = vrot.lane.b32.xlu0 %v343, 32
      %v652 = vpop.permute.xlu0 %651
      %653 = vrot.lane.b32.xlu0 %v344, 32
      %v654 = vpop.permute.xlu0 %653
      %655 = vrot.lane.b32.xlu0 %v345, 32
      %v656 = vpop.permute.xlu0 %655
      %657 = vrot.lane.b32.xlu0 %v346, 32
      %v658 = vpop.permute.xlu0 %657
      %659 = vrot.lane.b32.xlu0 %v347, 32
      %v660 = vpop.permute.xlu0 %659
      %661 = vrot.lane.b32.xlu0 %v348, 32
      %v662 = vpop.permute.xlu0 %661
      %663 = vrot.lane.b32.xlu0 %v349, 32
      %v664 = vpop.permute.xlu0 %663
      %665 = vrot.lane.b32.xlu0 %v350, 32
      %v666 = vpop.permute.xlu0 %665
      %667 = vrot.lane.b32.xlu0 %v351, 32
      %v668 = vpop.permute.xlu0 %667
      %669 = vrot.lane.b32.xlu0 %v352, 32
      %v670 = vpop.permute.xlu0 %669
      %671 = vrot.lane.b32.xlu0 %v353, 32
      %v672 = vpop.permute.xlu0 %671
      %673 = vrot.lane.b32.xlu0 %v354, 32
      %v674 = vpop.permute.xlu0 %673
      %675 = vrot.lane.b32.xlu0 %v355, 32
      %v676 = vpop.permute.xlu0 %675
      %741 = vrot.lane.b32.xlu0 %v356, 64
      %v742 = vpop.permute.xlu0 %741
      %743 = vrot.lane.b32.xlu0 %v357, 64
      %v744 = vpop.permute.xlu0 %743
      %745 = vrot.lane.b32.xlu0 %v358, 64
      %v746 = vpop.permute.xlu0 %745
      %747 = vrot.lane.b32.xlu0 %v359, 64
      %v748 = vpop.permute.xlu0 %747
      %749 = vrot.lane.b32.xlu0 %v360, 64
      %v750 = vpop.permute.xlu0 %749
      %751 = vrot.lane.b32.xlu0 %v361, 64
      %v752 = vpop.permute.xlu0 %751
      %753 = vrot.lane.b32.xlu0 %v362, 64
      %v754 = vpop.permute.xlu0 %753
      %755 = vrot.lane.b32.xlu0 %v363, 64
      %v756 = vpop.permute.xlu0 %755
      %757 = vrot.lane.b32.xlu0 %v364, 64
      %v758 = vpop.permute.xlu0 %757
      %759 = vrot.lane.b32.xlu0 %v365, 64
      %v760 = vpop.permute.xlu0 %759
      %761 = vrot.lane.b32.xlu0 %v366, 64
      %v762 = vpop.permute.xlu0 %761
      %763 = vrot.lane.b32.xlu0 %v367, 64
      %v764 = vpop.permute.xlu0 %763
      %765 = vrot.lane.b32.xlu0 %v368, 64
      %v766 = vpop.permute.xlu0 %765
      %767 = vrot.lane.b32.xlu0 %v369, 64
      %v768 = vpop.permute.xlu0 %767
      %769 = vrot.lane.b32.xlu0 %v370, 64
      %v770 = vpop.permute.xlu0 %769
      %771 = vrot.lane.b32.xlu0 %v371, 64
      %v772 = vpop.permute.xlu0 %771
      %773 = vrot.lane.b32.xlu0 %v372, 64
      %v774 = vpop.permute.xlu0 %773
      %775 = vrot.lane.b32.xlu0 %v373, 64
      %v776 = vpop.permute.xlu0 %775
      %777 = vrot.lane.b32.xlu0 %v374, 64
      %v778 = vpop.permute.xlu0 %777
      %779 = vrot.lane.b32.xlu0 %v375, 64
      %v780 = vpop.permute.xlu0 %779
      %781 = vrot.lane.b32.xlu0 %v376, 64
      %v782 = vpop.permute.xlu0 %781
      %783 = vrot.lane.b32.xlu0 %v377, 64
      %v784 = vpop.permute.xlu0 %783
      %785 = vrot.lane.b32.xlu0 %v378, 64
      %v786 = vpop.permute.xlu0 %785
      %787 = vrot.lane.b32.xlu0 %v379, 64
      %v788 = vpop.permute.xlu0 %787
      %789 = vrot.lane.b32.xlu0 %v380, 64
      %v790 = vpop.permute.xlu0 %789
      %791 = vrot.lane.b32.xlu0 %v381, 64
      %v792 = vpop.permute.xlu0 %791
      %793 = vrot.lane.b32.xlu0 %v382, 64
      %v794 = vpop.permute.xlu0 %793
      %795 = vrot.lane.b32.xlu0 %v383, 64
      %v796 = vpop.permute.xlu0 %795
      %797 = vrot.lane.b32.xlu0 %v384, 64
      %v798 = vpop.permute.xlu0 %797
      %799 = vrot.lane.b32.xlu0 %v385, 64
      %v800 = vpop.permute.xlu0 %799
      %801 = vrot.lane.b32.xlu0 %v386, 64
      %v802 = vpop.permute.xlu0 %801
      %803 = vrot.lane.b32.xlu0 %v387, 64
      %v804 = vpop.permute.xlu0 %803
      %869 = vrot.lane.b32.xlu0 %v388, 96
      %v870 = vpop.permute.xlu0 %869
      %871 = vrot.lane.b32.xlu0 %v389, 96
      %v872 = vpop.permute.xlu0 %871
      %873 = vrot.lane.b32.xlu0 %v390, 96
      %v874 = vpop.permute.xlu0 %873
      %875 = vrot.lane.b32.xlu0 %v391, 96
      %v876 = vpop.permute.xlu0 %875
      %877 = vrot.lane.b32.xlu0 %v392, 96
      %v878 = vpop.permute.xlu0 %877
      %879 = vrot.lane.b32.xlu0 %v393, 96
      %v880 = vpop.permute.xlu0 %879
      %881 = vrot.lane.b32.xlu0 %v394, 96
      %v882 = vpop.permute.xlu0 %881
      %883 = vrot.lane.b32.xlu0 %v395, 96
      %v884 = vpop.permute.xlu0 %883
      %885 = vrot.lane.b32.xlu0 %v396, 96
      %v886 = vpop.permute.xlu0 %885
      %887 = vrot.lane.b32.xlu0 %v397, 96
      %v888 = vpop.permute.xlu0 %887
      %889 = vrot.lane.b32.xlu0 %v398, 96
      %v890 = vpop.permute.xlu0 %889
      %891 = vrot.lane.b32.xlu0 %v399, 96
      %v892 = vpop.permute.xlu0 %891
      %893 = vrot.lane.b32.xlu0 %v400, 96
      %v894 = vpop.permute.xlu0 %893
      %895 = vrot.lane.b32.xlu0 %v401, 96
      %v896 = vpop.permute.xlu0 %895
      %897 = vrot.lane.b32.xlu0 %v402, 96
      %v898 = vpop.permute.xlu0 %897
      %899 = vrot.lane.b32.xlu0 %v403, 96
      %v900 = vpop.permute.xlu0 %899
      %901 = vrot.lane.b32.xlu0 %v404, 96
      %v902 = vpop.permute.xlu0 %901
      %903 = vrot.lane.b32.xlu0 %v405, 96
      %v904 = vpop.permute.xlu0 %903
      %905 = vrot.lane.b32.xlu0 %v406, 96
      %v906 = vpop.permute.xlu0 %905
      %907 = vrot.lane.b32.xlu0 %v407, 96
      %v908 = vpop.permute.xlu0 %907
      %909 = vrot.lane.b32.xlu0 %v408, 96
      %v910 = vpop.permute.xlu0 %909
      %911 = vrot.lane.b32.xlu0 %v409, 96
      %v912 = vpop.permute.xlu0 %911
      %913 = vrot.lane.b32.xlu0 %v410, 96
      %v914 = vpop.permute.xlu0 %913
      %915 = vrot.lane.b32.xlu0 %v411, 96
      %v916 = vpop.permute.xlu0 %915
      %917 = vrot.lane.b32.xlu0 %v412, 96
      %v918 = vpop.permute.xlu0 %917
      %919 = vrot.lane.b32.xlu0 %v413, 96
      %v920 = vpop.permute.xlu0 %919
      %921 = vrot.lane.b32.xlu0 %v414, 96
      %v922 = vpop.permute.xlu0 %921
      %923 = vrot.lane.b32.xlu0 %v415, 96
      %v924 = vpop.permute.xlu0 %923
      %925 = vrot.lane.b32.xlu0 %v416, 96
      %v926 = vpop.permute.xlu0 %925
      %927 = vrot.lane.b32.xlu0 %v417, 96
      %v928 = vpop.permute.xlu0 %927
      %929 = vrot.lane.b32.xlu0 %v418, 96
      %v930 = vpop.permute.xlu0 %929
      %931 = vrot.lane.b32.xlu0 %v419, 96
      %v932 = vpop.permute.xlu0 %931
      %997 = vrot.lane.b32.xlu0 %v452, 32
      %v998 = vpop.permute.xlu0 %997
      %999 = vrot.lane.b32.xlu0 %v453, 32
      %v1000 = vpop.permute.xlu0 %999
      %1001 = vrot.lane.b32.xlu0 %v454, 32
      %v1002 = vpop.permute.xlu0 %1001
      %1003 = vrot.lane.b32.xlu0 %v455, 32
      %v1004 = vpop.permute.xlu0 %1003
      %1005 = vrot.lane.b32.xlu0 %v456, 32
      %v1006 = vpop.permute.xlu0 %1005
      %1007 = vrot.lane.b32.xlu0 %v457, 32
      %v1008 = vpop.permute.xlu0 %1007
      %1009 = vrot.lane.b32.xlu0 %v458, 32
      %v1010 = vpop.permute.xlu0 %1009
      %1011 = vrot.lane.b32.xlu0 %v459, 32
      %v1012 = vpop.permute.xlu0 %1011
      %1013 = vrot.lane.b32.xlu0 %v460, 32
      %v1014 = vpop.permute.xlu0 %1013
      %1015 = vrot.lane.b32.xlu0 %v461, 32
      %v1016 = vpop.permute.xlu0 %1015
      %1017 = vrot.lane.b32.xlu0 %v462, 32
      %v1018 = vpop.permute.xlu0 %1017
      %1019 = vrot.lane.b32.xlu0 %v463, 32
      %v1020 = vpop.permute.xlu0 %1019
      %1021 = vrot.lane.b32.xlu0 %v464, 32
      %v1022 = vpop.permute.xlu0 %1021
      %1023 = vrot.lane.b32.xlu0 %v465, 32
      %v1024 = vpop.permute.xlu0 %1023
      %1025 = vrot.lane.b32.xlu0 %v466, 32
      %v1026 = vpop.permute.xlu0 %1025
      %1027 = vrot.lane.b32.xlu0 %v467, 32
      %v1028 = vpop.permute.xlu0 %1027
      %1029 = vrot.lane.b32.xlu0 %v468, 32
      %v1030 = vpop.permute.xlu0 %1029
      %1031 = vrot.lane.b32.xlu0 %v469, 32
      %v1032 = vpop.permute.xlu0 %1031
      %1033 = vrot.lane.b32.xlu0 %v470, 32
      %v1034 = vpop.permute.xlu0 %1033
      %1035 = vrot.lane.b32.xlu0 %v471, 32
      %v1036 = vpop.permute.xlu0 %1035
      %1037 = vrot.lane.b32.xlu0 %v472, 32
      %v1038 = vpop.permute.xlu0 %1037
      %1039 = vrot.lane.b32.xlu0 %v473, 32
      %v1040 = vpop.permute.xlu0 %1039
      %1041 = vrot.lane.b32.xlu0 %v474, 32
      %v1042 = vpop.permute.xlu0 %1041
      %1043 = vrot.lane.b32.xlu0 %v475, 32
      %v1044 = vpop.permute.xlu0 %1043
      %1045 = vrot.lane.b32.xlu0 %v476, 32
      %v1046 = vpop.permute.xlu0 %1045
      %1047 = vrot.lane.b32.xlu0 %v477, 32
      %v1048 = vpop.permute.xlu0 %1047
      %1049 = vrot.lane.b32.xlu0 %v478, 32
      %v1050 = vpop.permute.xlu0 %1049
      %1051 = vrot.lane.b32.xlu0 %v479, 32
      %v1052 = vpop.permute.xlu0 %1051
      %1053 = vrot.lane.b32.xlu0 %v480, 32
      %v1054 = vpop.permute.xlu0 %1053
      %1055 = vrot.lane.b32.xlu0 %v481, 32
      %v1056 = vpop.permute.xlu0 %1055
      %1057 = vrot.lane.b32.xlu0 %v482, 32
      %v1058 = vpop.permute.xlu0 %1057
      %1059 = vrot.lane.b32.xlu0 %v483, 32
      %v1060 = vpop.permute.xlu0 %1059
      %1125 = vrot.lane.b32.xlu0 %v485, 64
      %v1126 = vpop.permute.xlu0 %1125
      %1127 = vrot.lane.b32.xlu0 %v486, 64
      %v1128 = vpop.permute.xlu0 %1127
      %1129 = vrot.lane.b32.xlu0 %v487, 64
      %v1130 = vpop.permute.xlu0 %1129
      %1131 = vrot.lane.b32.xlu0 %v488, 64
      %v1132 = vpop.permute.xlu0 %1131
      %1133 = vrot.lane.b32.xlu0 %v489, 64
      %v1134 = vpop.permute.xlu0 %1133
      %1135 = vrot.lane.b32.xlu0 %v490, 64
      %v1136 = vpop.permute.xlu0 %1135
      %1137 = vrot.lane.b32.xlu0 %v491, 64
      %v1138 = vpop.permute.xlu0 %1137
      %1139 = vrot.lane.b32.xlu0 %v492, 64
      %v1140 = vpop.permute.xlu0 %1139
      %1141 = vrot.lane.b32.xlu0 %v493, 64
      %v1142 = vpop.permute.xlu0 %1141
      %1143 = vrot.lane.b32.xlu0 %v494, 64
      %v1144 = vpop.permute.xlu0 %1143
      %1145 = vrot.lane.b32.xlu0 %v495, 64
      %v1146 = vpop.permute.xlu0 %1145
      %1147 = vrot.lane.b32.xlu0 %v496, 64
      %v1148 = vpop.permute.xlu0 %1147
      %1149 = vrot.lane.b32.xlu0 %v497, 64
      %v1150 = vpop.permute.xlu0 %1149
      %1151 = vrot.lane.b32.xlu0 %v498, 64
      %v1152 = vpop.permute.xlu0 %1151
      %1153 = vrot.lane.b32.xlu0 %v499, 64
      %v1154 = vpop.permute.xlu0 %1153
      %1155 = vrot.lane.b32.xlu0 %v500, 64
      %v1156 = vpop.permute.xlu0 %1155
      %1157 = vrot.lane.b32.xlu0 %v501, 64
      %v1158 = vpop.permute.xlu0 %1157
      %1159 = vrot.lane.b32.xlu0 %v502, 64
      %v1160 = vpop.permute.xlu0 %1159
      %1161 = vrot.lane.b32.xlu0 %v503, 64
      %v1162 = vpop.permute.xlu0 %1161
      %1163 = vrot.lane.b32.xlu0 %v504, 64
      %v1164 = vpop.permute.xlu0 %1163
      %1165 = vrot.lane.b32.xlu0 %v505, 64
      %v1166 = vpop.permute.xlu0 %1165
      %1167 = vrot.lane.b32.xlu0 %v506, 64
      %v1168 = vpop.permute.xlu0 %1167
      %1169 = vrot.lane.b32.xlu0 %v507, 64
      %v1170 = vpop.permute.xlu0 %1169
      %1171 = vrot.lane.b32.xlu0 %v508, 64
      %v1172 = vpop.permute.xlu0 %1171
      %1173 = vrot.lane.b32.xlu0 %v509, 64
      %v1174 = vpop.permute.xlu0 %1173
      %1175 = vrot.lane.b32.xlu0 %v510, 64
      %v1176 = vpop.permute.xlu0 %1175
      %1177 = vrot.lane.b32.xlu0 %v511, 64
      %v1178 = vpop.permute.xlu0 %1177
      %1179 = vrot.lane.b32.xlu0 %v512, 64
      %v1180 = vpop.permute.xlu0 %1179
      %1181 = vrot.lane.b32.xlu0 %v513, 64
      %v1182 = vpop.permute.xlu0 %1181
      %1183 = vrot.lane.b32.xlu0 %v514, 64
      %v1184 = vpop.permute.xlu0 %1183
      %1185 = vrot.lane.b32.xlu0 %v515, 64
      %v1186 = vpop.permute.xlu0 %1185
      %1187 = vrot.lane.b32.xlu0 %v516, 64
      %v1188 = vpop.permute.xlu0 %1187
      %1253 = vrot.lane.b32.xlu0 %v517, 96
      %v1254 = vpop.permute.xlu0 %1253
      %1255 = vrot.lane.b32.xlu0 %v518, 96
      %v1256 = vpop.permute.xlu0 %1255
      %1257 = vrot.lane.b32.xlu0 %v519, 96
      %v1258 = vpop.permute.xlu0 %1257
      %1259 = vrot.lane.b32.xlu0 %v520, 96
      %v1260 = vpop.permute.xlu0 %1259
      %1261 = vrot.lane.b32.xlu0 %v521, 96
      %v1262 = vpop.permute.xlu0 %1261
      %1263 = vrot.lane.b32.xlu0 %v522, 96
      %v1264 = vpop.permute.xlu0 %1263
      %1265 = vrot.lane.b32.xlu0 %v523, 96
      %v1266 = vpop.permute.xlu0 %1265
      %1267 = vrot.lane.b32.xlu0 %v524, 96
      %v1268 = vpop.permute.xlu0 %1267
      %1269 = vrot.lane.b32.xlu0 %v525, 96
      %v1270 = vpop.permute.xlu0 %1269
      %1271 = vrot.lane.b32.xlu0 %v526, 96
      %v1272 = vpop.permute.xlu0 %1271
      %1273 = vrot.lane.b32.xlu0 %v527, 96
      %v1274 = vpop.permute.xlu0 %1273
      %1275 = vrot.lane.b32.xlu0 %v528, 96
      %v1276 = vpop.permute.xlu0 %1275
      %1277 = vrot.lane.b32.xlu0 %v529, 96
      %v1278 = vpop.permute.xlu0 %1277
      %1279 = vrot.lane.b32.xlu0 %v530, 96
      %v1280 = vpop.permute.xlu0 %1279
      %1281 = vrot.lane.b32.xlu0 %v531, 96
      %v1282 = vpop.permute.xlu0 %1281
      %1283 = vrot.lane.b32.xlu0 %v532, 96
      %v1284 = vpop.permute.xlu0 %1283
      %1285 = vrot.lane.b32.xlu0 %v533, 96
      %v1286 = vpop.permute.xlu0 %1285
      %1287 = vrot.lane.b32.xlu0 %v534, 96
      %v1288 = vpop.permute.xlu0 %1287
      %1289 = vrot.lane.b32.xlu0 %v535, 96
      %v1290 = vpop.permute.xlu0 %1289
      %1291 = vrot.lane.b32.xlu0 %v536, 96
      %v1292 = vpop.permute.xlu0 %1291
      %1293 = vrot.lane.b32.xlu0 %v537, 96
      %v1294 = vpop.permute.xlu0 %1293
      %1295 = vrot.lane.b32.xlu0 %v538, 96
      %v1296 = vpop.permute.xlu0 %1295
      %1297 = vrot.lane.b32.xlu0 %v539, 96
      %v1298 = vpop.permute.xlu0 %1297
      %1299 = vrot.lane.b32.xlu0 %v540, 96
      %v1300 = vpop.permute.xlu0 %1299
      %1301 = vrot.lane.b32.xlu0 %v541, 96
      %v1302 = vpop.permute.xlu0 %1301
      %1303 = vrot.lane.b32.xlu0 %v542, 96
      %v1304 = vpop.permute.xlu0 %1303
      %1305 = vrot.lane.b32.xlu0 %v543, 96
      %v1306 = vpop.permute.xlu0 %1305
      %1307 = vrot.lane.b32.xlu0 %v544, 96
      %v1308 = vpop.permute.xlu0 %1307
      %1309 = vrot.lane.b32.xlu0 %v545, 96
      %v1310 = vpop.permute.xlu0 %1309
      %1311 = vrot.lane.b32.xlu0 %v546, 96
      %v1312 = vpop.permute.xlu0 %1311
      %1313 = vrot.lane.b32.xlu0 %v547, 96
      %v1314 = vpop.permute.xlu0 %1313
      %1315 = vrot.lane.b32.xlu0 %v548, 96
      %v1316 = vpop.permute.xlu0 %1315
      %v1349 = vsel %vm171, %v292, %v614
      %v1350 = vsel %vm171, %v293, %v616
      %v1351 = vsel %vm171, %v294, %v618
      %v1352 = vsel %vm171, %v295, %v620
      %v1353 = vsel %vm171, %v296, %v622
      %v1354 = vsel %vm171, %v297, %v624
      %v1355 = vsel %vm171, %v298, %v626
      %v1356 = vsel %vm171, %v299, %v628
      %v1357 = vsel %vm171, %v300, %v630
      %v1358 = vsel %vm171, %v301, %v632
      %v1359 = vsel %vm171, %v302, %v634
      %v1360 = vsel %vm171, %v303, %v636
      %v1361 = vsel %vm171, %v304, %v638
      %v1362 = vsel %vm171, %v305, %v640
      %v1363 = vsel %vm171, %v306, %v642
      %v1364 = vsel %vm171, %v307, %v644
      %v1365 = vsel %vm171, %v308, %v646
      %v1366 = vsel %vm171, %v309, %v648
      %v1367 = vsel %vm171, %v310, %v650
      %v1368 = vsel %vm171, %v311, %v652
      %v1369 = vsel %vm171, %v312, %v654
      %v1370 = vsel %vm171, %v313, %v656
      %v1371 = vsel %vm171, %v314, %v658
      %v1372 = vsel %vm171, %v315, %v660
      %v1373 = vsel %vm171, %v316, %v662
      %v1374 = vsel %vm171, %v317, %v664
      %v1375 = vsel %vm171, %v318, %v666
      %v1376 = vsel %vm171, %v319, %v668
      %v1377 = vsel %vm171, %v320, %v670
      %v1378 = vsel %vm171, %v321, %v672
      %v1379 = vsel %vm171, %v322, %v674
      %v1380 = vsel %vm171, %v323, %v676
      %vm1381 = vcmask 523264
      %v1382 = vsel %vm1381, %v1349, %v742
      %v1383 = vsel %vm1381, %v1350, %v744
      %v1384 = vsel %vm1381, %v1351, %v746
      %v1385 = vsel %vm1381, %v1352, %v748
      %v1386 = vsel %vm1381, %v1353, %v750
      %v1387 = vsel %vm1381, %v1354, %v752
      %v1388 = vsel %vm1381, %v1355, %v754
      %v1389 = vsel %vm1381, %v1356, %v756
      %v1390 = vsel %vm1381, %v1357, %v758
      %v1391 = vsel %vm1381, %v1358, %v760
      %v1392 = vsel %vm1381, %v1359, %v762
      %v1393 = vsel %vm1381, %v1360, %v764
      %v1394 = vsel %vm1381, %v1361, %v766
      %v1395 = vsel %vm1381, %v1362, %v768
      %v1396 = vsel %vm1381, %v1363, %v770
      %v1397 = vsel %vm1381, %v1364, %v772
      %v1398 = vsel %vm1381, %v1365, %v774
      %v1399 = vsel %vm1381, %v1366, %v776
      %v1400 = vsel %vm1381, %v1367, %v778
      %v1401 = vsel %vm1381, %v1368, %v780
      %v1402 = vsel %vm1381, %v1369, %v782
      %v1403 = vsel %vm1381, %v1370, %v784
      %v1404 = vsel %vm1381, %v1371, %v786
      %v1405 = vsel %vm1381, %v1372, %v788
      %v1406 = vsel %vm1381, %v1373, %v790
      %v1407 = vsel %vm1381, %v1374, %v792
      %v1408 = vsel %vm1381, %v1375, %v794
      %v1409 = vsel %vm1381, %v1376, %v796
      %v1410 = vsel %vm1381, %v1377, %v798
      %v1411 = vsel %vm1381, %v1378, %v800
      %v1412 = vsel %vm1381, %v1379, %v802
      %v1413 = vsel %vm1381, %v1380, %v804
      %vm1414 = vcmask 785408
      %v1415 = vsel %vm1414, %v1382, %v870
      %v1416 = vsel %vm1414, %v1383, %v872
      %v1417 = vsel %vm1414, %v1384, %v874
      %v1418 = vsel %vm1414, %v1385, %v876
      %v1419 = vsel %vm1414, %v1386, %v878
      %v1420 = vsel %vm1414, %v1387, %v880
      %v1421 = vsel %vm1414, %v1388, %v882
      %v1422 = vsel %vm1414, %v1389, %v884
      %v1423 = vsel %vm1414, %v1390, %v886
      %v1424 = vsel %vm1414, %v1391, %v888
      %v1425 = vsel %vm1414, %v1392, %v890
      %v1426 = vsel %vm1414, %v1393, %v892
      %v1427 = vsel %vm1414, %v1394, %v894
      %v1428 = vsel %vm1414, %v1395, %v896
      %v1429 = vsel %vm1414, %v1396, %v898
      %v1430 = vsel %vm1414, %v1397, %v900
      %v1431 = vsel %vm1414, %v1398, %v902
      %v1432 = vsel %vm1414, %v1399, %v904
      %v1433 = vsel %vm1414, %v1400, %v906
      %v1434 = vsel %vm1414, %v1401, %v908
      %v1435 = vsel %vm1414, %v1402, %v910
      %v1436 = vsel %vm1414, %v1403, %v912
      %v1437 = vsel %vm1414, %v1404, %v914
      %v1438 = vsel %vm1414, %v1405, %v916
      %v1439 = vsel %vm1414, %v1406, %v918
      %v1440 = vsel %vm1414, %v1407, %v920
      %v1441 = vsel %vm1414, %v1408, %v922
      %v1442 = vsel %vm1414, %v1409, %v924
      %v1443 = vsel %vm1414, %v1410, %v926
      %v1444 = vsel %vm1414, %v1411, %v928
      %v1445 = vsel %vm1414, %v1412, %v930
      %v1446 = vsel %vm1414, %v1413, %v932
      %v1447 = vsel %vm171, %v420, %v998
      %v1448 = vsel %vm171, %v421, %v1000
      %v1449 = vsel %vm171, %v422, %v1002
      %v1450 = vsel %vm171, %v423, %v1004
      %v1451 = vsel %vm171, %v424, %v1006
      %v1452 = vsel %vm171, %v425, %v1008
      %v1453 = vsel %vm171, %v426, %v1010
      %v1454 = vsel %vm171, %v427, %v1012
      %v1455 = vsel %vm171, %v428, %v1014
      %v1456 = vsel %vm171, %v429, %v1016
      %v1457 = vsel %vm171, %v430, %v1018
      %v1458 = vsel %vm171, %v431, %v1020
      %v1459 = vsel %vm171, %v432, %v1022
      %v1460 = vsel %vm171, %v433, %v1024
      %v1461 = vsel %vm171, %v434, %v1026
      %v1462 = vsel %vm171, %v435, %v1028
      %v1463 = vsel %vm171, %v436, %v1030
      %v1464 = vsel %vm171, %v437, %v1032
      %v1465 = vsel %vm171, %v438, %v1034
      %v1466 = vsel %vm171, %v439, %v1036
      %v1467 = vsel %vm171, %v440, %v1038
      %v1468 = vsel %vm171, %v441, %v1040
      %v1469 = vsel %vm171, %v442, %v1042
      %v1470 = vsel %vm171, %v443, %v1044
      %v1471 = vsel %vm171, %v444, %v1046
      %v1472 = vsel %vm171, %v445, %v1048
      %v1473 = vsel %vm171, %v446, %v1050
      %v1474 = vsel %vm171, %v447, %v1052
      %v1475 = vsel %vm171, %v448, %v1054
      %v1476 = vsel %vm171, %v449, %v1056
      %v1477 = vsel %vm171, %v450, %v1058
      %v1478 = vsel %vm171, %v451, %v1060
      %v1479 = vsel %vm1381, %v1447, %v1126
      %v1480 = vsel %vm1381, %v1448, %v1128
      %v1481 = vsel %vm1381, %v1449, %v1130
      %v1482 = vsel %vm1381, %v1450, %v1132
      %v1483 = vsel %vm1381, %v1451, %v1134
      %v1484 = vsel %vm1381, %v1452, %v1136
      %v1485 = vsel %vm1381, %v1453, %v1138
      %v1486 = vsel %vm1381, %v1454, %v1140
      %v1487 = vsel %vm1381, %v1455, %v1142
      %v1488 = vsel %vm1381, %v1456, %v1144
      %v1489 = vsel %vm1381, %v1457, %v1146
      %v1490 = vsel %vm1381, %v1458, %v1148
      %v1491 = vsel %vm1381, %v1459, %v1150
      %v1492 = vsel %vm1381, %v1460, %v1152
      %v1493 = vsel %vm1381, %v1461, %v1154
      %v1494 = vsel %vm1381, %v1462, %v1156
      %v1495 = vsel %vm1381, %v1463, %v1158
      %v1496 = vsel %vm1381, %v1464, %v1160
      %v1497 = vsel %vm1381, %v1465, %v1162
      %v1498 = vsel %vm1381, %v1466, %v1164
      %v1499 = vsel %vm1381, %v1467, %v1166
      %v1500 = vsel %vm1381, %v1468, %v1168
      %v1501 = vsel %vm1381, %v1469, %v1170
      %v1502 = vsel %vm1381, %v1470, %v1172
      %v1503 = vsel %vm1381, %v1471, %v1174
      %v1504 = vsel %vm1381, %v1472, %v1176
      %v1505 = vsel %vm1381, %v1473, %v1178
      %v1506 = vsel %vm1381, %v1474, %v1180
      %v1507 = vsel %vm1381, %v1475, %v1182
      %v1508 = vsel %vm1381, %v1476, %v1184
      %v1509 = vsel %vm1381, %v1477, %v1186
      %v1510 = vsel %vm1381, %v1478, %v1188
      %v1511 = vsel %vm1414, %v1479, %v1254
      %v1512 = vsel %vm1414, %v1480, %v1256
      %v1513 = vsel %vm1414, %v1481, %v1258
      %v1514 = vsel %vm1414, %v1482, %v1260
      %v1515 = vsel %vm1414, %v1483, %v1262
      %v1516 = vsel %vm1414, %v1484, %v1264
      %v1517 = vsel %vm1414, %v1485, %v1266
      %v1518 = vsel %vm1414, %v1486, %v1268
      %v1519 = vsel %vm1414, %v1487, %v1270
      %v1520 = vsel %vm1414, %v1488, %v1272
      %v1521 = vsel %vm1414, %v1489, %v1274
      %v1522 = vsel %vm1414, %v1490, %v1276
      %v1523 = vsel %vm1414, %v1491, %v1278
      %v1524 = vsel %vm1414, %v1492, %v1280
      %v1525 = vsel %vm1414, %v1493, %v1282
      %v1526 = vsel %vm1414, %v1494, %v1284
      %v1527 = vsel %vm1414, %v1495, %v1286
      %v1528 = vsel %vm1414, %v1496, %v1288
      %v1529 = vsel %vm1414, %v1497, %v1290
      %v1530 = vsel %vm1414, %v1498, %v1292
      %v1531 = vsel %vm1414, %v1499, %v1294
      %v1532 = vsel %vm1414, %v1500, %v1296
      %v1533 = vsel %vm1414, %v1501, %v1298
      %v1534 = vsel %vm1414, %v1502, %v1300
      %v1535 = vsel %vm1414, %v1503, %v1302
      %v1536 = vsel %vm1414, %v1504, %v1304
      %v1537 = vsel %vm1414, %v1505, %v1306
      %v1538 = vsel %vm1414, %v1506, %v1308
      %v1539 = vsel %vm1414, %v1507, %v1310
      %v1540 = vsel %vm1414, %v1508, %v1312
      %v1541 = vsel %vm1414, %v1509, %v1314
      %v1542 = vsel %vm1414, %v1510, %v1316
      %v1543 = vld [vmem:[%s1] sm:$0xff]
      %v1544 = vld [vmem:[%s1 + $0x8] sm:$0xff]
      %v1545 = vld [vmem:[%s1 + $0x10] sm:$0xff]
      %v1546 = vld [vmem:[%s1 + $0x18] sm:$0xff]
      %v1547 = vld [vmem:[%s1 + $0x20] sm:$0xff]
      %v1548 = vld [vmem:[%s1 + $0x28] sm:$0xff]
      %v1549 = vld [vmem:[%s1 + $0x30] sm:$0xff]
      %v1550 = vld [vmem:[%s1 + $0x38] sm:$0xff]
      %v1551 = vld [vmem:[%s1 + $0x40] sm:$0xff]
      %v1552 = vld [vmem:[%s1 + $0x48] sm:$0xff]
      %v1553 = vld [vmem:[%s1 + $0x50] sm:$0xff]
      %v1554 = vld [vmem:[%s1 + $0x58] sm:$0xff]
      %v1555 = vld [vmem:[%s1 + $0x60] sm:$0xff]
      %v1556 = vld [vmem:[%s1 + $0x68] sm:$0xff]
      %v1557 = vld [vmem:[%s1 + $0x70] sm:$0xff]
      %v1558 = vld [vmem:[%s1 + $0x78] sm:$0xff]
      %v1559 = vld [vmem:[%s1 + $0x80] sm:$0xff]
      %v1560 = vld [vmem:[%s1 + $0x88] sm:$0xff]
      %v1561 = vld [vmem:[%s1 + $0x90] sm:$0xff]
      %v1562 = vld [vmem:[%s1 + $0x98] sm:$0xff]
      %v1563 = vld [vmem:[%s1 + $0xa0] sm:$0xff]
      %v1564 = vld [vmem:[%s1 + $0xa8] sm:$0xff]
      %v1565 = vld [vmem:[%s1 + $0xb0] sm:$0xff]
      %v1566 = vld [vmem:[%s1 + $0xb8] sm:$0xff]
      %v1567 = vld [vmem:[%s1 + $0xc0] sm:$0xff]
      %v1568 = vld [vmem:[%s1 + $0xc8] sm:$0xff]
      %v1569 = vld [vmem:[%s1 + $0xd0] sm:$0xff]
      %v1570 = vld [vmem:[%s1 + $0xd8] sm:$0xff]
      %v1571 = vld [vmem:[%s1 + $0xe0] sm:$0xff]
      %v1572 = vld [vmem:[%s1 + $0xe8] sm:$0xff]
      %v1573 = vld [vmem:[%s1 + $0xf0] sm:$0xff]
      %v1574 = vld [vmem:[%s1 + $0xf8] sm:$0xff]
      %v1575 = vld [vmem:[%s1 + $0x100] sm:$0xff]
      %v1576 = vld [vmem:[%s1 + $0x108] sm:$0xff]
      %v1577 = vld [vmem:[%s1 + $0x110] sm:$0xff]
      %v1578 = vld [vmem:[%s1 + $0x118] sm:$0xff]
      %v1580 = vsel %vm171, %v549, 0
      %v1583 = vsel %vm171, %v550, 0
      %v1586 = vsel %vm171, %v551, 0
      %v1589 = vsel %vm171, %v552, 0
      %v1592 = vsel %vm171, %v553, 0
      %v1595 = vsel %vm171, %v554, 0
      %v1598 = vsel %vm171, %v555, 0
      %v1601 = vsel %vm171, %v556, 0
      %v1604 = vsel %vm171, %v557, 0
      %v1607 = vsel %vm171, %v558, 0
      %v1610 = vsel %vm171, %v559, 0
      %v1613 = vsel %vm171, %v560, 0
      %v1616 = vsel %vm171, %v561, 0
      %v1619 = vsel %vm171, %v562, 0
      %v1622 = vsel %vm171, %v563, 0
      %v1625 = vsel %vm171, %v564, 0
      %v1628 = vsel %vm171, %v565, 0
      %v1631 = vsel %vm171, %v566, 0
      %v1634 = vsel %vm171, %v567, 0
      %v1637 = vsel %vm171, %v568, 0
      %v1640 = vsel %vm171, %v569, 0
      %v1643 = vsel %vm171, %v570, 0
      %v1646 = vsel %vm171, %v571, 0
      %v1649 = vsel %vm171, %v572, 0
      %v1652 = vsel %vm171, %v573, 0
      %v1655 = vsel %vm171, %v574, 0
      %v1658 = vsel %vm171, %v575, 0
      %v1661 = vsel %vm171, %v576, 0
      %v1664 = vsel %vm171, %v577, 0
      %v1667 = vsel %vm171, %v578, 0
      %v1670 = vsel %vm171, %v579, 0
      %v1673 = vsel %vm171, %v580, 0
      %1675 = vmatprep.subr.mxu0 0.0
      %1676 = vmatpush1.msra.mxu0 %v1543
      %1677 = vmatprep.subr.mxu0 0.0
      %1678 = vmatpush1.msra.mxu0 %v1544
      %1679 = vmatprep.subr.mxu0 0.0
      %1680 = vmatpush1.msra.mxu0 %v1545
      %1681 = vmatprep.subr.mxu0 0.0
      %1682 = vmatpush1.msra.mxu0 %v1546
      %1683 = vmatprep.subr.mxu0 0.0
      %1684 = vmatpush1.msra.mxu0 %v1547
      %1685 = vmatprep.subr.mxu0 0.0
      %1686 = vmatpush1.msra.mxu0 %v1548
      %1687 = vmatprep.subr.mxu0 0.0
      %1688 = vmatpush1.msra.mxu0 %v1549
      %1689 = vmatprep.subr.mxu0 0.0
      %1690 = vmatpush1.msra.mxu0 %v1550
      %1691 = vmatprep.subr.mxu0 0.0
      %1692 = vmatpush1.msra.mxu0 %v1551
      %1693 = vmatprep.subr.mxu0 0.0
      %1694 = vmatpush1.msra.mxu0 %v1552
      %1695 = vmatprep.subr.mxu0 0.0
      %1696 = vmatpush1.msra.mxu0 %v1553
      %1697 = vmatprep.subr.mxu0 0.0
      %1698 = vmatpush1.msra.mxu0 %v1554
      %1699 = vmatprep.subr.mxu0 0.0
      %1700 = vmatpush1.msra.mxu0 %v1555
      %1701 = vmatprep.subr.mxu0 0.0
      %1702 = vmatpush1.msra.mxu0 %v1556
      %1703 = vmatprep.subr.mxu0 0.0
      %1704 = vmatpush1.msra.mxu0 %v1557
      %1705 = vmatprep.subr.mxu0 0.0
      %1706 = vmatpush1.msra.mxu0 %v1558
      %1707 = vmatprep.subr.mxu0 0.0
      %1708 = vmatpush1.msra.mxu0 %v1559
      %1709 = vmatprep.subr.mxu0 0.0
      %1710 = vmatpush1.msra.mxu0 %v1560
      %1711 = vmatprep.subr.mxu0 0.0
      %1712 = vmatpush1.msra.mxu0 %v1561
      %1713 = vmatprep.subr.mxu0 0.0
      %1714 = vmatpush1.msra.mxu0 %v1562
      %1715 = vmatprep.subr.mxu0 0.0
      %1716 = vmatpush1.msra.mxu0 %v1563
      %1717 = vmatprep.subr.mxu0 0.0
      %1718 = vmatpush1.msra.mxu0 %v1564
      %1719 = vmatprep.subr.mxu0 0.0
      %1720 = vmatpush1.msra.mxu0 %v1565
      %1721 = vmatprep.subr.mxu0 0.0
      %1722 = vmatpush1.msra.mxu0 %v1566
      %1723 = vmatprep.subr.mxu0 0.0
      %1724 = vmatpush1.msra.mxu0 %v1567
      %1725 = vmatprep.subr.mxu0 0.0
      %1726 = vmatpush1.msra.mxu0 %v1568
      %1727 = vmatprep.subr.mxu0 0.0
      %1728 = vmatpush1.msra.mxu0 %v1569
      %1729 = vmatprep.subr.mxu0 0.0
      %1730 = vmatpush1.msra.mxu0 %v1570
      %1731 = vmatprep.subr.mxu0 0.0
      %1732 = vmatpush1.msra.mxu0 %v1571
      %1733 = vmatprep.subr.mxu0 0.0
      %1734 = vmatpush1.msra.mxu0 %v1572
      %1735 = vmatprep.subr.mxu0 0.0
      %1736 = vmatpush1.msra.mxu0 %v1573
      %1737 = vmatprep.subr.mxu0 0.0
      %1738 = vmatpush1.msra.mxu0 %v1574
      %1739 = vmatprep.mubr.f32.mxu0 %v1511
      %1740 = vmatmul.mubr.f32.gmra.mrb[0].mxu0 %v1415
      %v1741 = vpop.f32.mrb[0].mxu0
      %v1742 = vadd.f32 0.0, %v1741
      %v1743 = vpop.f32.mrb[0].mxu0
      %1744 = vmatprep.mubr.f32.mxu0 %v1512
      %1745 = vmatmul.mubr.f32.gmra.mrb[0].mxu0 %v1416
      %v1746 = vpop.f32.mrb[0].mxu0
      %v1747 = vadd.f32 0.0, %v1746
      %v1748 = vpop.f32.mrb[0].mxu0
      %1749 = vmatprep.mubr.f32.mxu0 %v1513
      %1750 = vmatmul.mubr.f32.gmra.mrb[0].mxu0 %v1417
      %v1751 = vpop.f32.mrb[0].mxu0
      %v1752 = vadd.f32 0.0, %v1751
      %v1753 = vpop.f32.mrb[0].mxu0
      %1754 = vmatprep.mubr.f32.mxu0 %v1514
      %1755 = vmatmul.mubr.f32.gmra.mrb[0].mxu0 %v1418
      %v1756 = vpop.f32.mrb[0].mxu0
      %v1757 = vadd.f32 0.0, %v1756
      %v1758 = vpop.f32.mrb[0].mxu0
      %1759 = vmatprep.mubr.f32.mxu0 %v1515
      %1760 = vmatmul.mubr.f32.gmra.mrb[0].mxu0 %v1419
      %v1761 = vpop.f32.mrb[0].mxu0
      %v1762 = vadd.f32 0.0, %v1761
      %v1763 = vpop.f32.mrb[0].mxu0
      %1764 = vmatprep.mubr.f32.mxu0 %v1516
      %1765 = vmatmul.mubr.f32.gmra.mrb[0].mxu0 %v1420
      %v1766 = vpop.f32.mrb[0].mxu0
      %v1767 = vadd.f32 0.0, %v1766
      %v1768 = vpop.f32.mrb[0].mxu0
      %1769 = vmatprep.mubr.f32.mxu0 %v1517
      %1770 = vmatmul.mubr.f32.gmra.mrb[0].mxu0 %v1421
      %v1771 = vpop.f32.mrb[0].mxu0
      %v1772 = vadd.f32 0.0, %v1771
      %v1773 = vpop.f32.mrb[0].mxu0
      %1774 = vmatprep.mubr.f32.mxu0 %v1518
      %1775 = vmatmul.mubr.f32.gmra.mrb[0].mxu0 %v1422
      %v1776 = vpop.f32.mrb[0].mxu0
      %v1777 = vadd.f32 0.0, %v1776
      %v1778 = vpop.f32.mrb[0].mxu0
      %1779 = vmatprep.mubr.f32.mxu0 %v1519
      %1780 = vmatmul.mubr.f32.gmra.mrb[0].mxu0 %v1423
      %v1781 = vpop.f32.mrb[0].mxu0
      %v1782 = vadd.f32 0.0, %v1781
      %v1783 = vpop.f32.mrb[0].mxu0
      %1784 = vmatprep.mubr.f32.mxu0 %v1520
      %1785 = vmatmul.mubr.f32.gmra.mrb[0].mxu0 %v1424
      %v1786 = vpop.f32.mrb[0].mxu0
      %v1787 = vadd.f32 0.0, %v1786
      %v1788 = vpop.f32.mrb[0].mxu0
      %1789 = vmatprep.mubr.f32.mxu0 %v1521
      %1790 = vmatmul.mubr.f32.gmra.mrb[0].mxu0 %v1425
      %v1791 = vpop.f32.mrb[0].mxu0
      %v1792 = vadd.f32 0.0, %v1791
      %v1793 = vpop.f32.mrb[0].mxu0
      %1794 = vmatprep.mubr.f32.mxu0 %v1522
      %1795 = vmatmul.mubr.f32.gmra.mrb[0].mxu0 %v1426
      %v1796 = vpop.f32.mrb[0].mxu0
      %v1797 = vadd.f32 0.0, %v1796
      %v1798 = vpop.f32.mrb[0].mxu0
      %1799 = vmatprep.mubr.f32.mxu0 %v1523
      %1800 = vmatmul.mubr.f32.gmra.mrb[0].mxu0 %v1427
      %v1801 = vpop.f32.mrb[0].mxu0
      %v1802 = vadd.f32 0.0, %v1801
      %v1803 = vpop.f32.mrb[0].mxu0
      %1804 = vmatprep.mubr.f32.mxu0 %v1524
      %1805 = vmatmul.mubr.f32.gmra.mrb[0].mxu0 %v1428
      %v1806 = vpop.f32.mrb[0].mxu0
      %v1807 = vadd.f32 0.0, %v1806
      %v1808 = vpop.f32.mrb[0].mxu0
      %1809 = vmatprep.mubr.f32.mxu0 %v1525
      %1810 = vmatmul.mubr.f32.gmra.mrb[0].mxu0 %v1429
      %v1811 = vpop.f32.mrb[0].mxu0
      %v1812 = vadd.f32 0.0, %v1811
      %v1813 = vpop.f32.mrb[0].mxu0
      %1814 = vmatprep.mubr.f32.mxu0 %v1526
      %1815 = vmatmul.mubr.f32.gmra.mrb[0].mxu0 %v1430
      %v1816 = vpop.f32.mrb[0].mxu0
      %v1817 = vadd.f32 0.0, %v1816
      %v1818 = vpop.f32.mrb[0].mxu0
      %1819 = vmatprep.mubr.f32.mxu0 %v1527
      %1820 = vmatmul.mubr.f32.gmra.mrb[0].mxu0 %v1431
      %v1821 = vpop.f32.mrb[0].mxu0
      %v1822 = vadd.f32 0.0, %v1821
      %v1823 = vpop.f32.mrb[0].mxu0
      %1824 = vmatprep.mubr.f32.mxu0 %v1528
      %1825 = vmatmul.mubr.f32.gmra.mrb[0].mxu0 %v1432
      %v1826 = vpop.f32.mrb[0].mxu0
      %v1827 = vadd.f32 0.0, %v1826
      %v1828 = vpop.f32.mrb[0].mxu0
      %1829 = vmatprep.mubr.f32.mxu0 %v1529
      %1830 = vmatmul.mubr.f32.gmra.mrb[0].mxu0 %v1433
      %v1831 = vpop.f32.mrb[0].mxu0
      %v1832 = vadd.f32 0.0, %v1831
      %v1833 = vpop.f32.mrb[0].mxu0
      %1834 = vmatprep.mubr.f32.mxu0 %v1530
      %1835 = vmatmul.mubr.f32.gmra.mrb[0].mxu0 %v1434
      %v1836 = vpop.f32.mrb[0].mxu0
      %v1837 = vadd.f32 0.0, %v1836
      %v1838 = vpop.f32.mrb[0].mxu0
      %1839 = vmatprep.mubr.f32.mxu0 %v1531
      %1840 = vmatmul.mubr.f32.gmra.mrb[0].mxu0 %v1435
      %v1841 = vpop.f32.mrb[0].mxu0
      %v1842 = vadd.f32 0.0, %v1841
      %v1843 = vpop.f32.mrb[0].mxu0
      %1844 = vmatprep.mubr.f32.mxu0 %v1532
      %1845 = vmatmul.mubr.f32.gmra.mrb[0].mxu0 %v1436
      %v1846 = vpop.f32.mrb[0].mxu0
      %v1847 = vadd.f32 0.0, %v1846
      %v1848 = vpop.f32.mrb[0].mxu0
      %1849 = vmatprep.mubr.f32.mxu0 %v1533
      %1850 = vmatmul.mubr.f32.gmra.mrb[0].mxu0 %v1437
      %v1851 = vpop.f32.mrb[0].mxu0
      %v1852 = vadd.f32 0.0, %v1851
      %v1853 = vpop.f32.mrb[0].mxu0
      %1854 = vmatprep.mubr.f32.mxu0 %v1534
      %1855 = vmatmul.mubr.f32.gmra.mrb[0].mxu0 %v1438
      %v1856 = vpop.f32.mrb[0].mxu0
      %v1857 = vadd.f32 0.0, %v1856
      %v1858 = vpop.f32.mrb[0].mxu0
      %1859 = vmatprep.mubr.f32.mxu0 %v1535
      %1860 = vmatmul.mubr.f32.gmra.mrb[0].mxu0 %v1439
      %v1861 = vpop.f32.mrb[0].mxu0
      %v1862 = vadd.f32 0.0, %v1861
      %v1863 = vpop.f32.mrb[0].mxu0
      %1864 = vmatprep.mubr.f32.mxu0 %v1536
      %1865 = vmatmul.mubr.f32.gmra.mrb[0].mxu0 %v1440
      %v1866 = vpop.f32.mrb[0].mxu0
      %v1867 = vadd.f32 0.0, %v1866
      %v1868 = vpop.f32.mrb[0].mxu0
      %1869 = vmatprep.mubr.f32.mxu0 %v1537
      %1870 = vmatmul.mubr.f32.gmra.mrb[0].mxu0 %v1441
      %v1871 = vpop.f32.mrb[0].mxu0
      %v1872 = vadd.f32 0.0, %v1871
      %v1873 = vpop.f32.mrb[0].mxu0
      %1874 = vmatprep.mubr.f32.mxu0 %v1538
      %1875 = vmatmul.mubr.f32.gmra.mrb[0].mxu0 %v1442
      %v1876 = vpop.f32.mrb[0].mxu0
      %v1877 = vadd.f32 0.0, %v1876
      %v1878 = vpop.f32.mrb[0].mxu0
      %1879 = vmatprep.mubr.f32.mxu0 %v1539
      %1880 = vmatmul.mubr.f32.gmra.mrb[0].mxu0 %v1443
      %v1881 = vpop.f32.mrb[0].mxu0
      %v1882 = vadd.f32 0.0, %v1881
      %v1883 = vpop.f32.mrb[0].mxu0
      %1884 = vmatprep.mubr.f32.mxu0 %v1540
      %1885 = vmatmul.mubr.f32.gmra.mrb[0].mxu0 %v1444
      %v1886 = vpop.f32.mrb[0].mxu0
      %v1887 = vadd.f32 0.0, %v1886
      %v1888 = vpop.f32.mrb[0].mxu0
      %1889 = vmatprep.mubr.f32.mxu0 %v1541
      %1890 = vmatmul.mubr.f32.gmra.mrb[0].mxu0 %v1445
      %v1891 = vpop.f32.mrb[0].mxu0
      %v1892 = vadd.f32 0.0, %v1891
      %v1893 = vpop.f32.mrb[0].mxu0
      %1894 = vmatprep.mubr.f32.mxu0 %v1542
      %1895 = vmatmul.mubr.f32.gmra.mrb[0].mxu0 %v1446
      %v1896 = vpop.f32.mrb[0].mxu0
      %v1897 = vadd.f32 0.0, %v1896
      %v1898 = vpop.f32.mrb[0].mxu0
      %1899 = vdwg.mxu0
      %1900 = vmatprep.subr.mxu0 0.0
      %1901 = vmatpush1.msra.mxu0 %v1575
      %1902 = vmatprep.subr.mxu0 0.0
      %1903 = vmatpush1.msra.mxu0 %v1576
      %1904 = vmatprep.subr.mxu0 0.0
      %1905 = vmatpush1.msra.mxu0 %v1577
      %1906 = vmatprep.subr.mxu0 0.0
      %1907 = vmatpush1.msra.mxu0 %v1578
      %1908 = vmatprep.subr.mxu0 0.0
      %1909 = vmatpush1.msra.mxu0 0.0
      %1910 = vmatprep.subr.mxu0 0.0
      %1911 = vmatpush1.msra.mxu0 0.0
      %1912 = vmatprep.subr.mxu0 0.0
      %1913 = vmatpush1.msra.mxu0 0.0
      %1914 = vmatprep.subr.mxu0 0.0
      %1915 = vmatpush1.msra.mxu0 0.0
      %1916 = vmatprep.subr.mxu0 0.0
      %1917 = vmatpush1.msra.mxu0 0.0
      %1918 = vmatprep.subr.mxu0 0.0
      %1919 = vmatpush1.msra.mxu0 0.0
      %1920 = vmatprep.subr.mxu0 0.0
      %1921 = vmatpush1.msra.mxu0 0.0
      %1922 = vmatprep.subr.mxu0 0.0
      %1923 = vmatpush1.msra.mxu0 0.0
      %1924 = vmatprep.subr.mxu0 0.0
      %1925 = vmatpush1.msra.mxu0 0.0
      %1926 = vmatprep.subr.mxu0 0.0
      %1927 = vmatpush1.msra.mxu0 0.0
      %1928 = vmatprep.subr.mxu0 0.0
      %1929 = vmatpush1.msra.mxu0 0.0
      %1930 = vmatprep.subr.mxu0 0.0
      %1931 = vmatpush1.msra.mxu0 0.0
      %1932 = vmatprep.subr.mxu0 0.0
      %1933 = vmatpush1.msra.mxu0 0.0
      %1934 = vmatprep.subr.mxu0 0.0
      %1935 = vmatpush1.msra.mxu0 0.0
      %1936 = vmatprep.subr.mxu0 0.0
      %1937 = vmatpush1.msra.mxu0 0.0
      %1938 = vmatprep.subr.mxu0 0.0
      %1939 = vmatpush1.msra.mxu0 0.0
      %1940 = vmatprep.subr.mxu0 0.0
      %1941 = vmatpush1.msra.mxu0 0.0
      %1942 = vmatprep.subr.mxu0 0.0
      %1943 = vmatpush1.msra.mxu0 0.0
      %1944 = vmatprep.subr.mxu0 0.0
      %1945 = vmatpush1.msra.mxu0 0.0
      %1946 = vmatprep.subr.mxu0 0.0
      %1947 = vmatpush1.msra.mxu0 0.0
      %1948 = vmatprep.subr.mxu0 0.0
      %1949 = vmatpush1.msra.mxu0 0.0
      %1950 = vmatprep.subr.mxu0 0.0
      %1951 = vmatpush1.msra.mxu0 0.0
      %1952 = vmatprep.subr.mxu0 0.0
      %1953 = vmatpush1.msra.mxu0 0.0
      %1954 = vmatprep.subr.mxu0 0.0
      %1955 = vmatpush1.msra.mxu0 0.0
      %1956 = vmatprep.subr.mxu0 0.0
      %1957 = vmatpush1.msra.mxu0 0.0
      %1958 = vmatprep.subr.mxu0 0.0
      %1959 = vmatpush1.msra.mxu0 0.0
      %1960 = vmatprep.subr.mxu0 0.0
      %1961 = vmatpush1.msra.mxu0 0.0
      %1962 = vmatprep.subr.mxu0 0.0
      %1963 = vmatpush1.msra.mxu0 0.0
      %1964 = vmatprep.mubr.f32.mxu0 0.0
      %1965 = vmatmul.mubr.f32.gmra.mrb[0].mxu0 %v1580
      %v1966 = vpop.f32.mrb[0].mxu0
      %v1967 = vadd.f32 %v1742, %v1966
      %v1968 = vpop.f32.mrb[0].mxu0
      %1969 = vmatprep.mubr.f32.mxu0 0.0
      %1970 = vmatmul.mubr.f32.gmra.mrb[0].mxu0 %v1583
      %v1971 = vpop.f32.mrb[0].mxu0
      %v1972 = vadd.f32 %v1747, %v1971
      %v1973 = vpop.f32.mrb[0].mxu0
      %1974 = vmatprep.mubr.f32.mxu0 0.0
      %1975 = vmatmul.mubr.f32.gmra.mrb[0].mxu0 %v1586
      %v1976 = vpop.f32.mrb[0].mxu0
      %v1977 = vadd.f32 %v1752, %v1976
      %v1978 = vpop.f32.mrb[0].mxu0
      %1979 = vmatprep.mubr.f32.mxu0 0.0
      %1980 = vmatmul.mubr.f32.gmra.mrb[0].mxu0 %v1589
      %v1981 = vpop.f32.mrb[0].mxu0
      %v1982 = vadd.f32 %v1757, %v1981
      %v1983 = vpop.f32.mrb[0].mxu0
      %1984 = vmatprep.mubr.f32.mxu0 0.0
      %1985 = vmatmul.mubr.f32.gmra.mrb[0].mxu0 %v1592
      %v1986 = vpop.f32.mrb[0].mxu0
      %v1987 = vadd.f32 %v1762, %v1986
      %v1988 = vpop.f32.mrb[0].mxu0
      %1989 = vmatprep.mubr.f32.mxu0 0.0
      %1990 = vmatmul.mubr.f32.gmra.mrb[0].mxu0 %v1595
      %v1991 = vpop.f32.mrb[0].mxu0
      %v1992 = vadd.f32 %v1767, %v1991
      %v1993 = vpop.f32.mrb[0].mxu0
      %1994 = vmatprep.mubr.f32.mxu0 0.0
      %1995 = vmatmul.mubr.f32.gmra.mrb[0].mxu0 %v1598
      %v1996 = vpop.f32.mrb[0].mxu0
      %v1997 = vadd.f32 %v1772, %v1996
      %v1998 = vpop.f32.mrb[0].mxu0
      %1999 = vmatprep.mubr.f32.mxu0 0.0
      %2000 = vmatmul.mubr.f32.gmra.mrb[0].mxu0 %v1601
      %v2001 = vpop.f32.mrb[0].mxu0
      %v2002 = vadd.f32 %v1777, %v2001
      %v2003 = vpop.f32.mrb[0].mxu0
      %2004 = vmatprep.mubr.f32.mxu0 0.0
      %2005 = vmatmul.mubr.f32.gmra.mrb[0].mxu0 %v1604
      %v2006 = vpop.f32.mrb[0].mxu0
      %v2007 = vadd.f32 %v1782, %v2006
      %v2008 = vpop.f32.mrb[0].mxu0
      %2009 = vmatprep.mubr.f32.mxu0 0.0
      %2010 = vmatmul.mubr.f32.gmra.mrb[0].mxu0 %v1607
      %v2011 = vpop.f32.mrb[0].mxu0
      %v2012 = vadd.f32 %v1787, %v2011
      %v2013 = vpop.f32.mrb[0].mxu0
      %2014 = vmatprep.mubr.f32.mxu0 0.0
      %2015 = vmatmul.mubr.f32.gmra.mrb[0].mxu0 %v1610
      %v2016 = vpop.f32.mrb[0].mxu0
      %v2017 = vadd.f32 %v1792, %v2016
      %v2018 = vpop.f32.mrb[0].mxu0
      %2019 = vmatprep.mubr.f32.mxu0 0.0
      %2020 = vmatmul.mubr.f32.gmra.mrb[0].mxu0 %v1613
      %v2021 = vpop.f32.mrb[0].mxu0
      %v2022 = vadd.f32 %v1797, %v2021
      %v2023 = vpop.f32.mrb[0].mxu0
      %2024 = vmatprep.mubr.f32.mxu0 0.0
      %2025 = vmatmul.mubr.f32.gmra.mrb[0].mxu0 %v1616
      %v2026 = vpop.f32.mrb[0].mxu0
      %v2027 = vadd.f32 %v1802, %v2026
      %v2028 = vpop.f32.mrb[0].mxu0
      %2029 = vmatprep.mubr.f32.mxu0 0.0
      %2030 = vmatmul.mubr.f32.gmra.mrb[0].mxu0 %v1619
      %v2031 = vpop.f32.mrb[0].mxu0
      %v2032 = vadd.f32 %v1807, %v2031
      %v2033 = vpop.f32.mrb[0].mxu0
      %2034 = vmatprep.mubr.f32.mxu0 0.0
      %2035 = vmatmul.mubr.f32.gmra.mrb[0].mxu0 %v1622
      %v2036 = vpop.f32.mrb[0].mxu0
      %v2037 = vadd.f32 %v1812, %v2036
      %v2038 = vpop.f32.mrb[0].mxu0
      %2039 = vmatprep.mubr.f32.mxu0 0.0
      %2040 = vmatmul.mubr.f32.gmra.mrb[0].mxu0 %v1625
      %v2041 = vpop.f32.mrb[0].mxu0
      %v2042 = vadd.f32 %v1817, %v2041
      %v2043 = vpop.f32.mrb[0].mxu0
      %2044 = vmatprep.mubr.f32.mxu0 0.0
      %2045 = vmatmul.mubr.f32.gmra.mrb[0].mxu0 %v1628
      %v2046 = vpop.f32.mrb[0].mxu0
      %v2047 = vadd.f32 %v1822, %v2046
      %v2048 = vpop.f32.mrb[0].mxu0
      %2049 = vmatprep.mubr.f32.mxu0 0.0
      %2050 = vmatmul.mubr.f32.gmra.mrb[0].mxu0 %v1631
      %v2051 = vpop.f32.mrb[0].mxu0
      %v2052 = vadd.f32 %v1827, %v2051
      %v2053 = vpop.f32.mrb[0].mxu0
      %2054 = vmatprep.mubr.f32.mxu0 0.0
      %2055 = vmatmul.mubr.f32.gmra.mrb[0].mxu0 %v1634
      %v2056 = vpop.f32.mrb[0].mxu0
      %v2057 = vadd.f32 %v1832, %v2056
      %v2058 = vpop.f32.mrb[0].mxu0
      %2059 = vmatprep.mubr.f32.mxu0 0.0
      %2060 = vmatmul.mubr.f32.gmra.mrb[0].mxu0 %v1637
      %v2061 = vpop.f32.mrb[0].mxu0
      %v2062 = vadd.f32 %v1837, %v2061
      %v2063 = vpop.f32.mrb[0].mxu0
      %2064 = vmatprep.mubr.f32.mxu0 0.0
      %2065 = vmatmul.mubr.f32.gmra.mrb[0].mxu0 %v1640
      %v2066 = vpop.f32.mrb[0].mxu0
      %v2067 = vadd.f32 %v1842, %v2066
      %v2068 = vpop.f32.mrb[0].mxu0
      %2069 = vmatprep.mubr.f32.mxu0 0.0
      %2070 = vmatmul.mubr.f32.gmra.mrb[0].mxu0 %v1643
      %v2071 = vpop.f32.mrb[0].mxu0
      %v2072 = vadd.f32 %v1847, %v2071
      %v2073 = vpop.f32.mrb[0].mxu0
      %2074 = vmatprep.mubr.f32.mxu0 0.0
      %2075 = vmatmul.mubr.f32.gmra.mrb[0].mxu0 %v1646
      %v2076 = vpop.f32.mrb[0].mxu0
      %v2077 = vadd.f32 %v1852, %v2076
      %v2078 = vpop.f32.mrb[0].mxu0
      %2079 = vmatprep.mubr.f32.mxu0 0.0
      %2080 = vmatmul.mubr.f32.gmra.mrb[0].mxu0 %v1649
      %v2081 = vpop.f32.mrb[0].mxu0
      %v2082 = vadd.f32 %v1857, %v2081
      %v2083 = vpop.f32.mrb[0].mxu0
      %2084 = vmatprep.mubr.f32.mxu0 0.0
      %2085 = vmatmul.mubr.f32.gmra.mrb[0].mxu0 %v1652
      %v2086 = vpop.f32.mrb[0].mxu0
      %v2087 = vadd.f32 %v1862, %v2086
      %v2088 = vpop.f32.mrb[0].mxu0
      %2089 = vmatprep.mubr.f32.mxu0 0.0
      %2090 = vmatmul.mubr.f32.gmra.mrb[0].mxu0 %v1655
      %v2091 = vpop.f32.mrb[0].mxu0
      %v2092 = vadd.f32 %v1867, %v2091
      %v2093 = vpop.f32.mrb[0].mxu0
      %2094 = vmatprep.mubr.f32.mxu0 0.0
      %2095 = vmatmul.mubr.f32.gmra.mrb[0].mxu0 %v1658
      %v2096 = vpop.f32.mrb[0].mxu0
      %v2097 = vadd.f32 %v1872, %v2096
      %v2098 = vpop.f32.mrb[0].mxu0
      %2099 = vmatprep.mubr.f32.mxu0 0.0
      %2100 = vmatmul.mubr.f32.gmra.mrb[0].mxu0 %v1661
      %v2101 = vpop.f32.mrb[0].mxu0
      %v2102 = vadd.f32 %v1877, %v2101
      %v2103 = vpop.f32.mrb[0].mxu0
      %2104 = vmatprep.mubr.f32.mxu0 0.0
      %2105 = vmatmul.mubr.f32.gmra.mrb[0].mxu0 %v1664
      %v2106 = vpop.f32.mrb[0].mxu0
      %v2107 = vadd.f32 %v1882, %v2106
      %v2108 = vpop.f32.mrb[0].mxu0
      %2109 = vmatprep.mubr.f32.mxu0 0.0
      %2110 = vmatmul.mubr.f32.gmra.mrb[0].mxu0 %v1667
      %v2111 = vpop.f32.mrb[0].mxu0
      %v2112 = vadd.f32 %v1887, %v2111
      %v2113 = vpop.f32.mrb[0].mxu0
      %2114 = vmatprep.mubr.f32.mxu0 0.0
      %2115 = vmatmul.mubr.f32.gmra.mrb[0].mxu0 %v1670
      %v2116 = vpop.f32.mrb[0].mxu0
      %v2117 = vadd.f32 %v1892, %v2116
      %v2118 = vpop.f32.mrb[0].mxu0
      %2119 = vmatprep.mubr.f32.mxu0 0.0
      %2120 = vmatmul.mubr.f32.gmra.mrb[0].mxu0 %v1673
      %v2121 = vpop.f32.mrb[0].mxu0
      %v2122 = vadd.f32 %v1897, %v2121
      %v2123 = vpop.f32.mrb[0].mxu0
      %2124 = vdwg.mxu0
      %v2125 = vld [vmem:[%s2] sm:$0x1]
      %v2127 = vlaneseq
      %v2128 = vshrl.u32 %v2127, 7
      %v2129 = vsub.s32 0, %v2128
      %v2130 = vrot.slane %v2125, %v2129
      %v2132 = vadd.f32 %v1967, %v2130
      %v2133 = vadd.f32 %v1972, %v2130
      %v2134 = vadd.f32 %v1977, %v2130
      %v2135 = vadd.f32 %v1982, %v2130
      %v2136 = vadd.f32 %v1987, %v2130
      %v2137 = vadd.f32 %v1992, %v2130
      %v2138 = vadd.f32 %v1997, %v2130
      %v2139 = vadd.f32 %v2002, %v2130
      %v2140 = vadd.f32 %v2007, %v2130
      %v2141 = vadd.f32 %v2012, %v2130
      %v2142 = vadd.f32 %v2017, %v2130
      %v2143 = vadd.f32 %v2022, %v2130
      %v2144 = vadd.f32 %v2027, %v2130
      %v2145 = vadd.f32 %v2032, %v2130
      %v2146 = vadd.f32 %v2037, %v2130
      %v2147 = vadd.f32 %v2042, %v2130
      %v2148 = vadd.f32 %v2047, %v2130
      %v2149 = vadd.f32 %v2052, %v2130
      %v2150 = vadd.f32 %v2057, %v2130
      %v2151 = vadd.f32 %v2062, %v2130
      %v2152 = vadd.f32 %v2067, %v2130
      %v2153 = vadd.f32 %v2072, %v2130
      %v2154 = vadd.f32 %v2077, %v2130
      %v2155 = vadd.f32 %v2082, %v2130
      %v2156 = vadd.f32 %v2087, %v2130
      %v2157 = vadd.f32 %v2092, %v2130
      %v2158 = vadd.f32 %v2097, %v2130
      %v2159 = vadd.f32 %v2102, %v2130
      %v2160 = vadd.f32 %v2107, %v2130
      %v2161 = vadd.f32 %v2112, %v2130
      %v2162 = vadd.f32 %v2117, %v2130
      %v2163 = vadd.f32 %v2122, %v2130
      %v2164 = vtanh.pop %v2132
      %v2165 = vtanh.pop %v2133
      %v2166 = vtanh.pop %v2134
      %v2167 = vtanh.pop %v2135
      %v2168 = vtanh.pop %v2136
      %v2169 = vtanh.pop %v2137
      %v2170 = vtanh.pop %v2138
      %v2171 = vtanh.pop %v2139
      %v2172 = vtanh.pop %v2140
      %v2173 = vtanh.pop %v2141
      %v2174 = vtanh.pop %v2142
      %v2175 = vtanh.pop %v2143
      %v2176 = vtanh.pop %v2144
      %v2177 = vtanh.pop %v2145
      %v2178 = vtanh.pop %v2146
      %v2179 = vtanh.pop %v2147
      %v2180 = vtanh.pop %v2148
      %v2181 = vtanh.pop %v2149
      %v2182 = vtanh.pop %v2150
      %v2183 = vtanh.pop %v2151
      %v2184 = vtanh.pop %v2152
      %v2185 = vtanh.pop %v2153
      %v2186 = vtanh.pop %v2154
      %v2187 = vtanh.pop %v2155
      %v2188 = vtanh.pop %v2156
      %v2189 = vtanh.pop %v2157
      %v2190 = vtanh.pop %v2158
      %v2191 = vtanh.pop %v2159
      %v2192 = vtanh.pop %v2160
      %v2193 = vtanh.pop %v2161
      %v2194 = vtanh.pop %v2162
      %v2195 = vtanh.pop %v2163
      %vm2196 = vcmask 31744
      %2197 = vst.msk [vmem:[%s170] sm:$0xff] %vm2196, %v2164
      %2198 = vst.msk [vmem:[%s170 + $0x8] sm:$0xff] %vm2196, %v2165
      %2199 = vst.msk [vmem:[%s170 + $0x10] sm:$0xff] %vm2196, %v2166
      %2200 = vst.msk [vmem:[%s170 + $0x18] sm:$0xff] %vm2196, %v2167
      %2201 = vst.msk [vmem:[%s170 + $0x20] sm:$0xff] %vm2196, %v2168
      %2202 = vst.msk [vmem:[%s170 + $0x28] sm:$0xff] %vm2196, %v2169
      %2203 = vst.msk [vmem:[%s170 + $0x30] sm:$0xff] %vm2196, %v2170
      %2204 = vst.msk [vmem:[%s170 + $0x38] sm:$0xff] %vm2196, %v2171
      %2205 = vst.msk [vmem:[%s170 + $0x40] sm:$0xff] %vm2196, %v2172
      %2206 = vst.msk [vmem:[%s170 + $0x48] sm:$0xff] %vm2196, %v2173
      %2207 = vst.msk [vmem:[%s170 + $0x50] sm:$0xff] %vm2196, %v2174
      %2208 = vst.msk [vmem:[%s170 + $0x58] sm:$0xff] %vm2196, %v2175
      %2209 = vst.msk [vmem:[%s170 + $0x60] sm:$0xff] %vm2196, %v2176
      %2210 = vst.msk [vmem:[%s170 + $0x68] sm:$0xff] %vm2196, %v2177
      %2211 = vst.msk [vmem:[%s170 + $0x70] sm:$0xff] %vm2196, %v2178
      %2212 = vst.msk [vmem:[%s170 + $0x78] sm:$0xff] %vm2196, %v2179
      %2213 = vst.msk [vmem:[%s170 + $0x80] sm:$0xff] %vm2196, %v2180
      %2214 = vst.msk [vmem:[%s170 + $0x88] sm:$0xff] %vm2196, %v2181
      %2215 = vst.msk [vmem:[%s170 + $0x90] sm:$0xff] %vm2196, %v2182
      %2216 = vst.msk [vmem:[%s170 + $0x98] sm:$0xff] %vm2196, %v2183
      %2217 = vst.msk [vmem:[%s170 + $0xa0] sm:$0xff] %vm2196, %v2184
      %2218 = vst.msk [vmem:[%s170 + $0xa8] sm:$0xff] %vm2196, %v2185
      %2219 = vst.msk [vmem:[%s170 + $0xb0] sm:$0xff] %vm2196, %v2186
      %2220 = vst.msk [vmem:[%s170 + $0xb8] sm:$0xff] %vm2196, %v2187
      %2221 = vst.msk [vmem:[%s170 + $0xc0] sm:$0xff] %vm2196, %v2188
      %2222 = vst.msk [vmem:[%s170 + $0xc8] sm:$0xff] %vm2196, %v2189
      %2223 = vst.msk [vmem:[%s170 + $0xd0] sm:$0xff] %vm2196, %v2190
      %2224 = vst.msk [vmem:[%s170 + $0xd8] sm:$0xff] %vm2196, %v2191
      %2225 = vst.msk [vmem:[%s170 + $0xe0] sm:$0xff] %vm2196, %v2192
      %2226 = vst.msk [vmem:[%s170 + $0xe8] sm:$0xff] %vm2196, %v2193
      %2227 = vst.msk [vmem:[%s170 + $0xf0] sm:$0xff] %vm2196, %v2194
      %2228 = vst.msk [vmem:[%s170 + $0xf8] sm:$0xff] %vm2196, %v2195
      %p2229 = scmp.lt.s32.totalorder %s14, 1
      %s2230 = scalar_select %p2229, %s14, 1
      %s2231 = smul.addr %s2230, 32
      %s2232 = smul.addr %s2231, 8
      %s2233 = scalar_lea.vmem %s3, %s2232
      // Predicated region
      $region33: #{_lambda_.11} parent=31 // pred_check
        %p2234 = pneg %p100
      $region34: #{_lambda_.11} parent=31 // pred_check_branch
        %2236 = sbr.rel (%p2234) target = $region36
      $region35: #{_lambda_.11} parent=31 // pred_region
        _
      $region36: #{_lambda_.11} parent=31 // pred_fallthru
        _
    $region32: #{_lambda_.11} parent=5 // pred_fallthru
      _
    %p2237 = scmp.le.s32.totalorder 2, %s9
    // Predicated region
    $region37: #{_lambda_.11} parent=5 // pred_check
      %p2238 = pneg %p2237
    $region38: #{_lambda_.11} parent=5 // pred_check_branch
      %2240 = sbr.rel (%p2238) target = $region40
    $region39: #{_lambda_.11} parent=5 // pred_region
      %s2241 = ssub.s32 %s9, 2
      // Predicated region
      $region41: #{_lambda_.11} parent=39 // pred_check
        %p2242 = pneg %p106
      $region42: #{_lambda_.11} parent=39 // pred_check_branch
        %2244 = sbr.rel (%p2242) target = $region44
      $region43: #{_lambda_.11} parent=39 // pred_region
        %p2245 = scmp.lt.s32.totalorder %s15, 1
        %s2246 = scalar_select %p2245, %s15, 1
        %s2247 = smul.addr %s2246, 32
        %s2248 = smul.addr %s2247, 8
        %s2249 = scalar_lea.vmem %s3, %s2248
      $region44: #{_lambda_.11} parent=39 // pred_fallthru
        _
    $region40: #{_lambda_.11} parent=5 // pred_fallthru
      _
  $region6: #{_lambda_.11} parent=0 // loop_footer
    %s13 = sadd.s32 1, %s9
  $region7: #{_lambda_.11} parent=0 // loop_footer_branch
    %8 = sbr.rel target = $region3
  $region8: #{_lambda_.11} parent=0 // loop_exit
    _

</llo_original>
